<compile_context>
chip_gen: v7x
topology: tpu7x:2x2x1
jax: 0.10.0
libtpu: 0.0.40
codegen_flags: <defaults>
</compile_context>

<pallas_src>
import math

import numpy as np
import jax
import jax.numpy as jnp
from jax.experimental import pallas as pl
from jax.experimental.pallas import tpu as pltpu


_EPS = 1e-5
# Channel counts after each of the six "conv -> ReLU -> norm" stages.
_NORM_CHANNELS = (10, 16, 10, 12, 14, 16)


class Config:
    def __init__(self, channel_norm="GroupNorm", dropout_value=0.05,
                 loss_function="CrossEntropyLoss"):
        self.channel_norm = channel_norm          # 'BatchNorm2d' | 'GroupNorm' | 'LayerNorm'
        self.dropout_value = dropout_value        # inference: dropout == identity
        self.loss_function = loss_function        # 'CrossEntropyLoss' | 'NLLoss'


# ---------------------------------------------------------------------------
# Weight packing (done ONCE at init, on host with numpy -> tiny, not hot path)
#
# Activation layout inside the kernel:  act2d[h, w*C + c] == act[h, w, c]
# ---------------------------------------------------------------------------

def _tap_matrices(w, w_in):
    """(Cout, Cin, 3, KW) conv weight -> (3, w_in*Cin, wo*Cout) banded matrices.

    out2d[ho, wo*Cout+co] = sum_di  x2d[ho+di, :] @ M[di]   reproduces the conv.
    """
    w = np.asarray(w, np.float32)
    cout, cin, kh, kw = w.shape
    wo = w_in - kw + 1
    m = np.zeros((kh, w_in * cin, wo * cout), np.float32)
    for di in range(kh):
        for dj in range(kw):
            blk = w[:, :, di, dj].T                       # (cin, cout)
            for ow in range(wo):
                r = (ow + dj) * cin
                c = ow * cout
                m[di, r:r + cin, c:c + cout] = blk
    return m


def _conv1x1_matrix(w, w_sp):
    """(Cout, Cin, 1, 1) -> block-diagonal (w_sp*Cin, w_sp*Cout) matrix."""
    w = np.asarray(w, np.float32)
    cout, cin = w.shape[:2]
    blk = w.reshape(cout, cin).T                          # (cin, cout)
    m = np.zeros((w_sp * cin, w_sp * cout), np.float32)
    for ow in range(w_sp):
        m[ow * cin:(ow + 1) * cin, ow * cout:(ow + 1) * cout] = blk
    return m


def _pool_lane_selectors(w_in, c):
    """0/1 selectors picking even-w / odd-w lanes: (2, w_in*c, (w_in//2)*c)."""
    wo = w_in // 2
    sel = np.zeros((2, w_in * c, wo * c), np.float32)
    for ow in range(wo):
        for ch in range(c):
            sel[0, (2 * ow) * c + ch, ow * c + ch] = 1.0
            sel[1, (2 * ow + 1) * c + ch, ow * c + ch] = 1.0
    return sel


def _pool_row_selectors(h_in):
    """0/1 selectors picking even / odd rows: (2, h_in//2, h_in)."""
    ho = h_in // 2
    sel = np.zeros((2, ho, h_in), np.float32)
    for oh in range(ho):
        sel[0, oh, 2 * oh] = 1.0
        sel[1, oh, 2 * oh + 1] = 1.0
    return sel


def _gap_matrix(h_sp, w_sp, c):
    """Per-channel spatial-average reducer: (w_sp*c, c) with 1/(h*w) entries."""
    m = np.zeros((w_sp * c, c), np.float32)
    inv = 1.0 / float(h_sp * w_sp)
    for ow in range(w_sp):
        for ch in range(c):
            m[ow * c + ch, ch] = inv
    return m


def _norm_pack(norm_type, num_groups, w_sp, c, gamma, beta, run_mean, run_var):
    """Per-lane norm constants, rows: [gamma, beta, group masks...] (or BN affine)."""
    gamma = np.asarray(gamma, np.float32)
    beta = np.asarray(beta, np.float32)
    if norm_type == "BatchNorm2d":                        # eval: affine from running stats
        scale = gamma / np.sqrt(np.asarray(run_var, np.float32) + _EPS)
        shift = beta - np.asarray(run_mean, np.float32) * scale
        rows = [np.tile(scale, w_sp), np.tile(shift, w_sp)]
    else:                                                 # GroupNorm(2) / LayerNorm==GroupNorm(1)
        rows = [np.tile(gamma, w_sp), np.tile(beta, w_sp)]
        cg = c // num_groups
        for g in range(num_groups):
            mask = np.zeros((c,), np.float32)
            mask[g * cg:(g + 1) * cg] = 1.0
            rows.append(np.tile(mask, w_sp))
    return np.stack(rows, axis=0)


def _pack_params(params, norm_type, num_groups):
    p = {k: np.asarray(v, np.float32) for k, v in params.items()}
    packed = []

    def add(arr, dtype):
        packed.append(jnp.asarray(np.asarray(arr, np.float32), dtype))

    def add_norm(name, w_sp, c):
        add(_norm_pack(norm_type, num_groups, w_sp, c,
                       p[name + "_g"], p[name + "_b"],
                       p[name + "_rm"], p[name + "_rv"]), jnp.float32)

    # conv1 block (input pre-padded to 30x30, Cin=1)
    add(_tap_matrices(p["conv1a_w"], 30), jnp.bfloat16)
    add_norm("n1a", 28, 10)
    add(_tap_matrices(p["conv1b_w"], 28), jnp.bfloat16)
    add_norm("n1b", 26, 16)
    # pool1 selectors: (26, 26*16) -> (13, 13*16)
    add(_pool_lane_selectors(26, 16), jnp.float32)
    add(_pool_row_selectors(26), jnp.float32)
    # transition1: 1x1, 16 -> 8, on 13x13 (no bias)
    add(_conv1x1_matrix(p["t1_w"], 13), jnp.bfloat16)
    # conv2_1 block
    add(_tap_matrices(p["conv21a_w"], 13), jnp.bfloat16)
    add_norm("n21a", 11, 10)
    add(_tap_matrices(p["conv21b_w"], 11), jnp.bfloat16)
    add_norm("n21b", 9, 12)
    # conv2_2 block
    add(_tap_matrices(p["conv22a_w"], 9), jnp.bfloat16)
    add_norm("n22a", 7, 14)
    add(_tap_matrices(p["conv22b_w"], 7), jnp.bfloat16)
    add_norm("n22b", 5, 16)
    # conv3: 1x1, 16 -> 24 (bias), on 5x5
    add(_conv1x1_matrix(p["conv3_w"], 5), jnp.bfloat16)
    add(np.tile(p["conv3_b"], 5)[None, :], jnp.float32)
    # gap reducer: (1, 5*24) -> (1, 24), includes the 1/25 factor
    add(_gap_matrix(5, 5, 24), jnp.float32)
    # conv4: 1x1, 24 -> 10 (bias)
    add(p["conv4_w"].reshape(10, 24).T, jnp.float32)
    add(p["conv4_b"][None, :], jnp.float32)
    return tuple(packed)


# ---------------------------------------------------------------------------
# Fused Pallas kernel: whole forward per batch element
# ---------------------------------------------------------------------------

def _make_kernel(norm_type, num_groups, loss_function, norm_channels):
    use_group_stats = norm_type in ("GroupNorm", "LayerNorm")

    def _relu(v):
        return jnp.maximum(v, 0.0)

    def _norm(x, pack_ref, num_ch):
        if not use_group_stats:                            # BatchNorm2d (eval): affine
            return x * pack_ref[0:1, :] + pack_ref[1:2, :]
        h = x.shape[0]
        w = x.shape[1] // num_ch
        inv_n = 1.0 / float(h * w * (num_ch // num_groups))
        gamma = pack_ref[0:1, :]
        beta = pack_ref[1:2, :]
        mean_map = jnp.zeros((1, x.shape[1]), jnp.float32)
        var_map = jnp.zeros((1, x.shape[1]), jnp.float32)
        for g in range(num_groups):                        # static unroll, G <= 2
            m = pack_ref[2 + g:3 + g, :]                   # 0/1 lane mask of group g
            xm = x * m
            s = jnp.sum(jnp.sum(xm, axis=1, keepdims=True), axis=0, keepdims=True)
            ss = jnp.sum(jnp.sum(xm * x, axis=1, keepdims=True), axis=0, keepdims=True)
            mu = s * inv_n
            var = ss * inv_n - mu * mu
            mean_map = mean_map + m * mu
            var_map = var_map + m * var
        inv_std = jax.lax.rsqrt(var_map + _EPS)            # EUP, f32
        return (x - mean_map) * (inv_std * gamma) + beta

    def _conv3x3(src_ref, w_ref):
        # src_ref: (H, W*Cin) f32 VMEM scratch; w_ref: (3, W*Cin, Wo*Cout) bf16 taps.
        ho = src_ref.shape[0] - 2
        acc = jnp.dot(src_ref[0:ho, :].astype(jnp.bfloat16), w_ref[0],
                      preferred_element_type=jnp.float32)
        acc = acc + jnp.dot(src_ref[1:ho + 1, :].astype(jnp.bfloat16), w_ref[1],
                            preferred_element_type=jnp.float32)
        acc = acc + jnp.dot(src_ref[2:ho + 2, :].astype(jnp.bfloat16), w_ref[2],
                            preferred_element_type=jnp.float32)
        return acc

    def kernel(x_ref, w1, n1a, w2, n1b, pool_w, pool_h, wt,
               w21a, n21a, w21b, n21b, w22a, n22a, w22b, n22b,
               w3, b3, gap_r, w4, b4, o_ref,
               sx, s1, st, s21, s22, s23):
        c1, c2, c3, c4, c5, c6 = norm_channels

        # conv1 block: conv(pad=1) -> relu -> norm -> conv -> relu -> norm
        sx[...] = x_ref[0]                                           # (30, 30) padded input
        s1[...] = _norm(_relu(_conv3x3(sx, w1)), n1a, c1)            # (28, 28*10)
        a = _norm(_relu(_conv3x3(s1, w2)), n1b, c2)                  # (26, 26*16)

        # pool1: MaxPool2d(2, 2) via exact 0/1 selection matmuls + elementwise max
        pa = jnp.dot(a, pool_w[0], preferred_element_type=jnp.float32)
        pb = jnp.dot(a, pool_w[1], preferred_element_type=jnp.float32)
        pw = jnp.maximum(pa, pb)                                     # (26, 13*16)
        pe = jnp.dot(pool_h[0], pw, preferred_element_type=jnp.float32)
        po = jnp.dot(pool_h[1], pw, preferred_element_type=jnp.float32)
        pooled = jnp.maximum(pe, po)                                 # (13, 13*16)

        # transition1: 1x1 conv 16 -> 8 (no bias)
        st[...] = jnp.dot(pooled.astype(jnp.bfloat16), wt[...],
                          preferred_element_type=jnp.float32)        # (13, 13*8)

        # conv2_1 / conv2_2 blocks
        s21[...] = _norm(_relu(_conv3x3(st, w21a)), n21a, c3)        # (11, 11*10)
        s22[...] = _norm(_relu(_conv3x3(s21, w21b)), n21b, c4)       # (9, 9*12)
        s23[...] = _norm(_relu(_conv3x3(s22, w22a)), n22a, c5)       # (7, 7*14)
        a = _norm(_relu(_conv3x3(s23, w22b)), n22b, c6)              # (5, 5*16)

        # conv3: 1x1 conv 16 -> 24 (with bias)
        h3 = jnp.dot(a.astype(jnp.bfloat16), w3[...],
                     preferred_element_type=jnp.float32) + b3[...]   # (5, 5*24)

        # GAP (AdaptiveAvgPool2d(1)): sum rows, then (1/25) per-channel reduce over W
        col = jnp.sum(h3, axis=0, keepdims=True)                     # (1, 120)
        g = jnp.dot(col, gap_r[...], preferred_element_type=jnp.float32)   # (1, 24)

        # conv4: 1x1 conv 24 -> 10 (with bias)
        logits = jnp.dot(g, w4[...], preferred_element_type=jnp.float32) + b4[...]
        if loss_function == "NLLoss":
            mx = jnp.max(logits, axis=-1, keepdims=True)
            sh = logits - mx
            logits = sh - jnp.log(jnp.sum(jnp.exp(sh), axis=-1, keepdims=True))
        o_ref[0] = logits                                            # (1, 10)

    return kernel


class NoFCNet2Pallas:
    """Fused single-pallas_call forward for NoFCNet2 (MNIST 1x28x28 input)."""

    def __init__(self, config, params):
        self.config = config
        self.num_groups = {"GroupNorm": 2, "LayerNorm": 1}.get(config.channel_norm, 0)
        self.packed = _pack_params(params, config.channel_norm, self.num_groups)
        self._kernel = _make_kernel(config.channel_norm, self.num_groups,
                                    config.loss_function, _NORM_CHANNELS)
        self._forward = jax.jit(self._build_forward)

    def _build_forward(self, x_nchw, *packed):
        assert x_nchw.shape[1:] == (1, 28, 28), "NoFCNet2 kernel is built for 1x28x28 input"
        b = x_nchw.shape[0]
        xp = jnp.pad(x_nchw[:, 0, :, :], ((0, 0), (1, 1), (1, 1)))   # conv1 padding=1
        in_specs = [pl.BlockSpec((1, 30, 30), lambda i: (i, 0, 0))]
        in_specs += [pl.BlockSpec(a.shape, (lambda i, _n=a.ndim: (0,) * _n))
                     for a in packed]
        out = pl.pallas_call(
            self._kernel,
            out_shape=jax.ShapeDtypeStruct((b, 1, 10), jnp.float32),
            grid=(b,),
            in_specs=in_specs,
            out_specs=pl.BlockSpec((1, 1, 10), lambda i: (i, 0, 0)),
            scratch_shapes=[
                pltpu.VMEM((30, 30), jnp.float32),    # padded input (per sample)
                pltpu.VMEM((28, 280), jnp.float32),   # conv1a output
                pltpu.VMEM((13, 104), jnp.float32),   # transition1 output
                pltpu.VMEM((11, 110), jnp.float32),   # conv2_1a output
                pltpu.VMEM((9, 108), jnp.float32),    # conv2_1b output
                pltpu.VMEM((7, 98), jnp.float32),     # conv2_2a output
            ],
            compiler_params=pltpu.CompilerParams(
                dimension_semantics=("parallel",)),   # shard batch across TCs on v7x
        )(xp, *packed)
        return out[:, 0, :]

    def __call__(self, x_nchw):
        return self._forward(x_nchw, *self.packed)


# ---------------------------------------------------------------------------
# Parameters (deterministic, PyTorch-default-like init)
# ---------------------------------------------------------------------------

def init_params(key):
    def conv_w(k, cout, cin, kh, kw):
        bound = 1.0 / math.sqrt(cin * kh * kw)
        return jax.random.uniform(k, (cout, cin, kh, kw), jnp.float32, -bound, bound)

    def conv_b(k, cout, cin, kh, kw):
        bound = 1.0 / math.sqrt(cin * kh * kw)
        return jax.random.uniform(k, (cout,), jnp.float32, -bound, bound)

    ks = jax.random.split(key, 12)
    p = {}
    p["conv1a_w"] = conv_w(ks[0], 10, 1, 3, 3)
    p["conv1b_w"] = conv_w(ks[1], 16, 10, 3, 3)
    p["t1_w"] = conv_w(ks[2], 8, 16, 1, 1)
    p["conv21a_w"] = conv_w(ks[3], 10, 8, 3, 3)
    p["conv21b_w"] = conv_w(ks[4], 12, 10, 3, 3)
    p["conv22a_w"] = conv_w(ks[5], 14, 12, 3, 3)
    p["conv22b_w"] = conv_w(ks[6], 16, 14, 3, 3)
    p["conv3_w"] = conv_w(ks[7], 24, 16, 1, 1)
    p["conv3_b"] = conv_b(ks[8], 24, 16, 1, 1)
    p["conv4_w"] = conv_w(ks[9], 10, 24, 1, 1)
    p["conv4_b"] = conv_b(ks[10], 10, 24, 1, 1)
    for name, c in (("n1a", 10), ("n1b", 16), ("n21a", 10),
                    ("n21b", 12), ("n22a", 14), ("n22b", 16)):
        p[name + "_g"] = jnp.ones((c,), jnp.float32)
        p[name + "_b"] = jnp.zeros((c,), jnp.float32)
        p[name + "_rm"] = jnp.zeros((c,), jnp.float32)
        p[name + "_rv"] = jnp.ones((c,), jnp.float32)
    return p


# ---------------------------------------------------------------------------
# Pure-JAX (XLA) reference of the same forward, for a numerical sanity check
# ---------------------------------------------------------------------------

def reference_forward(params, x, config):
    dn = ("NCHW", "OIHW", "NCHW")

    def conv(h, w, b=None, padding="VALID"):
        y = jax.lax.conv_general_dilated(h, w, (1, 1), padding, dimension_numbers=dn)
        if b is not None:
            y = y + b.reshape(1, -1, 1, 1)
        return y

    def norm(h, name):
        g = params[name + "_g"]
        b = params[name + "_b"]
        if config.channel_norm == "BatchNorm2d":
            rm = params[name + "_rm"].reshape(1, -1, 1, 1)
            rv = params[name + "_rv"].reshape(1, -1, 1, 1)
            hn = (h - rm) / jnp.sqrt(rv + _EPS)
        else:
            groups = 2 if config.channel_norm == "GroupNorm" else 1
            bsz, c, hh, ww = h.shape
            hg = h.reshape(bsz, groups, c // groups, hh, ww)
            mu = hg.mean(axis=(2, 3, 4), keepdims=True)
            var = hg.var(axis=(2, 3, 4), keepdims=True)
            hn = ((hg - mu) / jnp.sqrt(var + _EPS)).reshape(bsz, c, hh, ww)
        return hn * g.reshape(1, -1, 1, 1) + b.reshape(1, -1, 1, 1)

    relu = jax.nn.relu
    h = conv(x, params["conv1a_w"], padding=((1, 1), (1, 1)))
    h = norm(relu(h), "n1a")
    h = conv(h, params["conv1b_w"])
    h = norm(relu(h), "n1b")
    h = jax.lax.reduce_window(h, -jnp.inf, jax.lax.max, (1, 1, 2, 2), (1, 1, 2, 2), "VALID")
    h = conv(h, params["t1_w"])
    h = norm(relu(conv(h, params["conv21a_w"])), "n21a")
    h = norm(relu(conv(h, params["conv21b_w"])), "n21b")
    h = norm(relu(conv(h, params["conv22a_w"])), "n22a")
    h = norm(relu(conv(h, params["conv22b_w"])), "n22b")
    h = conv(h, params["conv3_w"], params["conv3_b"])
    h = h.mean(axis=(2, 3), keepdims=True)
    h = conv(h, params["conv4_w"], params["conv4_b"])
    out = h.reshape(h.shape[0], -1)
    if config.loss_function == "NLLoss":
        out = jax.nn.log_softmax(out, axis=-1)
    return out


# ---------------------------------------------------------------------------

if __name__ == "__main__":
    key = jax.random.PRNGKey(0)
    kx, kp = jax.random.split(key)
    # MNIST-style input implied by the module: (B, 1, 28, 28)
    x = jax.random.normal(kx, (2, 1, 28, 28), dtype=jnp.float32)
    params = init_params(kp)

    # CrossEntropyLoss branch (raw logits)
    cfg = Config(channel_norm="GroupNorm", loss_function="CrossEntropyLoss")
    model = NoFCNet2Pallas(cfg, params)
    logits = jax.block_until_ready(model(x))
    assert logits.shape == (2, 10)
    ref = jax.block_until_ready(reference_forward(params, x, cfg))
    np.testing.assert_allclose(np.asarray(logits), np.asarray(ref), rtol=0.1, atol=0.05)

    # NLLoss branch (log_softmax fused into the kernel tail)
    cfg2 = Config(channel_norm="GroupNorm", loss_function="NLLoss")
    model2 = NoFCNet2Pallas(cfg2, params)
    logp = jax.block_until_ready(model2(x))
    assert logp.shape == (2, 10)
    ref2 = jax.block_until_ready(reference_forward(params, x, cfg2))
    np.testing.assert_allclose(np.asarray(logp), np.asarray(ref2), rtol=0.1, atol=0.05)

    print("KERNEL_OK")
</pallas_src>

<mosaic_0001>
module attributes {stable_mosaic.version = 11 : i64} {
  func.func @kernel(%arg0: i32, %arg1: memref<1x30x30xf32, #tpu.memory_space<vmem>>, %arg2: memref<3x30x280xbf16, #tpu.memory_space<vmem>>, %arg3: memref<4x280xf32, #tpu.memory_space<vmem>>, %arg4: memref<3x280x416xbf16, #tpu.memory_space<vmem>>, %arg5: memref<4x416xf32, #tpu.memory_space<vmem>>, %arg6: memref<2x416x208xf32, #tpu.memory_space<vmem>>, %arg7: memref<2x13x26xf32, #tpu.memory_space<vmem>>, %arg8: memref<208x104xbf16, #tpu.memory_space<vmem>>, %arg9: memref<3x104x110xbf16, #tpu.memory_space<vmem>>, %arg10: memref<4x110xf32, #tpu.memory_space<vmem>>, %arg11: memref<3x110x108xbf16, #tpu.memory_space<vmem>>, %arg12: memref<4x108xf32, #tpu.memory_space<vmem>>, %arg13: memref<3x108x98xbf16, #tpu.memory_space<vmem>>, %arg14: memref<4x98xf32, #tpu.memory_space<vmem>>, %arg15: memref<3x98x80xbf16, #tpu.memory_space<vmem>>, %arg16: memref<4x80xf32, #tpu.memory_space<vmem>>, %arg17: memref<80x120xbf16, #tpu.memory_space<vmem>>, %arg18: memref<1x120xf32, #tpu.memory_space<vmem>>, %arg19: memref<120x24xf32, #tpu.memory_space<vmem>>, %arg20: memref<24x10xf32, #tpu.memory_space<vmem>>, %arg21: memref<1x10xf32, #tpu.memory_space<vmem>>, %arg22: memref<1x1x10xf32, #tpu.memory_space<vmem>>, %arg23: memref<30x30xf32, #tpu.memory_space<vmem>>, %arg24: memref<28x280xf32, #tpu.memory_space<vmem>>, %arg25: memref<13x104xf32, #tpu.memory_space<vmem>>, %arg26: memref<11x110xf32, #tpu.memory_space<vmem>>, %arg27: memref<9x108xf32, #tpu.memory_space<vmem>>, %arg28: memref<7x98xf32, #tpu.memory_space<vmem>>) attributes {dimension_semantics = [#tpu.dimension_semantics<parallel>], iteration_bounds = array<i64: 2>, scalar_prefetch = 0 : i64, scratch_operands = 6 : i64, tpu.core_type = #tpu.core_type<tc>, window_params = [{transform_indices = @transform_0, window_bounds = array<i64: 1, 30, 30>}, {pipeline_mode = #tpu.pipeline_mode<synchronous>, transform_indices = @transform_1, window_bounds = array<i64: 3, 30, 280>}, {pipeline_mode = #tpu.pipeline_mode<synchronous>, transform_indices = @transform_2, window_bounds = array<i64: 4, 280>}, {pipeline_mode = #tpu.pipeline_mode<synchronous>, transform_indices = @transform_3, window_bounds = array<i64: 3, 280, 416>}, {pipeline_mode = #tpu.pipeline_mode<synchronous>, transform_indices = @transform_4, window_bounds = array<i64: 4, 416>}, {pipeline_mode = #tpu.pipeline_mode<synchronous>, transform_indices = @transform_5, window_bounds = array<i64: 2, 416, 208>}, {pipeline_mode = #tpu.pipeline_mode<synchronous>, transform_indices = @transform_6, window_bounds = array<i64: 2, 13, 26>}, {pipeline_mode = #tpu.pipeline_mode<synchronous>, transform_indices = @transform_7, window_bounds = array<i64: 208, 104>}, {pipeline_mode = #tpu.pipeline_mode<synchronous>, transform_indices = @transform_8, window_bounds = array<i64: 3, 104, 110>}, {pipeline_mode = #tpu.pipeline_mode<synchronous>, transform_indices = @transform_9, window_bounds = array<i64: 4, 110>}, {pipeline_mode = #tpu.pipeline_mode<synchronous>, transform_indices = @transform_10, window_bounds = array<i64: 3, 110, 108>}, {pipeline_mode = #tpu.pipeline_mode<synchronous>, transform_indices = @transform_11, window_bounds = array<i64: 4, 108>}, {pipeline_mode = #tpu.pipeline_mode<synchronous>, transform_indices = @transform_12, window_bounds = array<i64: 3, 108, 98>}, {pipeline_mode = #tpu.pipeline_mode<synchronous>, transform_indices = @transform_13, window_bounds = array<i64: 4, 98>}, {pipeline_mode = #tpu.pipeline_mode<synchronous>, transform_indices = @transform_14, window_bounds = array<i64: 3, 98, 80>}, {pipeline_mode = #tpu.pipeline_mode<synchronous>, transform_indices = @transform_15, window_bounds = array<i64: 4, 80>}, {pipeline_mode = #tpu.pipeline_mode<synchronous>, transform_indices = @transform_16, window_bounds = array<i64: 80, 120>}, {pipeline_mode = #tpu.pipeline_mode<synchronous>, transform_indices = @transform_17, window_bounds = array<i64: 1, 120>}, {pipeline_mode = #tpu.pipeline_mode<synchronous>, transform_indices = @transform_18, window_bounds = array<i64: 120, 24>}, {pipeline_mode = #tpu.pipeline_mode<synchronous>, transform_indices = @transform_19, window_bounds = array<i64: 24, 10>}, {pipeline_mode = #tpu.pipeline_mode<synchronous>, transform_indices = @transform_20, window_bounds = array<i64: 1, 10>}, {transform_indices = @transform_21, window_bounds = array<i64: 1, 1, 10>}]} {
    %c0 = arith.constant 0 : index
    %c0_0 = arith.constant 0 : index
    %c0_1 = arith.constant 0 : index
    %0 = vector.load %arg1[%c0, %c0_0, %c0_1] : memref<1x30x30xf32, #tpu.memory_space<vmem>>, vector<1x30x30xf32>
    %1 = vector.shape_cast %0 : vector<1x30x30xf32> to vector<30x30xf32>
    %c0_2 = arith.constant 0 : index
    %c0_3 = arith.constant 0 : index
    %2 = vector.load %arg23[%c0_2, %c0_3] : memref<30x30xf32, #tpu.memory_space<vmem>>, vector<30x30xf32>
    tpu.vector_store %arg23[%c0_2, %c0_3], %1 {strides = array<i32>} : memref<30x30xf32, #tpu.memory_space<vmem>>, vector<30x30xf32>,
    %c0_4 = arith.constant 0 : index
    %c0_5 = arith.constant 0 : index
    %3 = vector.load %arg23[%c0_4, %c0_5] : memref<30x30xf32, #tpu.memory_space<vmem>>, vector<28x30xf32>
    %4 = arith.truncf %3 : vector<28x30xf32> to vector<28x30xbf16>
    %c0_6 = arith.constant 0 : index
    %c0_7 = arith.constant 0 : index
    %c0_8 = arith.constant 0 : index
    %5 = vector.load %arg2[%c0_6, %c0_7, %c0_8] : memref<3x30x280xbf16, #tpu.memory_space<vmem>>, vector<1x30x280xbf16>
    %6 = vector.shape_cast %5 : vector<1x30x280xbf16> to vector<30x280xbf16>
    %cst = arith.constant dense<0.000000e+00> : vector<28x280xf32>
    %7 = tpu.matmul %4, %6, %cst {dimension_numbers = #tpu.dot_dimension_numbers<[1], [0], [0], [1], [0, 0, 1, 1], [], []>} : vector<28x30xbf16>, vector<30x280xbf16>, vector<28x280xf32> -> vector<28x280xf32>
    %c1 = arith.constant 1 : index
    %c0_9 = arith.constant 0 : index
    %8 = vector.load %arg23[%c1, %c0_9] : memref<30x30xf32, #tpu.memory_space<vmem>>, vector<28x30xf32>
    %9 = arith.truncf %8 : vector<28x30xf32> to vector<28x30xbf16>
    %c1_10 = arith.constant 1 : index
    %c0_11 = arith.constant 0 : index
    %c0_12 = arith.constant 0 : index
    %10 = vector.load %arg2[%c1_10, %c0_11, %c0_12] : memref<3x30x280xbf16, #tpu.memory_space<vmem>>, vector<1x30x280xbf16>
    %11 = vector.shape_cast %10 : vector<1x30x280xbf16> to vector<30x280xbf16>
    %cst_13 = arith.constant dense<0.000000e+00> : vector<28x280xf32>
    %12 = tpu.matmul %9, %11, %cst_13 {dimension_numbers = #tpu.dot_dimension_numbers<[1], [0], [0], [1], [0, 0, 1, 1], [], []>} : vector<28x30xbf16>, vector<30x280xbf16>, vector<28x280xf32> -> vector<28x280xf32>
    %13 = arith.addf %7, %12 : vector<28x280xf32>
    %c2 = arith.constant 2 : index
    %c0_14 = arith.constant 0 : index
    %14 = vector.load %arg23[%c2, %c0_14] : memref<30x30xf32, #tpu.memory_space<vmem>>, vector<28x30xf32>
    %15 = arith.truncf %14 : vector<28x30xf32> to vector<28x30xbf16>
    %c2_15 = arith.constant 2 : index
    %c0_16 = arith.constant 0 : index
    %c0_17 = arith.constant 0 : index
    %16 = vector.load %arg2[%c2_15, %c0_16, %c0_17] : memref<3x30x280xbf16, #tpu.memory_space<vmem>>, vector<1x30x280xbf16>
    %17 = vector.shape_cast %16 : vector<1x30x280xbf16> to vector<30x280xbf16>
    %cst_18 = arith.constant dense<0.000000e+00> : vector<28x280xf32>
    %18 = tpu.matmul %15, %17, %cst_18 {dimension_numbers = #tpu.dot_dimension_numbers<[1], [0], [0], [1], [0, 0, 1, 1], [], []>} : vector<28x30xbf16>, vector<30x280xbf16>, vector<28x280xf32> -> vector<28x280xf32>
    %19 = arith.addf %13, %18 : vector<28x280xf32>
    %cst_19 = arith.constant 0.000000e+00 : f32
    %20 = vector.broadcast %cst_19 : f32 to vector<28x280xf32>
    %21 = arith.maximumf %19, %20 : vector<28x280xf32>
    %c0_20 = arith.constant 0 : index
    %c0_21 = arith.constant 0 : index
    %22 = vector.load %arg3[%c0_20, %c0_21] : memref<4x280xf32, #tpu.memory_space<vmem>>, vector<1x280xf32>
    %c1_22 = arith.constant 1 : index
    %c0_23 = arith.constant 0 : index
    %23 = vector.load %arg3[%c1_22, %c0_23] : memref<4x280xf32, #tpu.memory_space<vmem>>, vector<1x280xf32>
    %cst_24 = arith.constant 0.000000e+00 : f32
    %24 = vector.broadcast %cst_24 : f32 to vector<1x280xf32>
    %cst_25 = arith.constant 0.000000e+00 : f32
    %25 = vector.broadcast %cst_25 : f32 to vector<1x280xf32>
    %c2_26 = arith.constant 2 : index
    %c0_27 = arith.constant 0 : index
    %26 = vector.load %arg3[%c2_26, %c0_27] : memref<4x280xf32, #tpu.memory_space<vmem>>, vector<1x280xf32>
    %27 = vector.broadcast %26 : vector<1x280xf32> to vector<28x280xf32>
    %28 = arith.mulf %21, %27 : vector<28x280xf32>
    %cst_28 = arith.constant dense<0.000000e+00> : vector<28xf32>
    %29 = vector.multi_reduction <add>, %28, %cst_28 [1] : vector<28x280xf32> to vector<28xf32>
    %30 = vector.shape_cast %29 : vector<28xf32> to vector<28x1xf32>
    %cst_29 = arith.constant dense<0.000000e+00> : vector<1xf32>
    %31 = vector.multi_reduction <add>, %30, %cst_29 [0] : vector<28x1xf32> to vector<1xf32>
    %32 = vector.shape_cast %31 : vector<1xf32> to vector<1x1xf32>
    %33 = arith.mulf %28, %21 : vector<28x280xf32>
    %cst_30 = arith.constant dense<0.000000e+00> : vector<28xf32>
    %34 = vector.multi_reduction <add>, %33, %cst_30 [1] : vector<28x280xf32> to vector<28xf32>
    %35 = vector.shape_cast %34 : vector<28xf32> to vector<28x1xf32>
    %cst_31 = arith.constant dense<0.000000e+00> : vector<1xf32>
    %36 = vector.multi_reduction <add>, %35, %cst_31 [0] : vector<28x1xf32> to vector<1xf32>
    %37 = vector.shape_cast %36 : vector<1xf32> to vector<1x1xf32>
    %cst_32 = arith.constant 2.5510203E-4 : f32
    %38 = vector.broadcast %cst_32 : f32 to vector<1x1xf32>
    %39 = arith.mulf %32, %38 : vector<1x1xf32>
    %cst_33 = arith.constant 2.5510203E-4 : f32
    %40 = vector.broadcast %cst_33 : f32 to vector<1x1xf32>
    %41 = arith.mulf %37, %40 : vector<1x1xf32>
    %42 = arith.mulf %39, %39 : vector<1x1xf32>
    %43 = arith.subf %41, %42 : vector<1x1xf32>
    %44 = vector.broadcast %39 : vector<1x1xf32> to vector<1x280xf32>
    %45 = arith.mulf %26, %44 : vector<1x280xf32>
    %46 = arith.addf %24, %45 : vector<1x280xf32>
    %47 = vector.broadcast %43 : vector<1x1xf32> to vector<1x280xf32>
    %48 = arith.mulf %26, %47 : vector<1x280xf32>
    %49 = arith.addf %25, %48 : vector<1x280xf32>
    %c3 = arith.constant 3 : index
    %c0_34 = arith.constant 0 : index
    %50 = vector.load %arg3[%c3, %c0_34] : memref<4x280xf32, #tpu.memory_space<vmem>>, vector<1x280xf32>
    %51 = vector.broadcast %50 : vector<1x280xf32> to vector<28x280xf32>
    %52 = arith.mulf %21, %51 : vector<28x280xf32>
    %cst_35 = arith.constant dense<0.000000e+00> : vector<28xf32>
    %53 = vector.multi_reduction <add>, %52, %cst_35 [1] : vector<28x280xf32> to vector<28xf32>
    %54 = vector.shape_cast %53 : vector<28xf32> to vector<28x1xf32>
    %cst_36 = arith.constant dense<0.000000e+00> : vector<1xf32>
    %55 = vector.multi_reduction <add>, %54, %cst_36 [0] : vector<28x1xf32> to vector<1xf32>
    %56 = vector.shape_cast %55 : vector<1xf32> to vector<1x1xf32>
    %57 = arith.mulf %52, %21 : vector<28x280xf32>
    %cst_37 = arith.constant dense<0.000000e+00> : vector<28xf32>
    %58 = vector.multi_reduction <add>, %57, %cst_37 [1] : vector<28x280xf32> to vector<28xf32>
    %59 = vector.shape_cast %58 : vector<28xf32> to vector<28x1xf32>
    %cst_38 = arith.constant dense<0.000000e+00> : vector<1xf32>
    %60 = vector.multi_reduction <add>, %59, %cst_38 [0] : vector<28x1xf32> to vector<1xf32>
    %61 = vector.shape_cast %60 : vector<1xf32> to vector<1x1xf32>
    %cst_39 = arith.constant 2.5510203E-4 : f32
    %62 = vector.broadcast %cst_39 : f32 to vector<1x1xf32>
    %63 = arith.mulf %56, %62 : vector<1x1xf32>
    %cst_40 = arith.constant 2.5510203E-4 : f32
    %64 = vector.broadcast %cst_40 : f32 to vector<1x1xf32>
    %65 = arith.mulf %61, %64 : vector<1x1xf32>
    %66 = arith.mulf %63, %63 : vector<1x1xf32>
    %67 = arith.subf %65, %66 : vector<1x1xf32>
    %68 = vector.broadcast %63 : vector<1x1xf32> to vector<1x280xf32>
    %69 = arith.mulf %50, %68 : vector<1x280xf32>
    %70 = arith.addf %46, %69 : vector<1x280xf32>
    %71 = vector.broadcast %67 : vector<1x1xf32> to vector<1x280xf32>
    %72 = arith.mulf %50, %71 : vector<1x280xf32>
    %73 = arith.addf %49, %72 : vector<1x280xf32>
    %cst_41 = arith.constant 9.99999974E-6 : f32
    %74 = vector.broadcast %cst_41 : f32 to vector<1x280xf32>
    %75 = arith.addf %73, %74 : vector<1x280xf32>
    %76 = math.rsqrt %75 : vector<1x280xf32>
    %77 = vector.broadcast %70 : vector<1x280xf32> to vector<28x280xf32>
    %78 = arith.subf %21, %77 : vector<28x280xf32>
    %79 = arith.mulf %76, %22 : vector<1x280xf32>
    %80 = vector.broadcast %79 : vector<1x280xf32> to vector<28x280xf32>
    %81 = arith.mulf %78, %80 : vector<28x280xf32>
    %82 = vector.broadcast %23 : vector<1x280xf32> to vector<28x280xf32>
    %83 = arith.addf %81, %82 : vector<28x280xf32>
    %c0_42 = arith.constant 0 : index
    %c0_43 = arith.constant 0 : index
    %84 = vector.load %arg24[%c0_42, %c0_43] : memref<28x280xf32, #tpu.memory_space<vmem>>, vector<28x280xf32>
    tpu.vector_store %arg24[%c0_42, %c0_43], %83 {strides = array<i32>} : memref<28x280xf32, #tpu.memory_space<vmem>>, vector<28x280xf32>,
    %c0_44 = arith.constant 0 : index
    %c0_45 = arith.constant 0 : index
    %85 = vector.load %arg24[%c0_44, %c0_45] : memref<28x280xf32, #tpu.memory_space<vmem>>, vector<26x280xf32>
    %86 = arith.truncf %85 : vector<26x280xf32> to vector<26x280xbf16>
    %c0_46 = arith.constant 0 : index
    %c0_47 = arith.constant 0 : index
    %c0_48 = arith.constant 0 : index
    %87 = vector.load %arg4[%c0_46, %c0_47, %c0_48] : memref<3x280x416xbf16, #tpu.memory_space<vmem>>, vector<1x280x416xbf16>
    %88 = vector.shape_cast %87 : vector<1x280x416xbf16> to vector<280x416xbf16>
    %cst_49 = arith.constant dense<0.000000e+00> : vector<26x416xf32>
    %89 = tpu.matmul %86, %88, %cst_49 {dimension_numbers = #tpu.dot_dimension_numbers<[1], [0], [0], [1], [0, 0, 1, 1], [], []>} : vector<26x280xbf16>, vector<280x416xbf16>, vector<26x416xf32> -> vector<26x416xf32>
    %c1_50 = arith.constant 1 : index
    %c0_51 = arith.constant 0 : index
    %90 = vector.load %arg24[%c1_50, %c0_51] : memref<28x280xf32, #tpu.memory_space<vmem>>, vector<26x280xf32>
    %91 = arith.truncf %90 : vector<26x280xf32> to vector<26x280xbf16>
    %c1_52 = arith.constant 1 : index
    %c0_53 = arith.constant 0 : index
    %c0_54 = arith.constant 0 : index
    %92 = vector.load %arg4[%c1_52, %c0_53, %c0_54] : memref<3x280x416xbf16, #tpu.memory_space<vmem>>, vector<1x280x416xbf16>
    %93 = vector.shape_cast %92 : vector<1x280x416xbf16> to vector<280x416xbf16>
    %cst_55 = arith.constant dense<0.000000e+00> : vector<26x416xf32>
    %94 = tpu.matmul %91, %93, %cst_55 {dimension_numbers = #tpu.dot_dimension_numbers<[1], [0], [0], [1], [0, 0, 1, 1], [], []>} : vector<26x280xbf16>, vector<280x416xbf16>, vector<26x416xf32> -> vector<26x416xf32>
    %95 = arith.addf %89, %94 : vector<26x416xf32>
    %c2_56 = arith.constant 2 : index
    %c0_57 = arith.constant 0 : index
    %96 = vector.load %arg24[%c2_56, %c0_57] : memref<28x280xf32, #tpu.memory_space<vmem>>, vector<26x280xf32>
    %97 = arith.truncf %96 : vector<26x280xf32> to vector<26x280xbf16>
    %c2_58 = arith.constant 2 : index
    %c0_59 = arith.constant 0 : index
    %c0_60 = arith.constant 0 : index
    %98 = vector.load %arg4[%c2_58, %c0_59, %c0_60] : memref<3x280x416xbf16, #tpu.memory_space<vmem>>, vector<1x280x416xbf16>
    %99 = vector.shape_cast %98 : vector<1x280x416xbf16> to vector<280x416xbf16>
    %cst_61 = arith.constant dense<0.000000e+00> : vector<26x416xf32>
    %100 = tpu.matmul %97, %99, %cst_61 {dimension_numbers = #tpu.dot_dimension_numbers<[1], [0], [0], [1], [0, 0, 1, 1], [], []>} : vector<26x280xbf16>, vector<280x416xbf16>, vector<26x416xf32> -> vector<26x416xf32>
    %101 = arith.addf %95, %100 : vector<26x416xf32>
    %cst_62 = arith.constant 0.000000e+00 : f32
    %102 = vector.broadcast %cst_62 : f32 to vector<26x416xf32>
    %103 = arith.maximumf %101, %102 : vector<26x416xf32>
    %c0_63 = arith.constant 0 : index
    %c0_64 = arith.constant 0 : index
    %104 = vector.load %arg5[%c0_63, %c0_64] : memref<4x416xf32, #tpu.memory_space<vmem>>, vector<1x416xf32>
    %c1_65 = arith.constant 1 : index
    %c0_66 = arith.constant 0 : index
    %105 = vector.load %arg5[%c1_65, %c0_66] : memref<4x416xf32, #tpu.memory_space<vmem>>, vector<1x416xf32>
    %cst_67 = arith.constant 0.000000e+00 : f32
    %106 = vector.broadcast %cst_67 : f32 to vector<1x416xf32>
    %cst_68 = arith.constant 0.000000e+00 : f32
    %107 = vector.broadcast %cst_68 : f32 to vector<1x416xf32>
    %c2_69 = arith.constant 2 : index
    %c0_70 = arith.constant 0 : index
    %108 = vector.load %arg5[%c2_69, %c0_70] : memref<4x416xf32, #tpu.memory_space<vmem>>, vector<1x416xf32>
    %109 = vector.broadcast %108 : vector<1x416xf32> to vector<26x416xf32>
    %110 = arith.mulf %103, %109 : vector<26x416xf32>
    %cst_71 = arith.constant dense<0.000000e+00> : vector<26xf32>
    %111 = vector.multi_reduction <add>, %110, %cst_71 [1] : vector<26x416xf32> to vector<26xf32>
    %112 = vector.shape_cast %111 : vector<26xf32> to vector<26x1xf32>
    %cst_72 = arith.constant dense<0.000000e+00> : vector<1xf32>
    %113 = vector.multi_reduction <add>, %112, %cst_72 [0] : vector<26x1xf32> to vector<1xf32>
    %114 = vector.shape_cast %113 : vector<1xf32> to vector<1x1xf32>
    %115 = arith.mulf %110, %103 : vector<26x416xf32>
    %cst_73 = arith.constant dense<0.000000e+00> : vector<26xf32>
    %116 = vector.multi_reduction <add>, %115, %cst_73 [1] : vector<26x416xf32> to vector<26xf32>
    %117 = vector.shape_cast %116 : vector<26xf32> to vector<26x1xf32>
    %cst_74 = arith.constant dense<0.000000e+00> : vector<1xf32>
    %118 = vector.multi_reduction <add>, %117, %cst_74 [0] : vector<26x1xf32> to vector<1xf32>
    %119 = vector.shape_cast %118 : vector<1xf32> to vector<1x1xf32>
    %cst_75 = arith.constant 1.84911245E-4 : f32
    %120 = vector.broadcast %cst_75 : f32 to vector<1x1xf32>
    %121 = arith.mulf %114, %120 : vector<1x1xf32>
    %cst_76 = arith.constant 1.84911245E-4 : f32
    %122 = vector.broadcast %cst_76 : f32 to vector<1x1xf32>
    %123 = arith.mulf %119, %122 : vector<1x1xf32>
    %124 = arith.mulf %121, %121 : vector<1x1xf32>
    %125 = arith.subf %123, %124 : vector<1x1xf32>
    %126 = vector.broadcast %121 : vector<1x1xf32> to vector<1x416xf32>
    %127 = arith.mulf %108, %126 : vector<1x416xf32>
    %128 = arith.addf %106, %127 : vector<1x416xf32>
    %129 = vector.broadcast %125 : vector<1x1xf32> to vector<1x416xf32>
    %130 = arith.mulf %108, %129 : vector<1x416xf32>
    %131 = arith.addf %107, %130 : vector<1x416xf32>
    %c3_77 = arith.constant 3 : index
    %c0_78 = arith.constant 0 : index
    %132 = vector.load %arg5[%c3_77, %c0_78] : memref<4x416xf32, #tpu.memory_space<vmem>>, vector<1x416xf32>
    %133 = vector.broadcast %132 : vector<1x416xf32> to vector<26x416xf32>
    %134 = arith.mulf %103, %133 : vector<26x416xf32>
    %cst_79 = arith.constant dense<0.000000e+00> : vector<26xf32>
    %135 = vector.multi_reduction <add>, %134, %cst_79 [1] : vector<26x416xf32> to vector<26xf32>
    %136 = vector.shape_cast %135 : vector<26xf32> to vector<26x1xf32>
    %cst_80 = arith.constant dense<0.000000e+00> : vector<1xf32>
    %137 = vector.multi_reduction <add>, %136, %cst_80 [0] : vector<26x1xf32> to vector<1xf32>
    %138 = vector.shape_cast %137 : vector<1xf32> to vector<1x1xf32>
    %139 = arith.mulf %134, %103 : vector<26x416xf32>
    %cst_81 = arith.constant dense<0.000000e+00> : vector<26xf32>
    %140 = vector.multi_reduction <add>, %139, %cst_81 [1] : vector<26x416xf32> to vector<26xf32>
    %141 = vector.shape_cast %140 : vector<26xf32> to vector<26x1xf32>
    %cst_82 = arith.constant dense<0.000000e+00> : vector<1xf32>
    %142 = vector.multi_reduction <add>, %141, %cst_82 [0] : vector<26x1xf32> to vector<1xf32>
    %143 = vector.shape_cast %142 : vector<1xf32> to vector<1x1xf32>
    %cst_83 = arith.constant 1.84911245E-4 : f32
    %144 = vector.broadcast %cst_83 : f32 to vector<1x1xf32>
    %145 = arith.mulf %138, %144 : vector<1x1xf32>
    %cst_84 = arith.constant 1.84911245E-4 : f32
    %146 = vector.broadcast %cst_84 : f32 to vector<1x1xf32>
    %147 = arith.mulf %143, %146 : vector<1x1xf32>
    %148 = arith.mulf %145, %145 : vector<1x1xf32>
    %149 = arith.subf %147, %148 : vector<1x1xf32>
    %150 = vector.broadcast %145 : vector<1x1xf32> to vector<1x416xf32>
    %151 = arith.mulf %132, %150 : vector<1x416xf32>
    %152 = arith.addf %128, %151 : vector<1x416xf32>
    %153 = vector.broadcast %149 : vector<1x1xf32> to vector<1x416xf32>
    %154 = arith.mulf %132, %153 : vector<1x416xf32>
    %155 = arith.addf %131, %154 : vector<1x416xf32>
    %cst_85 = arith.constant 9.99999974E-6 : f32
    %156 = vector.broadcast %cst_85 : f32 to vector<1x416xf32>
    %157 = arith.addf %155, %156 : vector<1x416xf32>
    %158 = math.rsqrt %157 : vector<1x416xf32>
    %159 = vector.broadcast %152 : vector<1x416xf32> to vector<26x416xf32>
    %160 = arith.subf %103, %159 : vector<26x416xf32>
    %161 = arith.mulf %158, %104 : vector<1x416xf32>
    %162 = vector.broadcast %161 : vector<1x416xf32> to vector<26x416xf32>
    %163 = arith.mulf %160, %162 : vector<26x416xf32>
    %164 = vector.broadcast %105 : vector<1x416xf32> to vector<26x416xf32>
    %165 = arith.addf %163, %164 : vector<26x416xf32>
    %c0_86 = arith.constant 0 : index
    %c0_87 = arith.constant 0 : index
    %c0_88 = arith.constant 0 : index
    %166 = vector.load %arg6[%c0_86, %c0_87, %c0_88] : memref<2x416x208xf32, #tpu.memory_space<vmem>>, vector<1x416x208xf32>
    %167 = vector.shape_cast %166 : vector<1x416x208xf32> to vector<416x208xf32>
    %cst_89 = arith.constant dense<0.000000e+00> : vector<26x208xf32>
    %168 = tpu.matmul %165, %167, %cst_89 {dimension_numbers = #tpu.dot_dimension_numbers<[1], [0], [0], [1], [0, 0, 1, 1], [], []>} : vector<26x416xf32>, vector<416x208xf32>, vector<26x208xf32> -> vector<26x208xf32>
    %c1_90 = arith.constant 1 : index
    %c0_91 = arith.constant 0 : index
    %c0_92 = arith.constant 0 : index
    %169 = vector.load %arg6[%c1_90, %c0_91, %c0_92] : memref<2x416x208xf32, #tpu.memory_space<vmem>>, vector<1x416x208xf32>
    %170 = vector.shape_cast %169 : vector<1x416x208xf32> to vector<416x208xf32>
    %cst_93 = arith.constant dense<0.000000e+00> : vector<26x208xf32>
    %171 = tpu.matmul %165, %170, %cst_93 {dimension_numbers = #tpu.dot_dimension_numbers<[1], [0], [0], [1], [0, 0, 1, 1], [], []>} : vector<26x416xf32>, vector<416x208xf32>, vector<26x208xf32> -> vector<26x208xf32>
    %172 = arith.maximumf %168, %171 : vector<26x208xf32>
    %c0_94 = arith.constant 0 : index
    %c0_95 = arith.constant 0 : index
    %c0_96 = arith.constant 0 : index
    %173 = vector.load %arg7[%c0_94, %c0_95, %c0_96] : memref<2x13x26xf32, #tpu.memory_space<vmem>>, vector<1x13x26xf32>
    %174 = vector.shape_cast %173 : vector<1x13x26xf32> to vector<13x26xf32>
    %cst_97 = arith.constant dense<0.000000e+00> : vector<13x208xf32>
    %175 = tpu.matmul %174, %172, %cst_97 {dimension_numbers = #tpu.dot_dimension_numbers<[1], [0], [0], [1], [0, 0, 1, 1], [], []>} : vector<13x26xf32>, vector<26x208xf32>, vector<13x208xf32> -> vector<13x208xf32>
    %c1_98 = arith.constant 1 : index
    %c0_99 = arith.constant 0 : index
    %c0_100 = arith.constant 0 : index
    %176 = vector.load %arg7[%c1_98, %c0_99, %c0_100] : memref<2x13x26xf32, #tpu.memory_space<vmem>>, vector<1x13x26xf32>
    %177 = vector.shape_cast %176 : vector<1x13x26xf32> to vector<13x26xf32>
    %cst_101 = arith.constant dense<0.000000e+00> : vector<13x208xf32>
    %178 = tpu.matmul %177, %172, %cst_101 {dimension_numbers = #tpu.dot_dimension_numbers<[1], [0], [0], [1], [0, 0, 1, 1], [], []>} : vector<13x26xf32>, vector<26x208xf32>, vector<13x208xf32> -> vector<13x208xf32>
    %179 = arith.maximumf %175, %178 : vector<13x208xf32>
    %180 = arith.truncf %179 : vector<13x208xf32> to vector<13x208xbf16>
    %c0_102 = arith.constant 0 : index
    %c0_103 = arith.constant 0 : index
    %181 = vector.load %arg8[%c0_102, %c0_103] : memref<208x104xbf16, #tpu.memory_space<vmem>>, vector<208x104xbf16>
    %cst_104 = arith.constant dense<0.000000e+00> : vector<13x104xf32>
    %182 = tpu.matmul %180, %181, %cst_104 {dimension_numbers = #tpu.dot_dimension_numbers<[1], [0], [0], [1], [0, 0, 1, 1], [], []>} : vector<13x208xbf16>, vector<208x104xbf16>, vector<13x104xf32> -> vector<13x104xf32>
    %c0_105 = arith.constant 0 : index
    %c0_106 = arith.constant 0 : index
    %183 = vector.load %arg25[%c0_105, %c0_106] : memref<13x104xf32, #tpu.memory_space<vmem>>, vector<13x104xf32>
    tpu.vector_store %arg25[%c0_105, %c0_106], %182 {strides = array<i32>} : memref<13x104xf32, #tpu.memory_space<vmem>>, vector<13x104xf32>,
    %c0_107 = arith.constant 0 : index
    %c0_108 = arith.constant 0 : index
    %184 = vector.load %arg25[%c0_107, %c0_108] : memref<13x104xf32, #tpu.memory_space<vmem>>, vector<11x104xf32>
    %185 = arith.truncf %184 : vector<11x104xf32> to vector<11x104xbf16>
    %c0_109 = arith.constant 0 : index
    %c0_110 = arith.constant 0 : index
    %c0_111 = arith.constant 0 : index
    %186 = vector.load %arg9[%c0_109, %c0_110, %c0_111] : memref<3x104x110xbf16, #tpu.memory_space<vmem>>, vector<1x104x110xbf16>
    %187 = vector.shape_cast %186 : vector<1x104x110xbf16> to vector<104x110xbf16>
    %cst_112 = arith.constant dense<0.000000e+00> : vector<11x110xf32>
    %188 = tpu.matmul %185, %187, %cst_112 {dimension_numbers = #tpu.dot_dimension_numbers<[1], [0], [0], [1], [0, 0, 1, 1], [], []>} : vector<11x104xbf16>, vector<104x110xbf16>, vector<11x110xf32> -> vector<11x110xf32>
    %c1_113 = arith.constant 1 : index
    %c0_114 = arith.constant 0 : index
    %189 = vector.load %arg25[%c1_113, %c0_114] : memref<13x104xf32, #tpu.memory_space<vmem>>, vector<11x104xf32>
    %190 = arith.truncf %189 : vector<11x104xf32> to vector<11x104xbf16>
    %c1_115 = arith.constant 1 : index
    %c0_116 = arith.constant 0 : index
    %c0_117 = arith.constant 0 : index
    %191 = vector.load %arg9[%c1_115, %c0_116, %c0_117] : memref<3x104x110xbf16, #tpu.memory_space<vmem>>, vector<1x104x110xbf16>
    %192 = vector.shape_cast %191 : vector<1x104x110xbf16> to vector<104x110xbf16>
    %cst_118 = arith.constant dense<0.000000e+00> : vector<11x110xf32>
    %193 = tpu.matmul %190, %192, %cst_118 {dimension_numbers = #tpu.dot_dimension_numbers<[1], [0], [0], [1], [0, 0, 1, 1], [], []>} : vector<11x104xbf16>, vector<104x110xbf16>, vector<11x110xf32> -> vector<11x110xf32>
    %194 = arith.addf %188, %193 : vector<11x110xf32>
    %c2_119 = arith.constant 2 : index
    %c0_120 = arith.constant 0 : index
    %195 = vector.load %arg25[%c2_119, %c0_120] : memref<13x104xf32, #tpu.memory_space<vmem>>, vector<11x104xf32>
    %196 = arith.truncf %195 : vector<11x104xf32> to vector<11x104xbf16>
    %c2_121 = arith.constant 2 : index
    %c0_122 = arith.constant 0 : index
    %c0_123 = arith.constant 0 : index
    %197 = vector.load %arg9[%c2_121, %c0_122, %c0_123] : memref<3x104x110xbf16, #tpu.memory_space<vmem>>, vector<1x104x110xbf16>
    %198 = vector.shape_cast %197 : vector<1x104x110xbf16> to vector<104x110xbf16>
    %cst_124 = arith.constant dense<0.000000e+00> : vector<11x110xf32>
    %199 = tpu.matmul %196, %198, %cst_124 {dimension_numbers = #tpu.dot_dimension_numbers<[1], [0], [0], [1], [0, 0, 1, 1], [], []>} : vector<11x104xbf16>, vector<104x110xbf16>, vector<11x110xf32> -> vector<11x110xf32>
    %200 = arith.addf %194, %199 : vector<11x110xf32>
    %cst_125 = arith.constant 0.000000e+00 : f32
    %201 = vector.broadcast %cst_125 : f32 to vector<11x110xf32>
    %202 = arith.maximumf %200, %201 : vector<11x110xf32>
    %c0_126 = arith.constant 0 : index
    %c0_127 = arith.constant 0 : index
    %203 = vector.load %arg10[%c0_126, %c0_127] : memref<4x110xf32, #tpu.memory_space<vmem>>, vector<1x110xf32>
    %c1_128 = arith.constant 1 : index
    %c0_129 = arith.constant 0 : index
    %204 = vector.load %arg10[%c1_128, %c0_129] : memref<4x110xf32, #tpu.memory_space<vmem>>, vector<1x110xf32>
    %cst_130 = arith.constant 0.000000e+00 : f32
    %205 = vector.broadcast %cst_130 : f32 to vector<1x110xf32>
    %cst_131 = arith.constant 0.000000e+00 : f32
    %206 = vector.broadcast %cst_131 : f32 to vector<1x110xf32>
    %c2_132 = arith.constant 2 : index
    %c0_133 = arith.constant 0 : index
    %207 = vector.load %arg10[%c2_132, %c0_133] : memref<4x110xf32, #tpu.memory_space<vmem>>, vector<1x110xf32>
    %208 = vector.broadcast %207 : vector<1x110xf32> to vector<11x110xf32>
    %209 = arith.mulf %202, %208 : vector<11x110xf32>
    %cst_134 = arith.constant dense<0.000000e+00> : vector<11xf32>
    %210 = vector.multi_reduction <add>, %209, %cst_134 [1] : vector<11x110xf32> to vector<11xf32>
    %211 = vector.shape_cast %210 : vector<11xf32> to vector<11x1xf32>
    %cst_135 = arith.constant dense<0.000000e+00> : vector<1xf32>
    %212 = vector.multi_reduction <add>, %211, %cst_135 [0] : vector<11x1xf32> to vector<1xf32>
    %213 = vector.shape_cast %212 : vector<1xf32> to vector<1x1xf32>
    %214 = arith.mulf %209, %202 : vector<11x110xf32>
    %cst_136 = arith.constant dense<0.000000e+00> : vector<11xf32>
    %215 = vector.multi_reduction <add>, %214, %cst_136 [1] : vector<11x110xf32> to vector<11xf32>
    %216 = vector.shape_cast %215 : vector<11xf32> to vector<11x1xf32>
    %cst_137 = arith.constant dense<0.000000e+00> : vector<1xf32>
    %217 = vector.multi_reduction <add>, %216, %cst_137 [0] : vector<11x1xf32> to vector<1xf32>
    %218 = vector.shape_cast %217 : vector<1xf32> to vector<1x1xf32>
    %cst_138 = arith.constant 0.00165289256 : f32
    %219 = vector.broadcast %cst_138 : f32 to vector<1x1xf32>
    %220 = arith.mulf %213, %219 : vector<1x1xf32>
    %cst_139 = arith.constant 0.00165289256 : f32
    %221 = vector.broadcast %cst_139 : f32 to vector<1x1xf32>
    %222 = arith.mulf %218, %221 : vector<1x1xf32>
    %223 = arith.mulf %220, %220 : vector<1x1xf32>
    %224 = arith.subf %222, %223 : vector<1x1xf32>
    %225 = vector.broadcast %220 : vector<1x1xf32> to vector<1x110xf32>
    %226 = arith.mulf %207, %225 : vector<1x110xf32>
    %227 = arith.addf %205, %226 : vector<1x110xf32>
    %228 = vector.broadcast %224 : vector<1x1xf32> to vector<1x110xf32>
    %229 = arith.mulf %207, %228 : vector<1x110xf32>
    %230 = arith.addf %206, %229 : vector<1x110xf32>
    %c3_140 = arith.constant 3 : index
    %c0_141 = arith.constant 0 : index
    %231 = vector.load %arg10[%c3_140, %c0_141] : memref<4x110xf32, #tpu.memory_space<vmem>>, vector<1x110xf32>
    %232 = vector.broadcast %231 : vector<1x110xf32> to vector<11x110xf32>
    %233 = arith.mulf %202, %232 : vector<11x110xf32>
    %cst_142 = arith.constant dense<0.000000e+00> : vector<11xf32>
    %234 = vector.multi_reduction <add>, %233, %cst_142 [1] : vector<11x110xf32> to vector<11xf32>
    %235 = vector.shape_cast %234 : vector<11xf32> to vector<11x1xf32>
    %cst_143 = arith.constant dense<0.000000e+00> : vector<1xf32>
    %236 = vector.multi_reduction <add>, %235, %cst_143 [0] : vector<11x1xf32> to vector<1xf32>
    %237 = vector.shape_cast %236 : vector<1xf32> to vector<1x1xf32>
    %238 = arith.mulf %233, %202 : vector<11x110xf32>
    %cst_144 = arith.constant dense<0.000000e+00> : vector<11xf32>
    %239 = vector.multi_reduction <add>, %238, %cst_144 [1] : vector<11x110xf32> to vector<11xf32>
    %240 = vector.shape_cast %239 : vector<11xf32> to vector<11x1xf32>
    %cst_145 = arith.constant dense<0.000000e+00> : vector<1xf32>
    %241 = vector.multi_reduction <add>, %240, %cst_145 [0] : vector<11x1xf32> to vector<1xf32>
    %242 = vector.shape_cast %241 : vector<1xf32> to vector<1x1xf32>
    %cst_146 = arith.constant 0.00165289256 : f32
    %243 = vector.broadcast %cst_146 : f32 to vector<1x1xf32>
    %244 = arith.mulf %237, %243 : vector<1x1xf32>
    %cst_147 = arith.constant 0.00165289256 : f32
    %245 = vector.broadcast %cst_147 : f32 to vector<1x1xf32>
    %246 = arith.mulf %242, %245 : vector<1x1xf32>
    %247 = arith.mulf %244, %244 : vector<1x1xf32>
    %248 = arith.subf %246, %247 : vector<1x1xf32>
    %249 = vector.broadcast %244 : vector<1x1xf32> to vector<1x110xf32>
    %250 = arith.mulf %231, %249 : vector<1x110xf32>
    %251 = arith.addf %227, %250 : vector<1x110xf32>
    %252 = vector.broadcast %248 : vector<1x1xf32> to vector<1x110xf32>
    %253 = arith.mulf %231, %252 : vector<1x110xf32>
    %254 = arith.addf %230, %253 : vector<1x110xf32>
    %cst_148 = arith.constant 9.99999974E-6 : f32
    %255 = vector.broadcast %cst_148 : f32 to vector<1x110xf32>
    %256 = arith.addf %254, %255 : vector<1x110xf32>
    %257 = math.rsqrt %256 : vector<1x110xf32>
    %258 = vector.broadcast %251 : vector<1x110xf32> to vector<11x110xf32>
    %259 = arith.subf %202, %258 : vector<11x110xf32>
    %260 = arith.mulf %257, %203 : vector<1x110xf32>
    %261 = vector.broadcast %260 : vector<1x110xf32> to vector<11x110xf32>
    %262 = arith.mulf %259, %261 : vector<11x110xf32>
    %263 = vector.broadcast %204 : vector<1x110xf32> to vector<11x110xf32>
    %264 = arith.addf %262, %263 : vector<11x110xf32>
    %c0_149 = arith.constant 0 : index
    %c0_150 = arith.constant 0 : index
    %265 = vector.load %arg26[%c0_149, %c0_150] : memref<11x110xf32, #tpu.memory_space<vmem>>, vector<11x110xf32>
    tpu.vector_store %arg26[%c0_149, %c0_150], %264 {strides = array<i32>} : memref<11x110xf32, #tpu.memory_space<vmem>>, vector<11x110xf32>,
    %c0_151 = arith.constant 0 : index
    %c0_152 = arith.constant 0 : index
    %266 = vector.load %arg26[%c0_151, %c0_152] : memref<11x110xf32, #tpu.memory_space<vmem>>, vector<9x110xf32>
    %267 = arith.truncf %266 : vector<9x110xf32> to vector<9x110xbf16>
    %c0_153 = arith.constant 0 : index
    %c0_154 = arith.constant 0 : index
    %c0_155 = arith.constant 0 : index
    %268 = vector.load %arg11[%c0_153, %c0_154, %c0_155] : memref<3x110x108xbf16, #tpu.memory_space<vmem>>, vector<1x110x108xbf16>
    %269 = vector.shape_cast %268 : vector<1x110x108xbf16> to vector<110x108xbf16>
    %cst_156 = arith.constant dense<0.000000e+00> : vector<9x108xf32>
    %270 = tpu.matmul %267, %269, %cst_156 {dimension_numbers = #tpu.dot_dimension_numbers<[1], [0], [0], [1], [0, 0, 1, 1], [], []>} : vector<9x110xbf16>, vector<110x108xbf16>, vector<9x108xf32> -> vector<9x108xf32>
    %c1_157 = arith.constant 1 : index
    %c0_158 = arith.constant 0 : index
    %271 = vector.load %arg26[%c1_157, %c0_158] : memref<11x110xf32, #tpu.memory_space<vmem>>, vector<9x110xf32>
    %272 = arith.truncf %271 : vector<9x110xf32> to vector<9x110xbf16>
    %c1_159 = arith.constant 1 : index
    %c0_160 = arith.constant 0 : index
    %c0_161 = arith.constant 0 : index
    %273 = vector.load %arg11[%c1_159, %c0_160, %c0_161] : memref<3x110x108xbf16, #tpu.memory_space<vmem>>, vector<1x110x108xbf16>
    %274 = vector.shape_cast %273 : vector<1x110x108xbf16> to vector<110x108xbf16>
    %cst_162 = arith.constant dense<0.000000e+00> : vector<9x108xf32>
    %275 = tpu.matmul %272, %274, %cst_162 {dimension_numbers = #tpu.dot_dimension_numbers<[1], [0], [0], [1], [0, 0, 1, 1], [], []>} : vector<9x110xbf16>, vector<110x108xbf16>, vector<9x108xf32> -> vector<9x108xf32>
    %276 = arith.addf %270, %275 : vector<9x108xf32>
    %c2_163 = arith.constant 2 : index
    %c0_164 = arith.constant 0 : index
    %277 = vector.load %arg26[%c2_163, %c0_164] : memref<11x110xf32, #tpu.memory_space<vmem>>, vector<9x110xf32>
    %278 = arith.truncf %277 : vector<9x110xf32> to vector<9x110xbf16>
    %c2_165 = arith.constant 2 : index
    %c0_166 = arith.constant 0 : index
    %c0_167 = arith.constant 0 : index
    %279 = vector.load %arg11[%c2_165, %c0_166, %c0_167] : memref<3x110x108xbf16, #tpu.memory_space<vmem>>, vector<1x110x108xbf16>
    %280 = vector.shape_cast %279 : vector<1x110x108xbf16> to vector<110x108xbf16>
    %cst_168 = arith.constant dense<0.000000e+00> : vector<9x108xf32>
    %281 = tpu.matmul %278, %280, %cst_168 {dimension_numbers = #tpu.dot_dimension_numbers<[1], [0], [0], [1], [0, 0, 1, 1], [], []>} : vector<9x110xbf16>, vector<110x108xbf16>, vector<9x108xf32> -> vector<9x108xf32>
    %282 = arith.addf %276, %281 : vector<9x108xf32>
    %cst_169 = arith.constant 0.000000e+00 : f32
    %283 = vector.broadcast %cst_169 : f32 to vector<9x108xf32>
    %284 = arith.maximumf %282, %283 : vector<9x108xf32>
    %c0_170 = arith.constant 0 : index
    %c0_171 = arith.constant 0 : index
    %285 = vector.load %arg12[%c0_170, %c0_171] : memref<4x108xf32, #tpu.memory_space<vmem>>, vector<1x108xf32>
    %c1_172 = arith.constant 1 : index
    %c0_173 = arith.constant 0 : index
    %286 = vector.load %arg12[%c1_172, %c0_173] : memref<4x108xf32, #tpu.memory_space<vmem>>, vector<1x108xf32>
    %cst_174 = arith.constant 0.000000e+00 : f32
    %287 = vector.broadcast %cst_174 : f32 to vector<1x108xf32>
    %cst_175 = arith.constant 0.000000e+00 : f32
    %288 = vector.broadcast %cst_175 : f32 to vector<1x108xf32>
    %c2_176 = arith.constant 2 : index
    %c0_177 = arith.constant 0 : index
    %289 = vector.load %arg12[%c2_176, %c0_177] : memref<4x108xf32, #tpu.memory_space<vmem>>, vector<1x108xf32>
    %290 = vector.broadcast %289 : vector<1x108xf32> to vector<9x108xf32>
    %291 = arith.mulf %284, %290 : vector<9x108xf32>
    %cst_178 = arith.constant dense<0.000000e+00> : vector<9xf32>
    %292 = vector.multi_reduction <add>, %291, %cst_178 [1] : vector<9x108xf32> to vector<9xf32>
    %293 = vector.shape_cast %292 : vector<9xf32> to vector<9x1xf32>
    %cst_179 = arith.constant dense<0.000000e+00> : vector<1xf32>
    %294 = vector.multi_reduction <add>, %293, %cst_179 [0] : vector<9x1xf32> to vector<1xf32>
    %295 = vector.shape_cast %294 : vector<1xf32> to vector<1x1xf32>
    %296 = arith.mulf %291, %284 : vector<9x108xf32>
    %cst_180 = arith.constant dense<0.000000e+00> : vector<9xf32>
    %297 = vector.multi_reduction <add>, %296, %cst_180 [1] : vector<9x108xf32> to vector<9xf32>
    %298 = vector.shape_cast %297 : vector<9xf32> to vector<9x1xf32>
    %cst_181 = arith.constant dense<0.000000e+00> : vector<1xf32>
    %299 = vector.multi_reduction <add>, %298, %cst_181 [0] : vector<9x1xf32> to vector<1xf32>
    %300 = vector.shape_cast %299 : vector<1xf32> to vector<1x1xf32>
    %cst_182 = arith.constant 0.00205761311 : f32
    %301 = vector.broadcast %cst_182 : f32 to vector<1x1xf32>
    %302 = arith.mulf %295, %301 : vector<1x1xf32>
    %cst_183 = arith.constant 0.00205761311 : f32
    %303 = vector.broadcast %cst_183 : f32 to vector<1x1xf32>
    %304 = arith.mulf %300, %303 : vector<1x1xf32>
    %305 = arith.mulf %302, %302 : vector<1x1xf32>
    %306 = arith.subf %304, %305 : vector<1x1xf32>
    %307 = vector.broadcast %302 : vector<1x1xf32> to vector<1x108xf32>
    %308 = arith.mulf %289, %307 : vector<1x108xf32>
    %309 = arith.addf %287, %308 : vector<1x108xf32>
    %310 = vector.broadcast %306 : vector<1x1xf32> to vector<1x108xf32>
    %311 = arith.mulf %289, %310 : vector<1x108xf32>
    %312 = arith.addf %288, %311 : vector<1x108xf32>
    %c3_184 = arith.constant 3 : index
    %c0_185 = arith.constant 0 : index
    %313 = vector.load %arg12[%c3_184, %c0_185] : memref<4x108xf32, #tpu.memory_space<vmem>>, vector<1x108xf32>
    %314 = vector.broadcast %313 : vector<1x108xf32> to vector<9x108xf32>
    %315 = arith.mulf %284, %314 : vector<9x108xf32>
    %cst_186 = arith.constant dense<0.000000e+00> : vector<9xf32>
    %316 = vector.multi_reduction <add>, %315, %cst_186 [1] : vector<9x108xf32> to vector<9xf32>
    %317 = vector.shape_cast %316 : vector<9xf32> to vector<9x1xf32>
    %cst_187 = arith.constant dense<0.000000e+00> : vector<1xf32>
    %318 = vector.multi_reduction <add>, %317, %cst_187 [0] : vector<9x1xf32> to vector<1xf32>
    %319 = vector.shape_cast %318 : vector<1xf32> to vector<1x1xf32>
    %320 = arith.mulf %315, %284 : vector<9x108xf32>
    %cst_188 = arith.constant dense<0.000000e+00> : vector<9xf32>
    %321 = vector.multi_reduction <add>, %320, %cst_188 [1] : vector<9x108xf32> to vector<9xf32>
    %322 = vector.shape_cast %321 : vector<9xf32> to vector<9x1xf32>
    %cst_189 = arith.constant dense<0.000000e+00> : vector<1xf32>
    %323 = vector.multi_reduction <add>, %322, %cst_189 [0] : vector<9x1xf32> to vector<1xf32>
    %324 = vector.shape_cast %323 : vector<1xf32> to vector<1x1xf32>
    %cst_190 = arith.constant 0.00205761311 : f32
    %325 = vector.broadcast %cst_190 : f32 to vector<1x1xf32>
    %326 = arith.mulf %319, %325 : vector<1x1xf32>
    %cst_191 = arith.constant 0.00205761311 : f32
    %327 = vector.broadcast %cst_191 : f32 to vector<1x1xf32>
    %328 = arith.mulf %324, %327 : vector<1x1xf32>
    %329 = arith.mulf %326, %326 : vector<1x1xf32>
    %330 = arith.subf %328, %329 : vector<1x1xf32>
    %331 = vector.broadcast %326 : vector<1x1xf32> to vector<1x108xf32>
    %332 = arith.mulf %313, %331 : vector<1x108xf32>
    %333 = arith.addf %309, %332 : vector<1x108xf32>
    %334 = vector.broadcast %330 : vector<1x1xf32> to vector<1x108xf32>
    %335 = arith.mulf %313, %334 : vector<1x108xf32>
    %336 = arith.addf %312, %335 : vector<1x108xf32>
    %cst_192 = arith.constant 9.99999974E-6 : f32
    %337 = vector.broadcast %cst_192 : f32 to vector<1x108xf32>
    %338 = arith.addf %336, %337 : vector<1x108xf32>
    %339 = math.rsqrt %338 : vector<1x108xf32>
    %340 = vector.broadcast %333 : vector<1x108xf32> to vector<9x108xf32>
    %341 = arith.subf %284, %340 : vector<9x108xf32>
    %342 = arith.mulf %339, %285 : vector<1x108xf32>
    %343 = vector.broadcast %342 : vector<1x108xf32> to vector<9x108xf32>
    %344 = arith.mulf %341, %343 : vector<9x108xf32>
    %345 = vector.broadcast %286 : vector<1x108xf32> to vector<9x108xf32>
    %346 = arith.addf %344, %345 : vector<9x108xf32>
    %c0_193 = arith.constant 0 : index
    %c0_194 = arith.constant 0 : index
    %347 = vector.load %arg27[%c0_193, %c0_194] : memref<9x108xf32, #tpu.memory_space<vmem>>, vector<9x108xf32>
    tpu.vector_store %arg27[%c0_193, %c0_194], %346 {strides = array<i32>} : memref<9x108xf32, #tpu.memory_space<vmem>>, vector<9x108xf32>,
    %c0_195 = arith.constant 0 : index
    %c0_196 = arith.constant 0 : index
    %348 = vector.load %arg27[%c0_195, %c0_196] : memref<9x108xf32, #tpu.memory_space<vmem>>, vector<7x108xf32>
    %349 = arith.truncf %348 : vector<7x108xf32> to vector<7x108xbf16>
    %c0_197 = arith.constant 0 : index
    %c0_198 = arith.constant 0 : index
    %c0_199 = arith.constant 0 : index
    %350 = vector.load %arg13[%c0_197, %c0_198, %c0_199] : memref<3x108x98xbf16, #tpu.memory_space<vmem>>, vector<1x108x98xbf16>
    %351 = vector.shape_cast %350 : vector<1x108x98xbf16> to vector<108x98xbf16>
    %cst_200 = arith.constant dense<0.000000e+00> : vector<7x98xf32>
    %352 = tpu.matmul %349, %351, %cst_200 {dimension_numbers = #tpu.dot_dimension_numbers<[1], [0], [0], [1], [0, 0, 1, 1], [], []>} : vector<7x108xbf16>, vector<108x98xbf16>, vector<7x98xf32> -> vector<7x98xf32>
    %c1_201 = arith.constant 1 : index
    %c0_202 = arith.constant 0 : index
    %353 = vector.load %arg27[%c1_201, %c0_202] : memref<9x108xf32, #tpu.memory_space<vmem>>, vector<7x108xf32>
    %354 = arith.truncf %353 : vector<7x108xf32> to vector<7x108xbf16>
    %c1_203 = arith.constant 1 : index
    %c0_204 = arith.constant 0 : index
    %c0_205 = arith.constant 0 : index
    %355 = vector.load %arg13[%c1_203, %c0_204, %c0_205] : memref<3x108x98xbf16, #tpu.memory_space<vmem>>, vector<1x108x98xbf16>
    %356 = vector.shape_cast %355 : vector<1x108x98xbf16> to vector<108x98xbf16>
    %cst_206 = arith.constant dense<0.000000e+00> : vector<7x98xf32>
    %357 = tpu.matmul %354, %356, %cst_206 {dimension_numbers = #tpu.dot_dimension_numbers<[1], [0], [0], [1], [0, 0, 1, 1], [], []>} : vector<7x108xbf16>, vector<108x98xbf16>, vector<7x98xf32> -> vector<7x98xf32>
    %358 = arith.addf %352, %357 : vector<7x98xf32>
    %c2_207 = arith.constant 2 : index
    %c0_208 = arith.constant 0 : index
    %359 = vector.load %arg27[%c2_207, %c0_208] : memref<9x108xf32, #tpu.memory_space<vmem>>, vector<7x108xf32>
    %360 = arith.truncf %359 : vector<7x108xf32> to vector<7x108xbf16>
    %c2_209 = arith.constant 2 : index
    %c0_210 = arith.constant 0 : index
    %c0_211 = arith.constant 0 : index
    %361 = vector.load %arg13[%c2_209, %c0_210, %c0_211] : memref<3x108x98xbf16, #tpu.memory_space<vmem>>, vector<1x108x98xbf16>
    %362 = vector.shape_cast %361 : vector<1x108x98xbf16> to vector<108x98xbf16>
    %cst_212 = arith.constant dense<0.000000e+00> : vector<7x98xf32>
    %363 = tpu.matmul %360, %362, %cst_212 {dimension_numbers = #tpu.dot_dimension_numbers<[1], [0], [0], [1], [0, 0, 1, 1], [], []>} : vector<7x108xbf16>, vector<108x98xbf16>, vector<7x98xf32> -> vector<7x98xf32>
    %364 = arith.addf %358, %363 : vector<7x98xf32>
    %cst_213 = arith.constant 0.000000e+00 : f32
    %365 = vector.broadcast %cst_213 : f32 to vector<7x98xf32>
    %366 = arith.maximumf %364, %365 : vector<7x98xf32>
    %c0_214 = arith.constant 0 : index
    %c0_215 = arith.constant 0 : index
    %367 = vector.load %arg14[%c0_214, %c0_215] : memref<4x98xf32, #tpu.memory_space<vmem>>, vector<1x98xf32>
    %c1_216 = arith.constant 1 : index
    %c0_217 = arith.constant 0 : index
    %368 = vector.load %arg14[%c1_216, %c0_217] : memref<4x98xf32, #tpu.memory_space<vmem>>, vector<1x98xf32>
    %cst_218 = arith.constant 0.000000e+00 : f32
    %369 = vector.broadcast %cst_218 : f32 to vector<1x98xf32>
    %cst_219 = arith.constant 0.000000e+00 : f32
    %370 = vector.broadcast %cst_219 : f32 to vector<1x98xf32>
    %c2_220 = arith.constant 2 : index
    %c0_221 = arith.constant 0 : index
    %371 = vector.load %arg14[%c2_220, %c0_221] : memref<4x98xf32, #tpu.memory_space<vmem>>, vector<1x98xf32>
    %372 = vector.broadcast %371 : vector<1x98xf32> to vector<7x98xf32>
    %373 = arith.mulf %366, %372 : vector<7x98xf32>
    %cst_222 = arith.constant dense<0.000000e+00> : vector<7xf32>
    %374 = vector.multi_reduction <add>, %373, %cst_222 [1] : vector<7x98xf32> to vector<7xf32>
    %375 = vector.shape_cast %374 : vector<7xf32> to vector<7x1xf32>
    %cst_223 = arith.constant dense<0.000000e+00> : vector<1xf32>
    %376 = vector.multi_reduction <add>, %375, %cst_223 [0] : vector<7x1xf32> to vector<1xf32>
    %377 = vector.shape_cast %376 : vector<1xf32> to vector<1x1xf32>
    %378 = arith.mulf %373, %366 : vector<7x98xf32>
    %cst_224 = arith.constant dense<0.000000e+00> : vector<7xf32>
    %379 = vector.multi_reduction <add>, %378, %cst_224 [1] : vector<7x98xf32> to vector<7xf32>
    %380 = vector.shape_cast %379 : vector<7xf32> to vector<7x1xf32>
    %cst_225 = arith.constant dense<0.000000e+00> : vector<1xf32>
    %381 = vector.multi_reduction <add>, %380, %cst_225 [0] : vector<7x1xf32> to vector<1xf32>
    %382 = vector.shape_cast %381 : vector<1xf32> to vector<1x1xf32>
    %cst_226 = arith.constant 0.002915452 : f32
    %383 = vector.broadcast %cst_226 : f32 to vector<1x1xf32>
    %384 = arith.mulf %377, %383 : vector<1x1xf32>
    %cst_227 = arith.constant 0.002915452 : f32
    %385 = vector.broadcast %cst_227 : f32 to vector<1x1xf32>
    %386 = arith.mulf %382, %385 : vector<1x1xf32>
    %387 = arith.mulf %384, %384 : vector<1x1xf32>
    %388 = arith.subf %386, %387 : vector<1x1xf32>
    %389 = vector.broadcast %384 : vector<1x1xf32> to vector<1x98xf32>
    %390 = arith.mulf %371, %389 : vector<1x98xf32>
    %391 = arith.addf %369, %390 : vector<1x98xf32>
    %392 = vector.broadcast %388 : vector<1x1xf32> to vector<1x98xf32>
    %393 = arith.mulf %371, %392 : vector<1x98xf32>
    %394 = arith.addf %370, %393 : vector<1x98xf32>
    %c3_228 = arith.constant 3 : index
    %c0_229 = arith.constant 0 : index
    %395 = vector.load %arg14[%c3_228, %c0_229] : memref<4x98xf32, #tpu.memory_space<vmem>>, vector<1x98xf32>
    %396 = vector.broadcast %395 : vector<1x98xf32> to vector<7x98xf32>
    %397 = arith.mulf %366, %396 : vector<7x98xf32>
    %cst_230 = arith.constant dense<0.000000e+00> : vector<7xf32>
    %398 = vector.multi_reduction <add>, %397, %cst_230 [1] : vector<7x98xf32> to vector<7xf32>
    %399 = vector.shape_cast %398 : vector<7xf32> to vector<7x1xf32>
    %cst_231 = arith.constant dense<0.000000e+00> : vector<1xf32>
    %400 = vector.multi_reduction <add>, %399, %cst_231 [0] : vector<7x1xf32> to vector<1xf32>
    %401 = vector.shape_cast %400 : vector<1xf32> to vector<1x1xf32>
    %402 = arith.mulf %397, %366 : vector<7x98xf32>
    %cst_232 = arith.constant dense<0.000000e+00> : vector<7xf32>
    %403 = vector.multi_reduction <add>, %402, %cst_232 [1] : vector<7x98xf32> to vector<7xf32>
    %404 = vector.shape_cast %403 : vector<7xf32> to vector<7x1xf32>
    %cst_233 = arith.constant dense<0.000000e+00> : vector<1xf32>
    %405 = vector.multi_reduction <add>, %404, %cst_233 [0] : vector<7x1xf32> to vector<1xf32>
    %406 = vector.shape_cast %405 : vector<1xf32> to vector<1x1xf32>
    %cst_234 = arith.constant 0.002915452 : f32
    %407 = vector.broadcast %cst_234 : f32 to vector<1x1xf32>
    %408 = arith.mulf %401, %407 : vector<1x1xf32>
    %cst_235 = arith.constant 0.002915452 : f32
    %409 = vector.broadcast %cst_235 : f32 to vector<1x1xf32>
    %410 = arith.mulf %406, %409 : vector<1x1xf32>
    %411 = arith.mulf %408, %408 : vector<1x1xf32>
    %412 = arith.subf %410, %411 : vector<1x1xf32>
    %413 = vector.broadcast %408 : vector<1x1xf32> to vector<1x98xf32>
    %414 = arith.mulf %395, %413 : vector<1x98xf32>
    %415 = arith.addf %391, %414 : vector<1x98xf32>
    %416 = vector.broadcast %412 : vector<1x1xf32> to vector<1x98xf32>
    %417 = arith.mulf %395, %416 : vector<1x98xf32>
    %418 = arith.addf %394, %417 : vector<1x98xf32>
    %cst_236 = arith.constant 9.99999974E-6 : f32
    %419 = vector.broadcast %cst_236 : f32 to vector<1x98xf32>
    %420 = arith.addf %418, %419 : vector<1x98xf32>
    %421 = math.rsqrt %420 : vector<1x98xf32>
    %422 = vector.broadcast %415 : vector<1x98xf32> to vector<7x98xf32>
    %423 = arith.subf %366, %422 : vector<7x98xf32>
    %424 = arith.mulf %421, %367 : vector<1x98xf32>
    %425 = vector.broadcast %424 : vector<1x98xf32> to vector<7x98xf32>
    %426 = arith.mulf %423, %425 : vector<7x98xf32>
    %427 = vector.broadcast %368 : vector<1x98xf32> to vector<7x98xf32>
    %428 = arith.addf %426, %427 : vector<7x98xf32>
    %c0_237 = arith.constant 0 : index
    %c0_238 = arith.constant 0 : index
    %429 = vector.load %arg28[%c0_237, %c0_238] : memref<7x98xf32, #tpu.memory_space<vmem>>, vector<7x98xf32>
    tpu.vector_store %arg28[%c0_237, %c0_238], %428 {strides = array<i32>} : memref<7x98xf32, #tpu.memory_space<vmem>>, vector<7x98xf32>,
    %c0_239 = arith.constant 0 : index
    %c0_240 = arith.constant 0 : index
    %430 = vector.load %arg28[%c0_239, %c0_240] : memref<7x98xf32, #tpu.memory_space<vmem>>, vector<5x98xf32>
    %431 = arith.truncf %430 : vector<5x98xf32> to vector<5x98xbf16>
    %c0_241 = arith.constant 0 : index
    %c0_242 = arith.constant 0 : index
    %c0_243 = arith.constant 0 : index
    %432 = vector.load %arg15[%c0_241, %c0_242, %c0_243] : memref<3x98x80xbf16, #tpu.memory_space<vmem>>, vector<1x98x80xbf16>
    %433 = vector.shape_cast %432 : vector<1x98x80xbf16> to vector<98x80xbf16>
    %cst_244 = arith.constant dense<0.000000e+00> : vector<5x80xf32>
    %434 = tpu.matmul %431, %433, %cst_244 {dimension_numbers = #tpu.dot_dimension_numbers<[1], [0], [0], [1], [0, 0, 1, 1], [], []>} : vector<5x98xbf16>, vector<98x80xbf16>, vector<5x80xf32> -> vector<5x80xf32>
    %c1_245 = arith.constant 1 : index
    %c0_246 = arith.constant 0 : index
    %435 = vector.load %arg28[%c1_245, %c0_246] : memref<7x98xf32, #tpu.memory_space<vmem>>, vector<5x98xf32>
    %436 = arith.truncf %435 : vector<5x98xf32> to vector<5x98xbf16>
    %c1_247 = arith.constant 1 : index
    %c0_248 = arith.constant 0 : index
    %c0_249 = arith.constant 0 : index
    %437 = vector.load %arg15[%c1_247, %c0_248, %c0_249] : memref<3x98x80xbf16, #tpu.memory_space<vmem>>, vector<1x98x80xbf16>
    %438 = vector.shape_cast %437 : vector<1x98x80xbf16> to vector<98x80xbf16>
    %cst_250 = arith.constant dense<0.000000e+00> : vector<5x80xf32>
    %439 = tpu.matmul %436, %438, %cst_250 {dimension_numbers = #tpu.dot_dimension_numbers<[1], [0], [0], [1], [0, 0, 1, 1], [], []>} : vector<5x98xbf16>, vector<98x80xbf16>, vector<5x80xf32> -> vector<5x80xf32>
    %440 = arith.addf %434, %439 : vector<5x80xf32>
    %c2_251 = arith.constant 2 : index
    %c0_252 = arith.constant 0 : index
    %441 = vector.load %arg28[%c2_251, %c0_252] : memref<7x98xf32, #tpu.memory_space<vmem>>, vector<5x98xf32>
    %442 = arith.truncf %441 : vector<5x98xf32> to vector<5x98xbf16>
    %c2_253 = arith.constant 2 : index
    %c0_254 = arith.constant 0 : index
    %c0_255 = arith.constant 0 : index
    %443 = vector.load %arg15[%c2_253, %c0_254, %c0_255] : memref<3x98x80xbf16, #tpu.memory_space<vmem>>, vector<1x98x80xbf16>
    %444 = vector.shape_cast %443 : vector<1x98x80xbf16> to vector<98x80xbf16>
    %cst_256 = arith.constant dense<0.000000e+00> : vector<5x80xf32>
    %445 = tpu.matmul %442, %444, %cst_256 {dimension_numbers = #tpu.dot_dimension_numbers<[1], [0], [0], [1], [0, 0, 1, 1], [], []>} : vector<5x98xbf16>, vector<98x80xbf16>, vector<5x80xf32> -> vector<5x80xf32>
    %446 = arith.addf %440, %445 : vector<5x80xf32>
    %cst_257 = arith.constant 0.000000e+00 : f32
    %447 = vector.broadcast %cst_257 : f32 to vector<5x80xf32>
    %448 = arith.maximumf %446, %447 : vector<5x80xf32>
    %c0_258 = arith.constant 0 : index
    %c0_259 = arith.constant 0 : index
    %449 = vector.load %arg16[%c0_258, %c0_259] : memref<4x80xf32, #tpu.memory_space<vmem>>, vector<1x80xf32>
    %c1_260 = arith.constant 1 : index
    %c0_261 = arith.constant 0 : index
    %450 = vector.load %arg16[%c1_260, %c0_261] : memref<4x80xf32, #tpu.memory_space<vmem>>, vector<1x80xf32>
    %cst_262 = arith.constant 0.000000e+00 : f32
    %451 = vector.broadcast %cst_262 : f32 to vector<1x80xf32>
    %cst_263 = arith.constant 0.000000e+00 : f32
    %452 = vector.broadcast %cst_263 : f32 to vector<1x80xf32>
    %c2_264 = arith.constant 2 : index
    %c0_265 = arith.constant 0 : index
    %453 = vector.load %arg16[%c2_264, %c0_265] : memref<4x80xf32, #tpu.memory_space<vmem>>, vector<1x80xf32>
    %454 = vector.broadcast %453 : vector<1x80xf32> to vector<5x80xf32>
    %455 = arith.mulf %448, %454 : vector<5x80xf32>
    %cst_266 = arith.constant dense<0.000000e+00> : vector<5xf32>
    %456 = vector.multi_reduction <add>, %455, %cst_266 [1] : vector<5x80xf32> to vector<5xf32>
    %457 = vector.shape_cast %456 : vector<5xf32> to vector<5x1xf32>
    %cst_267 = arith.constant dense<0.000000e+00> : vector<1xf32>
    %458 = vector.multi_reduction <add>, %457, %cst_267 [0] : vector<5x1xf32> to vector<1xf32>
    %459 = vector.shape_cast %458 : vector<1xf32> to vector<1x1xf32>
    %460 = arith.mulf %455, %448 : vector<5x80xf32>
    %cst_268 = arith.constant dense<0.000000e+00> : vector<5xf32>
    %461 = vector.multi_reduction <add>, %460, %cst_268 [1] : vector<5x80xf32> to vector<5xf32>
    %462 = vector.shape_cast %461 : vector<5xf32> to vector<5x1xf32>
    %cst_269 = arith.constant dense<0.000000e+00> : vector<1xf32>
    %463 = vector.multi_reduction <add>, %462, %cst_269 [0] : vector<5x1xf32> to vector<1xf32>
    %464 = vector.shape_cast %463 : vector<1xf32> to vector<1x1xf32>
    %cst_270 = arith.constant 5.000000e-03 : f32
    %465 = vector.broadcast %cst_270 : f32 to vector<1x1xf32>
    %466 = arith.mulf %459, %465 : vector<1x1xf32>
    %cst_271 = arith.constant 5.000000e-03 : f32
    %467 = vector.broadcast %cst_271 : f32 to vector<1x1xf32>
    %468 = arith.mulf %464, %467 : vector<1x1xf32>
    %469 = arith.mulf %466, %466 : vector<1x1xf32>
    %470 = arith.subf %468, %469 : vector<1x1xf32>
    %471 = vector.broadcast %466 : vector<1x1xf32> to vector<1x80xf32>
    %472 = arith.mulf %453, %471 : vector<1x80xf32>
    %473 = arith.addf %451, %472 : vector<1x80xf32>
    %474 = vector.broadcast %470 : vector<1x1xf32> to vector<1x80xf32>
    %475 = arith.mulf %453, %474 : vector<1x80xf32>
    %476 = arith.addf %452, %475 : vector<1x80xf32>
    %c3_272 = arith.constant 3 : index
    %c0_273 = arith.constant 0 : index
    %477 = vector.load %arg16[%c3_272, %c0_273] : memref<4x80xf32, #tpu.memory_space<vmem>>, vector<1x80xf32>
    %478 = vector.broadcast %477 : vector<1x80xf32> to vector<5x80xf32>
    %479 = arith.mulf %448, %478 : vector<5x80xf32>
    %cst_274 = arith.constant dense<0.000000e+00> : vector<5xf32>
    %480 = vector.multi_reduction <add>, %479, %cst_274 [1] : vector<5x80xf32> to vector<5xf32>
    %481 = vector.shape_cast %480 : vector<5xf32> to vector<5x1xf32>
    %cst_275 = arith.constant dense<0.000000e+00> : vector<1xf32>
    %482 = vector.multi_reduction <add>, %481, %cst_275 [0] : vector<5x1xf32> to vector<1xf32>
    %483 = vector.shape_cast %482 : vector<1xf32> to vector<1x1xf32>
    %484 = arith.mulf %479, %448 : vector<5x80xf32>
    %cst_276 = arith.constant dense<0.000000e+00> : vector<5xf32>
    %485 = vector.multi_reduction <add>, %484, %cst_276 [1] : vector<5x80xf32> to vector<5xf32>
    %486 = vector.shape_cast %485 : vector<5xf32> to vector<5x1xf32>
    %cst_277 = arith.constant dense<0.000000e+00> : vector<1xf32>
    %487 = vector.multi_reduction <add>, %486, %cst_277 [0] : vector<5x1xf32> to vector<1xf32>
    %488 = vector.shape_cast %487 : vector<1xf32> to vector<1x1xf32>
    %cst_278 = arith.constant 5.000000e-03 : f32
    %489 = vector.broadcast %cst_278 : f32 to vector<1x1xf32>
    %490 = arith.mulf %483, %489 : vector<1x1xf32>
    %cst_279 = arith.constant 5.000000e-03 : f32
    %491 = vector.broadcast %cst_279 : f32 to vector<1x1xf32>
    %492 = arith.mulf %488, %491 : vector<1x1xf32>
    %493 = arith.mulf %490, %490 : vector<1x1xf32>
    %494 = arith.subf %492, %493 : vector<1x1xf32>
    %495 = vector.broadcast %490 : vector<1x1xf32> to vector<1x80xf32>
    %496 = arith.mulf %477, %495 : vector<1x80xf32>
    %497 = arith.addf %473, %496 : vector<1x80xf32>
    %498 = vector.broadcast %494 : vector<1x1xf32> to vector<1x80xf32>
    %499 = arith.mulf %477, %498 : vector<1x80xf32>
    %500 = arith.addf %476, %499 : vector<1x80xf32>
    %cst_280 = arith.constant 9.99999974E-6 : f32
    %501 = vector.broadcast %cst_280 : f32 to vector<1x80xf32>
    %502 = arith.addf %500, %501 : vector<1x80xf32>
    %503 = math.rsqrt %502 : vector<1x80xf32>
    %504 = vector.broadcast %497 : vector<1x80xf32> to vector<5x80xf32>
    %505 = arith.subf %448, %504 : vector<5x80xf32>
    %506 = arith.mulf %503, %449 : vector<1x80xf32>
    %507 = vector.broadcast %506 : vector<1x80xf32> to vector<5x80xf32>
    %508 = arith.mulf %505, %507 : vector<5x80xf32>
    %509 = vector.broadcast %450 : vector<1x80xf32> to vector<5x80xf32>
    %510 = arith.addf %508, %509 : vector<5x80xf32>
    %511 = arith.truncf %510 : vector<5x80xf32> to vector<5x80xbf16>
    %c0_281 = arith.constant 0 : index
    %c0_282 = arith.constant 0 : index
    %512 = vector.load %arg17[%c0_281, %c0_282] : memref<80x120xbf16, #tpu.memory_space<vmem>>, vector<80x120xbf16>
    %cst_283 = arith.constant dense<0.000000e+00> : vector<5x120xf32>
    %513 = tpu.matmul %511, %512, %cst_283 {dimension_numbers = #tpu.dot_dimension_numbers<[1], [0], [0], [1], [0, 0, 1, 1], [], []>} : vector<5x80xbf16>, vector<80x120xbf16>, vector<5x120xf32> -> vector<5x120xf32>
    %c0_284 = arith.constant 0 : index
    %c0_285 = arith.constant 0 : index
    %514 = vector.load %arg18[%c0_284, %c0_285] : memref<1x120xf32, #tpu.memory_space<vmem>>, vector<1x120xf32>
    %515 = vector.broadcast %514 : vector<1x120xf32> to vector<5x120xf32>
    %516 = arith.addf %513, %515 : vector<5x120xf32>
    %cst_286 = arith.constant dense<0.000000e+00> : vector<120xf32>
    %517 = vector.multi_reduction <add>, %516, %cst_286 [0] : vector<5x120xf32> to vector<120xf32>
    %518 = vector.shape_cast %517 : vector<120xf32> to vector<1x120xf32>
    %c0_287 = arith.constant 0 : index
    %c0_288 = arith.constant 0 : index
    %519 = vector.load %arg19[%c0_287, %c0_288] : memref<120x24xf32, #tpu.memory_space<vmem>>, vector<120x24xf32>
    %cst_289 = arith.constant dense<0.000000e+00> : vector<1x24xf32>
    %520 = tpu.matmul %518, %519, %cst_289 {dimension_numbers = #tpu.dot_dimension_numbers<[1], [0], [0], [1], [0, 0, 1, 1], [], []>} : vector<1x120xf32>, vector<120x24xf32>, vector<1x24xf32> -> vector<1x24xf32>
    %c0_290 = arith.constant 0 : index
    %c0_291 = arith.constant 0 : index
    %521 = vector.load %arg20[%c0_290, %c0_291] : memref<24x10xf32, #tpu.memory_space<vmem>>, vector<24x10xf32>
    %cst_292 = arith.constant dense<0.000000e+00> : vector<1x10xf32>
    %522 = tpu.matmul %520, %521, %cst_292 {dimension_numbers = #tpu.dot_dimension_numbers<[1], [0], [0], [1], [0, 0, 1, 1], [], []>} : vector<1x24xf32>, vector<24x10xf32>, vector<1x10xf32> -> vector<1x10xf32>
    %c0_293 = arith.constant 0 : index
    %c0_294 = arith.constant 0 : index
    %523 = vector.load %arg21[%c0_293, %c0_294] : memref<1x10xf32, #tpu.memory_space<vmem>>, vector<1x10xf32>
    %524 = arith.addf %522, %523 : vector<1x10xf32>
    %c0_295 = arith.constant 0 : index
    %c0_296 = arith.constant 0 : index
    %c0_297 = arith.constant 0 : index
    %525 = vector.load %arg22[%c0_295, %c0_296, %c0_297] : memref<1x1x10xf32, #tpu.memory_space<vmem>>, vector<1x1x10xf32>
    %526 = vector.shape_cast %525 : vector<1x1x10xf32> to vector<1x10xf32>
    %527 = vector.shape_cast %524 : vector<1x10xf32> to vector<1x1x10xf32>
    tpu.vector_store %arg22[%c0_295, %c0_296, %c0_297], %527 {strides = array<i32>} : memref<1x1x10xf32, #tpu.memory_space<vmem>>, vector<1x1x10xf32>,
    return
  }
  func.func @transform_0(%arg0: i32) -> (i32, i32, i32) {
    %c0_i32 = arith.constant 0 : i32
    %c0_i32_0 = arith.constant 0 : i32
    %c0_i32_1 = arith.constant 0 : i32
    return %arg0, %c0_i32, %c0_i32_0 : i32, i32, i32
  }
  func.func @transform_1(%arg0: i32) -> (i32, i32, i32) {
    %c0_i32 = arith.constant 0 : i32
    %c0_i32_0 = arith.constant 0 : i32
    %c0_i32_1 = arith.constant 0 : i32
    %c0_i32_2 = arith.constant 0 : i32
    return %c0_i32, %c0_i32_0, %c0_i32_1 : i32, i32, i32
  }
  func.func @transform_2(%arg0: i32) -> (i32, i32) {
    %c0_i32 = arith.constant 0 : i32
    %c0_i32_0 = arith.constant 0 : i32
    %c0_i32_1 = arith.constant 0 : i32
    return %c0_i32, %c0_i32_0 : i32, i32
  }
  func.func @transform_3(%arg0: i32) -> (i32, i32, i32) {
    %c0_i32 = arith.constant 0 : i32
    %c0_i32_0 = arith.constant 0 : i32
    %c0_i32_1 = arith.constant 0 : i32
    %c0_i32_2 = arith.constant 0 : i32
    return %c0_i32, %c0_i32_0, %c0_i32_1 : i32, i32, i32
  }
  func.func @transform_4(%arg0: i32) -> (i32, i32) {
    %c0_i32 = arith.constant 0 : i32
    %c0_i32_0 = arith.constant 0 : i32
    %c0_i32_1 = arith.constant 0 : i32
    return %c0_i32, %c0_i32_0 : i32, i32
  }
  func.func @transform_5(%arg0: i32) -> (i32, i32, i32) {
    %c0_i32 = arith.constant 0 : i32
    %c0_i32_0 = arith.constant 0 : i32
    %c0_i32_1 = arith.constant 0 : i32
    %c0_i32_2 = arith.constant 0 : i32
    return %c0_i32, %c0_i32_0, %c0_i32_1 : i32, i32, i32
  }
  func.func @transform_6(%arg0: i32) -> (i32, i32, i32) {
    %c0_i32 = arith.constant 0 : i32
    %c0_i32_0 = arith.constant 0 : i32
    %c0_i32_1 = arith.constant 0 : i32
    %c0_i32_2 = arith.constant 0 : i32
    return %c0_i32, %c0_i32_0, %c0_i32_1 : i32, i32, i32
  }
  func.func @transform_7(%arg0: i32) -> (i32, i32) {
    %c0_i32 = arith.constant 0 : i32
    %c0_i32_0 = arith.constant 0 : i32
    %c0_i32_1 = arith.constant 0 : i32
    return %c0_i32, %c0_i32_0 : i32, i32
  }
  func.func @transform_8(%arg0: i32) -> (i32, i32, i32) {
    %c0_i32 = arith.constant 0 : i32
    %c0_i32_0 = arith.constant 0 : i32
    %c0_i32_1 = arith.constant 0 : i32
    %c0_i32_2 = arith.constant 0 : i32
    return %c0_i32, %c0_i32_0, %c0_i32_1 : i32, i32, i32
  }
  func.func @transform_9(%arg0: i32) -> (i32, i32) {
    %c0_i32 = arith.constant 0 : i32
    %c0_i32_0 = arith.constant 0 : i32
    %c0_i32_1 = arith.constant 0 : i32
    return %c0_i32, %c0_i32_0 : i32, i32
  }
  func.func @transform_10(%arg0: i32) -> (i32, i32, i32) {
    %c0_i32 = arith.constant 0 : i32
    %c0_i32_0 = arith.constant 0 : i32
    %c0_i32_1 = arith.constant 0 : i32
    %c0_i32_2 = arith.constant 0 : i32
    return %c0_i32, %c0_i32_0, %c0_i32_1 : i32, i32, i32
  }
  func.func @transform_11(%arg0: i32) -> (i32, i32) {
    %c0_i32 = arith.constant 0 : i32
    %c0_i32_0 = arith.constant 0 : i32
    %c0_i32_1 = arith.constant 0 : i32
    return %c0_i32, %c0_i32_0 : i32, i32
  }
  func.func @transform_12(%arg0: i32) -> (i32, i32, i32) {
    %c0_i32 = arith.constant 0 : i32
    %c0_i32_0 = arith.constant 0 : i32
    %c0_i32_1 = arith.constant 0 : i32
    %c0_i32_2 = arith.constant 0 : i32
    return %c0_i32, %c0_i32_0, %c0_i32_1 : i32, i32, i32
  }
  func.func @transform_13(%arg0: i32) -> (i32, i32) {
    %c0_i32 = arith.constant 0 : i32
    %c0_i32_0 = arith.constant 0 : i32
    %c0_i32_1 = arith.constant 0 : i32
    return %c0_i32, %c0_i32_0 : i32, i32
  }
  func.func @transform_14(%arg0: i32) -> (i32, i32, i32) {
    %c0_i32 = arith.constant 0 : i32
    %c0_i32_0 = arith.constant 0 : i32
    %c0_i32_1 = arith.constant 0 : i32
    %c0_i32_2 = arith.constant 0 : i32
    return %c0_i32, %c0_i32_0, %c0_i32_1 : i32, i32, i32
  }
  func.func @transform_15(%arg0: i32) -> (i32, i32) {
    %c0_i32 = arith.constant 0 : i32
    %c0_i32_0 = arith.constant 0 : i32
    %c0_i32_1 = arith.constant 0 : i32
    return %c0_i32, %c0_i32_0 : i32, i32
  }
  func.func @transform_16(%arg0: i32) -> (i32, i32) {
    %c0_i32 = arith.constant 0 : i32
    %c0_i32_0 = arith.constant 0 : i32
    %c0_i32_1 = arith.constant 0 : i32
    return %c0_i32, %c0_i32_0 : i32, i32
  }
  func.func @transform_17(%arg0: i32) -> (i32, i32) {
    %c0_i32 = arith.constant 0 : i32
    %c0_i32_0 = arith.constant 0 : i32
    %c0_i32_1 = arith.constant 0 : i32
    return %c0_i32, %c0_i32_0 : i32, i32
  }
  func.func @transform_18(%arg0: i32) -> (i32, i32) {
    %c0_i32 = arith.constant 0 : i32
    %c0_i32_0 = arith.constant 0 : i32
    %c0_i32_1 = arith.constant 0 : i32
    return %c0_i32, %c0_i32_0 : i32, i32
  }
  func.func @transform_19(%arg0: i32) -> (i32, i32) {
    %c0_i32 = arith.constant 0 : i32
    %c0_i32_0 = arith.constant 0 : i32
    %c0_i32_1 = arith.constant 0 : i32
    return %c0_i32, %c0_i32_0 : i32, i32
  }
  func.func @transform_20(%arg0: i32) -> (i32, i32) {
    %c0_i32 = arith.constant 0 : i32
    %c0_i32_0 = arith.constant 0 : i32
    %c0_i32_1 = arith.constant 0 : i32
    return %c0_i32, %c0_i32_0 : i32, i32
  }
  func.func @transform_21(%arg0: i32) -> (i32, i32, i32) {
    %c0_i32 = arith.constant 0 : i32
    %c0_i32_0 = arith.constant 0 : i32
    %c0_i32_1 = arith.constant 0 : i32
    return %arg0, %c0_i32, %c0_i32_0 : i32, i32, i32
  }
}

</mosaic_0001>

<llo_original>
// kernel: _build_forward.1
$region0: #{_build_forward.1}
  #allocation0 [shape = 'u32[]', space=smem, size = 0x4, offset = 0x4, fixed_abs, tag = 'smem constant byte address 0x4 - core index']
  #allocation1 [shape = 'u32[144,128]{1,0:T(1,128)}', space=vmem, size = 0x12000, scoped, tag = 'internal scratch']
  #allocation2 [shape = 'f32[30,30]{1,0:T(8,128)}', space=vmem, size = 0x4000, scoped, tag = 'scratch operand']
  #allocation3 [shape = 'f32[28,280]{1,0:T(8,128)}', space=vmem, size = 0xc000, scoped, tag = 'scratch operand']
  #allocation4 [shape = 'f32[13,104]{1,0:T(8,128)}', space=vmem, size = 0x2000, scoped, tag = 'scratch operand']
  #allocation5 [shape = 'f32[11,110]{1,0:T(8,128)}', space=vmem, size = 0x2000, scoped, tag = 'scratch operand']
  #allocation6 [shape = 'f32[9,108]{1,0:T(8,128)}', space=vmem, size = 0x2000, scoped, tag = 'scratch operand']
  #allocation7 [shape = 'f32[7,98]{1,0:T(8,128)}', space=vmem, size = 0x1000, scoped, tag = 'scratch operand']
  %s0 = inlined_call_operand.vmem [shape: f32[2,30,30], index: 0, kind: input, shape index: {}]
  %s1 = inlined_call_operand.vmem [shape: bf16[3,30,280], index: 1, kind: input, shape index: {}]
  %s2 = inlined_call_operand.vmem [shape: f32[4,280], index: 2, kind: input, shape index: {}]
  %s3 = inlined_call_operand.hbm [shape: bf16[3,280,416], index: 3, kind: input, shape index: {}]
  %s4 = inlined_call_operand.vmem [shape: f32[4,416], index: 4, kind: input, shape index: {}]
  %s5 = inlined_call_operand.hbm [shape: f32[2,416,208], index: 5, kind: input, shape index: {}]
  %s6 = inlined_call_operand.vmem [shape: f32[2,13,26], index: 6, kind: input, shape index: {}]
  %s7 = inlined_call_operand.vmem [shape: bf16[208,104], index: 7, kind: input, shape index: {}]
  %s8 = inlined_call_operand.vmem [shape: bf16[3,104,110], index: 8, kind: input, shape index: {}]
  %s9 = inlined_call_operand.vmem [shape: f32[4,110], index: 9, kind: input, shape index: {}]
  %s10 = inlined_call_operand.vmem [shape: bf16[3,110,108], index: 10, kind: input, shape index: {}]
  %s11 = inlined_call_operand.vmem [shape: f32[4,108], index: 11, kind: input, shape index: {}]
  %s12 = inlined_call_operand.vmem [shape: bf16[3,108,98], index: 12, kind: input, shape index: {}]
  %s13 = inlined_call_operand.vmem [shape: f32[4,98], index: 13, kind: input, shape index: {}]
  %s14 = inlined_call_operand.vmem [shape: bf16[3,98,80], index: 14, kind: input, shape index: {}]
  %s15 = inlined_call_operand.vmem [shape: f32[4,80], index: 15, kind: input, shape index: {}]
  %s16 = inlined_call_operand.vmem [shape: bf16[80,120], index: 16, kind: input, shape index: {}]
  %s17 = inlined_call_operand.vmem [shape: f32[1,120], index: 17, kind: input, shape index: {}]
  %s18 = inlined_call_operand.vmem [shape: f32[120,24], index: 18, kind: input, shape index: {}]
  %s19 = inlined_call_operand.vmem [shape: f32[24,10], index: 19, kind: input, shape index: {}]
  %s20 = inlined_call_operand.vmem [shape: f32[1,10], index: 20, kind: input, shape index: {}]
  %s21 = inlined_call_operand.hbm [shape: f32[2,1,10], index: 21, kind: output, shape index: {}]
  %s22 = sld [smem:[#allocation0]]
  $region125: #{_build_forward.1} parent=0
    _
  %s24 = ssub.s32 1, %s22
  %s25 = scalar_select 0, %s24, %s22
  $region1: #{_build_forward.1} parent=0
    #allocation8 [shape = 'u8[860160]{0}', space=vmem, size = 0xd2000, scoped, tag = 'input window, operand 3, single buffered']
    #allocation9 [shape = 's32[2]{0}', space=sflag, size = 0x8, scoped, tag = 'scoped memory for _build_forward.1']
    #allocation10 [shape = 's32[2]{0}', space=sflag, size = 0x8, scoped, tag = 'scoped memory for _build_forward.1']
    #allocation11 [shape = 'u8[851968]{0}', space=vmem, size = 0xd0000, scoped, tag = 'input window, operand 5, single buffered']
    #allocation12 [shape = 's32[1]{0}', space=sflag, size = 0x4, scoped, tag = 'scoped memory for _build_forward.1']
    #allocation13 [shape = 'u8[1024]{0}', space=vmem, size = 0x400, scoped, tag = 'output window, operand 0']
    %26 = vsyncpa [#allocation9], 0
    %27 = vsyncpa [#allocation12], 0
    %28 = vsyncpa [#allocation10], 0
    %s29 = scalar_lea.sflag [#allocation10], 1
    %30 = vsyncpa %s29, 0
    loop: start=0, step=1, limit=4
    $region2: #{_build_forward.1} parent=1 // loop_pre_header
      _
    $region3: #{_build_forward.1} parent=1 // loop_header
      %s32 = sphi 0, %s36
      %p33 = scmp.ge.s32.totalorder %s32, 4
      %s42 = sphi 0, %s44
      %s45 = sphi 0, %s42
      %s46 = sphi 0, %s45
      %s62 = sphi 0, %s46
      %s66 = sphi 0, %s66
      %s68 = sphi 0, %s66
      %s69 = sphi 0, %s68
      %s83 = sphi 0, %s69
      %s87 = sphi 0, %s87
      %s89 = sphi 0, %s87
      %s90 = sphi 0, %s89
      %s104 = sphi 0, %s90
      %s108 = sphi 0, %s108
      %s110 = sphi 0, %s108
      %s111 = sphi 0, %s110
      %s125 = sphi 0, %s111
      %s129 = sphi 0, %s129
      %s131 = sphi 0, %s129
      %s132 = sphi 0, %s131
      %s146 = sphi 0, %s132
      %s150 = sphi 0, %s150
      %s152 = sphi 0, %s150
      %s153 = sphi 0, %s152
      %s167 = sphi 0, %s153
      %s171 = sphi 0, %s171
      %s173 = sphi 0, %s171
      %s174 = sphi 0, %s173
      %s188 = sphi 0, %s174
      %s192 = sphi 0, %s192
      %s194 = sphi 0, %s192
      %s195 = sphi 0, %s194
      %s209 = sphi 0, %s195
      %s213 = sphi 0, %s213
      %s215 = sphi 0, %s213
      %s216 = sphi 0, %s215
      %s230 = sphi 0, %s216
      %s234 = sphi 0, %s234
      %s236 = sphi 0, %s234
      %s237 = sphi 0, %s236
      %s251 = sphi 0, %s237
      %s255 = sphi 0, %s255
      %s257 = sphi 0, %s255
      %s258 = sphi 0, %s257
      %s272 = sphi 0, %s258
      %s276 = sphi 0, %s276
      %s278 = sphi 0, %s276
      %s279 = sphi 0, %s278
      %s293 = sphi 0, %s279
      %s297 = sphi 0, %s297
      %s299 = sphi 0, %s297
      %s300 = sphi 0, %s299
      %s314 = sphi 0, %s300
      %s318 = sphi 0, %s318
      %s320 = sphi 0, %s318
      %s321 = sphi 0, %s320
      %s335 = sphi 0, %s321
      %s339 = sphi 0, %s339
      %s341 = sphi 0, %s339
      %s342 = sphi 0, %s341
      %s356 = sphi 0, %s342
      %s360 = sphi 0, %s360
      %s362 = sphi 0, %s360
      %s363 = sphi 0, %s362
      %s377 = sphi 0, %s363
      %s381 = sphi 0, %s381
      %s383 = sphi 0, %s381
      %s384 = sphi 0, %s383
      %s398 = sphi 0, %s384
      %s402 = sphi 0, %s402
      %s404 = sphi 0, %s402
      %s405 = sphi 0, %s404
      %s419 = sphi 0, %s405
      %s423 = sphi 0, %s423
      %s425 = sphi 0, %s423
      %s426 = sphi 0, %s425
      %s440 = sphi 0, %s426
      %s444 = sphi 0, %s444
      %s446 = sphi 0, %s444
      %s447 = sphi 0, %s446
      %s461 = sphi 0, %s447
      %s465 = sphi 0, %s465
      %s467 = sphi 0, %s465
      %s468 = sphi 0, %s467
      %s482 = sphi 0, %s468
      %s488 = sphi 0, %s490
      %s491 = sphi 0, %s488
      %s492 = sphi 0, %s491
      %s508 = sphi 0, %s492
    $region4: #{_build_forward.1} parent=1 // loop_header_branch
      %35 = sbr.rel (%p33) target = $region8
    $region5: #{_build_forward.1} parent=1 // loop_body
      %s37 = ssub.s32 %s32, 1
      %s38 = ssub.s32 %s32, 2
      %s39 = sadd.s32 %s32, 1
      %s40 = ssub.s32 %s32, %s39
      %p41 = scmp.eq.s32.totalorder %s40, 0
      %s43 = sadd.s32 %s42, 1
      %s44 = scalar_select %p41, %s42, %s43
      %p47 = pneg %p41
      %p48 = scmp.eq.s32.totalorder %s32, 1
      %p49 = por %p47, %p48
      %p50 = scmp.ne.s32.totalorder %s42, %s45
      %p51 = scmp.eq.s32.totalorder %s32, 0
      %p52 = por %p50, %p51
      %p53 = scmp.ne.s32.totalorder %s42, %s45
      %p54 = scmp.eq.s32.totalorder %s37, 1
      %p55 = por %p53, %p54
      %p56 = scmp.ne.s32.totalorder %s45, %s46
      %p57 = scmp.eq.s32.totalorder %s37, 0
      %p58 = por %p56, %p57
      %p59 = scmp.ne.s32.totalorder %s45, %s46
      %p60 = scmp.eq.s32.totalorder %s38, 1
      %p61 = por %p59, %p60
      %p63 = scmp.ne.s32.totalorder %s46, %s62
      %p64 = scmp.eq.s32.totalorder %s38, 0
      %p65 = por %p63, %p64
      %s67 = sadd.s32 %s66, 1
      %p70 = scmp.eq.s32.totalorder %s32, 1
      %p71 = scmp.ne.s32.totalorder %s66, %s68
      %p72 = scmp.eq.s32.totalorder %s32, 0
      %p73 = por %p71, %p72
      %p74 = scmp.ne.s32.totalorder %s66, %s68
      %p75 = scmp.eq.s32.totalorder %s37, 1
      %p76 = por %p74, %p75
      %p77 = scmp.ne.s32.totalorder %s68, %s69
      %p78 = scmp.eq.s32.totalorder %s37, 0
      %p79 = por %p77, %p78
      %p80 = scmp.ne.s32.totalorder %s68, %s69
      %p81 = scmp.eq.s32.totalorder %s38, 1
      %p82 = por %p80, %p81
      %p84 = scmp.ne.s32.totalorder %s69, %s83
      %p85 = scmp.eq.s32.totalorder %s38, 0
      %p86 = por %p84, %p85
      %s88 = sadd.s32 %s87, 1
      %p91 = scmp.eq.s32.totalorder %s32, 1
      %p92 = scmp.ne.s32.totalorder %s87, %s89
      %p93 = scmp.eq.s32.totalorder %s32, 0
      %p94 = por %p92, %p93
      %p95 = scmp.ne.s32.totalorder %s87, %s89
      %p96 = scmp.eq.s32.totalorder %s37, 1
      %p97 = por %p95, %p96
      %p98 = scmp.ne.s32.totalorder %s89, %s90
      %p99 = scmp.eq.s32.totalorder %s37, 0
      %p100 = por %p98, %p99
      %p101 = scmp.ne.s32.totalorder %s89, %s90
      %p102 = scmp.eq.s32.totalorder %s38, 1
      %p103 = por %p101, %p102
      %p105 = scmp.ne.s32.totalorder %s90, %s104
      %p106 = scmp.eq.s32.totalorder %s38, 0
      %p107 = por %p105, %p106
      %s109 = sadd.s32 %s108, 1
      %p112 = scmp.eq.s32.totalorder %s32, 1
      %p113 = scmp.ne.s32.totalorder %s108, %s110
      %p114 = scmp.eq.s32.totalorder %s32, 0
      %p115 = por %p113, %p114
      %p116 = scmp.ne.s32.totalorder %s108, %s110
      %p117 = scmp.eq.s32.totalorder %s37, 1
      %p118 = por %p116, %p117
      %p119 = scmp.ne.s32.totalorder %s110, %s111
      %p120 = scmp.eq.s32.totalorder %s37, 0
      %p121 = por %p119, %p120
      %p122 = scmp.ne.s32.totalorder %s110, %s111
      %p123 = scmp.eq.s32.totalorder %s38, 1
      %p124 = por %p122, %p123
      %p126 = scmp.ne.s32.totalorder %s111, %s125
      %p127 = scmp.eq.s32.totalorder %s38, 0
      %p128 = por %p126, %p127
      %s130 = sadd.s32 %s129, 1
      %p133 = scmp.eq.s32.totalorder %s32, 1
      %p134 = scmp.ne.s32.totalorder %s129, %s131
      %p135 = scmp.eq.s32.totalorder %s32, 0
      %p136 = por %p134, %p135
      %p137 = scmp.ne.s32.totalorder %s129, %s131
      %p138 = scmp.eq.s32.totalorder %s37, 1
      %p139 = por %p137, %p138
      %p140 = scmp.ne.s32.totalorder %s131, %s132
      %p141 = scmp.eq.s32.totalorder %s37, 0
      %p142 = por %p140, %p141
      %p143 = scmp.ne.s32.totalorder %s131, %s132
      %p144 = scmp.eq.s32.totalorder %s38, 1
      %p145 = por %p143, %p144
      %p147 = scmp.ne.s32.totalorder %s132, %s146
      %p148 = scmp.eq.s32.totalorder %s38, 0
      %p149 = por %p147, %p148
      %s151 = sadd.s32 %s150, 1
      %p154 = scmp.eq.s32.totalorder %s32, 1
      %p155 = scmp.ne.s32.totalorder %s150, %s152
      %p156 = scmp.eq.s32.totalorder %s32, 0
      %p157 = por %p155, %p156
      %p158 = scmp.ne.s32.totalorder %s150, %s152
      %p159 = scmp.eq.s32.totalorder %s37, 1
      %p160 = por %p158, %p159
      %p161 = scmp.ne.s32.totalorder %s152, %s153
      %p162 = scmp.eq.s32.totalorder %s37, 0
      %p163 = por %p161, %p162
      %p164 = scmp.ne.s32.totalorder %s152, %s153
      %p165 = scmp.eq.s32.totalorder %s38, 1
      %p166 = por %p164, %p165
      %p168 = scmp.ne.s32.totalorder %s153, %s167
      %p169 = scmp.eq.s32.totalorder %s38, 0
      %p170 = por %p168, %p169
      %s172 = sadd.s32 %s171, 1
      %p175 = scmp.eq.s32.totalorder %s32, 1
      %p176 = scmp.ne.s32.totalorder %s171, %s173
      %p177 = scmp.eq.s32.totalorder %s32, 0
      %p178 = por %p176, %p177
      %p179 = scmp.ne.s32.totalorder %s171, %s173
      %p180 = scmp.eq.s32.totalorder %s37, 1
      %p181 = por %p179, %p180
      %p182 = scmp.ne.s32.totalorder %s173, %s174
      %p183 = scmp.eq.s32.totalorder %s37, 0
      %p184 = por %p182, %p183
      %p185 = scmp.ne.s32.totalorder %s173, %s174
      %p186 = scmp.eq.s32.totalorder %s38, 1
      %p187 = por %p185, %p186
      %p189 = scmp.ne.s32.totalorder %s174, %s188
      %p190 = scmp.eq.s32.totalorder %s38, 0
      %p191 = por %p189, %p190
      %s193 = sadd.s32 %s192, 1
      %p196 = scmp.eq.s32.totalorder %s32, 1
      %p197 = scmp.ne.s32.totalorder %s192, %s194
      %p198 = scmp.eq.s32.totalorder %s32, 0
      %p199 = por %p197, %p198
      %p200 = scmp.ne.s32.totalorder %s192, %s194
      %p201 = scmp.eq.s32.totalorder %s37, 1
      %p202 = por %p200, %p201
      %p203 = scmp.ne.s32.totalorder %s194, %s195
      %p204 = scmp.eq.s32.totalorder %s37, 0
      %p205 = por %p203, %p204
      %p206 = scmp.ne.s32.totalorder %s194, %s195
      %p207 = scmp.eq.s32.totalorder %s38, 1
      %p208 = por %p206, %p207
      %p210 = scmp.ne.s32.totalorder %s195, %s209
      %p211 = scmp.eq.s32.totalorder %s38, 0
      %p212 = por %p210, %p211
      %s214 = sadd.s32 %s213, 1
      %p217 = scmp.eq.s32.totalorder %s32, 1
      %p218 = scmp.ne.s32.totalorder %s213, %s215
      %p219 = scmp.eq.s32.totalorder %s32, 0
      %p220 = por %p218, %p219
      %p221 = scmp.ne.s32.totalorder %s213, %s215
      %p222 = scmp.eq.s32.totalorder %s37, 1
      %p223 = por %p221, %p222
      %p224 = scmp.ne.s32.totalorder %s215, %s216
      %p225 = scmp.eq.s32.totalorder %s37, 0
      %p226 = por %p224, %p225
      %p227 = scmp.ne.s32.totalorder %s215, %s216
      %p228 = scmp.eq.s32.totalorder %s38, 1
      %p229 = por %p227, %p228
      %p231 = scmp.ne.s32.totalorder %s216, %s230
      %p232 = scmp.eq.s32.totalorder %s38, 0
      %p233 = por %p231, %p232
      %s235 = sadd.s32 %s234, 1
      %p238 = scmp.eq.s32.totalorder %s32, 1
      %p239 = scmp.ne.s32.totalorder %s234, %s236
      %p240 = scmp.eq.s32.totalorder %s32, 0
      %p241 = por %p239, %p240
      %p242 = scmp.ne.s32.totalorder %s234, %s236
      %p243 = scmp.eq.s32.totalorder %s37, 1
      %p244 = por %p242, %p243
      %p245 = scmp.ne.s32.totalorder %s236, %s237
      %p246 = scmp.eq.s32.totalorder %s37, 0
      %p247 = por %p245, %p246
      %p248 = scmp.ne.s32.totalorder %s236, %s237
      %p249 = scmp.eq.s32.totalorder %s38, 1
      %p250 = por %p248, %p249
      %p252 = scmp.ne.s32.totalorder %s237, %s251
      %p253 = scmp.eq.s32.totalorder %s38, 0
      %p254 = por %p252, %p253
      %s256 = sadd.s32 %s255, 1
      %p259 = scmp.eq.s32.totalorder %s32, 1
      %p260 = scmp.ne.s32.totalorder %s255, %s257
      %p261 = scmp.eq.s32.totalorder %s32, 0
      %p262 = por %p260, %p261
      %p263 = scmp.ne.s32.totalorder %s255, %s257
      %p264 = scmp.eq.s32.totalorder %s37, 1
      %p265 = por %p263, %p264
      %p266 = scmp.ne.s32.totalorder %s257, %s258
      %p267 = scmp.eq.s32.totalorder %s37, 0
      %p268 = por %p266, %p267
      %p269 = scmp.ne.s32.totalorder %s257, %s258
      %p270 = scmp.eq.s32.totalorder %s38, 1
      %p271 = por %p269, %p270
      %p273 = scmp.ne.s32.totalorder %s258, %s272
      %p274 = scmp.eq.s32.totalorder %s38, 0
      %p275 = por %p273, %p274
      %s277 = sadd.s32 %s276, 1
      %p280 = scmp.eq.s32.totalorder %s32, 1
      %p281 = scmp.ne.s32.totalorder %s276, %s278
      %p282 = scmp.eq.s32.totalorder %s32, 0
      %p283 = por %p281, %p282
      %p284 = scmp.ne.s32.totalorder %s276, %s278
      %p285 = scmp.eq.s32.totalorder %s37, 1
      %p286 = por %p284, %p285
      %p287 = scmp.ne.s32.totalorder %s278, %s279
      %p288 = scmp.eq.s32.totalorder %s37, 0
      %p289 = por %p287, %p288
      %p290 = scmp.ne.s32.totalorder %s278, %s279
      %p291 = scmp.eq.s32.totalorder %s38, 1
      %p292 = por %p290, %p291
      %p294 = scmp.ne.s32.totalorder %s279, %s293
      %p295 = scmp.eq.s32.totalorder %s38, 0
      %p296 = por %p294, %p295
      %s298 = sadd.s32 %s297, 1
      %p301 = scmp.eq.s32.totalorder %s32, 1
      %p302 = scmp.ne.s32.totalorder %s297, %s299
      %p303 = scmp.eq.s32.totalorder %s32, 0
      %p304 = por %p302, %p303
      %p305 = scmp.ne.s32.totalorder %s297, %s299
      %p306 = scmp.eq.s32.totalorder %s37, 1
      %p307 = por %p305, %p306
      %p308 = scmp.ne.s32.totalorder %s299, %s300
      %p309 = scmp.eq.s32.totalorder %s37, 0
      %p310 = por %p308, %p309
      %p311 = scmp.ne.s32.totalorder %s299, %s300
      %p312 = scmp.eq.s32.totalorder %s38, 1
      %p313 = por %p311, %p312
      %p315 = scmp.ne.s32.totalorder %s300, %s314
      %p316 = scmp.eq.s32.totalorder %s38, 0
      %p317 = por %p315, %p316
      %s319 = sadd.s32 %s318, 1
      %p322 = scmp.eq.s32.totalorder %s32, 1
      %p323 = scmp.ne.s32.totalorder %s318, %s320
      %p324 = scmp.eq.s32.totalorder %s32, 0
      %p325 = por %p323, %p324
      %p326 = scmp.ne.s32.totalorder %s318, %s320
      %p327 = scmp.eq.s32.totalorder %s37, 1
      %p328 = por %p326, %p327
      %p329 = scmp.ne.s32.totalorder %s320, %s321
      %p330 = scmp.eq.s32.totalorder %s37, 0
      %p331 = por %p329, %p330
      %p332 = scmp.ne.s32.totalorder %s320, %s321
      %p333 = scmp.eq.s32.totalorder %s38, 1
      %p334 = por %p332, %p333
      %p336 = scmp.ne.s32.totalorder %s321, %s335
      %p337 = scmp.eq.s32.totalorder %s38, 0
      %p338 = por %p336, %p337
      %s340 = sadd.s32 %s339, 1
      %p343 = scmp.eq.s32.totalorder %s32, 1
      %p344 = scmp.ne.s32.totalorder %s339, %s341
      %p345 = scmp.eq.s32.totalorder %s32, 0
      %p346 = por %p344, %p345
      %p347 = scmp.ne.s32.totalorder %s339, %s341
      %p348 = scmp.eq.s32.totalorder %s37, 1
      %p349 = por %p347, %p348
      %p350 = scmp.ne.s32.totalorder %s341, %s342
      %p351 = scmp.eq.s32.totalorder %s37, 0
      %p352 = por %p350, %p351
      %p353 = scmp.ne.s32.totalorder %s341, %s342
      %p354 = scmp.eq.s32.totalorder %s38, 1
      %p355 = por %p353, %p354
      %p357 = scmp.ne.s32.totalorder %s342, %s356
      %p358 = scmp.eq.s32.totalorder %s38, 0
      %p359 = por %p357, %p358
      %s361 = sadd.s32 %s360, 1
      %p364 = scmp.eq.s32.totalorder %s32, 1
      %p365 = scmp.ne.s32.totalorder %s360, %s362
      %p366 = scmp.eq.s32.totalorder %s32, 0
      %p367 = por %p365, %p366
      %p368 = scmp.ne.s32.totalorder %s360, %s362
      %p369 = scmp.eq.s32.totalorder %s37, 1
      %p370 = por %p368, %p369
      %p371 = scmp.ne.s32.totalorder %s362, %s363
      %p372 = scmp.eq.s32.totalorder %s37, 0
      %p373 = por %p371, %p372
      %p374 = scmp.ne.s32.totalorder %s362, %s363
      %p375 = scmp.eq.s32.totalorder %s38, 1
      %p376 = por %p374, %p375
      %p378 = scmp.ne.s32.totalorder %s363, %s377
      %p379 = scmp.eq.s32.totalorder %s38, 0
      %p380 = por %p378, %p379
      %s382 = sadd.s32 %s381, 1
      %p385 = scmp.eq.s32.totalorder %s32, 1
      %p386 = scmp.ne.s32.totalorder %s381, %s383
      %p387 = scmp.eq.s32.totalorder %s32, 0
      %p388 = por %p386, %p387
      %p389 = scmp.ne.s32.totalorder %s381, %s383
      %p390 = scmp.eq.s32.totalorder %s37, 1
      %p391 = por %p389, %p390
      %p392 = scmp.ne.s32.totalorder %s383, %s384
      %p393 = scmp.eq.s32.totalorder %s37, 0
      %p394 = por %p392, %p393
      %p395 = scmp.ne.s32.totalorder %s383, %s384
      %p396 = scmp.eq.s32.totalorder %s38, 1
      %p397 = por %p395, %p396
      %p399 = scmp.ne.s32.totalorder %s384, %s398
      %p400 = scmp.eq.s32.totalorder %s38, 0
      %p401 = por %p399, %p400
      %s403 = sadd.s32 %s402, 1
      %p406 = scmp.eq.s32.totalorder %s32, 1
      %p407 = scmp.ne.s32.totalorder %s402, %s404
      %p408 = scmp.eq.s32.totalorder %s32, 0
      %p409 = por %p407, %p408
      %p410 = scmp.ne.s32.totalorder %s402, %s404
      %p411 = scmp.eq.s32.totalorder %s37, 1
      %p412 = por %p410, %p411
      %p413 = scmp.ne.s32.totalorder %s404, %s405
      %p414 = scmp.eq.s32.totalorder %s37, 0
      %p415 = por %p413, %p414
      %p416 = scmp.ne.s32.totalorder %s404, %s405
      %p417 = scmp.eq.s32.totalorder %s38, 1
      %p418 = por %p416, %p417
      %p420 = scmp.ne.s32.totalorder %s405, %s419
      %p421 = scmp.eq.s32.totalorder %s38, 0
      %p422 = por %p420, %p421
      %s424 = sadd.s32 %s423, 1
      %p427 = scmp.eq.s32.totalorder %s32, 1
      %p428 = scmp.ne.s32.totalorder %s423, %s425
      %p429 = scmp.eq.s32.totalorder %s32, 0
      %p430 = por %p428, %p429
      %p431 = scmp.ne.s32.totalorder %s423, %s425
      %p432 = scmp.eq.s32.totalorder %s37, 1
      %p433 = por %p431, %p432
      %p434 = scmp.ne.s32.totalorder %s425, %s426
      %p435 = scmp.eq.s32.totalorder %s37, 0
      %p436 = por %p434, %p435
      %p437 = scmp.ne.s32.totalorder %s425, %s426
      %p438 = scmp.eq.s32.totalorder %s38, 1
      %p439 = por %p437, %p438
      %p441 = scmp.ne.s32.totalorder %s426, %s440
      %p442 = scmp.eq.s32.totalorder %s38, 0
      %p443 = por %p441, %p442
      %s445 = sadd.s32 %s444, 1
      %p448 = scmp.eq.s32.totalorder %s32, 1
      %p449 = scmp.ne.s32.totalorder %s444, %s446
      %p450 = scmp.eq.s32.totalorder %s32, 0
      %p451 = por %p449, %p450
      %p452 = scmp.ne.s32.totalorder %s444, %s446
      %p453 = scmp.eq.s32.totalorder %s37, 1
      %p454 = por %p452, %p453
      %p455 = scmp.ne.s32.totalorder %s446, %s447
      %p456 = scmp.eq.s32.totalorder %s37, 0
      %p457 = por %p455, %p456
      %p458 = scmp.ne.s32.totalorder %s446, %s447
      %p459 = scmp.eq.s32.totalorder %s38, 1
      %p460 = por %p458, %p459
      %p462 = scmp.ne.s32.totalorder %s447, %s461
      %p463 = scmp.eq.s32.totalorder %s38, 0
      %p464 = por %p462, %p463
      %s466 = sadd.s32 %s465, 1
      %p469 = scmp.eq.s32.totalorder %s32, 1
      %p470 = scmp.ne.s32.totalorder %s465, %s467
      %p471 = scmp.eq.s32.totalorder %s32, 0
      %p472 = por %p470, %p471
      %p473 = scmp.ne.s32.totalorder %s465, %s467
      %p474 = scmp.eq.s32.totalorder %s37, 1
      %p475 = por %p473, %p474
      %p476 = scmp.ne.s32.totalorder %s467, %s468
      %p477 = scmp.eq.s32.totalorder %s37, 0
      %p478 = por %p476, %p477
      %p479 = scmp.ne.s32.totalorder %s467, %s468
      %p480 = scmp.eq.s32.totalorder %s38, 1
      %p481 = por %p479, %p480
      %p483 = scmp.ne.s32.totalorder %s468, %s482
      %p484 = scmp.eq.s32.totalorder %s38, 0
      %p485 = por %p483, %p484
      %s486 = ssub.s32 %s32, %s39
      %p487 = scmp.eq.s32.totalorder %s486, 0
      %s489 = sadd.s32 %s488, 1
      %s490 = scalar_select %p487, %s488, %s489
      %p493 = pneg %p487
      %p494 = scmp.eq.s32.totalorder %s32, 1
      %p495 = por %p493, %p494
      %p496 = scmp.ne.s32.totalorder %s488, %s491
      %p497 = scmp.eq.s32.totalorder %s32, 0
      %p498 = por %p496, %p497
      %p499 = scmp.ne.s32.totalorder %s488, %s491
      %p500 = scmp.eq.s32.totalorder %s37, 1
      %p501 = por %p499, %p500
      %p502 = scmp.ne.s32.totalorder %s491, %s492
      %p503 = scmp.eq.s32.totalorder %s37, 0
      %p504 = por %p502, %p503
      %p505 = scmp.ne.s32.totalorder %s491, %s492
      %p506 = scmp.eq.s32.totalorder %s38, 1
      %p507 = por %p505, %p506
      %p509 = scmp.ne.s32.totalorder %s492, %s508
      %p510 = scmp.eq.s32.totalorder %s38, 0
      %p511 = por %p509, %p510
      %p512 = scmp.le.s32.totalorder 1, %s32
      %p513 = scmp.lt.s32.totalorder %s32, 3
      %p514 = pnand %p512, %p513
      %p515 = pneg %p514
      // Predicated region
      $region9: #{_build_forward.1} parent=5 // pred_check
        _
      $region10: #{_build_forward.1} parent=5 // pred_check_branch
        %517 = sbr.rel (%p514) target = $region12
      $region11: #{_build_forward.1} parent=5 // pred_region
        %s518 = ssub.s32 %s32, 1
        // Predicated region
        $region13: #{_build_forward.1} parent=11 // pred_check
          %p519 = pneg %p79
        $region14: #{_build_forward.1} parent=11 // pred_check_branch
          %521 = sbr.rel (%p519) target = $region16
        $region15: #{_build_forward.1} parent=11 // pred_region
          _
        $region16: #{_build_forward.1} parent=11 // pred_fallthru
          _
        // Predicated region
        $region17: #{_build_forward.1} parent=11 // pred_check
          %p522 = pneg %p100
        $region18: #{_build_forward.1} parent=11 // pred_check_branch
          %524 = sbr.rel (%p522) target = $region20
        $region19: #{_build_forward.1} parent=11 // pred_region
          _
        $region20: #{_build_forward.1} parent=11 // pred_fallthru
          _
        // Predicated region
        $region21: #{_build_forward.1} parent=11 // pred_check
          %p525 = pneg %p121
        $region22: #{_build_forward.1} parent=11 // pred_check_branch
          %527 = sbr.rel (%p525) target = $region24
        $region23: #{_build_forward.1} parent=11 // pred_region
          %s529 = ssub.s32 26880, 26880
          %530 = vsyncadd [#allocation9], %s529
          %s531 = sshll.u32 [#allocation8], 4
          %s532 = int_to_ptr.vmem [resolvable:$true] %s531
          %537 = dma.hbm_to_vmem [thread:$0]  %s3, 26880, %s532, [#allocation9], 256, 256, 16
        $region24: #{_build_forward.1} parent=11 // pred_fallthru
          _
        // Predicated region
        $region25: #{_build_forward.1} parent=11 // pred_check
          %p538 = pneg %p142
        $region26: #{_build_forward.1} parent=11 // pred_check_branch
          %540 = sbr.rel (%p538) target = $region28
        $region27: #{_build_forward.1} parent=11 // pred_region
          _
        $region28: #{_build_forward.1} parent=11 // pred_fallthru
          _
        // Predicated region
        $region29: #{_build_forward.1} parent=11 // pred_check
          %p541 = pneg %p163
        $region30: #{_build_forward.1} parent=11 // pred_check_branch
          %543 = sbr.rel (%p541) target = $region32
        $region31: #{_build_forward.1} parent=11 // pred_region
          %s545 = ssub.s32 26624, 26624
          %546 = vsyncadd [#allocation12], %s545
          %s547 = sshll.u32 [#allocation11], 4
          %s548 = int_to_ptr.vmem [resolvable:$true] %s547
          %553 = dma.hbm_to_vmem [thread:$0]  %s5, 26624, %s548, [#allocation12], 256, 256, 16
        $region32: #{_build_forward.1} parent=11 // pred_fallthru
          _
        // Predicated region
        $region33: #{_build_forward.1} parent=11 // pred_check
          %p554 = pneg %p184
        $region34: #{_build_forward.1} parent=11 // pred_check_branch
          %556 = sbr.rel (%p554) target = $region36
        $region35: #{_build_forward.1} parent=11 // pred_region
          _
        $region36: #{_build_forward.1} parent=11 // pred_fallthru
          _
        // Predicated region
        $region37: #{_build_forward.1} parent=11 // pred_check
          %p557 = pneg %p205
        $region38: #{_build_forward.1} parent=11 // pred_check_branch
          %559 = sbr.rel (%p557) target = $region40
        $region39: #{_build_forward.1} parent=11 // pred_region
          _
        $region40: #{_build_forward.1} parent=11 // pred_fallthru
          _
        // Predicated region
        $region41: #{_build_forward.1} parent=11 // pred_check
          %p560 = pneg %p226
        $region42: #{_build_forward.1} parent=11 // pred_check_branch
          %562 = sbr.rel (%p560) target = $region44
        $region43: #{_build_forward.1} parent=11 // pred_region
          _
        $region44: #{_build_forward.1} parent=11 // pred_fallthru
          _
        // Predicated region
        $region45: #{_build_forward.1} parent=11 // pred_check
          %p563 = pneg %p247
        $region46: #{_build_forward.1} parent=11 // pred_check_branch
          %565 = sbr.rel (%p563) target = $region48
        $region47: #{_build_forward.1} parent=11 // pred_region
          _
        $region48: #{_build_forward.1} parent=11 // pred_fallthru
          _
        // Predicated region
        $region49: #{_build_forward.1} parent=11 // pred_check
          %p566 = pneg %p268
        $region50: #{_build_forward.1} parent=11 // pred_check_branch
          %568 = sbr.rel (%p566) target = $region52
        $region51: #{_build_forward.1} parent=11 // pred_region
          _
        $region52: #{_build_forward.1} parent=11 // pred_fallthru
          _
        // Predicated region
        $region53: #{_build_forward.1} parent=11 // pred_check
          %p569 = pneg %p289
        $region54: #{_build_forward.1} parent=11 // pred_check_branch
          %571 = sbr.rel (%p569) target = $region56
        $region55: #{_build_forward.1} parent=11 // pred_region
          _
        $region56: #{_build_forward.1} parent=11 // pred_fallthru
          _
        // Predicated region
        $region57: #{_build_forward.1} parent=11 // pred_check
          %p572 = pneg %p310
        $region58: #{_build_forward.1} parent=11 // pred_check_branch
          %574 = sbr.rel (%p572) target = $region60
        $region59: #{_build_forward.1} parent=11 // pred_region
          _
        $region60: #{_build_forward.1} parent=11 // pred_fallthru
          _
        // Predicated region
        $region61: #{_build_forward.1} parent=11 // pred_check
          %p575 = pneg %p331
        $region62: #{_build_forward.1} parent=11 // pred_check_branch
          %577 = sbr.rel (%p575) target = $region64
        $region63: #{_build_forward.1} parent=11 // pred_region
          _
        $region64: #{_build_forward.1} parent=11 // pred_fallthru
          _
        // Predicated region
        $region65: #{_build_forward.1} parent=11 // pred_check
          %p578 = pneg %p352
        $region66: #{_build_forward.1} parent=11 // pred_check_branch
          %580 = sbr.rel (%p578) target = $region68
        $region67: #{_build_forward.1} parent=11 // pred_region
          _
        $region68: #{_build_forward.1} parent=11 // pred_fallthru
          _
        // Predicated region
        $region69: #{_build_forward.1} parent=11 // pred_check
          %p581 = pneg %p373
        $region70: #{_build_forward.1} parent=11 // pred_check_branch
          %583 = sbr.rel (%p581) target = $region72
        $region71: #{_build_forward.1} parent=11 // pred_region
          _
        $region72: #{_build_forward.1} parent=11 // pred_fallthru
          _
        // Predicated region
        $region73: #{_build_forward.1} parent=11 // pred_check
          %p584 = pneg %p394
        $region74: #{_build_forward.1} parent=11 // pred_check_branch
          %586 = sbr.rel (%p584) target = $region76
        $region75: #{_build_forward.1} parent=11 // pred_region
          _
        $region76: #{_build_forward.1} parent=11 // pred_fallthru
          _
        // Predicated region
        $region77: #{_build_forward.1} parent=11 // pred_check
          %p587 = pneg %p415
        $region78: #{_build_forward.1} parent=11 // pred_check_branch
          %589 = sbr.rel (%p587) target = $region80
        $region79: #{_build_forward.1} parent=11 // pred_region
          _
        $region80: #{_build_forward.1} parent=11 // pred_fallthru
          _
        // Predicated region
        $region81: #{_build_forward.1} parent=11 // pred_check
          %p590 = pneg %p436
        $region82: #{_build_forward.1} parent=11 // pred_check_branch
          %592 = sbr.rel (%p590) target = $region84
        $region83: #{_build_forward.1} parent=11 // pred_region
          _
        $region84: #{_build_forward.1} parent=11 // pred_fallthru
          _
        // Predicated region
        $region85: #{_build_forward.1} parent=11 // pred_check
          %p593 = pneg %p457
        $region86: #{_build_forward.1} parent=11 // pred_check_branch
          %595 = sbr.rel (%p593) target = $region88
        $region87: #{_build_forward.1} parent=11 // pred_region
          _
        $region88: #{_build_forward.1} parent=11 // pred_fallthru
          _
        // Predicated region
        $region89: #{_build_forward.1} parent=11 // pred_check
          %p596 = pneg %p478
        $region90: #{_build_forward.1} parent=11 // pred_check_branch
          %598 = sbr.rel (%p596) target = $region92
        $region91: #{_build_forward.1} parent=11 // pred_region
          _
        $region92: #{_build_forward.1} parent=11 // pred_fallthru
          _
      $region12: #{_build_forward.1} parent=5 // pred_fallthru
        _
      %p599 = scmp.lt.s32.totalorder %s32, 2
      // Predicated region
      $region93: #{_build_forward.1} parent=5 // pred_check
        %p600 = pneg %p599
      $region94: #{_build_forward.1} parent=5 // pred_check_branch
        %602 = sbr.rel (%p600) target = $region96
      $region95: #{_build_forward.1} parent=5 // pred_region
        // Predicated region
        $region97: #{_build_forward.1} parent=95 // pred_check
          %p603 = pneg %p52
        $region98: #{_build_forward.1} parent=95 // pred_check_branch
          %605 = sbr.rel (%p603) target = $region100
        $region99: #{_build_forward.1} parent=95 // pred_region
          %p606 = scmp.lt.s32.totalorder %s32, 1
          %s607 = scalar_select %p606, %s32, 1
          %s608 = smul.addr %s607, 4
          %s609 = smul.addr %s608, 8
          %s610 = scalar_lea.vmem %s0, %s609
        $region100: #{_build_forward.1} parent=95 // pred_fallthru
          _
      $region96: #{_build_forward.1} parent=5 // pred_fallthru
        _
      %p611 = scmp.le.s32.totalorder 1, %s32
      %p612 = scmp.lt.s32.totalorder %s32, 3
      %p613 = pnand %p611, %p612
      %p614 = pneg %p613
      // Predicated region
      $region101: #{_build_forward.1} parent=5 // pred_check
        _
      $region102: #{_build_forward.1} parent=5 // pred_check_branch
        %616 = sbr.rel (%p613) target = $region104
      $region103: #{_build_forward.1} parent=5 // pred_region
        %s617 = ssub.s32 %s32, 1
        // Predicated region
        $region105: #{_build_forward.1} parent=103 // pred_check
          %p618 = pneg %p121
        $region106: #{_build_forward.1} parent=103 // pred_check_branch
          %620 = sbr.rel (%p618) target = $region108
        $region107: #{_build_forward.1} parent=103 // pred_region
          %621 = dma.done [#allocation9], 26880
        $region108: #{_build_forward.1} parent=103 // pred_fallthru
          _
        // Predicated region
        $region109: #{_build_forward.1} parent=103 // pred_check
          %p622 = pneg %p163
        $region110: #{_build_forward.1} parent=103 // pred_check_branch
          %624 = sbr.rel (%p622) target = $region112
        $region111: #{_build_forward.1} parent=103 // pred_region
          %625 = dma.done [#allocation12], 26624
        $region112: #{_build_forward.1} parent=103 // pred_fallthru
          _
        %p626 = scmp.lt.s32.totalorder %s37, 1
        %s627 = scalar_select %p626, %s37, 1
        %s628 = smul.addr %s627, 4
        %s629 = smul.addr %s628, 8
        %s630 = scalar_lea.vmem %s0, %s629
        %p631 = pneg %p58
        %p632 = pneg %p55
        %p633 = pneg %p79
        %p634 = pneg %p76
        %p635 = pneg %p100
        %p636 = pneg %p97
        %p637 = pneg %p121
        %p638 = pneg %p118
        %p639 = pneg %p142
        %p640 = pneg %p139
        %p641 = pneg %p163
        %p642 = pneg %p160
        %p643 = pneg %p184
        %p644 = pneg %p181
        %p645 = pneg %p205
        %p646 = pneg %p202
        %p647 = pneg %p226
        %p648 = pneg %p223
        %p649 = pneg %p247
        %p650 = pneg %p244
        %p651 = pneg %p268
        %p652 = pneg %p265
        %p653 = pneg %p289
        %p654 = pneg %p286
        %p655 = pneg %p310
        %p656 = pneg %p307
        %p657 = pneg %p331
        %p658 = pneg %p328
        %p659 = pneg %p352
        %p660 = pneg %p349
        %p661 = pneg %p373
        %p662 = pneg %p370
        %p663 = pneg %p394
        %p664 = pneg %p391
        %p665 = pneg %p415
        %p666 = pneg %p412
        %p667 = pneg %p436
        %p668 = pneg %p433
        %p669 = pneg %p457
        %p670 = pneg %p454
        %p671 = pneg %p478
        %p672 = pneg %p475
        %p673 = pneg %p504
        %p674 = pneg %p501
        %s675 = sand.u32 %s491, 1
        %s676 = scalar_lea.sflag [#allocation10], %s675
        %s677 = sand.u32 %s491, 1
        %s678 = scalar_lea.vmem [#allocation13], %s677
        %p679 = scmp.lt.s32.totalorder %s37, 1
        %s680 = scalar_select %p679, %s37, 1
        %s681 = smul.addr %s680, 4
        %s682 = smul.addr %s681, 8
        %s683 = scalar_lea.vmem %s0, %s682
        %v685 = vld [vmem:[%s683] sm:$0xff]
        %v686 = vld [vmem:[%s683 + $0x8] sm:$0xff]
        %v687 = vld [vmem:[%s683 + $0x10] sm:$0xff]
        %v688 = vld [vmem:[%s683 + $0x18] sm:$0x3f]
        %vm689 = vcmask 244736
        %690 = vst.msk [vmem:[#allocation2] sm:$0xff] %vm689, %v685
        %691 = vst.msk [vmem:[#allocation2 + $0x8] sm:$0xff] %vm689, %v686
        %692 = vst.msk [vmem:[#allocation2 + $0x10] sm:$0xff] %vm689, %v687
        %vm693 = vcmask 242688
        %694 = vst.msk [vmem:[#allocation2 + $0x18] sm:$0x3f] %vm693, %v688
        %v695 = vld [vmem:[#allocation2] sm:$0xff]
        %v696 = vld [vmem:[#allocation2 + $0x8] sm:$0xff]
        %v697 = vld [vmem:[#allocation2 + $0x10] sm:$0xff]
        %v698 = vld [vmem:[#allocation2 + $0x18] sm:$0xf]
        %v699 = vpack.c.bf16 %v696, %v695
        %v700 = vpack.c.bf16 %v698, %v697
        %v701 = vld [vmem:[%s1] sm:$0xff]
        %v702 = vld [vmem:[%s1 + $0x8] sm:$0xf]
        %v703 = vld [vmem:[%s1 + $0xc] sm:$0xff]
        %v704 = vld [vmem:[%s1 + $0x14] sm:$0xf]
        %v705 = vld [vmem:[%s1 + $0x18] sm:$0xff]
        %v706 = vld [vmem:[%s1 + $0x20] sm:$0xf]
        %v707 = vld [vmem:[%s1 + $0x24] sm:$0x77]
        %v708 = vld [vmem:[%s1 + $0x2c] sm:$0x7]
        %v709 = vld [vmem:[#allocation2 + $0x1] sm:$0xff]
        %v710 = vld [vmem:[#allocation2 + $0x9] sm:$0xff]
        %v711 = vld [vmem:[#allocation2 + $0x11] sm:$0xff]
        %v712 = vld [vmem:[#allocation2 + $0x19] sm:$0xf]
        %v713 = vpack.c.bf16 %v710, %v709
        %v714 = vpack.c.bf16 %v712, %v711
        %s715 = scalar_lea.vmem %s1, 48
        %v716 = vld [vmem:[%s715] sm:$0xff]
        %v717 = vld [vmem:[%s715 + $0x8] sm:$0xf]
        %v718 = vld [vmem:[%s715 + $0xc] sm:$0xff]
        %v719 = vld [vmem:[%s715 + $0x14] sm:$0xf]
        %v720 = vld [vmem:[%s715 + $0x18] sm:$0xff]
        %v721 = vld [vmem:[%s715 + $0x20] sm:$0xf]
        %v722 = vld [vmem:[%s715 + $0x24] sm:$0x77]
        %v723 = vld [vmem:[%s715 + $0x2c] sm:$0x7]
        %v732 = vunpack.c.l.b16 %v716
        %v733 = vunpack.c.h.b16 %v716
        %v734 = vunpack.c.l.b16 %v717
        %v735 = vunpack.c.l.b16 %v718
        %v736 = vunpack.c.h.b16 %v718
        %v737 = vunpack.c.l.b16 %v719
        %v738 = vunpack.c.l.b16 %v720
        %v739 = vunpack.c.h.b16 %v720
        %v740 = vunpack.c.l.b16 %v721
        %v741 = vunpack.c.l.b16 %v722
        %v742 = vunpack.c.h.b16 %v722
        %v743 = vunpack.c.l.b16 %v723
        %v744 = vpack.c.b16 %v735, %v732
        %v745 = vpack.c.b16 %v736, %v733
        %v746 = vpack.c.b16 %v737, %v734
        %v747 = vpack.c.b16 %v741, %v738
        %v748 = vpack.c.b16 %v742, %v739
        %v749 = vpack.c.b16 %v743, %v740
        %v754 = vsel %vm689, %v713, 0
        %v757 = vsel %vm689, %v714, 0
        %vm759 = vcmask 1046528
        %v761 = vsel %vm759, %v747, 0
        %v764 = vsel %vm759, %v748, 0
        %v767 = vsel %vm759, %v749, 0
        %769 = vmatprep.subr.bf16.mxu0 %v745
        %770 = vmatpush1.bf16.msra.mxu0 %v744
        %771 = vmatprep.subr.bf16.mxu0 %v764
        %772 = vmatpush1.bf16.msra.mxu0 %v761
        %773 = vmatprep.subr.bf16.mxu0 0
        %774 = vmatpush1.bf16.msra.mxu0 0
        %775 = vmatprep.subr.bf16.mxu0 0
        %776 = vmatpush1.bf16.msra.mxu0 0
        %777 = vmatprep.subr.bf16.mxu0 0
        %778 = vmatpush1.bf16.msra.mxu0 0
        %779 = vmatprep.subr.bf16.mxu0 0
        %780 = vmatpush1.bf16.msra.mxu0 0
        %781 = vmatprep.subr.bf16.mxu0 0
        %782 = vmatpush1.bf16.msra.mxu0 0
        %783 = vmatprep.subr.bf16.mxu0 0
        %784 = vmatpush1.bf16.msra.mxu0 0
        %785 = vmatprep.subr.bf16.mxu0 0
        %786 = vmatpush1.bf16.msra.mxu0 0
        %787 = vmatprep.subr.bf16.mxu0 0
        %788 = vmatpush1.bf16.msra.mxu0 0
        %789 = vmatprep.subr.bf16.mxu0 0
        %790 = vmatpush1.bf16.msra.mxu0 0
        %791 = vmatprep.subr.bf16.mxu0 0
        %792 = vmatpush1.bf16.msra.mxu0 0
        %793 = vmatprep.subr.bf16.mxu0 0
        %794 = vmatpush1.bf16.msra.mxu0 0
        %795 = vmatprep.subr.bf16.mxu0 0
        %796 = vmatpush1.bf16.msra.mxu0 0
        %797 = vmatprep.subr.bf16.mxu0 0
        %798 = vmatpush1.bf16.msra.mxu0 0
        %799 = vmatprep.subr.bf16.mxu0 0
        %800 = vmatpush1.bf16.msra.mxu0 0
        %801 = vmatprep.mubr.bf16.mxu0 0
        %802 = vmatmul.mubr.bf16.gmra.mrb[0].mxu0 %v754
        %v803 = vpop.f32.mrb[0].mxu0
        %v804 = vadd.f32 0.0, %v803
        %v805 = vpop.f32.mrb[0].mxu0
        %v806 = vadd.f32 0.0, %v805
        %v807 = vpop.f32.mrb[0].mxu0
        %v808 = vadd.f32 0.0, %v807
        %v809 = vpop.f32.mrb[0].mxu0
        %v810 = vadd.f32 0.0, %v809
        %811 = vmatprep.mubr.bf16.mxu0 0
        %812 = vmatmul.mubr.bf16.gmra.mrb[0].mxu0 %v757
        %v813 = vpop.f32.mrb[0].mxu0
        %v814 = vadd.f32 0.0, %v813
        %v815 = vpop.f32.mrb[0].mxu0
        %v816 = vadd.f32 0.0, %v815
        %v817 = vpop.f32.mrb[0].mxu0
        %v818 = vadd.f32 0.0, %v817
        %v819 = vpop.f32.mrb[0].mxu0
        %v820 = vadd.f32 0.0, %v819
        %821 = vdwg.mxu0
        %822 = vmatprep.subr.bf16.mxu0 0
        %823 = vmatpush1.bf16.msra.mxu0 %v746
        %824 = vmatprep.subr.bf16.mxu0 0
        %825 = vmatpush1.bf16.msra.mxu0 %v767
        %826 = vmatprep.subr.bf16.mxu0 0
        %827 = vmatpush1.bf16.msra.mxu0 0
        %828 = vmatprep.subr.bf16.mxu0 0
        %829 = vmatpush1.bf16.msra.mxu0 0
        %830 = vmatprep.subr.bf16.mxu0 0
        %831 = vmatpush1.bf16.msra.mxu0 0
        %832 = vmatprep.subr.bf16.mxu0 0
        %833 = vmatpush1.bf16.msra.mxu0 0
        %834 = vmatprep.subr.bf16.mxu0 0
        %835 = vmatpush1.bf16.msra.mxu0 0
        %836 = vmatprep.subr.bf16.mxu0 0
        %837 = vmatpush1.bf16.msra.mxu0 0
        %838 = vmatprep.subr.bf16.mxu0 0
        %839 = vmatpush1.bf16.msra.mxu0 0
        %840 = vmatprep.subr.bf16.mxu0 0
        %841 = vmatpush1.bf16.msra.mxu0 0
        %842 = vmatprep.subr.bf16.mxu0 0
        %843 = vmatpush1.bf16.msra.mxu0 0
        %844 = vmatprep.subr.bf16.mxu0 0
        %845 = vmatpush1.bf16.msra.mxu0 0
        %846 = vmatprep.subr.bf16.mxu0 0
        %847 = vmatpush1.bf16.msra.mxu0 0
        %848 = vmatprep.subr.bf16.mxu0 0
        %849 = vmatpush1.bf16.msra.mxu0 0
        %850 = vmatprep.subr.bf16.mxu0 0
        %851 = vmatpush1.bf16.msra.mxu0 0
        %852 = vmatprep.subr.bf16.mxu0 0
        %853 = vmatpush1.bf16.msra.mxu0 0
        %854 = vmatprep.mubr.bf16.mxu0 0
        %855 = vmatmul.mubr.bf16.gmra.mrb[0].mxu0 %v754
        %v856 = vpop.f32.mrb[0].mxu0
        %v857 = vadd.f32 0.0, %v856
        %v858 = vpop.f32.mrb[0].mxu0
        %v859 = vpop.f32.mrb[0].mxu0
        %v860 = vadd.f32 0.0, %v859
        %v861 = vpop.f32.mrb[0].mxu0
        %862 = vmatprep.mubr.bf16.mxu0 0
        %863 = vmatmul.mubr.bf16.gmra.mrb[0].mxu0 %v757
        %v864 = vpop.f32.mrb[0].mxu0
        %v865 = vadd.f32 0.0, %v864
        %v866 = vpop.f32.mrb[0].mxu0
        %v867 = vpop.f32.mrb[0].mxu0
        %v868 = vadd.f32 0.0, %v867
        %v869 = vpop.f32.mrb[0].mxu0
        %870 = vdwg.mxu0
        %v879 = vunpack.c.l.b16 %v701
        %v880 = vunpack.c.h.b16 %v701
        %v881 = vunpack.c.l.b16 %v702
        %v882 = vunpack.c.l.b16 %v703
        %v883 = vunpack.c.h.b16 %v703
        %v884 = vunpack.c.l.b16 %v704
        %v885 = vunpack.c.l.b16 %v705
        %v886 = vunpack.c.h.b16 %v705
        %v887 = vunpack.c.l.b16 %v706
        %v888 = vunpack.c.l.b16 %v707
        %v889 = vunpack.c.h.b16 %v707
        %v890 = vunpack.c.l.b16 %v708
        %v891 = vpack.c.b16 %v882, %v879
        %v892 = vpack.c.b16 %v883, %v880
        %v893 = vpack.c.b16 %v884, %v881
        %v894 = vpack.c.b16 %v888, %v885
        %v895 = vpack.c.b16 %v889, %v886
        %v896 = vpack.c.b16 %v890, %v887
        %v901 = vsel %vm689, %v699, 0
        %v904 = vsel %vm689, %v700, 0
        %v907 = vsel %vm759, %v894, 0
        %v910 = vsel %vm759, %v895, 0
        %v913 = vsel %vm759, %v896, 0
        %915 = vmatprep.subr.bf16.mxu0 %v892
        %916 = vmatpush1.bf16.msra.mxu0 %v891
        %917 = vmatprep.subr.bf16.mxu0 %v910
        %918 = vmatpush1.bf16.msra.mxu0 %v907
        %919 = vmatprep.subr.bf16.mxu0 0
        %920 = vmatpush1.bf16.msra.mxu0 0
        %921 = vmatprep.subr.bf16.mxu0 0
        %922 = vmatpush1.bf16.msra.mxu0 0
        %923 = vmatprep.subr.bf16.mxu0 0
        %924 = vmatpush1.bf16.msra.mxu0 0
        %925 = vmatprep.subr.bf16.mxu0 0
        %926 = vmatpush1.bf16.msra.mxu0 0
        %927 = vmatprep.subr.bf16.mxu0 0
        %928 = vmatpush1.bf16.msra.mxu0 0
        %929 = vmatprep.subr.bf16.mxu0 0
        %930 = vmatpush1.bf16.msra.mxu0 0
        %931 = vmatprep.subr.bf16.mxu0 0
        %932 = vmatpush1.bf16.msra.mxu0 0
        %933 = vmatprep.subr.bf16.mxu0 0
        %934 = vmatpush1.bf16.msra.mxu0 0
        %935 = vmatprep.subr.bf16.mxu0 0
        %936 = vmatpush1.bf16.msra.mxu0 0
        %937 = vmatprep.subr.bf16.mxu0 0
        %938 = vmatpush1.bf16.msra.mxu0 0
        %939 = vmatprep.subr.bf16.mxu0 0
        %940 = vmatpush1.bf16.msra.mxu0 0
        %941 = vmatprep.subr.bf16.mxu0 0
        %942 = vmatpush1.bf16.msra.mxu0 0
        %943 = vmatprep.subr.bf16.mxu0 0
        %944 = vmatpush1.bf16.msra.mxu0 0
        %945 = vmatprep.subr.bf16.mxu0 0
        %946 = vmatpush1.bf16.msra.mxu0 0
        %947 = vmatprep.mubr.bf16.mxu0 0
        %948 = vmatmul.mubr.bf16.gmra.mrb[0].mxu0 %v901
        %v949 = vpop.f32.mrb[0].mxu0
        %v950 = vadd.f32 %v804, %v949
        %v951 = vpop.f32.mrb[0].mxu0
        %v952 = vadd.f32 %v806, %v951
        %v953 = vpop.f32.mrb[0].mxu0
        %v954 = vadd.f32 %v808, %v953
        %v955 = vpop.f32.mrb[0].mxu0
        %v956 = vadd.f32 %v810, %v955
        %957 = vmatprep.mubr.bf16.mxu0 0
        %958 = vmatmul.mubr.bf16.gmra.mrb[0].mxu0 %v904
        %v959 = vpop.f32.mrb[0].mxu0
        %v960 = vadd.f32 %v814, %v959
        %v961 = vpop.f32.mrb[0].mxu0
        %v962 = vadd.f32 %v816, %v961
        %v963 = vpop.f32.mrb[0].mxu0
        %v964 = vadd.f32 %v818, %v963
        %v965 = vpop.f32.mrb[0].mxu0
        %v966 = vadd.f32 %v820, %v965
        %967 = vdwg.mxu0
        %968 = vmatprep.subr.bf16.mxu0 0
        %969 = vmatpush1.bf16.msra.mxu0 %v893
        %970 = vmatprep.subr.bf16.mxu0 0
        %971 = vmatpush1.bf16.msra.mxu0 %v913
        %972 = vmatprep.subr.bf16.mxu0 0
        %973 = vmatpush1.bf16.msra.mxu0 0
        %974 = vmatprep.subr.bf16.mxu0 0
        %975 = vmatpush1.bf16.msra.mxu0 0
        %976 = vmatprep.subr.bf16.mxu0 0
        %977 = vmatpush1.bf16.msra.mxu0 0
        %978 = vmatprep.subr.bf16.mxu0 0
        %979 = vmatpush1.bf16.msra.mxu0 0
        %980 = vmatprep.subr.bf16.mxu0 0
        %981 = vmatpush1.bf16.msra.mxu0 0
        %982 = vmatprep.subr.bf16.mxu0 0
        %983 = vmatpush1.bf16.msra.mxu0 0
        %984 = vmatprep.subr.bf16.mxu0 0
        %985 = vmatpush1.bf16.msra.mxu0 0
        %986 = vmatprep.subr.bf16.mxu0 0
        %987 = vmatpush1.bf16.msra.mxu0 0
        %988 = vmatprep.subr.bf16.mxu0 0
        %989 = vmatpush1.bf16.msra.mxu0 0
        %990 = vmatprep.subr.bf16.mxu0 0
        %991 = vmatpush1.bf16.msra.mxu0 0
        %992 = vmatprep.subr.bf16.mxu0 0
        %993 = vmatpush1.bf16.msra.mxu0 0
        %994 = vmatprep.subr.bf16.mxu0 0
        %995 = vmatpush1.bf16.msra.mxu0 0
        %996 = vmatprep.subr.bf16.mxu0 0
        %997 = vmatpush1.bf16.msra.mxu0 0
        %998 = vmatprep.subr.bf16.mxu0 0
        %999 = vmatpush1.bf16.msra.mxu0 0
        %1000 = vmatprep.mubr.bf16.mxu0 0
        %1001 = vmatmul.mubr.bf16.gmra.mrb[0].mxu0 %v901
        %v1002 = vpop.f32.mrb[0].mxu0
        %v1003 = vadd.f32 %v857, %v1002
        %v1004 = vpop.f32.mrb[0].mxu0
        %v1005 = vpop.f32.mrb[0].mxu0
        %v1006 = vadd.f32 %v860, %v1005
        %v1007 = vpop.f32.mrb[0].mxu0
        %1008 = vmatprep.mubr.bf16.mxu0 0
        %1009 = vmatmul.mubr.bf16.gmra.mrb[0].mxu0 %v904
        %v1010 = vpop.f32.mrb[0].mxu0
        %v1011 = vadd.f32 %v865, %v1010
        %v1012 = vpop.f32.mrb[0].mxu0
        %v1013 = vpop.f32.mrb[0].mxu0
        %v1014 = vadd.f32 %v868, %v1013
        %v1015 = vpop.f32.mrb[0].mxu0
        %1016 = vdwg.mxu0
        %v1017 = vld [vmem:[#allocation2 + $0x2] sm:$0xff]
        %v1018 = vld [vmem:[#allocation2 + $0xa] sm:$0xff]
        %v1019 = vld [vmem:[#allocation2 + $0x12] sm:$0xff]
        %v1020 = vld [vmem:[#allocation2 + $0x1a] sm:$0xf]
        %v1021 = vpack.c.bf16 %v1018, %v1017
        %v1022 = vpack.c.bf16 %v1020, %v1019
        %s1023 = scalar_lea.vmem %s1, 96
        %v1024 = vld [vmem:[%s1023] sm:$0xff]
        %v1025 = vld [vmem:[%s1023 + $0x8] sm:$0xf]
        %v1026 = vld [vmem:[%s1023 + $0xc] sm:$0xff]
        %v1027 = vld [vmem:[%s1023 + $0x14] sm:$0xf]
        %v1028 = vld [vmem:[%s1023 + $0x18] sm:$0xff]
        %v1029 = vld [vmem:[%s1023 + $0x20] sm:$0xf]
        %v1030 = vld [vmem:[%s1023 + $0x24] sm:$0x77]
        %v1031 = vld [vmem:[%s1023 + $0x2c] sm:$0x7]
        %v1040 = vunpack.c.l.b16 %v1024
        %v1041 = vunpack.c.h.b16 %v1024
        %v1042 = vunpack.c.l.b16 %v1025
        %v1043 = vunpack.c.l.b16 %v1026
        %v1044 = vunpack.c.h.b16 %v1026
        %v1045 = vunpack.c.l.b16 %v1027
        %v1046 = vunpack.c.l.b16 %v1028
        %v1047 = vunpack.c.h.b16 %v1028
        %v1048 = vunpack.c.l.b16 %v1029
        %v1049 = vunpack.c.l.b16 %v1030
        %v1050 = vunpack.c.h.b16 %v1030
        %v1051 = vunpack.c.l.b16 %v1031
        %v1052 = vpack.c.b16 %v1043, %v1040
        %v1053 = vpack.c.b16 %v1044, %v1041
        %v1054 = vpack.c.b16 %v1045, %v1042
        %v1055 = vpack.c.b16 %v1049, %v1046
        %v1056 = vpack.c.b16 %v1050, %v1047
        %v1057 = vpack.c.b16 %v1051, %v1048
        %v1062 = vsel %vm689, %v1021, 0
        %v1065 = vsel %vm689, %v1022, 0
        %v1068 = vsel %vm759, %v1055, 0
        %v1071 = vsel %vm759, %v1056, 0
        %v1074 = vsel %vm759, %v1057, 0
        %1076 = vmatprep.subr.bf16.mxu0 %v1053
        %1077 = vmatpush1.bf16.msra.mxu0 %v1052
        %1078 = vmatprep.subr.bf16.mxu0 %v1071
        %1079 = vmatpush1.bf16.msra.mxu0 %v1068
        %1080 = vmatprep.subr.bf16.mxu0 0
        %1081 = vmatpush1.bf16.msra.mxu0 0
        %1082 = vmatprep.subr.bf16.mxu0 0
        %1083 = vmatpush1.bf16.msra.mxu0 0
        %1084 = vmatprep.subr.bf16.mxu0 0
        %1085 = vmatpush1.bf16.msra.mxu0 0
        %1086 = vmatprep.subr.bf16.mxu0 0
        %1087 = vmatpush1.bf16.msra.mxu0 0
        %1088 = vmatprep.subr.bf16.mxu0 0
        %1089 = vmatpush1.bf16.msra.mxu0 0
        %1090 = vmatprep.subr.bf16.mxu0 0
        %1091 = vmatpush1.bf16.msra.mxu0 0
        %1092 = vmatprep.subr.bf16.mxu0 0
        %1093 = vmatpush1.bf16.msra.mxu0 0
        %1094 = vmatprep.subr.bf16.mxu0 0
        %1095 = vmatpush1.bf16.msra.mxu0 0
        %1096 = vmatprep.subr.bf16.mxu0 0
        %1097 = vmatpush1.bf16.msra.mxu0 0
        %1098 = vmatprep.subr.bf16.mxu0 0
        %1099 = vmatpush1.bf16.msra.mxu0 0
        %1100 = vmatprep.subr.bf16.mxu0 0
        %1101 = vmatpush1.bf16.msra.mxu0 0
        %1102 = vmatprep.subr.bf16.mxu0 0
        %1103 = vmatpush1.bf16.msra.mxu0 0
        %1104 = vmatprep.subr.bf16.mxu0 0
        %1105 = vmatpush1.bf16.msra.mxu0 0
        %1106 = vmatprep.subr.bf16.mxu0 0
        %1107 = vmatpush1.bf16.msra.mxu0 0
        %1108 = vmatprep.mubr.bf16.mxu0 0
        %1109 = vmatmul.mubr.bf16.gmra.mrb[0].mxu0 %v1062
        %v1110 = vpop.f32.mrb[0].mxu0
        %v1111 = vadd.f32 0.0, %v1110
        %v1112 = vpop.f32.mrb[0].mxu0
        %v1113 = vadd.f32 0.0, %v1112
        %v1114 = vpop.f32.mrb[0].mxu0
        %v1115 = vadd.f32 0.0, %v1114
        %v1116 = vpop.f32.mrb[0].mxu0
        %v1117 = vadd.f32 0.0, %v1116
        %1118 = vmatprep.mubr.bf16.mxu0 0
        %1119 = vmatmul.mubr.bf16.gmra.mrb[0].mxu0 %v1065
        %v1120 = vpop.f32.mrb[0].mxu0
        %v1121 = vadd.f32 0.0, %v1120
        %v1122 = vpop.f32.mrb[0].mxu0
        %v1123 = vadd.f32 0.0, %v1122
        %v1124 = vpop.f32.mrb[0].mxu0
        %v1125 = vadd.f32 0.0, %v1124
        %v1126 = vpop.f32.mrb[0].mxu0
        %v1127 = vadd.f32 0.0, %v1126
        %1128 = vdwg.mxu0
        %1129 = vmatprep.subr.bf16.mxu0 0
        %1130 = vmatpush1.bf16.msra.mxu0 %v1054
        %1131 = vmatprep.subr.bf16.mxu0 0
        %1132 = vmatpush1.bf16.msra.mxu0 %v1074
        %1133 = vmatprep.subr.bf16.mxu0 0
        %1134 = vmatpush1.bf16.msra.mxu0 0
        %1135 = vmatprep.subr.bf16.mxu0 0
        %1136 = vmatpush1.bf16.msra.mxu0 0
        %1137 = vmatprep.subr.bf16.mxu0 0
        %1138 = vmatpush1.bf16.msra.mxu0 0
        %1139 = vmatprep.subr.bf16.mxu0 0
        %1140 = vmatpush1.bf16.msra.mxu0 0
        %1141 = vmatprep.subr.bf16.mxu0 0
        %1142 = vmatpush1.bf16.msra.mxu0 0
        %1143 = vmatprep.subr.bf16.mxu0 0
        %1144 = vmatpush1.bf16.msra.mxu0 0
        %1145 = vmatprep.subr.bf16.mxu0 0
        %1146 = vmatpush1.bf16.msra.mxu0 0
        %1147 = vmatprep.subr.bf16.mxu0 0
        %1148 = vmatpush1.bf16.msra.mxu0 0
        %1149 = vmatprep.subr.bf16.mxu0 0
        %1150 = vmatpush1.bf16.msra.mxu0 0
        %1151 = vmatprep.subr.bf16.mxu0 0
        %1152 = vmatpush1.bf16.msra.mxu0 0
        %1153 = vmatprep.subr.bf16.mxu0 0
        %1154 = vmatpush1.bf16.msra.mxu0 0
        %1155 = vmatprep.subr.bf16.mxu0 0
        %1156 = vmatpush1.bf16.msra.mxu0 0
        %1157 = vmatprep.subr.bf16.mxu0 0
        %1158 = vmatpush1.bf16.msra.mxu0 0
        %1159 = vmatprep.subr.bf16.mxu0 0
        %1160 = vmatpush1.bf16.msra.mxu0 0
        %1161 = vmatprep.mubr.bf16.mxu0 0
        %1162 = vmatmul.mubr.bf16.gmra.mrb[0].mxu0 %v1062
        %v1163 = vpop.f32.mrb[0].mxu0
        %v1164 = vadd.f32 0.0, %v1163
        %v1165 = vpop.f32.mrb[0].mxu0
        %v1166 = vpop.f32.mrb[0].mxu0
        %v1167 = vadd.f32 0.0, %v1166
        %v1168 = vpop.f32.mrb[0].mxu0
        %1169 = vmatprep.mubr.bf16.mxu0 0
        %1170 = vmatmul.mubr.bf16.gmra.mrb[0].mxu0 %v1065
        %v1171 = vpop.f32.mrb[0].mxu0
        %v1172 = vadd.f32 0.0, %v1171
        %v1173 = vpop.f32.mrb[0].mxu0
        %v1174 = vpop.f32.mrb[0].mxu0
        %v1175 = vadd.f32 0.0, %v1174
        %v1176 = vpop.f32.mrb[0].mxu0
        %1177 = vdwg.mxu0
        %v1178 = vadd.f32 %v950, %v1111
        %v1179 = vadd.f32 %v952, %v1113
        %v1180 = vadd.f32 %v1003, %v1164
        %v1181 = vadd.f32 %v954, %v1115
        %v1182 = vadd.f32 %v956, %v1117
        %v1183 = vadd.f32 %v1006, %v1167
        %v1184 = vadd.f32 %v960, %v1121
        %v1185 = vadd.f32 %v962, %v1123
        %v1186 = vadd.f32 %v1011, %v1172
        %v1187 = vadd.f32 %v964, %v1125
        %v1188 = vadd.f32 %v966, %v1127
        %v1189 = vadd.f32 %v1014, %v1175
        %v1190 = vmax.f32 %v1178, 0.0
        %v1191 = vmax.f32 %v1179, 0.0
        %v1192 = vmax.f32 %v1180, 0.0
        %v1193 = vmax.f32 %v1181, 0.0
        %v1194 = vmax.f32 %v1182, 0.0
        %v1195 = vmax.f32 %v1183, 0.0
        %v1196 = vmax.f32 %v1184, 0.0
        %v1197 = vmax.f32 %v1185, 0.0
        %v1198 = vmax.f32 %v1186, 0.0
        %v1199 = vmax.f32 %v1187, 0.0
        %v1200 = vmax.f32 %v1188, 0.0
        %v1201 = vmax.f32 %v1189, 0.0
        %v1202 = vld [vmem:[%s2] ss:$4 sm:$0x7]
        %s1203 = scalar_lea.vmem %s2, 1
        %v1204 = vld [vmem:[%s1203] ss:$4 sm:$0x7]
        %s1205 = scalar_lea.vmem %s2, 2
        %v1206 = vld [vmem:[%s1205] ss:$4 sm:$0x7]
        %v1208 = vlaneseq
        %v1209 = vshrl.u32 %v1208, 7
        %v1210 = vsub.s32 0, %v1209
        %v1211 = vrot.slane %v1206, %v1210
        %v1212 = vlaneseq
        %v1213 = vshrl.u32 %v1212, 7
        %v1214 = vsub.s32 1, %v1213
        %v1215 = vrot.slane %v1206, %v1214
        %v1216 = vlaneseq
        %v1217 = vshrl.u32 %v1216, 7
        %v1218 = vsub.s32 2, %v1217
        %v1219 = vrot.slane %v1206, %v1218
        %v1223 = vmul.f32 %v1190, %v1211
        %v1224 = vmul.f32 %v1191, %v1215
        %v1225 = vmul.f32 %v1192, %v1219
        %v1226 = vmul.f32 %v1193, %v1211
        %v1227 = vmul.f32 %v1194, %v1215
        %v1228 = vmul.f32 %v1195, %v1219
        %v1229 = vmul.f32 %v1196, %v1211
        %v1230 = vmul.f32 %v1197, %v1215
        %v1231 = vmul.f32 %v1198, %v1219
        %v1232 = vmul.f32 %v1199, %v1211
        %v1233 = vmul.f32 %v1200, %v1215
        %v1234 = vmul.f32 %v1201, %v1219
        %v1235 = vadd.f32 %v1223, %v1224
        %vm1236 = vcmask 195584
        %v1237 = vsel %vm1236, %v1225, 0.0
        %v1238 = vadd.f32 %v1235, %v1237
        %1239 = vadd.xlane.f32.xlu0 %v1238
        %v1240 = vpop.xlane.xlu0 %1239
        %v1241 = vadd.f32 %v1226, %v1227
        %v1242 = vsel %vm1236, %v1228, 0.0
        %v1243 = vadd.f32 %v1241, %v1242
        %1244 = vadd.xlane.f32.xlu0 %v1243
        %v1245 = vpop.xlane.xlu0 %1244
        %v1246 = vadd.f32 %v1229, %v1230
        %v1247 = vsel %vm1236, %v1231, 0.0
        %v1248 = vadd.f32 %v1246, %v1247
        %1249 = vadd.xlane.f32.xlu0 %v1248
        %v1250 = vpop.xlane.xlu0 %1249
        %vm1251 = vcmask 1043456
        %v1252 = vsel %vm1251, %v1232, 0.0
        %v1253 = vsel %vm1251, %v1233, 0.0
        %v1254 = vadd.f32 %v1252, %v1253
        %vm1255 = vcmask 191488
        %v1256 = vsel %vm1255, %v1234, 0.0
        %v1257 = vadd.f32 %v1254, %v1256
        %1258 = vadd.xlane.f32.xlu0 %v1257
        %v1259 = vpop.xlane.xlu0 %1258
        %v1260 = vadd.f32 %v1240, %v1245
        %v1261 = vadd.f32 %v1260, %v1250
        %v1262 = vsel %vm1251, %v1259, 0.0
        %v1263 = vadd.f32 %v1261, %v1262
        %v1264 = vrot.slane %v1263, 4
        %v1265 = vadd.f32 %v1263, %v1264
        %v1266 = vrot.slane %v1265, 2
        %v1267 = vadd.f32 %v1265, %v1266
        %v1268 = vrot.slane %v1267, 1
        %v1269 = vadd.f32 %v1267, %v1268
        %v1270 = vmul.f32 %v1223, %v1190
        %v1271 = vmul.f32 %v1224, %v1191
        %v1272 = vmul.f32 %v1225, %v1192
        %v1273 = vmul.f32 %v1226, %v1193
        %v1274 = vmul.f32 %v1227, %v1194
        %v1275 = vmul.f32 %v1228, %v1195
        %v1276 = vmul.f32 %v1229, %v1196
        %v1277 = vmul.f32 %v1230, %v1197
        %v1278 = vmul.f32 %v1231, %v1198
        %v1279 = vmul.f32 %v1232, %v1199
        %v1280 = vmul.f32 %v1233, %v1200
        %v1281 = vmul.f32 %v1234, %v1201
        %v1282 = vadd.f32 %v1270, %v1271
        %v1283 = vsel %vm1236, %v1272, 0.0
        %v1284 = vadd.f32 %v1282, %v1283
        %1285 = vadd.xlane.f32.xlu0 %v1284
        %v1286 = vpop.xlane.xlu0 %1285
        %v1287 = vadd.f32 %v1273, %v1274
        %v1288 = vsel %vm1236, %v1275, 0.0
        %v1289 = vadd.f32 %v1287, %v1288
        %1290 = vadd.xlane.f32.xlu0 %v1289
        %v1291 = vpop.xlane.xlu0 %1290
        %v1292 = vadd.f32 %v1276, %v1277
        %v1293 = vsel %vm1236, %v1278, 0.0
        %v1294 = vadd.f32 %v1292, %v1293
        %1295 = vadd.xlane.f32.xlu0 %v1294
        %v1296 = vpop.xlane.xlu0 %1295
        %v1297 = vsel %vm1251, %v1279, 0.0
        %v1298 = vsel %vm1251, %v1280, 0.0
        %v1299 = vadd.f32 %v1297, %v1298
        %v1300 = vsel %vm1255, %v1281, 0.0
        %v1301 = vadd.f32 %v1299, %v1300
        %1302 = vadd.xlane.f32.xlu0 %v1301
        %v1303 = vpop.xlane.xlu0 %1302
        %v1304 = vadd.f32 %v1286, %v1291
        %v1305 = vadd.f32 %v1304, %v1296
        %v1306 = vsel %vm1251, %v1303, 0.0
        %v1307 = vadd.f32 %v1305, %v1306
        %v1308 = vrot.slane %v1307, 4
        %v1309 = vadd.f32 %v1307, %v1308
        %v1310 = vrot.slane %v1309, 2
        %v1311 = vadd.f32 %v1309, %v1310
        %v1312 = vrot.slane %v1311, 1
        %v1313 = vadd.f32 %v1311, %v1312
        %v1314 = vmul.f32 %v1269, 0.00025510203
        %v1315 = vmul.f32 %v1313, 0.00025510203
        %v1316 = vmul.f32 %v1314, %v1314
        %v1317 = vsub.f32 %v1315, %v1316
        %v1318 = vmul.f32 %v1206, %v1314
        %v1319 = vadd.f32 %v1318, 0.0
        %v1320 = vmul.f32 %v1206, %v1317
        %v1321 = vadd.f32 %v1320, 0.0
        %s1322 = scalar_lea.vmem %s2, 3
        %v1323 = vld [vmem:[%s1322] ss:$4 sm:$0x7]
        %v1325 = vlaneseq
        %v1326 = vshrl.u32 %v1325, 7
        %v1327 = vsub.s32 0, %v1326
        %v1328 = vrot.slane %v1323, %v1327
        %v1329 = vlaneseq
        %v1330 = vshrl.u32 %v1329, 7
        %v1331 = vsub.s32 1, %v1330
        %v1332 = vrot.slane %v1323, %v1331
        %v1333 = vlaneseq
        %v1334 = vshrl.u32 %v1333, 7
        %v1335 = vsub.s32 2, %v1334
        %v1336 = vrot.slane %v1323, %v1335
        %v1340 = vmul.f32 %v1190, %v1328
        %v1341 = vmul.f32 %v1191, %v1332
        %v1342 = vmul.f32 %v1192, %v1336
        %v1343 = vmul.f32 %v1193, %v1328
        %v1344 = vmul.f32 %v1194, %v1332
        %v1345 = vmul.f32 %v1195, %v1336
        %v1346 = vmul.f32 %v1196, %v1328
        %v1347 = vmul.f32 %v1197, %v1332
        %v1348 = vmul.f32 %v1198, %v1336
        %v1349 = vmul.f32 %v1199, %v1328
        %v1350 = vmul.f32 %v1200, %v1332
        %v1351 = vmul.f32 %v1201, %v1336
        %v1352 = vadd.f32 %v1340, %v1341
        %v1353 = vsel %vm1236, %v1342, 0.0
        %v1354 = vadd.f32 %v1352, %v1353
        %1355 = vadd.xlane.f32.xlu0 %v1354
        %v1356 = vpop.xlane.xlu0 %1355
        %v1357 = vadd.f32 %v1343, %v1344
        %v1358 = vsel %vm1236, %v1345, 0.0
        %v1359 = vadd.f32 %v1357, %v1358
        %1360 = vadd.xlane.f32.xlu0 %v1359
        %v1361 = vpop.xlane.xlu0 %1360
        %v1362 = vadd.f32 %v1346, %v1347
        %v1363 = vsel %vm1236, %v1348, 0.0
        %v1364 = vadd.f32 %v1362, %v1363
        %1365 = vadd.xlane.f32.xlu0 %v1364
        %v1366 = vpop.xlane.xlu0 %1365
        %v1367 = vsel %vm1251, %v1349, 0.0
        %v1368 = vsel %vm1251, %v1350, 0.0
        %v1369 = vadd.f32 %v1367, %v1368
        %v1370 = vsel %vm1255, %v1351, 0.0
        %v1371 = vadd.f32 %v1369, %v1370
        %1372 = vadd.xlane.f32.xlu0 %v1371
        %v1373 = vpop.xlane.xlu0 %1372
        %v1374 = vadd.f32 %v1356, %v1361
        %v1375 = vadd.f32 %v1374, %v1366
        %v1376 = vsel %vm1251, %v1373, 0.0
        %v1377 = vadd.f32 %v1375, %v1376
        %v1378 = vrot.slane %v1377, 4
        %v1379 = vadd.f32 %v1377, %v1378
        %v1380 = vrot.slane %v1379, 2
        %v1381 = vadd.f32 %v1379, %v1380
        %v1382 = vrot.slane %v1381, 1
        %v1383 = vadd.f32 %v1381, %v1382
        %v1384 = vmul.f32 %v1340, %v1190
        %v1385 = vmul.f32 %v1341, %v1191
        %v1386 = vmul.f32 %v1342, %v1192
        %v1387 = vmul.f32 %v1343, %v1193
        %v1388 = vmul.f32 %v1344, %v1194
        %v1389 = vmul.f32 %v1345, %v1195
        %v1390 = vmul.f32 %v1346, %v1196
        %v1391 = vmul.f32 %v1347, %v1197
        %v1392 = vmul.f32 %v1348, %v1198
        %v1393 = vmul.f32 %v1349, %v1199
        %v1394 = vmul.f32 %v1350, %v1200
        %v1395 = vmul.f32 %v1351, %v1201
        %v1396 = vadd.f32 %v1384, %v1385
        %v1397 = vsel %vm1236, %v1386, 0.0
        %v1398 = vadd.f32 %v1396, %v1397
        %1399 = vadd.xlane.f32.xlu0 %v1398
        %v1400 = vpop.xlane.xlu0 %1399
        %v1401 = vadd.f32 %v1387, %v1388
        %v1402 = vsel %vm1236, %v1389, 0.0
        %v1403 = vadd.f32 %v1401, %v1402
        %1404 = vadd.xlane.f32.xlu0 %v1403
        %v1405 = vpop.xlane.xlu0 %1404
        %v1406 = vadd.f32 %v1390, %v1391
        %v1407 = vsel %vm1236, %v1392, 0.0
        %v1408 = vadd.f32 %v1406, %v1407
        %1409 = vadd.xlane.f32.xlu0 %v1408
        %v1410 = vpop.xlane.xlu0 %1409
        %v1411 = vsel %vm1251, %v1393, 0.0
        %v1412 = vsel %vm1251, %v1394, 0.0
        %v1413 = vadd.f32 %v1411, %v1412
        %v1414 = vsel %vm1255, %v1395, 0.0
        %v1415 = vadd.f32 %v1413, %v1414
        %1416 = vadd.xlane.f32.xlu0 %v1415
        %v1417 = vpop.xlane.xlu0 %1416
        %v1418 = vadd.f32 %v1400, %v1405
        %v1419 = vadd.f32 %v1418, %v1410
        %v1420 = vsel %vm1251, %v1417, 0.0
        %v1421 = vadd.f32 %v1419, %v1420
        %v1422 = vrot.slane %v1421, 4
        %v1423 = vadd.f32 %v1421, %v1422
        %v1424 = vrot.slane %v1423, 2
        %v1425 = vadd.f32 %v1423, %v1424
        %v1426 = vrot.slane %v1425, 1
        %v1427 = vadd.f32 %v1425, %v1426
        %v1428 = vmul.f32 %v1383, 0.00025510203
        %v1429 = vmul.f32 %v1427, 0.00025510203
        %v1430 = vmul.f32 %v1428, %v1428
        %v1431 = vsub.f32 %v1429, %v1430
        %v1432 = vmul.f32 %v1323, %v1428
        %v1433 = vadd.f32 %v1319, %v1432
        %v1434 = vmul.f32 %v1323, %v1431
        %v1435 = vadd.f32 %v1321, %v1434
        %v1436 = vadd.f32 %v1435, 1e-05
        %v1437 = vrsqrt.pop %v1436
        %v1439 = vlaneseq
        %v1440 = vshrl.u32 %v1439, 7
        %v1441 = vsub.s32 0, %v1440
        %v1442 = vrot.slane %v1433, %v1441
        %v1443 = vlaneseq
        %v1444 = vshrl.u32 %v1443, 7
        %v1445 = vsub.s32 1, %v1444
        %v1446 = vrot.slane %v1433, %v1445
        %v1447 = vlaneseq
        %v1448 = vshrl.u32 %v1447, 7
        %v1449 = vsub.s32 2, %v1448
        %v1450 = vrot.slane %v1433, %v1449
        %v1454 = vsub.f32 %v1190, %v1442
        %v1455 = vsub.f32 %v1191, %v1446
        %v1456 = vsub.f32 %v1192, %v1450
        %v1457 = vsub.f32 %v1193, %v1442
        %v1458 = vsub.f32 %v1194, %v1446
        %v1459 = vsub.f32 %v1195, %v1450
        %v1460 = vsub.f32 %v1196, %v1442
        %v1461 = vsub.f32 %v1197, %v1446
        %v1462 = vsub.f32 %v1198, %v1450
        %v1463 = vsub.f32 %v1199, %v1442
        %v1464 = vsub.f32 %v1200, %v1446
        %v1465 = vsub.f32 %v1201, %v1450
        %v1466 = vmul.f32 %v1437, %v1202
        %v1468 = vlaneseq
        %v1469 = vshrl.u32 %v1468, 7
        %v1470 = vsub.s32 0, %v1469
        %v1471 = vrot.slane %v1466, %v1470
        %v1472 = vlaneseq
        %v1473 = vshrl.u32 %v1472, 7
        %v1474 = vsub.s32 1, %v1473
        %v1475 = vrot.slane %v1466, %v1474
        %v1476 = vlaneseq
        %v1477 = vshrl.u32 %v1476, 7
        %v1478 = vsub.s32 2, %v1477
        %v1479 = vrot.slane %v1466, %v1478
        %v1483 = vmul.f32 %v1454, %v1471
        %v1484 = vmul.f32 %v1455, %v1475
        %v1485 = vmul.f32 %v1456, %v1479
        %v1486 = vmul.f32 %v1457, %v1471
        %v1487 = vmul.f32 %v1458, %v1475
        %v1488 = vmul.f32 %v1459, %v1479
        %v1489 = vmul.f32 %v1460, %v1471
        %v1490 = vmul.f32 %v1461, %v1475
        %v1491 = vmul.f32 %v1462, %v1479
        %v1492 = vmul.f32 %v1463, %v1471
        %v1493 = vmul.f32 %v1464, %v1475
        %v1494 = vmul.f32 %v1465, %v1479
        %v1496 = vlaneseq
        %v1497 = vshrl.u32 %v1496, 7
        %v1498 = vsub.s32 0, %v1497
        %v1499 = vrot.slane %v1204, %v1498
        %v1500 = vlaneseq
        %v1501 = vshrl.u32 %v1500, 7
        %v1502 = vsub.s32 1, %v1501
        %v1503 = vrot.slane %v1204, %v1502
        %v1504 = vlaneseq
        %v1505 = vshrl.u32 %v1504, 7
        %v1506 = vsub.s32 2, %v1505
        %v1507 = vrot.slane %v1204, %v1506
        %v1511 = vadd.f32 %v1483, %v1499
        %v1512 = vadd.f32 %v1484, %v1503
        %v1513 = vadd.f32 %v1485, %v1507
        %v1514 = vadd.f32 %v1486, %v1499
        %v1515 = vadd.f32 %v1487, %v1503
        %v1516 = vadd.f32 %v1488, %v1507
        %v1517 = vadd.f32 %v1489, %v1499
        %v1518 = vadd.f32 %v1490, %v1503
        %v1519 = vadd.f32 %v1491, %v1507
        %v1520 = vadd.f32 %v1492, %v1499
        %v1521 = vadd.f32 %v1493, %v1503
        %v1522 = vadd.f32 %v1494, %v1507
        %1523 = vst [vmem:[#allocation3] sm:$0xff] %v1511
        %1524 = vst [vmem:[#allocation3 + $0x8] sm:$0xff] %v1512
        %1525 = vst.msk [vmem:[#allocation3 + $0x10] sm:$0xff] %vm1236, %v1513
        %1526 = vst [vmem:[#allocation3 + $0x18] sm:$0xff] %v1514
        %1527 = vst [vmem:[#allocation3 + $0x20] sm:$0xff] %v1515
        %1528 = vst.msk [vmem:[#allocation3 + $0x28] sm:$0xff] %vm1236, %v1516
        %1529 = vst [vmem:[#allocation3 + $0x30] sm:$0xff] %v1517
        %1530 = vst [vmem:[#allocation3 + $0x38] sm:$0xff] %v1518
        %1531 = vst.msk [vmem:[#allocation3 + $0x40] sm:$0xff] %vm1236, %v1519
        %1532 = vst [vmem:[#allocation3 + $0x48] sm:$0xf] %v1520
        %1533 = vst [vmem:[#allocation3 + $0x50] sm:$0xf] %v1521
        %1534 = vst.msk [vmem:[#allocation3 + $0x58] sm:$0xf] %vm1255, %v1522
        %v1535 = vld [vmem:[#allocation3] sm:$0xff]
        %v1536 = vld [vmem:[#allocation3 + $0x8] sm:$0xff]
        %v1537 = vld [vmem:[#allocation3 + $0x10] sm:$0xff]
        %v1538 = vld [vmem:[#allocation3 + $0x18] sm:$0xff]
        %v1539 = vld [vmem:[#allocation3 + $0x20] sm:$0xff]
        %v1540 = vld [vmem:[#allocation3 + $0x28] sm:$0xff]
        %v1541 = vld [vmem:[#allocation3 + $0x30] sm:$0xff]
        %v1542 = vld [vmem:[#allocation3 + $0x38] sm:$0xff]
        %v1543 = vld [vmem:[#allocation3 + $0x40] sm:$0xff]
        %v1544 = vld [vmem:[#allocation3 + $0x48] sm:$0x3]
        %v1545 = vld [vmem:[#allocation3 + $0x50] sm:$0x3]
        %v1546 = vld [vmem:[#allocation3 + $0x58] sm:$0x3]
        %v1547 = vpack.c.bf16 %v1538, %v1535
        %v1548 = vpack.c.bf16 %v1539, %v1536
        %v1549 = vpack.c.bf16 %v1540, %v1537
        %v1550 = vpack.c.bf16 %v1544, %v1541
        %v1551 = vpack.c.bf16 %v1545, %v1542
        %v1552 = vpack.c.bf16 %v1546, %v1543
        %v1553 = vld [vmem:[#allocation8] sm:$0xff]
        %v1554 = vld [vmem:[#allocation8 + $0x8] sm:$0xff]
        %v1555 = vld [vmem:[#allocation8 + $0x10] sm:$0xff]
        %v1556 = vld [vmem:[#allocation8 + $0x18] sm:$0xff]
        %v1557 = vld [vmem:[#allocation8 + $0x20] sm:$0xff]
        %v1558 = vld [vmem:[#allocation8 + $0x28] sm:$0xff]
        %v1559 = vld [vmem:[#allocation8 + $0x30] sm:$0xff]
        %v1560 = vld [vmem:[#allocation8 + $0x38] sm:$0xff]
        %v1561 = vld [vmem:[#allocation8 + $0x40] sm:$0xff]
        %v1562 = vld [vmem:[#allocation8 + $0x48] sm:$0xff]
        %v1563 = vld [vmem:[#allocation8 + $0x50] sm:$0xff]
        %v1564 = vld [vmem:[#allocation8 + $0x58] sm:$0xff]
        %v1565 = vld [vmem:[#allocation8 + $0x60] sm:$0xff]
        %v1566 = vld [vmem:[#allocation8 + $0x68] sm:$0xff]
        %v1567 = vld [vmem:[#allocation8 + $0x70] sm:$0xff]
        %v1568 = vld [vmem:[#allocation8 + $0x78] sm:$0xff]
        %v1569 = vld [vmem:[#allocation8 + $0x80] sm:$0xff]
        %v1570 = vld [vmem:[#allocation8 + $0x88] sm:$0xff]
        %v1571 = vld [vmem:[#allocation8 + $0x90] sm:$0xff]
        %v1572 = vld [vmem:[#allocation8 + $0x98] sm:$0xff]
        %v1573 = vld [vmem:[#allocation8 + $0xa0] sm:$0xff]
        %v1574 = vld [vmem:[#allocation8 + $0xa8] sm:$0xff]
        %v1575 = vld [vmem:[#allocation8 + $0xb0] sm:$0xff]
        %v1576 = vld [vmem:[#allocation8 + $0xb8] sm:$0xff]
        %v1577 = vld [vmem:[#allocation8 + $0xc0] sm:$0xff]
        %v1578 = vld [vmem:[#allocation8 + $0xc8] sm:$0xff]
        %v1579 = vld [vmem:[#allocation8 + $0xd0] sm:$0xff]
        %v1580 = vld [vmem:[#allocation8 + $0xd8] sm:$0xff]
        %v1581 = vld [vmem:[#allocation8 + $0xe0] sm:$0xff]
        %v1582 = vld [vmem:[#allocation8 + $0xe8] sm:$0xff]
        %v1583 = vld [vmem:[#allocation8 + $0xf0] sm:$0xff]
        %v1584 = vld [vmem:[#allocation8 + $0xf8] sm:$0xff]
        %v1585 = vld [vmem:[#allocation8 + $0x100] sm:$0xff]
        %v1586 = vld [vmem:[#allocation8 + $0x108] sm:$0xff]
        %v1587 = vld [vmem:[#allocation8 + $0x110] sm:$0xff]
        %v1588 = vld [vmem:[#allocation8 + $0x118] sm:$0xff]
        %v1589 = vld [vmem:[#allocation8 + $0x120] sm:$0xff]
        %v1590 = vld [vmem:[#allocation8 + $0x128] sm:$0xff]
        %v1591 = vld [vmem:[#allocation8 + $0x130] sm:$0xff]
        %v1592 = vld [vmem:[#allocation8 + $0x138] sm:$0xff]
        %v1593 = vld [vmem:[#allocation8 + $0x140] sm:$0xff]
        %v1594 = vld [vmem:[#allocation8 + $0x148] sm:$0xff]
        %v1595 = vld [vmem:[#allocation8 + $0x150] sm:$0xff]
        %v1596 = vld [vmem:[#allocation8 + $0x158] sm:$0xff]
        %v1597 = vld [vmem:[#allocation8 + $0x160] sm:$0xff]
        %v1598 = vld [vmem:[#allocation8 + $0x168] sm:$0xff]
        %v1599 = vld [vmem:[#allocation8 + $0x170] sm:$0xff]
        %v1600 = vld [vmem:[#allocation8 + $0x178] sm:$0xff]
        %v1601 = vld [vmem:[#allocation8 + $0x180] sm:$0xff]
        %v1602 = vld [vmem:[#allocation8 + $0x188] sm:$0xff]
        %v1603 = vld [vmem:[#allocation8 + $0x190] sm:$0xff]
        %v1604 = vld [vmem:[#allocation8 + $0x198] sm:$0xff]
        %v1605 = vld [vmem:[#allocation8 + $0x1a0] sm:$0xff]
        %v1606 = vld [vmem:[#allocation8 + $0x1a8] sm:$0xff]
        %v1607 = vld [vmem:[#allocation8 + $0x1b0] sm:$0xff]
        %v1608 = vld [vmem:[#allocation8 + $0x1b8] sm:$0xff]
        %v1609 = vld [vmem:[#allocation8 + $0x1c0] sm:$0xff]
        %v1610 = vld [vmem:[#allocation8 + $0x1c8] sm:$0xff]
        %v1611 = vld [vmem:[#allocation8 + $0x1d0] sm:$0xff]
        %v1612 = vld [vmem:[#allocation8 + $0x1d8] sm:$0xff]
        %v1613 = vld [vmem:[#allocation8 + $0x1e0] sm:$0xff]
        %v1614 = vld [vmem:[#allocation8 + $0x1e8] sm:$0xff]
        %v1615 = vld [vmem:[#allocation8 + $0x1f0] sm:$0xff]
        %v1616 = vld [vmem:[#allocation8 + $0x1f8] sm:$0xff]
        %v1617 = vld [vmem:[#allocation8 + $0x200] sm:$0xff]
        %v1618 = vld [vmem:[#allocation8 + $0x208] sm:$0xff]
        %v1619 = vld [vmem:[#allocation8 + $0x210] sm:$0xff]
        %v1620 = vld [vmem:[#allocation8 + $0x218] sm:$0xff]
        %v1621 = vld [vmem:[#allocation8 + $0x220] sm:$0xff]
        %v1622 = vld [vmem:[#allocation8 + $0x228] sm:$0xff]
        %v1623 = vld [vmem:[#allocation3] sm:$0xfe]
        %v1624 = vld [vmem:[#allocation3 + $0x8] sm:$0xfe]
        %v1625 = vld [vmem:[#allocation3 + $0x10] sm:$0xfe]
        %v1626 = vld [vmem:[#allocation3 + $0x48] sm:$0x7]
        %v1627 = vld [vmem:[#allocation3 + $0x50] sm:$0x7]
        %v1628 = vld [vmem:[#allocation3 + $0x58] sm:$0x7]
        %v1629 = vpack.c.bf16 %v1538, %v1623
        %v1630 = vpack.c.bf16 %v1539, %v1624
        %v1631 = vpack.c.bf16 %v1540, %v1625
        %v1632 = vpack.c.bf16 %v1626, %v1541
        %v1633 = vpack.c.bf16 %v1627, %v1542
        %v1634 = vpack.c.bf16 %v1628, %v1543
        %s1635 = scalar_lea.vmem [#allocation8], 560
        %v1636 = vld [vmem:[%s1635] sm:$0xff]
        %v1637 = vld [vmem:[%s1635 + $0x8] sm:$0xff]
        %v1638 = vld [vmem:[%s1635 + $0x10] sm:$0xff]
        %v1639 = vld [vmem:[%s1635 + $0x18] sm:$0xff]
        %v1640 = vld [vmem:[%s1635 + $0x20] sm:$0xff]
        %v1641 = vld [vmem:[%s1635 + $0x28] sm:$0xff]
        %v1642 = vld [vmem:[%s1635 + $0x30] sm:$0xff]
        %v1643 = vld [vmem:[%s1635 + $0x38] sm:$0xff]
        %v1644 = vld [vmem:[%s1635 + $0x40] sm:$0xff]
        %v1645 = vld [vmem:[%s1635 + $0x48] sm:$0xff]
        %v1646 = vld [vmem:[%s1635 + $0x50] sm:$0xff]
        %v1647 = vld [vmem:[%s1635 + $0x58] sm:$0xff]
        %v1648 = vld [vmem:[%s1635 + $0x60] sm:$0xff]
        %v1649 = vld [vmem:[%s1635 + $0x68] sm:$0xff]
        %v1650 = vld [vmem:[%s1635 + $0x70] sm:$0xff]
        %v1651 = vld [vmem:[%s1635 + $0x78] sm:$0xff]
        %v1652 = vld [vmem:[%s1635 + $0x80] sm:$0xff]
        %v1653 = vld [vmem:[%s1635 + $0x88] sm:$0xff]
        %v1654 = vld [vmem:[%s1635 + $0x90] sm:$0xff]
        %v1655 = vld [vmem:[%s1635 + $0x98] sm:$0xff]
        %v1656 = vld [vmem:[%s1635 + $0xa0] sm:$0xff]
        %v1657 = vld [vmem:[%s1635 + $0xa8] sm:$0xff]
        %v1658 = vld [vmem:[%s1635 + $0xb0] sm:$0xff]
        %v1659 = vld [vmem:[%s1635 + $0xb8] sm:$0xff]
        %v1660 = vld [vmem:[%s1635 + $0xc0] sm:$0xff]
        %v1661 = vld [vmem:[%s1635 + $0xc8] sm:$0xff]
        %v1662 = vld [vmem:[%s1635 + $0xd0] sm:$0xff]
        %v1663 = vld [vmem:[%s1635 + $0xd8] sm:$0xff]
        %v1664 = vld [vmem:[%s1635 + $0xe0] sm:$0xff]
        %v1665 = vld [vmem:[%s1635 + $0xe8] sm:$0xff]
        %v1666 = vld [vmem:[%s1635 + $0xf0] sm:$0xff]
        %v1667 = vld [vmem:[%s1635 + $0xf8] sm:$0xff]
        %v1668 = vld [vmem:[%s1635 + $0x100] sm:$0xff]
        %v1669 = vld [vmem:[%s1635 + $0x108] sm:$0xff]
        %v1670 = vld [vmem:[%s1635 + $0x110] sm:$0xff]
        %v1671 = vld [vmem:[%s1635 + $0x118] sm:$0xff]
        %v1672 = vld [vmem:[%s1635 + $0x120] sm:$0xff]
        %v1673 = vld [vmem:[%s1635 + $0x128] sm:$0xff]
        %v1674 = vld [vmem:[%s1635 + $0x130] sm:$0xff]
        %v1675 = vld [vmem:[%s1635 + $0x138] sm:$0xff]
        %v1676 = vld [vmem:[%s1635 + $0x140] sm:$0xff]
        %v1677 = vld [vmem:[%s1635 + $0x148] sm:$0xff]
        %v1678 = vld [vmem:[%s1635 + $0x150] sm:$0xff]
        %v1679 = vld [vmem:[%s1635 + $0x158] sm:$0xff]
        %v1680 = vld [vmem:[%s1635 + $0x160] sm:$0xff]
        %v1681 = vld [vmem:[%s1635 + $0x168] sm:$0xff]
        %v1682 = vld [vmem:[%s1635 + $0x170] sm:$0xff]
        %v1683 = vld [vmem:[%s1635 + $0x178] sm:$0xff]
        %v1684 = vld [vmem:[%s1635 + $0x180] sm:$0xff]
        %v1685 = vld [vmem:[%s1635 + $0x188] sm:$0xff]
        %v1686 = vld [vmem:[%s1635 + $0x190] sm:$0xff]
        %v1687 = vld [vmem:[%s1635 + $0x198] sm:$0xff]
        %v1688 = vld [vmem:[%s1635 + $0x1a0] sm:$0xff]
        %v1689 = vld [vmem:[%s1635 + $0x1a8] sm:$0xff]
        %v1690 = vld [vmem:[%s1635 + $0x1b0] sm:$0xff]
        %v1691 = vld [vmem:[%s1635 + $0x1b8] sm:$0xff]
        %v1692 = vld [vmem:[%s1635 + $0x1c0] sm:$0xff]
        %v1693 = vld [vmem:[%s1635 + $0x1c8] sm:$0xff]
        %v1694 = vld [vmem:[%s1635 + $0x1d0] sm:$0xff]
        %v1695 = vld [vmem:[%s1635 + $0x1d8] sm:$0xff]
        %v1696 = vld [vmem:[%s1635 + $0x1e0] sm:$0xff]
        %v1697 = vld [vmem:[%s1635 + $0x1e8] sm:$0xff]
        %v1698 = vld [vmem:[%s1635 + $0x1f0] sm:$0xff]
        %v1699 = vld [vmem:[%s1635 + $0x1f8] sm:$0xff]
        %v1700 = vld [vmem:[%s1635 + $0x200] sm:$0xff]
        %v1701 = vld [vmem:[%s1635 + $0x208] sm:$0xff]
        %v1702 = vld [vmem:[%s1635 + $0x210] sm:$0xff]
        %v1703 = vld [vmem:[%s1635 + $0x218] sm:$0xff]
        %v1704 = vld [vmem:[%s1635 + $0x220] sm:$0xff]
        %v1705 = vld [vmem:[%s1635 + $0x228] sm:$0xff]
        %vm1706 = vsmask.f32 7424
        %v1708 = vshrl.u32 %v1629, 16
        %v1710 = vshll.u32 %v1629, 16
        %v1712 = vrot.slane %v1710, 1
        %v1713 = vor.u32 %v1708, %v1712
        %v1715 = vshll.u32 %v1632, 16
        %v1717 = vrot.slane %v1715, 1
        %v1718 = vsel %vm1706, %v1713, %v1717
        %v1720 = vshrl.u32 %v1630, 16
        %v1722 = vshll.u32 %v1630, 16
        %v1724 = vrot.slane %v1722, 1
        %v1725 = vor.u32 %v1720, %v1724
        %v1727 = vshll.u32 %v1633, 16
        %v1729 = vrot.slane %v1727, 1
        %v1730 = vsel %vm1706, %v1725, %v1729
        %v1732 = vshrl.u32 %v1631, 16
        %v1734 = vshll.u32 %v1631, 16
        %v1736 = vrot.slane %v1734, 1
        %v1737 = vor.u32 %v1732, %v1736
        %v1739 = vshll.u32 %v1634, 16
        %v1741 = vrot.slane %v1739, 1
        %v1742 = vsel %vm1706, %v1737, %v1741
        %v1743 = vshrl.u32 %v1632, 16
        %v1745 = vor.u32 %v1743, %v1717
        %v1746 = vshrl.u32 %v1633, 16
        %v1748 = vor.u32 %v1746, %v1729
        %v1749 = vshrl.u32 %v1634, 16
        %v1751 = vor.u32 %v1749, %v1741
        %v1826 = vunpack.c.l.b16 %v1636
        %v1827 = vunpack.c.h.b16 %v1636
        %v1828 = vunpack.c.l.b16 %v1637
        %v1829 = vunpack.c.h.b16 %v1637
        %v1830 = vunpack.c.l.b16 %v1638
        %v1831 = vunpack.c.h.b16 %v1638
        %v1832 = vunpack.c.l.b16 %v1639
        %v1833 = vunpack.c.h.b16 %v1639
        %v1834 = vunpack.c.l.b16 %v1640
        %v1835 = vunpack.c.h.b16 %v1640
        %v1836 = vunpack.c.l.b16 %v1641
        %v1837 = vunpack.c.h.b16 %v1641
        %v1838 = vunpack.c.l.b16 %v1642
        %v1839 = vunpack.c.h.b16 %v1642
        %v1840 = vunpack.c.l.b16 %v1643
        %v1841 = vunpack.c.h.b16 %v1643
        %v1842 = vunpack.c.l.b16 %v1644
        %v1843 = vunpack.c.h.b16 %v1644
        %v1844 = vunpack.c.l.b16 %v1645
        %v1845 = vunpack.c.h.b16 %v1645
        %v1846 = vunpack.c.l.b16 %v1646
        %v1847 = vunpack.c.h.b16 %v1646
        %v1848 = vunpack.c.l.b16 %v1647
        %v1849 = vunpack.c.h.b16 %v1647
        %v1850 = vunpack.c.l.b16 %v1648
        %v1851 = vunpack.c.h.b16 %v1648
        %v1852 = vunpack.c.l.b16 %v1649
        %v1853 = vunpack.c.h.b16 %v1649
        %v1854 = vunpack.c.l.b16 %v1650
        %v1855 = vunpack.c.h.b16 %v1650
        %v1856 = vunpack.c.l.b16 %v1651
        %v1857 = vunpack.c.h.b16 %v1651
        %v1858 = vunpack.c.l.b16 %v1652
        %v1859 = vunpack.c.h.b16 %v1652
        %v1860 = vunpack.c.l.b16 %v1653
        %v1861 = vunpack.c.h.b16 %v1653
        %v1862 = vunpack.c.l.b16 %v1654
        %v1863 = vunpack.c.h.b16 %v1654
        %v1864 = vunpack.c.l.b16 %v1655
        %v1865 = vunpack.c.h.b16 %v1655
        %v1866 = vunpack.c.l.b16 %v1656
        %v1867 = vunpack.c.h.b16 %v1656
        %v1868 = vunpack.c.l.b16 %v1657
        %v1869 = vunpack.c.h.b16 %v1657
        %v1870 = vunpack.c.l.b16 %v1658
        %v1871 = vunpack.c.h.b16 %v1658
        %v1872 = vunpack.c.l.b16 %v1659
        %v1873 = vunpack.c.h.b16 %v1659
        %v1874 = vunpack.c.l.b16 %v1660
        %v1875 = vunpack.c.h.b16 %v1660
        %v1876 = vunpack.c.l.b16 %v1661
        %v1877 = vunpack.c.h.b16 %v1661
        %v1878 = vunpack.c.l.b16 %v1662
        %v1879 = vunpack.c.h.b16 %v1662
        %v1880 = vunpack.c.l.b16 %v1663
        %v1881 = vunpack.c.h.b16 %v1663
        %v1882 = vunpack.c.l.b16 %v1664
        %v1883 = vunpack.c.h.b16 %v1664
        %v1884 = vunpack.c.l.b16 %v1665
        %v1885 = vunpack.c.h.b16 %v1665
        %v1886 = vunpack.c.l.b16 %v1666
        %v1887 = vunpack.c.h.b16 %v1666
        %v1888 = vunpack.c.l.b16 %v1667
        %v1889 = vunpack.c.h.b16 %v1667
        %v1890 = vunpack.c.l.b16 %v1668
        %v1891 = vunpack.c.h.b16 %v1668
        %v1892 = vunpack.c.l.b16 %v1669
        %v1893 = vunpack.c.h.b16 %v1669
        %v1894 = vunpack.c.l.b16 %v1670
        %v1895 = vunpack.c.h.b16 %v1670
        %v1896 = vunpack.c.l.b16 %v1671
        %v1897 = vunpack.c.h.b16 %v1671
        %v1898 = vunpack.c.l.b16 %v1672
        %v1899 = vunpack.c.h.b16 %v1672
        %v1900 = vunpack.c.l.b16 %v1673
        %v1901 = vunpack.c.h.b16 %v1673
        %v1902 = vunpack.c.l.b16 %v1674
        %v1903 = vunpack.c.h.b16 %v1674
        %v1904 = vunpack.c.l.b16 %v1675
        %v1905 = vunpack.c.h.b16 %v1675
        %v1906 = vunpack.c.l.b16 %v1676
        %v1907 = vunpack.c.h.b16 %v1676
        %v1908 = vunpack.c.l.b16 %v1677
        %v1909 = vunpack.c.h.b16 %v1677
        %v1910 = vunpack.c.l.b16 %v1678
        %v1911 = vunpack.c.h.b16 %v1678
        %v1912 = vunpack.c.l.b16 %v1679
        %v1913 = vunpack.c.h.b16 %v1679
        %v1914 = vunpack.c.l.b16 %v1680
        %v1915 = vunpack.c.h.b16 %v1680
        %v1916 = vunpack.c.l.b16 %v1681
        %v1917 = vunpack.c.h.b16 %v1681
        %v1918 = vunpack.c.l.b16 %v1682
        %v1919 = vunpack.c.h.b16 %v1682
        %v1920 = vunpack.c.l.b16 %v1683
        %v1921 = vunpack.c.h.b16 %v1683
        %v1922 = vunpack.c.l.b16 %v1684
        %v1923 = vunpack.c.h.b16 %v1684
        %v1924 = vunpack.c.l.b16 %v1685
        %v1925 = vunpack.c.h.b16 %v1685
        %v1926 = vunpack.c.l.b16 %v1686
        %v1927 = vunpack.c.h.b16 %v1686
        %v1928 = vunpack.c.l.b16 %v1687
        %v1929 = vunpack.c.h.b16 %v1687
        %v1930 = vunpack.c.l.b16 %v1688
        %v1931 = vunpack.c.h.b16 %v1688
        %v1932 = vunpack.c.l.b16 %v1689
        %v1933 = vunpack.c.h.b16 %v1689
        %v1934 = vunpack.c.l.b16 %v1690
        %v1935 = vunpack.c.h.b16 %v1690
        %v1936 = vunpack.c.l.b16 %v1691
        %v1937 = vunpack.c.h.b16 %v1691
        %v1938 = vunpack.c.l.b16 %v1692
        %v1939 = vunpack.c.h.b16 %v1692
        %v1940 = vunpack.c.l.b16 %v1693
        %v1941 = vunpack.c.h.b16 %v1693
        %v1942 = vunpack.c.l.b16 %v1694
        %v1943 = vunpack.c.h.b16 %v1694
        %v1944 = vunpack.c.l.b16 %v1695
        %v1945 = vunpack.c.h.b16 %v1695
        %v1946 = vunpack.c.l.b16 %v1696
        %v1947 = vunpack.c.h.b16 %v1696
        %v1948 = vunpack.c.l.b16 %v1697
        %v1949 = vunpack.c.h.b16 %v1697
        %v1950 = vunpack.c.l.b16 %v1698
        %v1951 = vunpack.c.h.b16 %v1698
        %v1952 = vunpack.c.l.b16 %v1699
        %v1953 = vunpack.c.h.b16 %v1699
        %v1954 = vunpack.c.l.b16 %v1700
        %v1955 = vunpack.c.h.b16 %v1700
        %v1956 = vunpack.c.l.b16 %v1701
        %v1957 = vunpack.c.h.b16 %v1701
        %v1958 = vunpack.c.l.b16 %v1702
        %v1959 = vunpack.c.h.b16 %v1702
        %v1960 = vunpack.c.l.b16 %v1703
        %v1961 = vunpack.c.h.b16 %v1703
        %v1962 = vunpack.c.l.b16 %v1704
        %v1963 = vunpack.c.h.b16 %v1704
        %v1964 = vunpack.c.l.b16 %v1705
        %v1965 = vunpack.c.h.b16 %v1705
        %v1966 = vpack.c.b16 %v1830, %v1826
        %v1967 = vpack.c.b16 %v1831, %v1827
        %v1968 = vpack.c.b16 %v1832, %v1828
        %v1969 = vpack.c.b16 %v1833, %v1829
        %v1970 = vpack.c.b16 %v1838, %v1834
        %v1971 = vpack.c.b16 %v1839, %v1835
        %v1972 = vpack.c.b16 %v1840, %v1836
        %v1973 = vpack.c.b16 %v1841, %v1837
        %v1974 = vpack.c.b16 %v1846, %v1842
        %v1975 = vpack.c.b16 %v1847, %v1843
        %v1976 = vpack.c.b16 %v1848, %v1844
        %v1977 = vpack.c.b16 %v1849, %v1845
        %v1978 = vpack.c.b16 %v1854, %v1850
        %v1979 = vpack.c.b16 %v1855, %v1851
        %v1980 = vpack.c.b16 %v1856, %v1852
        %v1981 = vpack.c.b16 %v1857, %v1853
        %v1982 = vpack.c.b16 %v1862, %v1858
        %v1983 = vpack.c.b16 %v1863, %v1859
        %v1984 = vpack.c.b16 %v1864, %v1860
        %v1985 = vpack.c.b16 %v1865, %v1861
        %v1986 = vpack.c.b16 %v1870, %v1866
        %v1987 = vpack.c.b16 %v1871, %v1867
        %v1988 = vpack.c.b16 %v1872, %v1868
        %v1989 = vpack.c.b16 %v1873, %v1869
        %v1990 = vpack.c.b16 %v1878, %v1874
        %v1991 = vpack.c.b16 %v1879, %v1875
        %v1992 = vpack.c.b16 %v1880, %v1876
        %v1993 = vpack.c.b16 %v1881, %v1877
        %v1994 = vpack.c.b16 %v1886, %v1882
        %v1995 = vpack.c.b16 %v1887, %v1883
        %v1996 = vpack.c.b16 %v1888, %v1884
        %v1997 = vpack.c.b16 %v1889, %v1885
        %v1998 = vpack.c.b16 %v1894, %v1890
        %v1999 = vpack.c.b16 %v1895, %v1891
        %v2000 = vpack.c.b16 %v1896, %v1892
        %v2001 = vpack.c.b16 %v1897, %v1893
        %v2002 = vpack.c.b16 %v1902, %v1898
        %v2003 = vpack.c.b16 %v1903, %v1899
        %v2004 = vpack.c.b16 %v1904, %v1900
        %v2005 = vpack.c.b16 %v1905, %v1901
        %v2006 = vpack.c.b16 %v1910, %v1906
        %v2007 = vpack.c.b16 %v1911, %v1907
        %v2008 = vpack.c.b16 %v1912, %v1908
        %v2009 = vpack.c.b16 %v1913, %v1909
        %v2010 = vpack.c.b16 %v1918, %v1914
        %v2011 = vpack.c.b16 %v1919, %v1915
        %v2012 = vpack.c.b16 %v1920, %v1916
        %v2013 = vpack.c.b16 %v1921, %v1917
        %v2014 = vpack.c.b16 %v1926, %v1922
        %v2015 = vpack.c.b16 %v1927, %v1923
        %v2016 = vpack.c.b16 %v1928, %v1924
        %v2017 = vpack.c.b16 %v1929, %v1925
        %v2018 = vpack.c.b16 %v1934, %v1930
        %v2019 = vpack.c.b16 %v1935, %v1931
        %v2020 = vpack.c.b16 %v1936, %v1932
        %v2021 = vpack.c.b16 %v1937, %v1933
        %v2022 = vpack.c.b16 %v1942, %v1938
        %v2023 = vpack.c.b16 %v1943, %v1939
        %v2024 = vpack.c.b16 %v1944, %v1940
        %v2025 = vpack.c.b16 %v1945, %v1941
        %v2026 = vpack.c.b16 %v1950, %v1946
        %v2027 = vpack.c.b16 %v1951, %v1947
        %v2028 = vpack.c.b16 %v1952, %v1948
        %v2029 = vpack.c.b16 %v1953, %v1949
        %v2030 = vpack.c.b16 %v1958, %v1954
        %v2031 = vpack.c.b16 %v1959, %v1955
        %v2032 = vpack.c.b16 %v1960, %v1956
        %v2033 = vpack.c.b16 %v1961, %v1957
        %v2034 = vpack.c.b16 %v1962, %v1962
        %v2035 = vpack.c.b16 %v1963, %v1963
        %v2036 = vpack.c.b16 %v1964, %v1964
        %v2037 = vpack.c.b16 %v1965, %v1965
        %v2107 = vsel %vm1236, %v1742, 0
        %v2110 = vsel %vm1236, %v1751, 0
        %v2113 = vsel %vm1251, %v2034, 0
        %v2116 = vsel %vm1251, %v2035, 0
        %v2119 = vsel %vm1251, %v2036, 0
        %v2122 = vsel %vm1251, %v2037, 0
        %2124 = vmatprep.subr.bf16.mxu0 %v1967
        %2125 = vmatpush1.bf16.msra.mxu0 %v1966
        %2126 = vmatprep.subr.bf16.mxu0 %v1971
        %2127 = vmatpush1.bf16.msra.mxu0 %v1970
        %2128 = vmatprep.subr.bf16.mxu0 %v1975
        %2129 = vmatpush1.bf16.msra.mxu0 %v1974
        %2130 = vmatprep.subr.bf16.mxu0 %v1979
        %2131 = vmatpush1.bf16.msra.mxu0 %v1978
        %2132 = vmatprep.subr.bf16.mxu0 %v1983
        %2133 = vmatpush1.bf16.msra.mxu0 %v1982
        %2134 = vmatprep.subr.bf16.mxu0 %v1987
        %2135 = vmatpush1.bf16.msra.mxu0 %v1986
        %2136 = vmatprep.subr.bf16.mxu0 %v1991
        %2137 = vmatpush1.bf16.msra.mxu0 %v1990
        %2138 = vmatprep.subr.bf16.mxu0 %v1995
        %2139 = vmatpush1.bf16.msra.mxu0 %v1994
        %2140 = vmatprep.subr.bf16.mxu0 %v1999
        %2141 = vmatpush1.bf16.msra.mxu0 %v1998
        %2142 = vmatprep.subr.bf16.mxu0 %v2003
        %2143 = vmatpush1.bf16.msra.mxu0 %v2002
        %2144 = vmatprep.subr.bf16.mxu0 %v2007
        %2145 = vmatpush1.bf16.msra.mxu0 %v2006
        %2146 = vmatprep.subr.bf16.mxu0 %v2011
        %2147 = vmatpush1.bf16.msra.mxu0 %v2010
        %2148 = vmatprep.subr.bf16.mxu0 %v2015
        %2149 = vmatpush1.bf16.msra.mxu0 %v2014
        %2150 = vmatprep.subr.bf16.mxu0 %v2019
        %2151 = vmatpush1.bf16.msra.mxu0 %v2018
        %2152 = vmatprep.subr.bf16.mxu0 %v2023
        %2153 = vmatpush1.bf16.msra.mxu0 %v2022
        %2154 = vmatprep.subr.bf16.mxu0 %v2027
        %2155 = vmatpush1.bf16.msra.mxu0 %v2026
        %2156 = vmatprep.mubr.bf16.mxu0 %v1730
        %2157 = vmatmul.mubr.bf16.gmra.mrb[0].mxu0 %v1718
        %v2158 = vpop.f32.mrb[0].mxu0
        %v2159 = vadd.f32 0.0, %v2158
        %v2160 = vpop.f32.mrb[0].mxu0
        %v2161 = vadd.f32 0.0, %v2160
        %v2162 = vpop.f32.mrb[0].mxu0
        %v2163 = vadd.f32 0.0, %v2162
        %v2164 = vpop.f32.mrb[0].mxu0
        %v2165 = vadd.f32 0.0, %v2164
        %2166 = vmatprep.mubr.bf16.mxu0 %v1748
        %2167 = vmatmul.mubr.bf16.gmra.mrb[0].mxu0 %v1745
        %v2168 = vpop.f32.mrb[0].mxu0
        %v2169 = vadd.f32 0.0, %v2168
        %v2170 = vpop.f32.mrb[0].mxu0
        %v2171 = vadd.f32 0.0, %v2170
        %v2172 = vpop.f32.mrb[0].mxu0
        %v2173 = vadd.f32 0.0, %v2172
        %v2174 = vpop.f32.mrb[0].mxu0
        %v2175 = vadd.f32 0.0, %v2174
        %2176 = vdwg.mxu0
        %2177 = vmatprep.subr.bf16.mxu0 %v2031
        %2178 = vmatpush1.bf16.msra.mxu0 %v2030
        %2179 = vmatprep.subr.bf16.mxu0 %v2116
        %2180 = vmatpush1.bf16.msra.mxu0 %v2113
        %2181 = vmatprep.subr.bf16.mxu0 0
        %2182 = vmatpush1.bf16.msra.mxu0 0
        %2183 = vmatprep.subr.bf16.mxu0 0
        %2184 = vmatpush1.bf16.msra.mxu0 0
        %2185 = vmatprep.subr.bf16.mxu0 0
        %2186 = vmatpush1.bf16.msra.mxu0 0
        %2187 = vmatprep.subr.bf16.mxu0 0
        %2188 = vmatpush1.bf16.msra.mxu0 0
        %2189 = vmatprep.subr.bf16.mxu0 0
        %2190 = vmatpush1.bf16.msra.mxu0 0
        %2191 = vmatprep.subr.bf16.mxu0 0
        %2192 = vmatpush1.bf16.msra.mxu0 0
        %2193 = vmatprep.subr.bf16.mxu0 0
        %2194 = vmatpush1.bf16.msra.mxu0 0
        %2195 = vmatprep.subr.bf16.mxu0 0
        %2196 = vmatpush1.bf16.msra.mxu0 0
        %2197 = vmatprep.subr.bf16.mxu0 0
        %2198 = vmatpush1.bf16.msra.mxu0 0
        %2199 = vmatprep.subr.bf16.mxu0 0
        %2200 = vmatpush1.bf16.msra.mxu0 0
        %2201 = vmatprep.subr.bf16.mxu0 0
        %2202 = vmatpush1.bf16.msra.mxu0 0
        %2203 = vmatprep.subr.bf16.mxu0 0
        %2204 = vmatpush1.bf16.msra.mxu0 0
        %2205 = vmatprep.subr.bf16.mxu0 0
        %2206 = vmatpush1.bf16.msra.mxu0 0
        %2207 = vmatprep.subr.bf16.mxu0 0
        %2208 = vmatpush1.bf16.msra.mxu0 0
        %2209 = vmatprep.mubr.bf16.mxu0 0
        %2210 = vmatmul.mubr.bf16.gmra.mrb[0].mxu0 %v2107
        %v2211 = vpop.f32.mrb[0].mxu0
        %v2212 = vadd.f32 %v2159, %v2211
        %v2213 = vpop.f32.mrb[0].mxu0
        %v2214 = vadd.f32 %v2161, %v2213
        %v2215 = vpop.f32.mrb[0].mxu0
        %v2216 = vadd.f32 %v2163, %v2215
        %v2217 = vpop.f32.mrb[0].mxu0
        %v2218 = vadd.f32 %v2165, %v2217
        %2219 = vmatprep.mubr.bf16.mxu0 0
        %2220 = vmatmul.mubr.bf16.gmra.mrb[0].mxu0 %v2110
        %v2221 = vpop.f32.mrb[0].mxu0
        %v2222 = vadd.f32 %v2169, %v2221
        %v2223 = vpop.f32.mrb[0].mxu0
        %v2224 = vadd.f32 %v2171, %v2223
        %v2225 = vpop.f32.mrb[0].mxu0
        %v2226 = vadd.f32 %v2173, %v2225
        %v2227 = vpop.f32.mrb[0].mxu0
        %v2228 = vadd.f32 %v2175, %v2227
        %2229 = vdwg.mxu0
        %2230 = vmatprep.subr.bf16.mxu0 %v1969
        %2231 = vmatpush1.bf16.msra.mxu0 %v1968
        %2232 = vmatprep.subr.bf16.mxu0 %v1973
        %2233 = vmatpush1.bf16.msra.mxu0 %v1972
        %2234 = vmatprep.subr.bf16.mxu0 %v1977
        %2235 = vmatpush1.bf16.msra.mxu0 %v1976
        %2236 = vmatprep.subr.bf16.mxu0 %v1981
        %2237 = vmatpush1.bf16.msra.mxu0 %v1980
        %2238 = vmatprep.subr.bf16.mxu0 %v1985
        %2239 = vmatpush1.bf16.msra.mxu0 %v1984
        %2240 = vmatprep.subr.bf16.mxu0 %v1989
        %2241 = vmatpush1.bf16.msra.mxu0 %v1988
        %2242 = vmatprep.subr.bf16.mxu0 %v1993
        %2243 = vmatpush1.bf16.msra.mxu0 %v1992
        %2244 = vmatprep.subr.bf16.mxu0 %v1997
        %2245 = vmatpush1.bf16.msra.mxu0 %v1996
        %2246 = vmatprep.subr.bf16.mxu0 %v2001
        %2247 = vmatpush1.bf16.msra.mxu0 %v2000
        %2248 = vmatprep.subr.bf16.mxu0 %v2005
        %2249 = vmatpush1.bf16.msra.mxu0 %v2004
        %2250 = vmatprep.subr.bf16.mxu0 %v2009
        %2251 = vmatpush1.bf16.msra.mxu0 %v2008
        %2252 = vmatprep.subr.bf16.mxu0 %v2013
        %2253 = vmatpush1.bf16.msra.mxu0 %v2012
        %2254 = vmatprep.subr.bf16.mxu0 %v2017
        %2255 = vmatpush1.bf16.msra.mxu0 %v2016
        %2256 = vmatprep.subr.bf16.mxu0 %v2021
        %2257 = vmatpush1.bf16.msra.mxu0 %v2020
        %2258 = vmatprep.subr.bf16.mxu0 %v2025
        %2259 = vmatpush1.bf16.msra.mxu0 %v2024
        %2260 = vmatprep.subr.bf16.mxu0 %v2029
        %2261 = vmatpush1.bf16.msra.mxu0 %v2028
        %2262 = vmatprep.mubr.bf16.mxu0 %v1730
        %2263 = vmatmul.mubr.bf16.gmra.mrb[0].mxu0 %v1718
        %v2264 = vpop.f32.mrb[0].mxu0
        %v2265 = vadd.f32 0.0, %v2264
        %v2266 = vpop.f32.mrb[0].mxu0
        %v2267 = vadd.f32 0.0, %v2266
        %v2268 = vpop.f32.mrb[0].mxu0
        %v2269 = vadd.f32 0.0, %v2268
        %v2270 = vpop.f32.mrb[0].mxu0
        %v2271 = vadd.f32 0.0, %v2270
        %2272 = vmatprep.mubr.bf16.mxu0 %v1748
        %2273 = vmatmul.mubr.bf16.gmra.mrb[0].mxu0 %v1745
        %v2274 = vpop.f32.mrb[0].mxu0
        %v2275 = vadd.f32 0.0, %v2274
        %v2276 = vpop.f32.mrb[0].mxu0
        %v2277 = vadd.f32 0.0, %v2276
        %v2278 = vpop.f32.mrb[0].mxu0
        %v2279 = vadd.f32 0.0, %v2278
        %v2280 = vpop.f32.mrb[0].mxu0
        %v2281 = vadd.f32 0.0, %v2280
        %2282 = vdwg.mxu0
        %2283 = vmatprep.subr.bf16.mxu0 %v2033
        %2284 = vmatpush1.bf16.msra.mxu0 %v2032
        %2285 = vmatprep.subr.bf16.mxu0 %v2122
        %2286 = vmatpush1.bf16.msra.mxu0 %v2119
        %2287 = vmatprep.subr.bf16.mxu0 0
        %2288 = vmatpush1.bf16.msra.mxu0 0
        %2289 = vmatprep.subr.bf16.mxu0 0
        %2290 = vmatpush1.bf16.msra.mxu0 0
        %2291 = vmatprep.subr.bf16.mxu0 0
        %2292 = vmatpush1.bf16.msra.mxu0 0
        %2293 = vmatprep.subr.bf16.mxu0 0
        %2294 = vmatpush1.bf16.msra.mxu0 0
        %2295 = vmatprep.subr.bf16.mxu0 0
        %2296 = vmatpush1.bf16.msra.mxu0 0
        %2297 = vmatprep.subr.bf16.mxu0 0
        %2298 = vmatpush1.bf16.msra.mxu0 0
        %2299 = vmatprep.subr.bf16.mxu0 0
        %2300 = vmatpush1.bf16.msra.mxu0 0
        %2301 = vmatprep.subr.bf16.mxu0 0
        %2302 = vmatpush1.bf16.msra.mxu0 0
        %2303 = vmatprep.subr.bf16.mxu0 0
        %2304 = vmatpush1.bf16.msra.mxu0 0
        %2305 = vmatprep.subr.bf16.mxu0 0
        %2306 = vmatpush1.bf16.msra.mxu0 0
        %2307 = vmatprep.subr.bf16.mxu0 0
        %2308 = vmatpush1.bf16.msra.mxu0 0
        %2309 = vmatprep.subr.bf16.mxu0 0
        %2310 = vmatpush1.bf16.msra.mxu0 0
        %2311 = vmatprep.subr.bf16.mxu0 0
        %2312 = vmatpush1.bf16.msra.mxu0 0
        %2313 = vmatprep.subr.bf16.mxu0 0
        %2314 = vmatpush1.bf16.msra.mxu0 0
        %2315 = vmatprep.mubr.bf16.mxu0 0
        %2316 = vmatmul.mubr.bf16.gmra.mrb[0].mxu0 %v2107
        %v2317 = vpop.f32.mrb[0].mxu0
        %v2318 = vadd.f32 %v2265, %v2317
        %v2319 = vpop.f32.mrb[0].mxu0
        %v2320 = vadd.f32 %v2267, %v2319
        %v2321 = vpop.f32.mrb[0].mxu0
        %v2322 = vadd.f32 %v2269, %v2321
        %v2323 = vpop.f32.mrb[0].mxu0
        %v2324 = vadd.f32 %v2271, %v2323
        %2325 = vmatprep.mubr.bf16.mxu0 0
        %2326 = vmatmul.mubr.bf16.gmra.mrb[0].mxu0 %v2110
        %v2327 = vpop.f32.mrb[0].mxu0
        %v2328 = vadd.f32 %v2275, %v2327
        %v2329 = vpop.f32.mrb[0].mxu0
        %v2330 = vadd.f32 %v2277, %v2329
        %v2331 = vpop.f32.mrb[0].mxu0
        %v2332 = vadd.f32 %v2279, %v2331
        %v2333 = vpop.f32.mrb[0].mxu0
        %v2334 = vadd.f32 %v2281, %v2333
        %2335 = vdwg.mxu0
        %v2406 = vunpack.c.l.b16 %v1553
        %v2407 = vunpack.c.h.b16 %v1553
        %v2408 = vunpack.c.l.b16 %v1554
        %v2409 = vunpack.c.h.b16 %v1554
        %v2410 = vunpack.c.l.b16 %v1555
        %v2411 = vunpack.c.h.b16 %v1555
        %v2412 = vunpack.c.l.b16 %v1556
        %v2413 = vunpack.c.h.b16 %v1556
        %v2414 = vunpack.c.l.b16 %v1557
        %v2415 = vunpack.c.h.b16 %v1557
        %v2416 = vunpack.c.l.b16 %v1558
        %v2417 = vunpack.c.h.b16 %v1558
        %v2418 = vunpack.c.l.b16 %v1559
        %v2419 = vunpack.c.h.b16 %v1559
        %v2420 = vunpack.c.l.b16 %v1560
        %v2421 = vunpack.c.h.b16 %v1560
        %v2422 = vunpack.c.l.b16 %v1561
        %v2423 = vunpack.c.h.b16 %v1561
        %v2424 = vunpack.c.l.b16 %v1562
        %v2425 = vunpack.c.h.b16 %v1562
        %v2426 = vunpack.c.l.b16 %v1563
        %v2427 = vunpack.c.h.b16 %v1563
        %v2428 = vunpack.c.l.b16 %v1564
        %v2429 = vunpack.c.h.b16 %v1564
        %v2430 = vunpack.c.l.b16 %v1565
        %v2431 = vunpack.c.h.b16 %v1565
        %v2432 = vunpack.c.l.b16 %v1566
        %v2433 = vunpack.c.h.b16 %v1566
        %v2434 = vunpack.c.l.b16 %v1567
        %v2435 = vunpack.c.h.b16 %v1567
        %v2436 = vunpack.c.l.b16 %v1568
        %v2437 = vunpack.c.h.b16 %v1568
        %v2438 = vunpack.c.l.b16 %v1569
        %v2439 = vunpack.c.h.b16 %v1569
        %v2440 = vunpack.c.l.b16 %v1570
        %v2441 = vunpack.c.h.b16 %v1570
        %v2442 = vunpack.c.l.b16 %v1571
        %v2443 = vunpack.c.h.b16 %v1571
        %v2444 = vunpack.c.l.b16 %v1572
        %v2445 = vunpack.c.h.b16 %v1572
        %v2446 = vunpack.c.l.b16 %v1573
        %v2447 = vunpack.c.h.b16 %v1573
        %v2448 = vunpack.c.l.b16 %v1574
        %v2449 = vunpack.c.h.b16 %v1574
        %v2450 = vunpack.c.l.b16 %v1575
        %v2451 = vunpack.c.h.b16 %v1575
        %v2452 = vunpack.c.l.b16 %v1576
        %v2453 = vunpack.c.h.b16 %v1576
        %v2454 = vunpack.c.l.b16 %v1577
        %v2455 = vunpack.c.h.b16 %v1577
        %v2456 = vunpack.c.l.b16 %v1578
        %v2457 = vunpack.c.h.b16 %v1578
        %v2458 = vunpack.c.l.b16 %v1579
        %v2459 = vunpack.c.h.b16 %v1579
        %v2460 = vunpack.c.l.b16 %v1580
        %v2461 = vunpack.c.h.b16 %v1580
        %v2462 = vunpack.c.l.b16 %v1581
        %v2463 = vunpack.c.h.b16 %v1581
        %v2464 = vunpack.c.l.b16 %v1582
        %v2465 = vunpack.c.h.b16 %v1582
        %v2466 = vunpack.c.l.b16 %v1583
        %v2467 = vunpack.c.h.b16 %v1583
        %v2468 = vunpack.c.l.b16 %v1584
        %v2469 = vunpack.c.h.b16 %v1584
        %v2470 = vunpack.c.l.b16 %v1585
        %v2471 = vunpack.c.h.b16 %v1585
        %v2472 = vunpack.c.l.b16 %v1586
        %v2473 = vunpack.c.h.b16 %v1586
        %v2474 = vunpack.c.l.b16 %v1587
        %v2475 = vunpack.c.h.b16 %v1587
        %v2476 = vunpack.c.l.b16 %v1588
        %v2477 = vunpack.c.h.b16 %v1588
        %v2478 = vunpack.c.l.b16 %v1589
        %v2479 = vunpack.c.h.b16 %v1589
        %v2480 = vunpack.c.l.b16 %v1590
        %v2481 = vunpack.c.h.b16 %v1590
        %v2482 = vunpack.c.l.b16 %v1591
        %v2483 = vunpack.c.h.b16 %v1591
        %v2484 = vunpack.c.l.b16 %v1592
        %v2485 = vunpack.c.h.b16 %v1592
        %v2486 = vunpack.c.l.b16 %v1593
        %v2487 = vunpack.c.h.b16 %v1593
        %v2488 = vunpack.c.l.b16 %v1594
        %v2489 = vunpack.c.h.b16 %v1594
        %v2490 = vunpack.c.l.b16 %v1595
        %v2491 = vunpack.c.h.b16 %v1595
        %v2492 = vunpack.c.l.b16 %v1596
        %v2493 = vunpack.c.h.b16 %v1596
        %v2494 = vunpack.c.l.b16 %v1597
        %v2495 = vunpack.c.h.b16 %v1597
        %v2496 = vunpack.c.l.b16 %v1598
        %v2497 = vunpack.c.h.b16 %v1598
        %v2498 = vunpack.c.l.b16 %v1599
        %v2499 = vunpack.c.h.b16 %v1599
        %v2500 = vunpack.c.l.b16 %v1600
        %v2501 = vunpack.c.h.b16 %v1600
        %v2502 = vunpack.c.l.b16 %v1601
        %v2503 = vunpack.c.h.b16 %v1601
        %v2504 = vunpack.c.l.b16 %v1602
        %v2505 = vunpack.c.h.b16 %v1602
        %v2506 = vunpack.c.l.b16 %v1603
        %v2507 = vunpack.c.h.b16 %v1603
        %v2508 = vunpack.c.l.b16 %v1604
        %v2509 = vunpack.c.h.b16 %v1604
        %v2510 = vunpack.c.l.b16 %v1605
        %v2511 = vunpack.c.h.b16 %v1605
        %v2512 = vunpack.c.l.b16 %v1606
        %v2513 = vunpack.c.h.b16 %v1606
        %v2514 = vunpack.c.l.b16 %v1607
        %v2515 = vunpack.c.h.b16 %v1607
        %v2516 = vunpack.c.l.b16 %v1608
        %v2517 = vunpack.c.h.b16 %v1608
        %v2518 = vunpack.c.l.b16 %v1609
        %v2519 = vunpack.c.h.b16 %v1609
        %v2520 = vunpack.c.l.b16 %v1610
        %v2521 = vunpack.c.h.b16 %v1610
        %v2522 = vunpack.c.l.b16 %v1611
        %v2523 = vunpack.c.h.b16 %v1611
        %v2524 = vunpack.c.l.b16 %v1612
        %v2525 = vunpack.c.h.b16 %v1612
        %v2526 = vunpack.c.l.b16 %v1613
        %v2527 = vunpack.c.h.b16 %v1613
        %v2528 = vunpack.c.l.b16 %v1614
        %v2529 = vunpack.c.h.b16 %v1614
        %v2530 = vunpack.c.l.b16 %v1615
        %v2531 = vunpack.c.h.b16 %v1615
        %v2532 = vunpack.c.l.b16 %v1616
        %v2533 = vunpack.c.h.b16 %v1616
        %v2534 = vunpack.c.l.b16 %v1617
        %v2535 = vunpack.c.h.b16 %v1617
        %v2536 = vunpack.c.l.b16 %v1618
        %v2537 = vunpack.c.h.b16 %v1618
        %v2538 = vunpack.c.l.b16 %v1619
        %v2539 = vunpack.c.h.b16 %v1619
        %v2540 = vunpack.c.l.b16 %v1620
        %v2541 = vunpack.c.h.b16 %v1620
        %v2542 = vunpack.c.l.b16 %v1621
        %v2543 = vunpack.c.h.b16 %v1621
        %v2544 = vunpack.c.l.b16 %v1622
        %v2545 = vunpack.c.h.b16 %v1622
        %v2546 = vpack.c.b16 %v2410, %v2406
        %v2547 = vpack.c.b16 %v2411, %v2407
        %v2548 = vpack.c.b16 %v2412, %v2408
        %v2549 = vpack.c.b16 %v2413, %v2409
        %v2550 = vpack.c.b16 %v2418, %v2414
        %v2551 = vpack.c.b16 %v2419, %v2415
        %v2552 = vpack.c.b16 %v2420, %v2416
        %v2553 = vpack.c.b16 %v2421, %v2417
        %v2554 = vpack.c.b16 %v2426, %v2422
        %v2555 = vpack.c.b16 %v2427, %v2423
        %v2556 = vpack.c.b16 %v2428, %v2424
        %v2557 = vpack.c.b16 %v2429, %v2425
        %v2558 = vpack.c.b16 %v2434, %v2430
        %v2559 = vpack.c.b16 %v2435, %v2431
        %v2560 = vpack.c.b16 %v2436, %v2432
        %v2561 = vpack.c.b16 %v2437, %v2433
        %v2562 = vpack.c.b16 %v2442, %v2438
        %v2563 = vpack.c.b16 %v2443, %v2439
        %v2564 = vpack.c.b16 %v2444, %v2440
        %v2565 = vpack.c.b16 %v2445, %v2441
        %v2566 = vpack.c.b16 %v2450, %v2446
        %v2567 = vpack.c.b16 %v2451, %v2447
        %v2568 = vpack.c.b16 %v2452, %v2448
        %v2569 = vpack.c.b16 %v2453, %v2449
        %v2570 = vpack.c.b16 %v2458, %v2454
        %v2571 = vpack.c.b16 %v2459, %v2455
        %v2572 = vpack.c.b16 %v2460, %v2456
        %v2573 = vpack.c.b16 %v2461, %v2457
        %v2574 = vpack.c.b16 %v2466, %v2462
        %v2575 = vpack.c.b16 %v2467, %v2463
        %v2576 = vpack.c.b16 %v2468, %v2464
        %v2577 = vpack.c.b16 %v2469, %v2465
        %v2578 = vpack.c.b16 %v2474, %v2470
        %v2579 = vpack.c.b16 %v2475, %v2471
        %v2580 = vpack.c.b16 %v2476, %v2472
        %v2581 = vpack.c.b16 %v2477, %v2473
        %v2582 = vpack.c.b16 %v2482, %v2478
        %v2583 = vpack.c.b16 %v2483, %v2479
        %v2584 = vpack.c.b16 %v2484, %v2480
        %v2585 = vpack.c.b16 %v2485, %v2481
        %v2586 = vpack.c.b16 %v2490, %v2486
        %v2587 = vpack.c.b16 %v2491, %v2487
        %v2588 = vpack.c.b16 %v2492, %v2488
        %v2589 = vpack.c.b16 %v2493, %v2489
        %v2590 = vpack.c.b16 %v2498, %v2494
        %v2591 = vpack.c.b16 %v2499, %v2495
        %v2592 = vpack.c.b16 %v2500, %v2496
        %v2593 = vpack.c.b16 %v2501, %v2497
        %v2594 = vpack.c.b16 %v2506, %v2502
        %v2595 = vpack.c.b16 %v2507, %v2503
        %v2596 = vpack.c.b16 %v2508, %v2504
        %v2597 = vpack.c.b16 %v2509, %v2505
        %v2598 = vpack.c.b16 %v2514, %v2510
        %v2599 = vpack.c.b16 %v2515, %v2511
        %v2600 = vpack.c.b16 %v2516, %v2512
        %v2601 = vpack.c.b16 %v2517, %v2513
        %v2602 = vpack.c.b16 %v2522, %v2518
        %v2603 = vpack.c.b16 %v2523, %v2519
        %v2604 = vpack.c.b16 %v2524, %v2520
        %v2605 = vpack.c.b16 %v2525, %v2521
        %v2606 = vpack.c.b16 %v2530, %v2526
        %v2607 = vpack.c.b16 %v2531, %v2527
        %v2608 = vpack.c.b16 %v2532, %v2528
        %v2609 = vpack.c.b16 %v2533, %v2529
        %v2610 = vpack.c.b16 %v2538, %v2534
        %v2611 = vpack.c.b16 %v2539, %v2535
        %v2612 = vpack.c.b16 %v2540, %v2536
        %v2613 = vpack.c.b16 %v2541, %v2537
        %v2614 = vpack.c.b16 %v2542, %v2542
        %v2615 = vpack.c.b16 %v2543, %v2543
        %v2616 = vpack.c.b16 %v2544, %v2544
        %v2617 = vpack.c.b16 %v2545, %v2545
        %v2687 = vsel %vm1236, %v1549, 0
        %v2690 = vsel %vm1236, %v1552, 0
        %v2693 = vsel %vm1251, %v2614, 0
        %v2696 = vsel %vm1251, %v2615, 0
        %v2699 = vsel %vm1251, %v2616, 0
        %v2702 = vsel %vm1251, %v2617, 0
        %2704 = vmatprep.subr.bf16.mxu0 %v2547
        %2705 = vmatpush1.bf16.msra.mxu0 %v2546
        %2706 = vmatprep.subr.bf16.mxu0 %v2551
        %2707 = vmatpush1.bf16.msra.mxu0 %v2550
        %2708 = vmatprep.subr.bf16.mxu0 %v2555
        %2709 = vmatpush1.bf16.msra.mxu0 %v2554
        %2710 = vmatprep.subr.bf16.mxu0 %v2559
        %2711 = vmatpush1.bf16.msra.mxu0 %v2558
        %2712 = vmatprep.subr.bf16.mxu0 %v2563
        %2713 = vmatpush1.bf16.msra.mxu0 %v2562
        %2714 = vmatprep.subr.bf16.mxu0 %v2567
        %2715 = vmatpush1.bf16.msra.mxu0 %v2566
        %2716 = vmatprep.subr.bf16.mxu0 %v2571
        %2717 = vmatpush1.bf16.msra.mxu0 %v2570
        %2718 = vmatprep.subr.bf16.mxu0 %v2575
        %2719 = vmatpush1.bf16.msra.mxu0 %v2574
        %2720 = vmatprep.subr.bf16.mxu0 %v2579
        %2721 = vmatpush1.bf16.msra.mxu0 %v2578
        %2722 = vmatprep.subr.bf16.mxu0 %v2583
        %2723 = vmatpush1.bf16.msra.mxu0 %v2582
        %2724 = vmatprep.subr.bf16.mxu0 %v2587
        %2725 = vmatpush1.bf16.msra.mxu0 %v2586
        %2726 = vmatprep.subr.bf16.mxu0 %v2591
        %2727 = vmatpush1.bf16.msra.mxu0 %v2590
        %2728 = vmatprep.subr.bf16.mxu0 %v2595
        %2729 = vmatpush1.bf16.msra.mxu0 %v2594
        %2730 = vmatprep.subr.bf16.mxu0 %v2599
        %2731 = vmatpush1.bf16.msra.mxu0 %v2598
        %2732 = vmatprep.subr.bf16.mxu0 %v2603
        %2733 = vmatpush1.bf16.msra.mxu0 %v2602
        %2734 = vmatprep.subr.bf16.mxu0 %v2607
        %2735 = vmatpush1.bf16.msra.mxu0 %v2606
        %2736 = vmatprep.mubr.bf16.mxu0 %v1548
        %2737 = vmatmul.mubr.bf16.gmra.mrb[0].mxu0 %v1547
        %v2738 = vpop.f32.mrb[0].mxu0
        %v2739 = vadd.f32 %v2212, %v2738
        %v2740 = vpop.f32.mrb[0].mxu0
        %v2741 = vadd.f32 %v2214, %v2740
        %v2742 = vpop.f32.mrb[0].mxu0
        %v2743 = vadd.f32 %v2216, %v2742
        %v2744 = vpop.f32.mrb[0].mxu0
        %v2745 = vadd.f32 %v2218, %v2744
        %2746 = vmatprep.mubr.bf16.mxu0 %v1551
        %2747 = vmatmul.mubr.bf16.gmra.mrb[0].mxu0 %v1550
        %v2748 = vpop.f32.mrb[0].mxu0
        %v2749 = vadd.f32 %v2222, %v2748
        %v2750 = vpop.f32.mrb[0].mxu0
        %v2751 = vadd.f32 %v2224, %v2750
        %v2752 = vpop.f32.mrb[0].mxu0
        %v2753 = vadd.f32 %v2226, %v2752
        %v2754 = vpop.f32.mrb[0].mxu0
        %v2755 = vadd.f32 %v2228, %v2754
        %2756 = vdwg.mxu0
        %2757 = vmatprep.subr.bf16.mxu0 %v2611
        %2758 = vmatpush1.bf16.msra.mxu0 %v2610
        %2759 = vmatprep.subr.bf16.mxu0 %v2696
        %2760 = vmatpush1.bf16.msra.mxu0 %v2693
        %2761 = vmatprep.subr.bf16.mxu0 0
        %2762 = vmatpush1.bf16.msra.mxu0 0
        %2763 = vmatprep.subr.bf16.mxu0 0
        %2764 = vmatpush1.bf16.msra.mxu0 0
        %2765 = vmatprep.subr.bf16.mxu0 0
        %2766 = vmatpush1.bf16.msra.mxu0 0
        %2767 = vmatprep.subr.bf16.mxu0 0
        %2768 = vmatpush1.bf16.msra.mxu0 0
        %2769 = vmatprep.subr.bf16.mxu0 0
        %2770 = vmatpush1.bf16.msra.mxu0 0
        %2771 = vmatprep.subr.bf16.mxu0 0
        %2772 = vmatpush1.bf16.msra.mxu0 0
        %2773 = vmatprep.subr.bf16.mxu0 0
        %2774 = vmatpush1.bf16.msra.mxu0 0
        %2775 = vmatprep.subr.bf16.mxu0 0
        %2776 = vmatpush1.bf16.msra.mxu0 0
        %2777 = vmatprep.subr.bf16.mxu0 0
        %2778 = vmatpush1.bf16.msra.mxu0 0
        %2779 = vmatprep.subr.bf16.mxu0 0
        %2780 = vmatpush1.bf16.msra.mxu0 0
        %2781 = vmatprep.subr.bf16.mxu0 0
        %2782 = vmatpush1.bf16.msra.mxu0 0
        %2783 = vmatprep.subr.bf16.mxu0 0
        %2784 = vmatpush1.bf16.msra.mxu0 0
        %2785 = vmatprep.subr.bf16.mxu0 0
        %2786 = vmatpush1.bf16.msra.mxu0 0
        %2787 = vmatprep.subr.bf16.mxu0 0
        %2788 = vmatpush1.bf16.msra.mxu0 0
        %2789 = vmatprep.mubr.bf16.mxu0 0
        %2790 = vmatmul.mubr.bf16.gmra.mrb[0].mxu0 %v2687
        %v2791 = vpop.f32.mrb[0].mxu0
        %v2792 = vadd.f32 %v2739, %v2791
        %v2793 = vpop.f32.mrb[0].mxu0
        %v2794 = vadd.f32 %v2741, %v2793
        %v2795 = vpop.f32.mrb[0].mxu0
        %v2796 = vadd.f32 %v2743, %v2795
        %v2797 = vpop.f32.mrb[0].mxu0
        %v2798 = vadd.f32 %v2745, %v2797
        %2799 = vmatprep.mubr.bf16.mxu0 0
        %2800 = vmatmul.mubr.bf16.gmra.mrb[0].mxu0 %v2690
        %v2801 = vpop.f32.mrb[0].mxu0
        %v2802 = vadd.f32 %v2749, %v2801
        %v2803 = vpop.f32.mrb[0].mxu0
        %v2804 = vadd.f32 %v2751, %v2803
        %v2805 = vpop.f32.mrb[0].mxu0
        %v2806 = vadd.f32 %v2753, %v2805
        %v2807 = vpop.f32.mrb[0].mxu0
        %v2808 = vadd.f32 %v2755, %v2807
        %2809 = vdwg.mxu0
        %2810 = vmatprep.subr.bf16.mxu0 %v2549
        %2811 = vmatpush1.bf16.msra.mxu0 %v2548
        %2812 = vmatprep.subr.bf16.mxu0 %v2553
        %2813 = vmatpush1.bf16.msra.mxu0 %v2552
        %2814 = vmatprep.subr.bf16.mxu0 %v2557
        %2815 = vmatpush1.bf16.msra.mxu0 %v2556
        %2816 = vmatprep.subr.bf16.mxu0 %v2561
        %2817 = vmatpush1.bf16.msra.mxu0 %v2560
        %2818 = vmatprep.subr.bf16.mxu0 %v2565
        %2819 = vmatpush1.bf16.msra.mxu0 %v2564
        %2820 = vmatprep.subr.bf16.mxu0 %v2569
        %2821 = vmatpush1.bf16.msra.mxu0 %v2568
        %2822 = vmatprep.subr.bf16.mxu0 %v2573
        %2823 = vmatpush1.bf16.msra.mxu0 %v2572
        %2824 = vmatprep.subr.bf16.mxu0 %v2577
        %2825 = vmatpush1.bf16.msra.mxu0 %v2576
        %2826 = vmatprep.subr.bf16.mxu0 %v2581
        %2827 = vmatpush1.bf16.msra.mxu0 %v2580
        %2828 = vmatprep.subr.bf16.mxu0 %v2585
        %2829 = vmatpush1.bf16.msra.mxu0 %v2584
        %2830 = vmatprep.subr.bf16.mxu0 %v2589
        %2831 = vmatpush1.bf16.msra.mxu0 %v2588
        %2832 = vmatprep.subr.bf16.mxu0 %v2593
        %2833 = vmatpush1.bf16.msra.mxu0 %v2592
        %2834 = vmatprep.subr.bf16.mxu0 %v2597
        %2835 = vmatpush1.bf16.msra.mxu0 %v2596
        %2836 = vmatprep.subr.bf16.mxu0 %v2601
        %2837 = vmatpush1.bf16.msra.mxu0 %v2600
        %2838 = vmatprep.subr.bf16.mxu0 %v2605
        %2839 = vmatpush1.bf16.msra.mxu0 %v2604
        %2840 = vmatprep.subr.bf16.mxu0 %v2609
        %2841 = vmatpush1.bf16.msra.mxu0 %v2608
        %2842 = vmatprep.mubr.bf16.mxu0 %v1548
        %2843 = vmatmul.mubr.bf16.gmra.mrb[0].mxu0 %v1547
        %v2844 = vpop.f32.mrb[0].mxu0
        %v2845 = vadd.f32 %v2318, %v2844
        %v2846 = vpop.f32.mrb[0].mxu0
        %v2847 = vadd.f32 %v2320, %v2846
        %v2848 = vpop.f32.mrb[0].mxu0
        %v2849 = vadd.f32 %v2322, %v2848
        %v2850 = vpop.f32.mrb[0].mxu0
        %v2851 = vadd.f32 %v2324, %v2850
        %2852 = vmatprep.mubr.bf16.mxu0 %v1551
        %2853 = vmatmul.mubr.bf16.gmra.mrb[0].mxu0 %v1550
        %v2854 = vpop.f32.mrb[0].mxu0
        %v2855 = vadd.f32 %v2328, %v2854
        %v2856 = vpop.f32.mrb[0].mxu0
        %v2857 = vadd.f32 %v2330, %v2856
        %v2858 = vpop.f32.mrb[0].mxu0
        %v2859 = vadd.f32 %v2332, %v2858
        %v2860 = vpop.f32.mrb[0].mxu0
        %v2861 = vadd.f32 %v2334, %v2860
        %2862 = vdwg.mxu0
        %2863 = vmatprep.subr.bf16.mxu0 %v2613
        %2864 = vmatpush1.bf16.msra.mxu0 %v2612
        %2865 = vmatprep.subr.bf16.mxu0 %v2702
        %2866 = vmatpush1.bf16.msra.mxu0 %v2699
        %2867 = vmatprep.subr.bf16.mxu0 0
        %2868 = vmatpush1.bf16.msra.mxu0 0
        %2869 = vmatprep.subr.bf16.mxu0 0
        %2870 = vmatpush1.bf16.msra.mxu0 0
        %2871 = vmatprep.subr.bf16.mxu0 0
        %2872 = vmatpush1.bf16.msra.mxu0 0
        %2873 = vmatprep.subr.bf16.mxu0 0
        %2874 = vmatpush1.bf16.msra.mxu0 0
        %2875 = vmatprep.subr.bf16.mxu0 0
        %2876 = vmatpush1.bf16.msra.mxu0 0
        %2877 = vmatprep.subr.bf16.mxu0 0
        %2878 = vmatpush1.bf16.msra.mxu0 0
        %2879 = vmatprep.subr.bf16.mxu0 0
        %2880 = vmatpush1.bf16.msra.mxu0 0
        %2881 = vmatprep.subr.bf16.mxu0 0
        %2882 = vmatpush1.bf16.msra.mxu0 0
        %2883 = vmatprep.subr.bf16.mxu0 0
        %2884 = vmatpush1.bf16.msra.mxu0 0
        %2885 = vmatprep.subr.bf16.mxu0 0
        %2886 = vmatpush1.bf16.msra.mxu0 0
        %2887 = vmatprep.subr.bf16.mxu0 0
        %2888 = vmatpush1.bf16.msra.mxu0 0
        %2889 = vmatprep.subr.bf16.mxu0 0
        %2890 = vmatpush1.bf16.msra.mxu0 0
        %2891 = vmatprep.subr.bf16.mxu0 0
        %2892 = vmatpush1.bf16.msra.mxu0 0
        %2893 = vmatprep.subr.bf16.mxu0 0
        %2894 = vmatpush1.bf16.msra.mxu0 0
        %2895 = vmatprep.mubr.bf16.mxu0 0
        %2896 = vmatmul.mubr.bf16.gmra.mrb[0].mxu0 %v2687
        %v2897 = vpop.f32.mrb[0].mxu0
        %v2898 = vadd.f32 %v2845, %v2897
        %v2899 = vpop.f32.mrb[0].mxu0
        %v2900 = vadd.f32 %v2847, %v2899
        %v2901 = vpop.f32.mrb[0].mxu0
        %v2902 = vadd.f32 %v2849, %v2901
        %v2903 = vpop.f32.mrb[0].mxu0
        %v2904 = vadd.f32 %v2851, %v2903
        %2905 = vmatprep.mubr.bf16.mxu0 0
        %2906 = vmatmul.mubr.bf16.gmra.mrb[0].mxu0 %v2690
        %v2907 = vpop.f32.mrb[0].mxu0
        %v2908 = vadd.f32 %v2855, %v2907
        %v2909 = vpop.f32.mrb[0].mxu0
        %v2910 = vadd.f32 %v2857, %v2909
        %v2911 = vpop.f32.mrb[0].mxu0
        %v2912 = vadd.f32 %v2859, %v2911
        %v2913 = vpop.f32.mrb[0].mxu0
        %v2914 = vadd.f32 %v2861, %v2913
        %2915 = vdwg.mxu0
        %v2916 = vld [vmem:[#allocation3] sm:$0xfc]
        %v2917 = vld [vmem:[#allocation3 + $0x8] sm:$0xfc]
        %v2918 = vld [vmem:[#allocation3 + $0x10] sm:$0xfc]
        %v2919 = vld [vmem:[#allocation3 + $0x48] sm:$0xf]
        %v2920 = vld [vmem:[#allocation3 + $0x50] sm:$0xf]
        %v2921 = vld [vmem:[#allocation3 + $0x58] sm:$0xf]
        %v2922 = vpack.c.bf16 %v1538, %v2916
        %v2923 = vpack.c.bf16 %v1539, %v2917
        %v2924 = vpack.c.bf16 %v1540, %v2918
        %v2925 = vpack.c.bf16 %v2919, %v1541
        %v2926 = vpack.c.bf16 %v2920, %v1542
        %v2927 = vpack.c.bf16 %v2921, %v1543
        %s2928 = scalar_lea.vmem [#allocation8], 1120
        %v2929 = vld [vmem:[%s2928] sm:$0xff]
        %v2930 = vld [vmem:[%s2928 + $0x8] sm:$0xff]
        %v2931 = vld [vmem:[%s2928 + $0x10] sm:$0xff]
        %v2932 = vld [vmem:[%s2928 + $0x18] sm:$0xff]
        %v2933 = vld [vmem:[%s2928 + $0x20] sm:$0xff]
        %v2934 = vld [vmem:[%s2928 + $0x28] sm:$0xff]
        %v2935 = vld [vmem:[%s2928 + $0x30] sm:$0xff]
        %v2936 = vld [vmem:[%s2928 + $0x38] sm:$0xff]
        %v2937 = vld [vmem:[%s2928 + $0x40] sm:$0xff]
        %v2938 = vld [vmem:[%s2928 + $0x48] sm:$0xff]
        %v2939 = vld [vmem:[%s2928 + $0x50] sm:$0xff]
        %v2940 = vld [vmem:[%s2928 + $0x58] sm:$0xff]
        %v2941 = vld [vmem:[%s2928 + $0x60] sm:$0xff]
        %v2942 = vld [vmem:[%s2928 + $0x68] sm:$0xff]
        %v2943 = vld [vmem:[%s2928 + $0x70] sm:$0xff]
        %v2944 = vld [vmem:[%s2928 + $0x78] sm:$0xff]
        %v2945 = vld [vmem:[%s2928 + $0x80] sm:$0xff]
        %v2946 = vld [vmem:[%s2928 + $0x88] sm:$0xff]
        %v2947 = vld [vmem:[%s2928 + $0x90] sm:$0xff]
        %v2948 = vld [vmem:[%s2928 + $0x98] sm:$0xff]
        %v2949 = vld [vmem:[%s2928 + $0xa0] sm:$0xff]
        %v2950 = vld [vmem:[%s2928 + $0xa8] sm:$0xff]
        %v2951 = vld [vmem:[%s2928 + $0xb0] sm:$0xff]
        %v2952 = vld [vmem:[%s2928 + $0xb8] sm:$0xff]
        %v2953 = vld [vmem:[%s2928 + $0xc0] sm:$0xff]
        %v2954 = vld [vmem:[%s2928 + $0xc8] sm:$0xff]
        %v2955 = vld [vmem:[%s2928 + $0xd0] sm:$0xff]
        %v2956 = vld [vmem:[%s2928 + $0xd8] sm:$0xff]
        %v2957 = vld [vmem:[%s2928 + $0xe0] sm:$0xff]
        %v2958 = vld [vmem:[%s2928 + $0xe8] sm:$0xff]
        %v2959 = vld [vmem:[%s2928 + $0xf0] sm:$0xff]
        %v2960 = vld [vmem:[%s2928 + $0xf8] sm:$0xff]
        %v2961 = vld [vmem:[%s2928 + $0x100] sm:$0xff]
        %v2962 = vld [vmem:[%s2928 + $0x108] sm:$0xff]
        %v2963 = vld [vmem:[%s2928 + $0x110] sm:$0xff]
        %v2964 = vld [vmem:[%s2928 + $0x118] sm:$0xff]
        %v2965 = vld [vmem:[%s2928 + $0x120] sm:$0xff]
        %v2966 = vld [vmem:[%s2928 + $0x128] sm:$0xff]
        %v2967 = vld [vmem:[%s2928 + $0x130] sm:$0xff]
        %v2968 = vld [vmem:[%s2928 + $0x138] sm:$0xff]
        %v2969 = vld [vmem:[%s2928 + $0x140] sm:$0xff]
        %v2970 = vld [vmem:[%s2928 + $0x148] sm:$0xff]
        %v2971 = vld [vmem:[%s2928 + $0x150] sm:$0xff]
        %v2972 = vld [vmem:[%s2928 + $0x158] sm:$0xff]
        %v2973 = vld [vmem:[%s2928 + $0x160] sm:$0xff]
        %v2974 = vld [vmem:[%s2928 + $0x168] sm:$0xff]
        %v2975 = vld [vmem:[%s2928 + $0x170] sm:$0xff]
        %v2976 = vld [vmem:[%s2928 + $0x178] sm:$0xff]
        %v2977 = vld [vmem:[%s2928 + $0x180] sm:$0xff]
        %v2978 = vld [vmem:[%s2928 + $0x188] sm:$0xff]
        %v2979 = vld [vmem:[%s2928 + $0x190] sm:$0xff]
        %v2980 = vld [vmem:[%s2928 + $0x198] sm:$0xff]
        %v2981 = vld [vmem:[%s2928 + $0x1a0] sm:$0xff]
        %v2982 = vld [vmem:[%s2928 + $0x1a8] sm:$0xff]
        %v2983 = vld [vmem:[%s2928 + $0x1b0] sm:$0xff]
        %v2984 = vld [vmem:[%s2928 + $0x1b8] sm:$0xff]
        %v2985 = vld [vmem:[%s2928 + $0x1c0] sm:$0xff]
        %v2986 = vld [vmem:[%s2928 + $0x1c8] sm:$0xff]
        %v2987 = vld [vmem:[%s2928 + $0x1d0] sm:$0xff]
        %v2988 = vld [vmem:[%s2928 + $0x1d8] sm:$0xff]
        %v2989 = vld [vmem:[%s2928 + $0x1e0] sm:$0xff]
        %v2990 = vld [vmem:[%s2928 + $0x1e8] sm:$0xff]
        %v2991 = vld [vmem:[%s2928 + $0x1f0] sm:$0xff]
        %v2992 = vld [vmem:[%s2928 + $0x1f8] sm:$0xff]
        %v2993 = vld [vmem:[%s2928 + $0x200] sm:$0xff]
        %v2994 = vld [vmem:[%s2928 + $0x208] sm:$0xff]
        %v2995 = vld [vmem:[%s2928 + $0x210] sm:$0xff]
        %v2996 = vld [vmem:[%s2928 + $0x218] sm:$0xff]
        %v2997 = vld [vmem:[%s2928 + $0x220] sm:$0xff]
        %v2998 = vld [vmem:[%s2928 + $0x228] sm:$0xff]
        %vm3005 = vcmask 1046528
        %v3006 = vrot.slane %v2922, 1
        %v3007 = vrot.slane %v2925, 1
        %v3008 = vsel %vm3005, %v3006, %v3007
        %v3009 = vrot.slane %v2923, 1
        %v3010 = vrot.slane %v2926, 1
        %v3011 = vsel %vm3005, %v3009, %v3010
        %v3012 = vrot.slane %v2924, 1
        %v3013 = vrot.slane %v2927, 1
        %v3014 = vsel %vm3005, %v3012, %v3013
        %v3089 = vunpack.c.l.b16 %v2929
        %v3090 = vunpack.c.h.b16 %v2929
        %v3091 = vunpack.c.l.b16 %v2930
        %v3092 = vunpack.c.h.b16 %v2930
        %v3093 = vunpack.c.l.b16 %v2931
        %v3094 = vunpack.c.h.b16 %v2931
        %v3095 = vunpack.c.l.b16 %v2932
        %v3096 = vunpack.c.h.b16 %v2932
        %v3097 = vunpack.c.l.b16 %v2933
        %v3098 = vunpack.c.h.b16 %v2933
        %v3099 = vunpack.c.l.b16 %v2934
        %v3100 = vunpack.c.h.b16 %v2934
        %v3101 = vunpack.c.l.b16 %v2935
        %v3102 = vunpack.c.h.b16 %v2935
        %v3103 = vunpack.c.l.b16 %v2936
        %v3104 = vunpack.c.h.b16 %v2936
        %v3105 = vunpack.c.l.b16 %v2937
        %v3106 = vunpack.c.h.b16 %v2937
        %v3107 = vunpack.c.l.b16 %v2938
        %v3108 = vunpack.c.h.b16 %v2938
        %v3109 = vunpack.c.l.b16 %v2939
        %v3110 = vunpack.c.h.b16 %v2939
        %v3111 = vunpack.c.l.b16 %v2940
        %v3112 = vunpack.c.h.b16 %v2940
        %v3113 = vunpack.c.l.b16 %v2941
        %v3114 = vunpack.c.h.b16 %v2941
        %v3115 = vunpack.c.l.b16 %v2942
        %v3116 = vunpack.c.h.b16 %v2942
        %v3117 = vunpack.c.l.b16 %v2943
        %v3118 = vunpack.c.h.b16 %v2943
        %v3119 = vunpack.c.l.b16 %v2944
        %v3120 = vunpack.c.h.b16 %v2944
        %v3121 = vunpack.c.l.b16 %v2945
        %v3122 = vunpack.c.h.b16 %v2945
        %v3123 = vunpack.c.l.b16 %v2946
        %v3124 = vunpack.c.h.b16 %v2946
        %v3125 = vunpack.c.l.b16 %v2947
        %v3126 = vunpack.c.h.b16 %v2947
        %v3127 = vunpack.c.l.b16 %v2948
        %v3128 = vunpack.c.h.b16 %v2948
        %v3129 = vunpack.c.l.b16 %v2949
        %v3130 = vunpack.c.h.b16 %v2949
        %v3131 = vunpack.c.l.b16 %v2950
        %v3132 = vunpack.c.h.b16 %v2950
        %v3133 = vunpack.c.l.b16 %v2951
        %v3134 = vunpack.c.h.b16 %v2951
        %v3135 = vunpack.c.l.b16 %v2952
        %v3136 = vunpack.c.h.b16 %v2952
        %v3137 = vunpack.c.l.b16 %v2953
        %v3138 = vunpack.c.h.b16 %v2953
        %v3139 = vunpack.c.l.b16 %v2954
        %v3140 = vunpack.c.h.b16 %v2954
        %v3141 = vunpack.c.l.b16 %v2955
        %v3142 = vunpack.c.h.b16 %v2955
        %v3143 = vunpack.c.l.b16 %v2956
        %v3144 = vunpack.c.h.b16 %v2956
        %v3145 = vunpack.c.l.b16 %v2957
        %v3146 = vunpack.c.h.b16 %v2957
        %v3147 = vunpack.c.l.b16 %v2958
        %v3148 = vunpack.c.h.b16 %v2958
        %v3149 = vunpack.c.l.b16 %v2959
        %v3150 = vunpack.c.h.b16 %v2959
        %v3151 = vunpack.c.l.b16 %v2960
        %v3152 = vunpack.c.h.b16 %v2960
        %v3153 = vunpack.c.l.b16 %v2961
        %v3154 = vunpack.c.h.b16 %v2961
        %v3155 = vunpack.c.l.b16 %v2962
        %v3156 = vunpack.c.h.b16 %v2962
        %v3157 = vunpack.c.l.b16 %v2963
        %v3158 = vunpack.c.h.b16 %v2963
        %v3159 = vunpack.c.l.b16 %v2964
        %v3160 = vunpack.c.h.b16 %v2964
        %v3161 = vunpack.c.l.b16 %v2965
        %v3162 = vunpack.c.h.b16 %v2965
        %v3163 = vunpack.c.l.b16 %v2966
        %v3164 = vunpack.c.h.b16 %v2966
        %v3165 = vunpack.c.l.b16 %v2967
        %v3166 = vunpack.c.h.b16 %v2967
        %v3167 = vunpack.c.l.b16 %v2968
        %v3168 = vunpack.c.h.b16 %v2968
        %v3169 = vunpack.c.l.b16 %v2969
        %v3170 = vunpack.c.h.b16 %v2969
        %v3171 = vunpack.c.l.b16 %v2970
        %v3172 = vunpack.c.h.b16 %v2970
        %v3173 = vunpack.c.l.b16 %v2971
        %v3174 = vunpack.c.h.b16 %v2971
        %v3175 = vunpack.c.l.b16 %v2972
        %v3176 = vunpack.c.h.b16 %v2972
        %v3177 = vunpack.c.l.b16 %v2973
        %v3178 = vunpack.c.h.b16 %v2973
        %v3179 = vunpack.c.l.b16 %v2974
        %v3180 = vunpack.c.h.b16 %v2974
        %v3181 = vunpack.c.l.b16 %v2975
        %v3182 = vunpack.c.h.b16 %v2975
        %v3183 = vunpack.c.l.b16 %v2976
        %v3184 = vunpack.c.h.b16 %v2976
        %v3185 = vunpack.c.l.b16 %v2977
        %v3186 = vunpack.c.h.b16 %v2977
        %v3187 = vunpack.c.l.b16 %v2978
        %v3188 = vunpack.c.h.b16 %v2978
        %v3189 = vunpack.c.l.b16 %v2979
        %v3190 = vunpack.c.h.b16 %v2979
        %v3191 = vunpack.c.l.b16 %v2980
        %v3192 = vunpack.c.h.b16 %v2980
        %v3193 = vunpack.c.l.b16 %v2981
        %v3194 = vunpack.c.h.b16 %v2981
        %v3195 = vunpack.c.l.b16 %v2982
        %v3196 = vunpack.c.h.b16 %v2982
        %v3197 = vunpack.c.l.b16 %v2983
        %v3198 = vunpack.c.h.b16 %v2983
        %v3199 = vunpack.c.l.b16 %v2984
        %v3200 = vunpack.c.h.b16 %v2984
        %v3201 = vunpack.c.l.b16 %v2985
        %v3202 = vunpack.c.h.b16 %v2985
        %v3203 = vunpack.c.l.b16 %v2986
        %v3204 = vunpack.c.h.b16 %v2986
        %v3205 = vunpack.c.l.b16 %v2987
        %v3206 = vunpack.c.h.b16 %v2987
        %v3207 = vunpack.c.l.b16 %v2988
        %v3208 = vunpack.c.h.b16 %v2988
        %v3209 = vunpack.c.l.b16 %v2989
        %v3210 = vunpack.c.h.b16 %v2989
        %v3211 = vunpack.c.l.b16 %v2990
        %v3212 = vunpack.c.h.b16 %v2990
        %v3213 = vunpack.c.l.b16 %v2991
        %v3214 = vunpack.c.h.b16 %v2991
        %v3215 = vunpack.c.l.b16 %v2992
        %v3216 = vunpack.c.h.b16 %v2992
        %v3217 = vunpack.c.l.b16 %v2993
        %v3218 = vunpack.c.h.b16 %v2993
        %v3219 = vunpack.c.l.b16 %v2994
        %v3220 = vunpack.c.h.b16 %v2994
        %v3221 = vunpack.c.l.b16 %v2995
        %v3222 = vunpack.c.h.b16 %v2995
        %v3223 = vunpack.c.l.b16 %v2996
        %v3224 = vunpack.c.h.b16 %v2996
        %v3225 = vunpack.c.l.b16 %v2997
        %v3226 = vunpack.c.h.b16 %v2997
        %v3227 = vunpack.c.l.b16 %v2998
        %v3228 = vunpack.c.h.b16 %v2998
        %v3229 = vpack.c.b16 %v3093, %v3089
        %v3230 = vpack.c.b16 %v3094, %v3090
        %v3231 = vpack.c.b16 %v3095, %v3091
        %v3232 = vpack.c.b16 %v3096, %v3092
        %v3233 = vpack.c.b16 %v3101, %v3097
        %v3234 = vpack.c.b16 %v3102, %v3098
        %v3235 = vpack.c.b16 %v3103, %v3099
        %v3236 = vpack.c.b16 %v3104, %v3100
        %v3237 = vpack.c.b16 %v3109, %v3105
        %v3238 = vpack.c.b16 %v3110, %v3106
        %v3239 = vpack.c.b16 %v3111, %v3107
        %v3240 = vpack.c.b16 %v3112, %v3108
        %v3241 = vpack.c.b16 %v3117, %v3113
        %v3242 = vpack.c.b16 %v3118, %v3114
        %v3243 = vpack.c.b16 %v3119, %v3115
        %v3244 = vpack.c.b16 %v3120, %v3116
        %v3245 = vpack.c.b16 %v3125, %v3121
        %v3246 = vpack.c.b16 %v3126, %v3122
        %v3247 = vpack.c.b16 %v3127, %v3123
        %v3248 = vpack.c.b16 %v3128, %v3124
        %v3249 = vpack.c.b16 %v3133, %v3129
        %v3250 = vpack.c.b16 %v3134, %v3130
        %v3251 = vpack.c.b16 %v3135, %v3131
        %v3252 = vpack.c.b16 %v3136, %v3132
        %v3253 = vpack.c.b16 %v3141, %v3137
        %v3254 = vpack.c.b16 %v3142, %v3138
        %v3255 = vpack.c.b16 %v3143, %v3139
        %v3256 = vpack.c.b16 %v3144, %v3140
        %v3257 = vpack.c.b16 %v3149, %v3145
        %v3258 = vpack.c.b16 %v3150, %v3146
        %v3259 = vpack.c.b16 %v3151, %v3147
        %v3260 = vpack.c.b16 %v3152, %v3148
        %v3261 = vpack.c.b16 %v3157, %v3153
        %v3262 = vpack.c.b16 %v3158, %v3154
        %v3263 = vpack.c.b16 %v3159, %v3155
        %v3264 = vpack.c.b16 %v3160, %v3156
        %v3265 = vpack.c.b16 %v3165, %v3161
        %v3266 = vpack.c.b16 %v3166, %v3162
        %v3267 = vpack.c.b16 %v3167, %v3163
        %v3268 = vpack.c.b16 %v3168, %v3164
        %v3269 = vpack.c.b16 %v3173, %v3169
        %v3270 = vpack.c.b16 %v3174, %v3170
        %v3271 = vpack.c.b16 %v3175, %v3171
        %v3272 = vpack.c.b16 %v3176, %v3172
        %v3273 = vpack.c.b16 %v3181, %v3177
        %v3274 = vpack.c.b16 %v3182, %v3178
        %v3275 = vpack.c.b16 %v3183, %v3179
        %v3276 = vpack.c.b16 %v3184, %v3180
        %v3277 = vpack.c.b16 %v3189, %v3185
        %v3278 = vpack.c.b16 %v3190, %v3186
        %v3279 = vpack.c.b16 %v3191, %v3187
        %v3280 = vpack.c.b16 %v3192, %v3188
        %v3281 = vpack.c.b16 %v3197, %v3193
        %v3282 = vpack.c.b16 %v3198, %v3194
        %v3283 = vpack.c.b16 %v3199, %v3195
        %v3284 = vpack.c.b16 %v3200, %v3196
        %v3285 = vpack.c.b16 %v3205, %v3201
        %v3286 = vpack.c.b16 %v3206, %v3202
        %v3287 = vpack.c.b16 %v3207, %v3203
        %v3288 = vpack.c.b16 %v3208, %v3204
        %v3289 = vpack.c.b16 %v3213, %v3209
        %v3290 = vpack.c.b16 %v3214, %v3210
        %v3291 = vpack.c.b16 %v3215, %v3211
        %v3292 = vpack.c.b16 %v3216, %v3212
        %v3293 = vpack.c.b16 %v3221, %v3217
        %v3294 = vpack.c.b16 %v3222, %v3218
        %v3295 = vpack.c.b16 %v3223, %v3219
        %v3296 = vpack.c.b16 %v3224, %v3220
        %v3297 = vpack.c.b16 %v3225, %v3225
        %v3298 = vpack.c.b16 %v3226, %v3226
        %v3299 = vpack.c.b16 %v3227, %v3227
        %v3300 = vpack.c.b16 %v3228, %v3228
        %v3370 = vsel %vm1236, %v3014, 0
        %v3373 = vsel %vm1236, %v3013, 0
        %v3376 = vsel %vm1251, %v3297, 0
        %v3379 = vsel %vm1251, %v3298, 0
        %v3382 = vsel %vm1251, %v3299, 0
        %v3385 = vsel %vm1251, %v3300, 0
        %3387 = vmatprep.subr.bf16.mxu0 %v3230
        %3388 = vmatpush1.bf16.msra.mxu0 %v3229
        %3389 = vmatprep.subr.bf16.mxu0 %v3234
        %3390 = vmatpush1.bf16.msra.mxu0 %v3233
        %3391 = vmatprep.subr.bf16.mxu0 %v3238
        %3392 = vmatpush1.bf16.msra.mxu0 %v3237
        %3393 = vmatprep.subr.bf16.mxu0 %v3242
        %3394 = vmatpush1.bf16.msra.mxu0 %v3241
        %3395 = vmatprep.subr.bf16.mxu0 %v3246
        %3396 = vmatpush1.bf16.msra.mxu0 %v3245
        %3397 = vmatprep.subr.bf16.mxu0 %v3250
        %3398 = vmatpush1.bf16.msra.mxu0 %v3249
        %3399 = vmatprep.subr.bf16.mxu0 %v3254
        %3400 = vmatpush1.bf16.msra.mxu0 %v3253
        %3401 = vmatprep.subr.bf16.mxu0 %v3258
        %3402 = vmatpush1.bf16.msra.mxu0 %v3257
        %3403 = vmatprep.subr.bf16.mxu0 %v3262
        %3404 = vmatpush1.bf16.msra.mxu0 %v3261
        %3405 = vmatprep.subr.bf16.mxu0 %v3266
        %3406 = vmatpush1.bf16.msra.mxu0 %v3265
        %3407 = vmatprep.subr.bf16.mxu0 %v3270
        %3408 = vmatpush1.bf16.msra.mxu0 %v3269
        %3409 = vmatprep.subr.bf16.mxu0 %v3274
        %3410 = vmatpush1.bf16.msra.mxu0 %v3273
        %3411 = vmatprep.subr.bf16.mxu0 %v3278
        %3412 = vmatpush1.bf16.msra.mxu0 %v3277
        %3413 = vmatprep.subr.bf16.mxu0 %v3282
        %3414 = vmatpush1.bf16.msra.mxu0 %v3281
        %3415 = vmatprep.subr.bf16.mxu0 %v3286
        %3416 = vmatpush1.bf16.msra.mxu0 %v3285
        %3417 = vmatprep.subr.bf16.mxu0 %v3290
        %3418 = vmatpush1.bf16.msra.mxu0 %v3289
        %3419 = vmatprep.mubr.bf16.mxu0 %v3011
        %3420 = vmatmul.mubr.bf16.gmra.mrb[0].mxu0 %v3008
        %v3421 = vpop.f32.mrb[0].mxu0
        %v3422 = vadd.f32 0.0, %v3421
        %v3423 = vpop.f32.mrb[0].mxu0
        %v3424 = vadd.f32 0.0, %v3423
        %v3425 = vpop.f32.mrb[0].mxu0
        %v3426 = vadd.f32 0.0, %v3425
        %v3427 = vpop.f32.mrb[0].mxu0
        %v3428 = vadd.f32 0.0, %v3427
        %3429 = vmatprep.mubr.bf16.mxu0 %v3010
        %3430 = vmatmul.mubr.bf16.gmra.mrb[0].mxu0 %v3007
        %v3431 = vpop.f32.mrb[0].mxu0
        %v3432 = vadd.f32 0.0, %v3431
        %v3433 = vpop.f32.mrb[0].mxu0
        %v3434 = vadd.f32 0.0, %v3433
        %v3435 = vpop.f32.mrb[0].mxu0
        %v3436 = vadd.f32 0.0, %v3435
        %v3437 = vpop.f32.mrb[0].mxu0
        %v3438 = vadd.f32 0.0, %v3437
        %3439 = vdwg.mxu0
        %3440 = vmatprep.subr.bf16.mxu0 %v3294
        %3441 = vmatpush1.bf16.msra.mxu0 %v3293
        %3442 = vmatprep.subr.bf16.mxu0 %v3379
        %3443 = vmatpush1.bf16.msra.mxu0 %v3376
        %3444 = vmatprep.subr.bf16.mxu0 0
        %3445 = vmatpush1.bf16.msra.mxu0 0
        %3446 = vmatprep.subr.bf16.mxu0 0
        %3447 = vmatpush1.bf16.msra.mxu0 0
        %3448 = vmatprep.subr.bf16.mxu0 0
        %3449 = vmatpush1.bf16.msra.mxu0 0
        %3450 = vmatprep.subr.bf16.mxu0 0
        %3451 = vmatpush1.bf16.msra.mxu0 0
        %3452 = vmatprep.subr.bf16.mxu0 0
        %3453 = vmatpush1.bf16.msra.mxu0 0
        %3454 = vmatprep.subr.bf16.mxu0 0
        %3455 = vmatpush1.bf16.msra.mxu0 0
        %3456 = vmatprep.subr.bf16.mxu0 0
        %3457 = vmatpush1.bf16.msra.mxu0 0
        %3458 = vmatprep.subr.bf16.mxu0 0
        %3459 = vmatpush1.bf16.msra.mxu0 0
        %3460 = vmatprep.subr.bf16.mxu0 0
        %3461 = vmatpush1.bf16.msra.mxu0 0
        %3462 = vmatprep.subr.bf16.mxu0 0
        %3463 = vmatpush1.bf16.msra.mxu0 0
        %3464 = vmatprep.subr.bf16.mxu0 0
        %3465 = vmatpush1.bf16.msra.mxu0 0
        %3466 = vmatprep.subr.bf16.mxu0 0
        %3467 = vmatpush1.bf16.msra.mxu0 0
        %3468 = vmatprep.subr.bf16.mxu0 0
        %3469 = vmatpush1.bf16.msra.mxu0 0
        %3470 = vmatprep.subr.bf16.mxu0 0
        %3471 = vmatpush1.bf16.msra.mxu0 0
        %3472 = vmatprep.mubr.bf16.mxu0 0
        %3473 = vmatmul.mubr.bf16.gmra.mrb[0].mxu0 %v3370
        %v3474 = vpop.f32.mrb[0].mxu0
        %v3475 = vadd.f32 %v3422, %v3474
        %v3476 = vpop.f32.mrb[0].mxu0
        %v3477 = vadd.f32 %v3424, %v3476
        %v3478 = vpop.f32.mrb[0].mxu0
        %v3479 = vadd.f32 %v3426, %v3478
        %v3480 = vpop.f32.mrb[0].mxu0
        %v3481 = vadd.f32 %v3428, %v3480
        %3482 = vmatprep.mubr.bf16.mxu0 0
        %3483 = vmatmul.mubr.bf16.gmra.mrb[0].mxu0 %v3373
        %v3484 = vpop.f32.mrb[0].mxu0
        %v3485 = vadd.f32 %v3432, %v3484
        %v3486 = vpop.f32.mrb[0].mxu0
        %v3487 = vadd.f32 %v3434, %v3486
        %v3488 = vpop.f32.mrb[0].mxu0
        %v3489 = vadd.f32 %v3436, %v3488
        %v3490 = vpop.f32.mrb[0].mxu0
        %v3491 = vadd.f32 %v3438, %v3490
        %3492 = vdwg.mxu0
        %3493 = vmatprep.subr.bf16.mxu0 %v3232
        %3494 = vmatpush1.bf16.msra.mxu0 %v3231
        %3495 = vmatprep.subr.bf16.mxu0 %v3236
        %3496 = vmatpush1.bf16.msra.mxu0 %v3235
        %3497 = vmatprep.subr.bf16.mxu0 %v3240
        %3498 = vmatpush1.bf16.msra.mxu0 %v3239
        %3499 = vmatprep.subr.bf16.mxu0 %v3244
        %3500 = vmatpush1.bf16.msra.mxu0 %v3243
        %3501 = vmatprep.subr.bf16.mxu0 %v3248
        %3502 = vmatpush1.bf16.msra.mxu0 %v3247
        %3503 = vmatprep.subr.bf16.mxu0 %v3252
        %3504 = vmatpush1.bf16.msra.mxu0 %v3251
        %3505 = vmatprep.subr.bf16.mxu0 %v3256
        %3506 = vmatpush1.bf16.msra.mxu0 %v3255
        %3507 = vmatprep.subr.bf16.mxu0 %v3260
        %3508 = vmatpush1.bf16.msra.mxu0 %v3259
        %3509 = vmatprep.subr.bf16.mxu0 %v3264
        %3510 = vmatpush1.bf16.msra.mxu0 %v3263
        %3511 = vmatprep.subr.bf16.mxu0 %v3268
        %3512 = vmatpush1.bf16.msra.mxu0 %v3267
        %3513 = vmatprep.subr.bf16.mxu0 %v3272
        %3514 = vmatpush1.bf16.msra.mxu0 %v3271
        %3515 = vmatprep.subr.bf16.mxu0 %v3276
        %3516 = vmatpush1.bf16.msra.mxu0 %v3275
        %3517 = vmatprep.subr.bf16.mxu0 %v3280
        %3518 = vmatpush1.bf16.msra.mxu0 %v3279
        %3519 = vmatprep.subr.bf16.mxu0 %v3284
        %3520 = vmatpush1.bf16.msra.mxu0 %v3283
        %3521 = vmatprep.subr.bf16.mxu0 %v3288
        %3522 = vmatpush1.bf16.msra.mxu0 %v3287
        %3523 = vmatprep.subr.bf16.mxu0 %v3292
        %3524 = vmatpush1.bf16.msra.mxu0 %v3291
        %3525 = vmatprep.mubr.bf16.mxu0 %v3011
        %3526 = vmatmul.mubr.bf16.gmra.mrb[0].mxu0 %v3008
        %v3527 = vpop.f32.mrb[0].mxu0
        %v3528 = vadd.f32 0.0, %v3527
        %v3529 = vpop.f32.mrb[0].mxu0
        %v3530 = vadd.f32 0.0, %v3529
        %v3531 = vpop.f32.mrb[0].mxu0
        %v3532 = vadd.f32 0.0, %v3531
        %v3533 = vpop.f32.mrb[0].mxu0
        %v3534 = vadd.f32 0.0, %v3533
        %3535 = vmatprep.mubr.bf16.mxu0 %v3010
        %3536 = vmatmul.mubr.bf16.gmra.mrb[0].mxu0 %v3007
        %v3537 = vpop.f32.mrb[0].mxu0
        %v3538 = vadd.f32 0.0, %v3537
        %v3539 = vpop.f32.mrb[0].mxu0
        %v3540 = vadd.f32 0.0, %v3539
        %v3541 = vpop.f32.mrb[0].mxu0
        %v3542 = vadd.f32 0.0, %v3541
        %v3543 = vpop.f32.mrb[0].mxu0
        %v3544 = vadd.f32 0.0, %v3543
        %3545 = vdwg.mxu0
        %3546 = vmatprep.subr.bf16.mxu0 %v3296
        %3547 = vmatpush1.bf16.msra.mxu0 %v3295
        %3548 = vmatprep.subr.bf16.mxu0 %v3385
        %3549 = vmatpush1.bf16.msra.mxu0 %v3382
        %3550 = vmatprep.subr.bf16.mxu0 0
        %3551 = vmatpush1.bf16.msra.mxu0 0
        %3552 = vmatprep.subr.bf16.mxu0 0
        %3553 = vmatpush1.bf16.msra.mxu0 0
        %3554 = vmatprep.subr.bf16.mxu0 0
        %3555 = vmatpush1.bf16.msra.mxu0 0
        %3556 = vmatprep.subr.bf16.mxu0 0
        %3557 = vmatpush1.bf16.msra.mxu0 0
        %3558 = vmatprep.subr.bf16.mxu0 0
        %3559 = vmatpush1.bf16.msra.mxu0 0
        %3560 = vmatprep.subr.bf16.mxu0 0
        %3561 = vmatpush1.bf16.msra.mxu0 0
        %3562 = vmatprep.subr.bf16.mxu0 0
        %3563 = vmatpush1.bf16.msra.mxu0 0
        %3564 = vmatprep.subr.bf16.mxu0 0
        %3565 = vmatpush1.bf16.msra.mxu0 0
        %3566 = vmatprep.subr.bf16.mxu0 0
        %3567 = vmatpush1.bf16.msra.mxu0 0
        %3568 = vmatprep.subr.bf16.mxu0 0
        %3569 = vmatpush1.bf16.msra.mxu0 0
        %3570 = vmatprep.subr.bf16.mxu0 0
        %3571 = vmatpush1.bf16.msra.mxu0 0
        %3572 = vmatprep.subr.bf16.mxu0 0
        %3573 = vmatpush1.bf16.msra.mxu0 0
        %3574 = vmatprep.subr.bf16.mxu0 0
        %3575 = vmatpush1.bf16.msra.mxu0 0
        %3576 = vmatprep.subr.bf16.mxu0 0
        %3577 = vmatpush1.bf16.msra.mxu0 0
        %3578 = vmatprep.mubr.bf16.mxu0 0
        %3579 = vmatmul.mubr.bf16.gmra.mrb[0].mxu0 %v3370
        %v3580 = vpop.f32.mrb[0].mxu0
        %v3581 = vadd.f32 %v3528, %v3580
        %v3582 = vpop.f32.mrb[0].mxu0
        %v3583 = vadd.f32 %v3530, %v3582
        %v3584 = vpop.f32.mrb[0].mxu0
        %v3585 = vadd.f32 %v3532, %v3584
        %v3586 = vpop.f32.mrb[0].mxu0
        %v3587 = vadd.f32 %v3534, %v3586
        %3588 = vmatprep.mubr.bf16.mxu0 0
        %3589 = vmatmul.mubr.bf16.gmra.mrb[0].mxu0 %v3373
        %v3590 = vpop.f32.mrb[0].mxu0
        %v3591 = vadd.f32 %v3538, %v3590
        %v3592 = vpop.f32.mrb[0].mxu0
        %v3593 = vadd.f32 %v3540, %v3592
        %v3594 = vpop.f32.mrb[0].mxu0
        %v3595 = vadd.f32 %v3542, %v3594
        %v3596 = vpop.f32.mrb[0].mxu0
        %v3597 = vadd.f32 %v3544, %v3596
        %3598 = vdwg.mxu0
        %v3599 = vadd.f32 %v2792, %v3475
        %v3600 = vadd.f32 %v2794, %v3477
        %v3601 = vadd.f32 %v2898, %v3581
        %v3602 = vadd.f32 %v2900, %v3583
        %v3603 = vadd.f32 %v2796, %v3479
        %v3604 = vadd.f32 %v2798, %v3481
        %v3605 = vadd.f32 %v2902, %v3585
        %v3606 = vadd.f32 %v2904, %v3587
        %v3607 = vadd.f32 %v2802, %v3485
        %v3608 = vadd.f32 %v2804, %v3487
        %v3609 = vadd.f32 %v2908, %v3591
        %v3610 = vadd.f32 %v2910, %v3593
        %v3611 = vadd.f32 %v2806, %v3489
        %v3612 = vadd.f32 %v2808, %v3491
        %v3613 = vadd.f32 %v2912, %v3595
        %v3614 = vadd.f32 %v2914, %v3597
        %v3615 = vmax.f32 %v3599, 0.0
        %v3616 = vmax.f32 %v3600, 0.0
        %v3617 = vmax.f32 %v3601, 0.0
        %v3618 = vmax.f32 %v3602, 0.0
        %v3619 = vmax.f32 %v3603, 0.0
        %v3620 = vmax.f32 %v3604, 0.0
        %v3621 = vmax.f32 %v3605, 0.0
        %v3622 = vmax.f32 %v3606, 0.0
        %v3623 = vmax.f32 %v3607, 0.0
        %v3624 = vmax.f32 %v3608, 0.0
        %v3625 = vmax.f32 %v3609, 0.0
        %v3626 = vmax.f32 %v3610, 0.0
        %v3627 = vmax.f32 %v3611, 0.0
        %v3628 = vmax.f32 %v3612, 0.0
        %v3629 = vmax.f32 %v3613, 0.0
        %v3630 = vmax.f32 %v3614, 0.0
        %v3631 = vld [vmem:[%s4] ss:$4 sm:$0xf]
        %s3632 = scalar_lea.vmem %s4, 1
        %v3633 = vld [vmem:[%s3632] ss:$4 sm:$0xf]
        %s3634 = scalar_lea.vmem %s4, 2
        %v3635 = vld [vmem:[%s3634] ss:$4 sm:$0xf]
        %v3637 = vlaneseq
        %v3638 = vshrl.u32 %v3637, 7
        %v3639 = vsub.s32 0, %v3638
        %v3640 = vrot.slane %v3635, %v3639
        %v3641 = vlaneseq
        %v3642 = vshrl.u32 %v3641, 7
        %v3643 = vsub.s32 1, %v3642
        %v3644 = vrot.slane %v3635, %v3643
        %v3645 = vlaneseq
        %v3646 = vshrl.u32 %v3645, 7
        %v3647 = vsub.s32 2, %v3646
        %v3648 = vrot.slane %v3635, %v3647
        %v3649 = vlaneseq
        %v3650 = vshrl.u32 %v3649, 7
        %v3651 = vsub.s32 3, %v3650
        %v3652 = vrot.slane %v3635, %v3651
        %v3657 = vmul.f32 %v3615, %v3640
        %v3658 = vmul.f32 %v3616, %v3644
        %v3659 = vmul.f32 %v3617, %v3648
        %v3660 = vmul.f32 %v3618, %v3652
        %v3661 = vmul.f32 %v3619, %v3640
        %v3662 = vmul.f32 %v3620, %v3644
        %v3663 = vmul.f32 %v3621, %v3648
        %v3664 = vmul.f32 %v3622, %v3652
        %v3665 = vmul.f32 %v3623, %v3640
        %v3666 = vmul.f32 %v3624, %v3644
        %v3667 = vmul.f32 %v3625, %v3648
        %v3668 = vmul.f32 %v3626, %v3652
        %v3669 = vmul.f32 %v3627, %v3640
        %v3670 = vmul.f32 %v3628, %v3644
        %v3671 = vmul.f32 %v3629, %v3648
        %v3672 = vmul.f32 %v3630, %v3652
        %v3673 = vadd.f32 %v3657, %v3658
        %v3674 = vadd.f32 %v3673, %v3659
        %vm3675 = vcmask 261120
        %v3676 = vsel %vm3675, %v3660, 0.0
        %v3677 = vadd.f32 %v3674, %v3676
        %3678 = vadd.xlane.f32.xlu0 %v3677
        %v3679 = vpop.xlane.xlu0 %3678
        %v3680 = vadd.f32 %v3661, %v3662
        %v3681 = vadd.f32 %v3680, %v3663
        %v3682 = vsel %vm3675, %v3664, 0.0
        %v3683 = vadd.f32 %v3681, %v3682
        %3684 = vadd.xlane.f32.xlu0 %v3683
        %v3685 = vpop.xlane.xlu0 %3684
        %v3686 = vadd.f32 %v3665, %v3666
        %v3687 = vadd.f32 %v3686, %v3667
        %v3688 = vsel %vm3675, %v3668, 0.0
        %v3689 = vadd.f32 %v3687, %v3688
        %3690 = vadd.xlane.f32.xlu0 %v3689
        %v3691 = vpop.xlane.xlu0 %3690
        %vm3692 = vcmask 1041408
        %v3693 = vsel %vm3692, %v3669, 0.0
        %v3694 = vsel %vm3692, %v3670, 0.0
        %v3695 = vadd.f32 %v3693, %v3694
        %v3696 = vsel %vm3692, %v3671, 0.0
        %v3697 = vadd.f32 %v3695, %v3696
        %vm3698 = vcmask 254976
        %v3699 = vsel %vm3698, %v3672, 0.0
        %v3700 = vadd.f32 %v3697, %v3699
        %3701 = vadd.xlane.f32.xlu0 %v3700
        %v3702 = vpop.xlane.xlu0 %3701
        %v3703 = vadd.f32 %v3679, %v3685
        %v3704 = vadd.f32 %v3703, %v3691
        %v3705 = vsel %vm3692, %v3702, 0.0
        %v3706 = vadd.f32 %v3704, %v3705
        %v3707 = vrot.slane %v3706, 4
        %v3708 = vadd.f32 %v3706, %v3707
        %v3709 = vrot.slane %v3708, 2
        %v3710 = vadd.f32 %v3708, %v3709
        %v3711 = vrot.slane %v3710, 1
        %v3712 = vadd.f32 %v3710, %v3711
        %v3713 = vmul.f32 %v3657, %v3615
        %v3714 = vmul.f32 %v3658, %v3616
        %v3715 = vmul.f32 %v3659, %v3617
        %v3716 = vmul.f32 %v3660, %v3618
        %v3717 = vmul.f32 %v3661, %v3619
        %v3718 = vmul.f32 %v3662, %v3620
        %v3719 = vmul.f32 %v3663, %v3621
        %v3720 = vmul.f32 %v3664, %v3622
        %v3721 = vmul.f32 %v3665, %v3623
        %v3722 = vmul.f32 %v3666, %v3624
        %v3723 = vmul.f32 %v3667, %v3625
        %v3724 = vmul.f32 %v3668, %v3626
        %v3725 = vmul.f32 %v3669, %v3627
        %v3726 = vmul.f32 %v3670, %v3628
        %v3727 = vmul.f32 %v3671, %v3629
        %v3728 = vmul.f32 %v3672, %v3630
        %v3729 = vadd.f32 %v3713, %v3714
        %v3730 = vadd.f32 %v3729, %v3715
        %v3731 = vsel %vm3675, %v3716, 0.0
        %v3732 = vadd.f32 %v3730, %v3731
        %3733 = vadd.xlane.f32.xlu0 %v3732
        %v3734 = vpop.xlane.xlu0 %3733
        %v3735 = vadd.f32 %v3717, %v3718
        %v3736 = vadd.f32 %v3735, %v3719
        %v3737 = vsel %vm3675, %v3720, 0.0
        %v3738 = vadd.f32 %v3736, %v3737
        %3739 = vadd.xlane.f32.xlu0 %v3738
        %v3740 = vpop.xlane.xlu0 %3739
        %v3741 = vadd.f32 %v3721, %v3722
        %v3742 = vadd.f32 %v3741, %v3723
        %v3743 = vsel %vm3675, %v3724, 0.0
        %v3744 = vadd.f32 %v3742, %v3743
        %3745 = vadd.xlane.f32.xlu0 %v3744
        %v3746 = vpop.xlane.xlu0 %3745
        %v3747 = vsel %vm3692, %v3725, 0.0
        %v3748 = vsel %vm3692, %v3726, 0.0
        %v3749 = vadd.f32 %v3747, %v3748
        %v3750 = vsel %vm3692, %v3727, 0.0
        %v3751 = vadd.f32 %v3749, %v3750
        %v3752 = vsel %vm3698, %v3728, 0.0
        %v3753 = vadd.f32 %v3751, %v3752
        %3754 = vadd.xlane.f32.xlu0 %v3753
        %v3755 = vpop.xlane.xlu0 %3754
        %v3756 = vadd.f32 %v3734, %v3740
        %v3757 = vadd.f32 %v3756, %v3746
        %v3758 = vsel %vm3692, %v3755, 0.0
        %v3759 = vadd.f32 %v3757, %v3758
        %v3760 = vrot.slane %v3759, 4
        %v3761 = vadd.f32 %v3759, %v3760
        %v3762 = vrot.slane %v3761, 2
        %v3763 = vadd.f32 %v3761, %v3762
        %v3764 = vrot.slane %v3763, 1
        %v3765 = vadd.f32 %v3763, %v3764
        %v3766 = vmul.f32 %v3712, 0.00018491125
        %v3767 = vmul.f32 %v3765, 0.00018491125
        %v3768 = vmul.f32 %v3766, %v3766
        %v3769 = vsub.f32 %v3767, %v3768
        %v3770 = vmul.f32 %v3635, %v3766
        %v3771 = vadd.f32 %v3770, 0.0
        %v3772 = vmul.f32 %v3635, %v3769
        %v3773 = vadd.f32 %v3772, 0.0
        %s3774 = scalar_lea.vmem %s4, 3
        %v3775 = vld [vmem:[%s3774] ss:$4 sm:$0xf]
        %v3777 = vlaneseq
        %v3778 = vshrl.u32 %v3777, 7
        %v3779 = vsub.s32 0, %v3778
        %v3780 = vrot.slane %v3775, %v3779
        %v3781 = vlaneseq
        %v3782 = vshrl.u32 %v3781, 7
        %v3783 = vsub.s32 1, %v3782
        %v3784 = vrot.slane %v3775, %v3783
        %v3785 = vlaneseq
        %v3786 = vshrl.u32 %v3785, 7
        %v3787 = vsub.s32 2, %v3786
        %v3788 = vrot.slane %v3775, %v3787
        %v3789 = vlaneseq
        %v3790 = vshrl.u32 %v3789, 7
        %v3791 = vsub.s32 3, %v3790
        %v3792 = vrot.slane %v3775, %v3791
        %v3797 = vmul.f32 %v3615, %v3780
        %v3798 = vmul.f32 %v3616, %v3784
        %v3799 = vmul.f32 %v3617, %v3788
        %v3800 = vmul.f32 %v3618, %v3792
        %v3801 = vmul.f32 %v3619, %v3780
        %v3802 = vmul.f32 %v3620, %v3784
        %v3803 = vmul.f32 %v3621, %v3788
        %v3804 = vmul.f32 %v3622, %v3792
        %v3805 = vmul.f32 %v3623, %v3780
        %v3806 = vmul.f32 %v3624, %v3784
        %v3807 = vmul.f32 %v3625, %v3788
        %v3808 = vmul.f32 %v3626, %v3792
        %v3809 = vmul.f32 %v3627, %v3780
        %v3810 = vmul.f32 %v3628, %v3784
        %v3811 = vmul.f32 %v3629, %v3788
        %v3812 = vmul.f32 %v3630, %v3792
        %v3813 = vadd.f32 %v3797, %v3798
        %v3814 = vadd.f32 %v3813, %v3799
        %v3815 = vsel %vm3675, %v3800, 0.0
        %v3816 = vadd.f32 %v3814, %v3815
        %3817 = vadd.xlane.f32.xlu0 %v3816
        %v3818 = vpop.xlane.xlu0 %3817
        %v3819 = vadd.f32 %v3801, %v3802
        %v3820 = vadd.f32 %v3819, %v3803
        %v3821 = vsel %vm3675, %v3804, 0.0
        %v3822 = vadd.f32 %v3820, %v3821
        %3823 = vadd.xlane.f32.xlu0 %v3822
        %v3824 = vpop.xlane.xlu0 %3823
        %v3825 = vadd.f32 %v3805, %v3806
        %v3826 = vadd.f32 %v3825, %v3807
        %v3827 = vsel %vm3675, %v3808, 0.0
        %v3828 = vadd.f32 %v3826, %v3827
        %3829 = vadd.xlane.f32.xlu0 %v3828
        %v3830 = vpop.xlane.xlu0 %3829
        %v3831 = vsel %vm3692, %v3809, 0.0
        %v3832 = vsel %vm3692, %v3810, 0.0
        %v3833 = vadd.f32 %v3831, %v3832
        %v3834 = vsel %vm3692, %v3811, 0.0
        %v3835 = vadd.f32 %v3833, %v3834
        %v3836 = vsel %vm3698, %v3812, 0.0
        %v3837 = vadd.f32 %v3835, %v3836
        %3838 = vadd.xlane.f32.xlu0 %v3837
        %v3839 = vpop.xlane.xlu0 %3838
        %v3840 = vadd.f32 %v3818, %v3824
        %v3841 = vadd.f32 %v3840, %v3830
        %v3842 = vsel %vm3692, %v3839, 0.0
        %v3843 = vadd.f32 %v3841, %v3842
        %v3844 = vrot.slane %v3843, 4
        %v3845 = vadd.f32 %v3843, %v3844
        %v3846 = vrot.slane %v3845, 2
        %v3847 = vadd.f32 %v3845, %v3846
        %v3848 = vrot.slane %v3847, 1
        %v3849 = vadd.f32 %v3847, %v3848
        %v3850 = vmul.f32 %v3797, %v3615
        %v3851 = vmul.f32 %v3798, %v3616
        %v3852 = vmul.f32 %v3799, %v3617
        %v3853 = vmul.f32 %v3800, %v3618
        %v3854 = vmul.f32 %v3801, %v3619
        %v3855 = vmul.f32 %v3802, %v3620
        %v3856 = vmul.f32 %v3803, %v3621
        %v3857 = vmul.f32 %v3804, %v3622
        %v3858 = vmul.f32 %v3805, %v3623
        %v3859 = vmul.f32 %v3806, %v3624
        %v3860 = vmul.f32 %v3807, %v3625
        %v3861 = vmul.f32 %v3808, %v3626
        %v3862 = vmul.f32 %v3809, %v3627
        %v3863 = vmul.f32 %v3810, %v3628
        %v3864 = vmul.f32 %v3811, %v3629
        %v3865 = vmul.f32 %v3812, %v3630
        %v3866 = vadd.f32 %v3850, %v3851
        %v3867 = vadd.f32 %v3866, %v3852
        %v3868 = vsel %vm3675, %v3853, 0.0
        %v3869 = vadd.f32 %v3867, %v3868
        %3870 = vadd.xlane.f32.xlu0 %v3869
        %v3871 = vpop.xlane.xlu0 %3870
        %v3872 = vadd.f32 %v3854, %v3855
        %v3873 = vadd.f32 %v3872, %v3856
        %v3874 = vsel %vm3675, %v3857, 0.0
        %v3875 = vadd.f32 %v3873, %v3874
        %3876 = vadd.xlane.f32.xlu0 %v3875
        %v3877 = vpop.xlane.xlu0 %3876
        %v3878 = vadd.f32 %v3858, %v3859
        %v3879 = vadd.f32 %v3878, %v3860
        %v3880 = vsel %vm3675, %v3861, 0.0
        %v3881 = vadd.f32 %v3879, %v3880
        %3882 = vadd.xlane.f32.xlu0 %v3881
        %v3883 = vpop.xlane.xlu0 %3882
        %v3884 = vsel %vm3692, %v3862, 0.0
        %v3885 = vsel %vm3692, %v3863, 0.0
        %v3886 = vadd.f32 %v3884, %v3885
        %v3887 = vsel %vm3692, %v3864, 0.0
        %v3888 = vadd.f32 %v3886, %v3887
        %v3889 = vsel %vm3698, %v3865, 0.0
        %v3890 = vadd.f32 %v3888, %v3889
        %3891 = vadd.xlane.f32.xlu0 %v3890
        %v3892 = vpop.xlane.xlu0 %3891
        %v3893 = vadd.f32 %v3871, %v3877
        %v3894 = vadd.f32 %v3893, %v3883
        %v3895 = vsel %vm3692, %v3892, 0.0
        %v3896 = vadd.f32 %v3894, %v3895
        %v3897 = vrot.slane %v3896, 4
        %v3898 = vadd.f32 %v3896, %v3897
        %v3899 = vrot.slane %v3898, 2
        %v3900 = vadd.f32 %v3898, %v3899
        %v3901 = vrot.slane %v3900, 1
        %v3902 = vadd.f32 %v3900, %v3901
        %v3903 = vmul.f32 %v3849, 0.00018491125
        %v3904 = vmul.f32 %v3902, 0.00018491125
        %v3905 = vmul.f32 %v3903, %v3903
        %v3906 = vsub.f32 %v3904, %v3905
        %v3907 = vmul.f32 %v3775, %v3903
        %v3908 = vadd.f32 %v3771, %v3907
        %v3909 = vmul.f32 %v3775, %v3906
        %v3910 = vadd.f32 %v3773, %v3909
        %v3911 = vadd.f32 %v3910, 1e-05
        %v3912 = vrsqrt.pop %v3911
        %v3914 = vlaneseq
        %v3915 = vshrl.u32 %v3914, 7
        %v3916 = vsub.s32 0, %v3915
        %v3917 = vrot.slane %v3908, %v3916
        %v3918 = vlaneseq
        %v3919 = vshrl.u32 %v3918, 7
        %v3920 = vsub.s32 1, %v3919
        %v3921 = vrot.slane %v3908, %v3920
        %v3922 = vlaneseq
        %v3923 = vshrl.u32 %v3922, 7
        %v3924 = vsub.s32 2, %v3923
        %v3925 = vrot.slane %v3908, %v3924
        %v3926 = vlaneseq
        %v3927 = vshrl.u32 %v3926, 7
        %v3928 = vsub.s32 3, %v3927
        %v3929 = vrot.slane %v3908, %v3928
        %v3934 = vsub.f32 %v3615, %v3917
        %v3935 = vsub.f32 %v3616, %v3921
        %v3936 = vsub.f32 %v3617, %v3925
        %v3937 = vsub.f32 %v3618, %v3929
        %v3938 = vsub.f32 %v3619, %v3917
        %v3939 = vsub.f32 %v3620, %v3921
        %v3940 = vsub.f32 %v3621, %v3925
        %v3941 = vsub.f32 %v3622, %v3929
        %v3942 = vsub.f32 %v3623, %v3917
        %v3943 = vsub.f32 %v3624, %v3921
        %v3944 = vsub.f32 %v3625, %v3925
        %v3945 = vsub.f32 %v3626, %v3929
        %v3946 = vsub.f32 %v3627, %v3917
        %v3947 = vsub.f32 %v3628, %v3921
        %v3948 = vsub.f32 %v3629, %v3925
        %v3949 = vsub.f32 %v3630, %v3929
        %v3950 = vmul.f32 %v3912, %v3631
        %v3952 = vlaneseq
        %v3953 = vshrl.u32 %v3952, 7
        %v3954 = vsub.s32 0, %v3953
        %v3955 = vrot.slane %v3950, %v3954
        %v3956 = vlaneseq
        %v3957 = vshrl.u32 %v3956, 7
        %v3958 = vsub.s32 1, %v3957
        %v3959 = vrot.slane %v3950, %v3958
        %v3960 = vlaneseq
        %v3961 = vshrl.u32 %v3960, 7
        %v3962 = vsub.s32 2, %v3961
        %v3963 = vrot.slane %v3950, %v3962
        %v3964 = vlaneseq
        %v3965 = vshrl.u32 %v3964, 7
        %v3966 = vsub.s32 3, %v3965
        %v3967 = vrot.slane %v3950, %v3966
        %v3972 = vmul.f32 %v3934, %v3955
        %v3973 = vmul.f32 %v3935, %v3959
        %v3974 = vmul.f32 %v3936, %v3963
        %v3975 = vmul.f32 %v3937, %v3967
        %v3976 = vmul.f32 %v3938, %v3955
        %v3977 = vmul.f32 %v3939, %v3959
        %v3978 = vmul.f32 %v3940, %v3963
        %v3979 = vmul.f32 %v3941, %v3967
        %v3980 = vmul.f32 %v3942, %v3955
        %v3981 = vmul.f32 %v3943, %v3959
        %v3982 = vmul.f32 %v3944, %v3963
        %v3983 = vmul.f32 %v3945, %v3967
        %v3984 = vmul.f32 %v3946, %v3955
        %v3985 = vmul.f32 %v3947, %v3959
        %v3986 = vmul.f32 %v3948, %v3963
        %v3987 = vmul.f32 %v3949, %v3967
        %v3989 = vlaneseq
        %v3990 = vshrl.u32 %v3989, 7
        %v3991 = vsub.s32 0, %v3990
        %v3992 = vrot.slane %v3633, %v3991
        %v3993 = vlaneseq
        %v3994 = vshrl.u32 %v3993, 7
        %v3995 = vsub.s32 1, %v3994
        %v3996 = vrot.slane %v3633, %v3995
        %v3997 = vlaneseq
        %v3998 = vshrl.u32 %v3997, 7
        %v3999 = vsub.s32 2, %v3998
        %v4000 = vrot.slane %v3633, %v3999
        %v4001 = vlaneseq
        %v4002 = vshrl.u32 %v4001, 7
        %v4003 = vsub.s32 3, %v4002
        %v4004 = vrot.slane %v3633, %v4003
        %v4009 = vadd.f32 %v3972, %v3992
        %v4010 = vadd.f32 %v3973, %v3996
        %v4011 = vadd.f32 %v3974, %v4000
        %v4012 = vadd.f32 %v3975, %v4004
        %v4013 = vadd.f32 %v3976, %v3992
        %v4014 = vadd.f32 %v3977, %v3996
        %v4015 = vadd.f32 %v3978, %v4000
        %v4016 = vadd.f32 %v3979, %v4004
        %v4017 = vadd.f32 %v3980, %v3992
        %v4018 = vadd.f32 %v3981, %v3996
        %v4019 = vadd.f32 %v3982, %v4000
        %v4020 = vadd.f32 %v3983, %v4004
        %v4021 = vadd.f32 %v3984, %v3992
        %v4022 = vadd.f32 %v3985, %v3996
        %v4023 = vadd.f32 %v3986, %v4000
        %v4024 = vadd.f32 %v3987, %v4004
        %v4025 = vld [vmem:[#allocation11] sm:$0xff]
        %v4026 = vld [vmem:[#allocation11 + $0x8] sm:$0xff]
        %v4027 = vld [vmem:[#allocation11 + $0x10] sm:$0xff]
        %v4028 = vld [vmem:[#allocation11 + $0x18] sm:$0xff]
        %v4029 = vld [vmem:[#allocation11 + $0x20] sm:$0xff]
        %v4030 = vld [vmem:[#allocation11 + $0x28] sm:$0xff]
        %v4031 = vld [vmem:[#allocation11 + $0x30] sm:$0xff]
        %v4032 = vld [vmem:[#allocation11 + $0x38] sm:$0xff]
        %v4033 = vld [vmem:[#allocation11 + $0x40] sm:$0xff]
        %v4034 = vld [vmem:[#allocation11 + $0x48] sm:$0xff]
        %v4035 = vld [vmem:[#allocation11 + $0x50] sm:$0xff]
        %v4036 = vld [vmem:[#allocation11 + $0x58] sm:$0xff]
        %v4037 = vld [vmem:[#allocation11 + $0x60] sm:$0xff]
        %v4038 = vld [vmem:[#allocation11 + $0x68] sm:$0xff]
        %v4039 = vld [vmem:[#allocation11 + $0x70] sm:$0xff]
        %v4040 = vld [vmem:[#allocation11 + $0x78] sm:$0xff]
        %v4041 = vld [vmem:[#allocation11 + $0x80] sm:$0xff]
        %v4042 = vld [vmem:[#allocation11 + $0x88] sm:$0xff]
        %v4043 = vld [vmem:[#allocation11 + $0x90] sm:$0xff]
        %v4044 = vld [vmem:[#allocation11 + $0x98] sm:$0xff]
        %v4045 = vld [vmem:[#allocation11 + $0xa0] sm:$0xff]
        %v4046 = vld [vmem:[#allocation11 + $0xa8] sm:$0xff]
        %v4047 = vld [vmem:[#allocation11 + $0xb0] sm:$0xff]
        %v4048 = vld [vmem:[#allocation11 + $0xb8] sm:$0xff]
        %v4049 = vld [vmem:[#allocation11 + $0xc0] sm:$0xff]
        %v4050 = vld [vmem:[#allocation11 + $0xc8] sm:$0xff]
        %v4051 = vld [vmem:[#allocation11 + $0xd0] sm:$0xff]
        %v4052 = vld [vmem:[#allocation11 + $0xd8] sm:$0xff]
        %v4053 = vld [vmem:[#allocation11 + $0xe0] sm:$0xff]
        %v4054 = vld [vmem:[#allocation11 + $0xe8] sm:$0xff]
        %v4055 = vld [vmem:[#allocation11 + $0xf0] sm:$0xff]
        %v4056 = vld [vmem:[#allocation11 + $0xf8] sm:$0xff]
        %v4057 = vld [vmem:[#allocation11 + $0x100] sm:$0xff]
        %v4058 = vld [vmem:[#allocation11 + $0x108] sm:$0xff]
        %v4059 = vld [vmem:[#allocation11 + $0x110] sm:$0xff]
        %v4060 = vld [vmem:[#allocation11 + $0x118] sm:$0xff]
        %v4061 = vld [vmem:[#allocation11 + $0x120] sm:$0xff]
        %v4062 = vld [vmem:[#allocation11 + $0x128] sm:$0xff]
        %v4063 = vld [vmem:[#allocation11 + $0x130] sm:$0xff]
        %v4064 = vld [vmem:[#allocation11 + $0x138] sm:$0xff]
        %v4065 = vld [vmem:[#allocation11 + $0x140] sm:$0xff]
        %v4066 = vld [vmem:[#allocation11 + $0x148] sm:$0xff]
        %v4067 = vld [vmem:[#allocation11 + $0x150] sm:$0xff]
        %v4068 = vld [vmem:[#allocation11 + $0x158] sm:$0xff]
        %v4069 = vld [vmem:[#allocation11 + $0x160] sm:$0xff]
        %v4070 = vld [vmem:[#allocation11 + $0x168] sm:$0xff]
        %v4071 = vld [vmem:[#allocation11 + $0x170] sm:$0xff]
        %v4072 = vld [vmem:[#allocation11 + $0x178] sm:$0xff]
        %v4073 = vld [vmem:[#allocation11 + $0x180] sm:$0xff]
        %v4074 = vld [vmem:[#allocation11 + $0x188] sm:$0xff]
        %v4075 = vld [vmem:[#allocation11 + $0x190] sm:$0xff]
        %v4076 = vld [vmem:[#allocation11 + $0x198] sm:$0xff]
        %v4077 = vld [vmem:[#allocation11 + $0x1a0] sm:$0xff]
        %v4078 = vld [vmem:[#allocation11 + $0x1a8] sm:$0xff]
        %v4079 = vld [vmem:[#allocation11 + $0x1b0] sm:$0xff]
        %v4080 = vld [vmem:[#allocation11 + $0x1b8] sm:$0xff]
        %v4081 = vld [vmem:[#allocation11 + $0x1c0] sm:$0xff]
        %v4082 = vld [vmem:[#allocation11 + $0x1c8] sm:$0xff]
        %v4083 = vld [vmem:[#allocation11 + $0x1d0] sm:$0xff]
        %v4084 = vld [vmem:[#allocation11 + $0x1d8] sm:$0xff]
        %v4085 = vld [vmem:[#allocation11 + $0x1e0] sm:$0xff]
        %v4086 = vld [vmem:[#allocation11 + $0x1e8] sm:$0xff]
        %v4087 = vld [vmem:[#allocation11 + $0x1f0] sm:$0xff]
        %v4088 = vld [vmem:[#allocation11 + $0x1f8] sm:$0xff]
        %v4089 = vld [vmem:[#allocation11 + $0x200] sm:$0xff]
        %v4090 = vld [vmem:[#allocation11 + $0x208] sm:$0xff]
        %v4091 = vld [vmem:[#allocation11 + $0x210] sm:$0xff]
        %v4092 = vld [vmem:[#allocation11 + $0x218] sm:$0xff]
        %v4093 = vld [vmem:[#allocation11 + $0x220] sm:$0xff]
        %v4094 = vld [vmem:[#allocation11 + $0x228] sm:$0xff]
        %v4095 = vld [vmem:[#allocation11 + $0x230] sm:$0xff]
        %v4096 = vld [vmem:[#allocation11 + $0x238] sm:$0xff]
        %v4097 = vld [vmem:[#allocation11 + $0x240] sm:$0xff]
        %v4098 = vld [vmem:[#allocation11 + $0x248] sm:$0xff]
        %v4099 = vld [vmem:[#allocation11 + $0x250] sm:$0xff]
        %v4100 = vld [vmem:[#allocation11 + $0x258] sm:$0xff]
        %v4101 = vld [vmem:[#allocation11 + $0x260] sm:$0xff]
        %v4102 = vld [vmem:[#allocation11 + $0x268] sm:$0xff]
        %v4103 = vld [vmem:[#allocation11 + $0x270] sm:$0xff]
        %v4104 = vld [vmem:[#allocation11 + $0x278] sm:$0xff]
        %v4105 = vld [vmem:[#allocation11 + $0x280] sm:$0xff]
        %v4106 = vld [vmem:[#allocation11 + $0x288] sm:$0xff]
        %v4107 = vld [vmem:[#allocation11 + $0x290] sm:$0xff]
        %v4108 = vld [vmem:[#allocation11 + $0x298] sm:$0xff]
        %v4109 = vld [vmem:[#allocation11 + $0x2a0] sm:$0xff]
        %v4110 = vld [vmem:[#allocation11 + $0x2a8] sm:$0xff]
        %v4111 = vld [vmem:[#allocation11 + $0x2b0] sm:$0xff]
        %v4112 = vld [vmem:[#allocation11 + $0x2b8] sm:$0xff]
        %v4113 = vld [vmem:[#allocation11 + $0x2c0] sm:$0xff]
        %v4114 = vld [vmem:[#allocation11 + $0x2c8] sm:$0xff]
        %v4115 = vld [vmem:[#allocation11 + $0x2d0] sm:$0xff]
        %v4116 = vld [vmem:[#allocation11 + $0x2d8] sm:$0xff]
        %v4117 = vld [vmem:[#allocation11 + $0x2e0] sm:$0xff]
        %v4118 = vld [vmem:[#allocation11 + $0x2e8] sm:$0xff]
        %v4119 = vld [vmem:[#allocation11 + $0x2f0] sm:$0xff]
        %v4120 = vld [vmem:[#allocation11 + $0x2f8] sm:$0xff]
        %v4121 = vld [vmem:[#allocation11 + $0x300] sm:$0xff]
        %v4122 = vld [vmem:[#allocation11 + $0x308] sm:$0xff]
        %v4123 = vld [vmem:[#allocation11 + $0x310] sm:$0xff]
        %v4124 = vld [vmem:[#allocation11 + $0x318] sm:$0xff]
        %v4125 = vld [vmem:[#allocation11 + $0x320] sm:$0xff]
        %v4126 = vld [vmem:[#allocation11 + $0x328] sm:$0xff]
        %v4127 = vld [vmem:[#allocation11 + $0x330] sm:$0xff]
        %v4128 = vld [vmem:[#allocation11 + $0x338] sm:$0xff]
        %v4130 = vsel %vm3675, %v4012, 0
        %v4133 = vsel %vm3675, %v4016, 0
        %v4136 = vsel %vm3675, %v4020, 0
        %v4139 = vsel %vm3675, %v4024, 0
        %4141 = vmatprep.subr.mxu0 %v4026
        %4142 = vmatpush1.msra.mxu0 %v4025
        %4143 = vmatprep.subr.mxu0 %v4028
        %4144 = vmatpush1.msra.mxu0 %v4027
        %4145 = vmatprep.subr.mxu0 %v4030
        %4146 = vmatpush1.msra.mxu0 %v4029
        %4147 = vmatprep.subr.mxu0 %v4032
        %4148 = vmatpush1.msra.mxu0 %v4031
        %4149 = vmatprep.subr.mxu0 %v4034
        %4150 = vmatpush1.msra.mxu0 %v4033
        %4151 = vmatprep.subr.mxu0 %v4036
        %4152 = vmatpush1.msra.mxu0 %v4035
        %4153 = vmatprep.subr.mxu0 %v4038
        %4154 = vmatpush1.msra.mxu0 %v4037
        %4155 = vmatprep.subr.mxu0 %v4040
        %4156 = vmatpush1.msra.mxu0 %v4039
        %4157 = vmatprep.subr.mxu0 %v4042
        %4158 = vmatpush1.msra.mxu0 %v4041
        %4159 = vmatprep.subr.mxu0 %v4044
        %4160 = vmatpush1.msra.mxu0 %v4043
        %4161 = vmatprep.subr.mxu0 %v4046
        %4162 = vmatpush1.msra.mxu0 %v4045
        %4163 = vmatprep.subr.mxu0 %v4048
        %4164 = vmatpush1.msra.mxu0 %v4047
        %4165 = vmatprep.subr.mxu0 %v4050
        %4166 = vmatpush1.msra.mxu0 %v4049
        %4167 = vmatprep.subr.mxu0 %v4052
        %4168 = vmatpush1.msra.mxu0 %v4051
        %4169 = vmatprep.subr.mxu0 %v4054
        %4170 = vmatpush1.msra.mxu0 %v4053
        %4171 = vmatprep.subr.mxu0 %v4056
        %4172 = vmatpush1.msra.mxu0 %v4055
        %4173 = vmatprep.subr.mxu0 %v4058
        %4174 = vmatpush1.msra.mxu0 %v4057
        %4175 = vmatprep.subr.mxu0 %v4060
        %4176 = vmatpush1.msra.mxu0 %v4059
        %4177 = vmatprep.subr.mxu0 %v4062
        %4178 = vmatpush1.msra.mxu0 %v4061
        %4179 = vmatprep.subr.mxu0 %v4064
        %4180 = vmatpush1.msra.mxu0 %v4063
        %4181 = vmatprep.subr.mxu0 %v4066
        %4182 = vmatpush1.msra.mxu0 %v4065
        %4183 = vmatprep.subr.mxu0 %v4068
        %4184 = vmatpush1.msra.mxu0 %v4067
        %4185 = vmatprep.subr.mxu0 %v4070
        %4186 = vmatpush1.msra.mxu0 %v4069
        %4187 = vmatprep.subr.mxu0 %v4072
        %4188 = vmatpush1.msra.mxu0 %v4071
        %4189 = vmatprep.subr.mxu0 %v4074
        %4190 = vmatpush1.msra.mxu0 %v4073
        %4191 = vmatprep.subr.mxu0 %v4076
        %4192 = vmatpush1.msra.mxu0 %v4075
        %4193 = vmatprep.subr.mxu0 %v4078
        %4194 = vmatpush1.msra.mxu0 %v4077
        %4195 = vmatprep.subr.mxu0 %v4080
        %4196 = vmatpush1.msra.mxu0 %v4079
        %4197 = vmatprep.subr.mxu0 %v4082
        %4198 = vmatpush1.msra.mxu0 %v4081
        %4199 = vmatprep.subr.mxu0 %v4084
        %4200 = vmatpush1.msra.mxu0 %v4083
        %4201 = vmatprep.subr.mxu0 %v4086
        %4202 = vmatpush1.msra.mxu0 %v4085
        %4203 = vmatprep.subr.mxu0 %v4088
        %4204 = vmatpush1.msra.mxu0 %v4087
        %4205 = vmatprep.mubr.f32.mxu0 %v4010
        %4206 = vmatmul.mubr.f32.gmra.mrb[0].mxu0 %v4009
        %v4207 = vpop.f32.mrb[0].mxu0
        %v4208 = vadd.f32 0.0, %v4207
        %v4209 = vpop.f32.mrb[0].mxu0
        %v4210 = vadd.f32 0.0, %v4209
        %4211 = vmatprep.mubr.f32.mxu0 %v4014
        %4212 = vmatmul.mubr.f32.gmra.mrb[0].mxu0 %v4013
        %v4213 = vpop.f32.mrb[0].mxu0
        %v4214 = vadd.f32 0.0, %v4213
        %v4215 = vpop.f32.mrb[0].mxu0
        %v4216 = vadd.f32 0.0, %v4215
        %4217 = vmatprep.mubr.f32.mxu0 %v4018
        %4218 = vmatmul.mubr.f32.gmra.mrb[0].mxu0 %v4017
        %v4219 = vpop.f32.mrb[0].mxu0
        %v4220 = vadd.f32 0.0, %v4219
        %v4221 = vpop.f32.mrb[0].mxu0
        %v4222 = vadd.f32 0.0, %v4221
        %4223 = vmatprep.mubr.f32.mxu0 %v4022
        %4224 = vmatmul.mubr.f32.gmra.mrb[0].mxu0 %v4021
        %v4225 = vpop.f32.mrb[0].mxu0
        %v4226 = vadd.f32 0.0, %v4225
        %v4227 = vpop.f32.mrb[0].mxu0
        %v4228 = vadd.f32 0.0, %v4227
        %4229 = vdwg.mxu0
        %4230 = vmatprep.subr.mxu0 %v4090
        %4231 = vmatpush1.msra.mxu0 %v4089
        %4232 = vmatprep.subr.mxu0 %v4092
        %4233 = vmatpush1.msra.mxu0 %v4091
        %4234 = vmatprep.subr.mxu0 %v4094
        %4235 = vmatpush1.msra.mxu0 %v4093
        %4236 = vmatprep.subr.mxu0 %v4096
        %4237 = vmatpush1.msra.mxu0 %v4095
        %4238 = vmatprep.subr.mxu0 %v4098
        %4239 = vmatpush1.msra.mxu0 %v4097
        %4240 = vmatprep.subr.mxu0 %v4100
        %4241 = vmatpush1.msra.mxu0 %v4099
        %4242 = vmatprep.subr.mxu0 %v4102
        %4243 = vmatpush1.msra.mxu0 %v4101
        %4244 = vmatprep.subr.mxu0 %v4104
        %4245 = vmatpush1.msra.mxu0 %v4103
        %4246 = vmatprep.subr.mxu0 %v4106
        %4247 = vmatpush1.msra.mxu0 %v4105
        %4248 = vmatprep.subr.mxu0 %v4108
        %4249 = vmatpush1.msra.mxu0 %v4107
        %4250 = vmatprep.subr.mxu0 %v4110
        %4251 = vmatpush1.msra.mxu0 %v4109
        %4252 = vmatprep.subr.mxu0 %v4112
        %4253 = vmatpush1.msra.mxu0 %v4111
        %4254 = vmatprep.subr.mxu0 %v4114
        %4255 = vmatpush1.msra.mxu0 %v4113
        %4256 = vmatprep.subr.mxu0 %v4116
        %4257 = vmatpush1.msra.mxu0 %v4115
        %4258 = vmatprep.subr.mxu0 %v4118
        %4259 = vmatpush1.msra.mxu0 %v4117
        %4260 = vmatprep.subr.mxu0 %v4120
        %4261 = vmatpush1.msra.mxu0 %v4119
        %4262 = vmatprep.subr.mxu0 %v4122
        %4263 = vmatpush1.msra.mxu0 %v4121
        %4264 = vmatprep.subr.mxu0 %v4124
        %4265 = vmatpush1.msra.mxu0 %v4123
        %4266 = vmatprep.subr.mxu0 %v4126
        %4267 = vmatpush1.msra.mxu0 %v4125
        %4268 = vmatprep.subr.mxu0 %v4128
        %4269 = vmatpush1.msra.mxu0 %v4127
        %4270 = vmatprep.subr.mxu0 0.0
        %4271 = vmatpush1.msra.mxu0 0.0
        %4272 = vmatprep.subr.mxu0 0.0
        %4273 = vmatpush1.msra.mxu0 0.0
        %4274 = vmatprep.subr.mxu0 0.0
        %4275 = vmatpush1.msra.mxu0 0.0
        %4276 = vmatprep.subr.mxu0 0.0
        %4277 = vmatpush1.msra.mxu0 0.0
        %4278 = vmatprep.subr.mxu0 0.0
        %4279 = vmatpush1.msra.mxu0 0.0
        %4280 = vmatprep.subr.mxu0 0.0
        %4281 = vmatpush1.msra.mxu0 0.0
        %4282 = vmatprep.subr.mxu0 0.0
        %4283 = vmatpush1.msra.mxu0 0.0
        %4284 = vmatprep.subr.mxu0 0.0
        %4285 = vmatpush1.msra.mxu0 0.0
        %4286 = vmatprep.subr.mxu0 0.0
        %4287 = vmatpush1.msra.mxu0 0.0
        %4288 = vmatprep.subr.mxu0 0.0
        %4289 = vmatpush1.msra.mxu0 0.0
        %4290 = vmatprep.subr.mxu0 0.0
        %4291 = vmatpush1.msra.mxu0 0.0
        %4292 = vmatprep.subr.mxu0 0.0
        %4293 = vmatpush1.msra.mxu0 0.0
        %4294 = vmatprep.mubr.f32.mxu0 %v4130
        %4295 = vmatmul.mubr.f32.gmra.mrb[0].mxu0 %v4011
        %v4296 = vpop.f32.mrb[0].mxu0
        %v4297 = vadd.f32 %v4208, %v4296
        %v4298 = vpop.f32.mrb[0].mxu0
        %v4299 = vadd.f32 %v4210, %v4298
        %4300 = vmatprep.mubr.f32.mxu0 %v4133
        %4301 = vmatmul.mubr.f32.gmra.mrb[0].mxu0 %v4015
        %v4302 = vpop.f32.mrb[0].mxu0
        %v4303 = vadd.f32 %v4214, %v4302
        %v4304 = vpop.f32.mrb[0].mxu0
        %v4305 = vadd.f32 %v4216, %v4304
        %4306 = vmatprep.mubr.f32.mxu0 %v4136
        %4307 = vmatmul.mubr.f32.gmra.mrb[0].mxu0 %v4019
        %v4308 = vpop.f32.mrb[0].mxu0
        %v4309 = vadd.f32 %v4220, %v4308
        %v4310 = vpop.f32.mrb[0].mxu0
        %v4311 = vadd.f32 %v4222, %v4310
        %4312 = vmatprep.mubr.f32.mxu0 %v4139
        %4313 = vmatmul.mubr.f32.gmra.mrb[0].mxu0 %v4023
        %v4314 = vpop.f32.mrb[0].mxu0
        %v4315 = vadd.f32 %v4226, %v4314
        %v4316 = vpop.f32.mrb[0].mxu0
        %v4317 = vadd.f32 %v4228, %v4316
        %4318 = vdwg.mxu0
        %s4319 = scalar_lea.vmem [#allocation11], 832
        %v4320 = vld [vmem:[%s4319] sm:$0xff]
        %v4321 = vld [vmem:[%s4319 + $0x8] sm:$0xff]
        %v4322 = vld [vmem:[%s4319 + $0x10] sm:$0xff]
        %v4323 = vld [vmem:[%s4319 + $0x18] sm:$0xff]
        %v4324 = vld [vmem:[%s4319 + $0x20] sm:$0xff]
        %v4325 = vld [vmem:[%s4319 + $0x28] sm:$0xff]
        %v4326 = vld [vmem:[%s4319 + $0x30] sm:$0xff]
        %v4327 = vld [vmem:[%s4319 + $0x38] sm:$0xff]
        %v4328 = vld [vmem:[%s4319 + $0x40] sm:$0xff]
        %v4329 = vld [vmem:[%s4319 + $0x48] sm:$0xff]
        %v4330 = vld [vmem:[%s4319 + $0x50] sm:$0xff]
        %v4331 = vld [vmem:[%s4319 + $0x58] sm:$0xff]
        %v4332 = vld [vmem:[%s4319 + $0x60] sm:$0xff]
        %v4333 = vld [vmem:[%s4319 + $0x68] sm:$0xff]
        %v4334 = vld [vmem:[%s4319 + $0x70] sm:$0xff]
        %v4335 = vld [vmem:[%s4319 + $0x78] sm:$0xff]
        %v4336 = vld [vmem:[%s4319 + $0x80] sm:$0xff]
        %v4337 = vld [vmem:[%s4319 + $0x88] sm:$0xff]
        %v4338 = vld [vmem:[%s4319 + $0x90] sm:$0xff]
        %v4339 = vld [vmem:[%s4319 + $0x98] sm:$0xff]
        %v4340 = vld [vmem:[%s4319 + $0xa0] sm:$0xff]
        %v4341 = vld [vmem:[%s4319 + $0xa8] sm:$0xff]
        %v4342 = vld [vmem:[%s4319 + $0xb0] sm:$0xff]
        %v4343 = vld [vmem:[%s4319 + $0xb8] sm:$0xff]
        %v4344 = vld [vmem:[%s4319 + $0xc0] sm:$0xff]
        %v4345 = vld [vmem:[%s4319 + $0xc8] sm:$0xff]
        %v4346 = vld [vmem:[%s4319 + $0xd0] sm:$0xff]
        %v4347 = vld [vmem:[%s4319 + $0xd8] sm:$0xff]
        %v4348 = vld [vmem:[%s4319 + $0xe0] sm:$0xff]
        %v4349 = vld [vmem:[%s4319 + $0xe8] sm:$0xff]
        %v4350 = vld [vmem:[%s4319 + $0xf0] sm:$0xff]
        %v4351 = vld [vmem:[%s4319 + $0xf8] sm:$0xff]
        %v4352 = vld [vmem:[%s4319 + $0x100] sm:$0xff]
        %v4353 = vld [vmem:[%s4319 + $0x108] sm:$0xff]
        %v4354 = vld [vmem:[%s4319 + $0x110] sm:$0xff]
        %v4355 = vld [vmem:[%s4319 + $0x118] sm:$0xff]
        %v4356 = vld [vmem:[%s4319 + $0x120] sm:$0xff]
        %v4357 = vld [vmem:[%s4319 + $0x128] sm:$0xff]
        %v4358 = vld [vmem:[%s4319 + $0x130] sm:$0xff]
        %v4359 = vld [vmem:[%s4319 + $0x138] sm:$0xff]
        %v4360 = vld [vmem:[%s4319 + $0x140] sm:$0xff]
        %v4361 = vld [vmem:[%s4319 + $0x148] sm:$0xff]
        %v4362 = vld [vmem:[%s4319 + $0x150] sm:$0xff]
        %v4363 = vld [vmem:[%s4319 + $0x158] sm:$0xff]
        %v4364 = vld [vmem:[%s4319 + $0x160] sm:$0xff]
        %v4365 = vld [vmem:[%s4319 + $0x168] sm:$0xff]
        %v4366 = vld [vmem:[%s4319 + $0x170] sm:$0xff]
        %v4367 = vld [vmem:[%s4319 + $0x178] sm:$0xff]
        %v4368 = vld [vmem:[%s4319 + $0x180] sm:$0xff]
        %v4369 = vld [vmem:[%s4319 + $0x188] sm:$0xff]
        %v4370 = vld [vmem:[%s4319 + $0x190] sm:$0xff]
        %v4371 = vld [vmem:[%s4319 + $0x198] sm:$0xff]
        %v4372 = vld [vmem:[%s4319 + $0x1a0] sm:$0xff]
        %v4373 = vld [vmem:[%s4319 + $0x1a8] sm:$0xff]
        %v4374 = vld [vmem:[%s4319 + $0x1b0] sm:$0xff]
        %v4375 = vld [vmem:[%s4319 + $0x1b8] sm:$0xff]
        %v4376 = vld [vmem:[%s4319 + $0x1c0] sm:$0xff]
        %v4377 = vld [vmem:[%s4319 + $0x1c8] sm:$0xff]
        %v4378 = vld [vmem:[%s4319 + $0x1d0] sm:$0xff]
        %v4379 = vld [vmem:[%s4319 + $0x1d8] sm:$0xff]
        %v4380 = vld [vmem:[%s4319 + $0x1e0] sm:$0xff]
        %v4381 = vld [vmem:[%s4319 + $0x1e8] sm:$0xff]
        %v4382 = vld [vmem:[%s4319 + $0x1f0] sm:$0xff]
        %v4383 = vld [vmem:[%s4319 + $0x1f8] sm:$0xff]
        %v4384 = vld [vmem:[%s4319 + $0x200] sm:$0xff]
        %v4385 = vld [vmem:[%s4319 + $0x208] sm:$0xff]
        %v4386 = vld [vmem:[%s4319 + $0x210] sm:$0xff]
        %v4387 = vld [vmem:[%s4319 + $0x218] sm:$0xff]
        %v4388 = vld [vmem:[%s4319 + $0x220] sm:$0xff]
        %v4389 = vld [vmem:[%s4319 + $0x228] sm:$0xff]
        %v4390 = vld [vmem:[%s4319 + $0x230] sm:$0xff]
        %v4391 = vld [vmem:[%s4319 + $0x238] sm:$0xff]
        %v4392 = vld [vmem:[%s4319 + $0x240] sm:$0xff]
        %v4393 = vld [vmem:[%s4319 + $0x248] sm:$0xff]
        %v4394 = vld [vmem:[%s4319 + $0x250] sm:$0xff]
        %v4395 = vld [vmem:[%s4319 + $0x258] sm:$0xff]
        %v4396 = vld [vmem:[%s4319 + $0x260] sm:$0xff]
        %v4397 = vld [vmem:[%s4319 + $0x268] sm:$0xff]
        %v4398 = vld [vmem:[%s4319 + $0x270] sm:$0xff]
        %v4399 = vld [vmem:[%s4319 + $0x278] sm:$0xff]
        %v4400 = vld [vmem:[%s4319 + $0x280] sm:$0xff]
        %v4401 = vld [vmem:[%s4319 + $0x288] sm:$0xff]
        %v4402 = vld [vmem:[%s4319 + $0x290] sm:$0xff]
        %v4403 = vld [vmem:[%s4319 + $0x298] sm:$0xff]
        %v4404 = vld [vmem:[%s4319 + $0x2a0] sm:$0xff]
        %v4405 = vld [vmem:[%s4319 + $0x2a8] sm:$0xff]
        %v4406 = vld [vmem:[%s4319 + $0x2b0] sm:$0xff]
        %v4407 = vld [vmem:[%s4319 + $0x2b8] sm:$0xff]
        %v4408 = vld [vmem:[%s4319 + $0x2c0] sm:$0xff]
        %v4409 = vld [vmem:[%s4319 + $0x2c8] sm:$0xff]
        %v4410 = vld [vmem:[%s4319 + $0x2d0] sm:$0xff]
        %v4411 = vld [vmem:[%s4319 + $0x2d8] sm:$0xff]
        %v4412 = vld [vmem:[%s4319 + $0x2e0] sm:$0xff]
        %v4413 = vld [vmem:[%s4319 + $0x2e8] sm:$0xff]
        %v4414 = vld [vmem:[%s4319 + $0x2f0] sm:$0xff]
        %v4415 = vld [vmem:[%s4319 + $0x2f8] sm:$0xff]
        %v4416 = vld [vmem:[%s4319 + $0x300] sm:$0xff]
        %v4417 = vld [vmem:[%s4319 + $0x308] sm:$0xff]
        %v4418 = vld [vmem:[%s4319 + $0x310] sm:$0xff]
        %v4419 = vld [vmem:[%s4319 + $0x318] sm:$0xff]
        %v4420 = vld [vmem:[%s4319 + $0x320] sm:$0xff]
        %v4421 = vld [vmem:[%s4319 + $0x328] sm:$0xff]
        %v4422 = vld [vmem:[%s4319 + $0x330] sm:$0xff]
        %v4423 = vld [vmem:[%s4319 + $0x338] sm:$0xff]
        %4424 = vmatprep.subr.mxu0 %v4321
        %4425 = vmatpush1.msra.mxu0 %v4320
        %4426 = vmatprep.subr.mxu0 %v4323
        %4427 = vmatpush1.msra.mxu0 %v4322
        %4428 = vmatprep.subr.mxu0 %v4325
        %4429 = vmatpush1.msra.mxu0 %v4324
        %4430 = vmatprep.subr.mxu0 %v4327
        %4431 = vmatpush1.msra.mxu0 %v4326
        %4432 = vmatprep.subr.mxu0 %v4329
        %4433 = vmatpush1.msra.mxu0 %v4328
        %4434 = vmatprep.subr.mxu0 %v4331
        %4435 = vmatpush1.msra.mxu0 %v4330
        %4436 = vmatprep.subr.mxu0 %v4333
        %4437 = vmatpush1.msra.mxu0 %v4332
        %4438 = vmatprep.subr.mxu0 %v4335
        %4439 = vmatpush1.msra.mxu0 %v4334
        %4440 = vmatprep.subr.mxu0 %v4337
        %4441 = vmatpush1.msra.mxu0 %v4336
        %4442 = vmatprep.subr.mxu0 %v4339
        %4443 = vmatpush1.msra.mxu0 %v4338
        %4444 = vmatprep.subr.mxu0 %v4341
        %4445 = vmatpush1.msra.mxu0 %v4340
        %4446 = vmatprep.subr.mxu0 %v4343
        %4447 = vmatpush1.msra.mxu0 %v4342
        %4448 = vmatprep.subr.mxu0 %v4345
        %4449 = vmatpush1.msra.mxu0 %v4344
        %4450 = vmatprep.subr.mxu0 %v4347
        %4451 = vmatpush1.msra.mxu0 %v4346
        %4452 = vmatprep.subr.mxu0 %v4349
        %4453 = vmatpush1.msra.mxu0 %v4348
        %4454 = vmatprep.subr.mxu0 %v4351
        %4455 = vmatpush1.msra.mxu0 %v4350
        %4456 = vmatprep.subr.mxu0 %v4353
        %4457 = vmatpush1.msra.mxu0 %v4352
        %4458 = vmatprep.subr.mxu0 %v4355
        %4459 = vmatpush1.msra.mxu0 %v4354
        %4460 = vmatprep.subr.mxu0 %v4357
        %4461 = vmatpush1.msra.mxu0 %v4356
        %4462 = vmatprep.subr.mxu0 %v4359
        %4463 = vmatpush1.msra.mxu0 %v4358
        %4464 = vmatprep.subr.mxu0 %v4361
        %4465 = vmatpush1.msra.mxu0 %v4360
        %4466 = vmatprep.subr.mxu0 %v4363
        %4467 = vmatpush1.msra.mxu0 %v4362
        %4468 = vmatprep.subr.mxu0 %v4365
        %4469 = vmatpush1.msra.mxu0 %v4364
        %4470 = vmatprep.subr.mxu0 %v4367
        %4471 = vmatpush1.msra.mxu0 %v4366
        %4472 = vmatprep.subr.mxu0 %v4369
        %4473 = vmatpush1.msra.mxu0 %v4368
        %4474 = vmatprep.subr.mxu0 %v4371
        %4475 = vmatpush1.msra.mxu0 %v4370
        %4476 = vmatprep.subr.mxu0 %v4373
        %4477 = vmatpush1.msra.mxu0 %v4372
        %4478 = vmatprep.subr.mxu0 %v4375
        %4479 = vmatpush1.msra.mxu0 %v4374
        %4480 = vmatprep.subr.mxu0 %v4377
        %4481 = vmatpush1.msra.mxu0 %v4376
        %4482 = vmatprep.subr.mxu0 %v4379
        %4483 = vmatpush1.msra.mxu0 %v4378
        %4484 = vmatprep.subr.mxu0 %v4381
        %4485 = vmatpush1.msra.mxu0 %v4380
        %4486 = vmatprep.subr.mxu0 %v4383
        %4487 = vmatpush1.msra.mxu0 %v4382
        %4488 = vmatprep.mubr.f32.mxu0 %v4010
        %4489 = vmatmul.mubr.f32.gmra.mrb[0].mxu0 %v4009
        %v4490 = vpop.f32.mrb[0].mxu0
        %v4491 = vadd.f32 0.0, %v4490
        %v4492 = vpop.f32.mrb[0].mxu0
        %v4493 = vadd.f32 0.0, %v4492
        %4494 = vmatprep.mubr.f32.mxu0 %v4014
        %4495 = vmatmul.mubr.f32.gmra.mrb[0].mxu0 %v4013
        %v4496 = vpop.f32.mrb[0].mxu0
        %v4497 = vadd.f32 0.0, %v4496
        %v4498 = vpop.f32.mrb[0].mxu0
        %v4499 = vadd.f32 0.0, %v4498
        %4500 = vmatprep.mubr.f32.mxu0 %v4018
        %4501 = vmatmul.mubr.f32.gmra.mrb[0].mxu0 %v4017
        %v4502 = vpop.f32.mrb[0].mxu0
        %v4503 = vadd.f32 0.0, %v4502
        %v4504 = vpop.f32.mrb[0].mxu0
        %v4505 = vadd.f32 0.0, %v4504
        %4506 = vmatprep.mubr.f32.mxu0 %v4022
        %4507 = vmatmul.mubr.f32.gmra.mrb[0].mxu0 %v4021
        %v4508 = vpop.f32.mrb[0].mxu0
        %v4509 = vadd.f32 0.0, %v4508
        %v4510 = vpop.f32.mrb[0].mxu0
        %v4511 = vadd.f32 0.0, %v4510
        %4512 = vdwg.mxu0
        %4513 = vmatprep.subr.mxu0 %v4385
        %4514 = vmatpush1.msra.mxu0 %v4384
        %4515 = vmatprep.subr.mxu0 %v4387
        %4516 = vmatpush1.msra.mxu0 %v4386
        %4517 = vmatprep.subr.mxu0 %v4389
        %4518 = vmatpush1.msra.mxu0 %v4388
        %4519 = vmatprep.subr.mxu0 %v4391
        %4520 = vmatpush1.msra.mxu0 %v4390
        %4521 = vmatprep.subr.mxu0 %v4393
        %4522 = vmatpush1.msra.mxu0 %v4392
        %4523 = vmatprep.subr.mxu0 %v4395
        %4524 = vmatpush1.msra.mxu0 %v4394
        %4525 = vmatprep.subr.mxu0 %v4397
        %4526 = vmatpush1.msra.mxu0 %v4396
        %4527 = vmatprep.subr.mxu0 %v4399
        %4528 = vmatpush1.msra.mxu0 %v4398
        %4529 = vmatprep.subr.mxu0 %v4401
        %4530 = vmatpush1.msra.mxu0 %v4400
        %4531 = vmatprep.subr.mxu0 %v4403
        %4532 = vmatpush1.msra.mxu0 %v4402
        %4533 = vmatprep.subr.mxu0 %v4405
        %4534 = vmatpush1.msra.mxu0 %v4404
        %4535 = vmatprep.subr.mxu0 %v4407
        %4536 = vmatpush1.msra.mxu0 %v4406
        %4537 = vmatprep.subr.mxu0 %v4409
        %4538 = vmatpush1.msra.mxu0 %v4408
        %4539 = vmatprep.subr.mxu0 %v4411
        %4540 = vmatpush1.msra.mxu0 %v4410
        %4541 = vmatprep.subr.mxu0 %v4413
        %4542 = vmatpush1.msra.mxu0 %v4412
        %4543 = vmatprep.subr.mxu0 %v4415
        %4544 = vmatpush1.msra.mxu0 %v4414
        %4545 = vmatprep.subr.mxu0 %v4417
        %4546 = vmatpush1.msra.mxu0 %v4416
        %4547 = vmatprep.subr.mxu0 %v4419
        %4548 = vmatpush1.msra.mxu0 %v4418
        %4549 = vmatprep.subr.mxu0 %v4421
        %4550 = vmatpush1.msra.mxu0 %v4420
        %4551 = vmatprep.subr.mxu0 %v4423
        %4552 = vmatpush1.msra.mxu0 %v4422
        %4553 = vmatprep.subr.mxu0 0.0
        %4554 = vmatpush1.msra.mxu0 0.0
        %4555 = vmatprep.subr.mxu0 0.0
        %4556 = vmatpush1.msra.mxu0 0.0
        %4557 = vmatprep.subr.mxu0 0.0
        %4558 = vmatpush1.msra.mxu0 0.0
        %4559 = vmatprep.subr.mxu0 0.0
        %4560 = vmatpush1.msra.mxu0 0.0
        %4561 = vmatprep.subr.mxu0 0.0
        %4562 = vmatpush1.msra.mxu0 0.0
        %4563 = vmatprep.subr.mxu0 0.0
        %4564 = vmatpush1.msra.mxu0 0.0
        %4565 = vmatprep.subr.mxu0 0.0
        %4566 = vmatpush1.msra.mxu0 0.0
        %4567 = vmatprep.subr.mxu0 0.0
        %4568 = vmatpush1.msra.mxu0 0.0
        %4569 = vmatprep.subr.mxu0 0.0
        %4570 = vmatpush1.msra.mxu0 0.0
        %4571 = vmatprep.subr.mxu0 0.0
        %4572 = vmatpush1.msra.mxu0 0.0
        %4573 = vmatprep.subr.mxu0 0.0
        %4574 = vmatpush1.msra.mxu0 0.0
        %4575 = vmatprep.subr.mxu0 0.0
        %4576 = vmatpush1.msra.mxu0 0.0
        %4577 = vmatprep.mubr.f32.mxu0 %v4130
        %4578 = vmatmul.mubr.f32.gmra.mrb[0].mxu0 %v4011
        %v4579 = vpop.f32.mrb[0].mxu0
        %v4580 = vadd.f32 %v4491, %v4579
        %v4581 = vpop.f32.mrb[0].mxu0
        %v4582 = vadd.f32 %v4493, %v4581
        %4583 = vmatprep.mubr.f32.mxu0 %v4133
        %4584 = vmatmul.mubr.f32.gmra.mrb[0].mxu0 %v4015
        %v4585 = vpop.f32.mrb[0].mxu0
        %v4586 = vadd.f32 %v4497, %v4585
        %v4587 = vpop.f32.mrb[0].mxu0
        %v4588 = vadd.f32 %v4499, %v4587
        %4589 = vmatprep.mubr.f32.mxu0 %v4136
        %4590 = vmatmul.mubr.f32.gmra.mrb[0].mxu0 %v4019
        %v4591 = vpop.f32.mrb[0].mxu0
        %v4592 = vadd.f32 %v4503, %v4591
        %v4593 = vpop.f32.mrb[0].mxu0
        %v4594 = vadd.f32 %v4505, %v4593
        %4595 = vmatprep.mubr.f32.mxu0 %v4139
        %4596 = vmatmul.mubr.f32.gmra.mrb[0].mxu0 %v4023
        %v4597 = vpop.f32.mrb[0].mxu0
        %v4598 = vadd.f32 %v4509, %v4597
        %v4599 = vpop.f32.mrb[0].mxu0
        %v4600 = vadd.f32 %v4511, %v4599
        %4601 = vdwg.mxu0
        %v4602 = vmax.f32 %v4297, %v4580
        %v4603 = vmax.f32 %v4299, %v4582
        %v4604 = vmax.f32 %v4303, %v4586
        %v4605 = vmax.f32 %v4305, %v4588
        %v4606 = vmax.f32 %v4309, %v4592
        %v4607 = vmax.f32 %v4311, %v4594
        %v4608 = vmax.f32 %v4315, %v4598
        %v4609 = vmax.f32 %v4317, %v4600
        %v4610 = vld [vmem:[%s6] sm:$0xff]
        %v4611 = vld [vmem:[%s6 + $0x8] sm:$0x1f]
        %vm4612 = vcmask 211968
        %v4614 = vsel %vm4612, %v4610, 0
        %v4617 = vsel %vm4612, %v4611, 0
        %v4620 = vsel %vm3692, %v4608, 0
        %v4623 = vsel %vm3692, %v4609, 0
        %4625 = vmatprep.subr.mxu0 %v4603
        %4626 = vmatpush1.msra.mxu0 %v4602
        %4627 = vmatprep.subr.mxu0 %v4605
        %4628 = vmatpush1.msra.mxu0 %v4604
        %4629 = vmatprep.subr.mxu0 %v4607
        %4630 = vmatpush1.msra.mxu0 %v4606
        %4631 = vmatprep.subr.mxu0 %v4623
        %4632 = vmatpush1.msra.mxu0 %v4620
        %4633 = vmatprep.subr.mxu0 0.0
        %4634 = vmatpush1.msra.mxu0 0.0
        %4635 = vmatprep.subr.mxu0 0.0
        %4636 = vmatpush1.msra.mxu0 0.0
        %4637 = vmatprep.subr.mxu0 0.0
        %4638 = vmatpush1.msra.mxu0 0.0
        %4639 = vmatprep.subr.mxu0 0.0
        %4640 = vmatpush1.msra.mxu0 0.0
        %4641 = vmatprep.subr.mxu0 0.0
        %4642 = vmatpush1.msra.mxu0 0.0
        %4643 = vmatprep.subr.mxu0 0.0
        %4644 = vmatpush1.msra.mxu0 0.0
        %4645 = vmatprep.subr.mxu0 0.0
        %4646 = vmatpush1.msra.mxu0 0.0
        %4647 = vmatprep.subr.mxu0 0.0
        %4648 = vmatpush1.msra.mxu0 0.0
        %4649 = vmatprep.subr.mxu0 0.0
        %4650 = vmatpush1.msra.mxu0 0.0
        %4651 = vmatprep.subr.mxu0 0.0
        %4652 = vmatpush1.msra.mxu0 0.0
        %4653 = vmatprep.subr.mxu0 0.0
        %4654 = vmatpush1.msra.mxu0 0.0
        %4655 = vmatprep.subr.mxu0 0.0
        %4656 = vmatpush1.msra.mxu0 0.0
        %4657 = vmatprep.subr.mxu0 0.0
        %4658 = vmatpush1.msra.mxu0 0.0
        %4659 = vmatprep.subr.mxu0 0.0
        %4660 = vmatpush1.msra.mxu0 0.0
        %4661 = vmatprep.subr.mxu0 0.0
        %4662 = vmatpush1.msra.mxu0 0.0
        %4663 = vmatprep.subr.mxu0 0.0
        %4664 = vmatpush1.msra.mxu0 0.0
        %4665 = vmatprep.subr.mxu0 0.0
        %4666 = vmatpush1.msra.mxu0 0.0
        %4667 = vmatprep.subr.mxu0 0.0
        %4668 = vmatpush1.msra.mxu0 0.0
        %4669 = vmatprep.subr.mxu0 0.0
        %4670 = vmatpush1.msra.mxu0 0.0
        %4671 = vmatprep.subr.mxu0 0.0
        %4672 = vmatpush1.msra.mxu0 0.0
        %4673 = vmatprep.subr.mxu0 0.0
        %4674 = vmatpush1.msra.mxu0 0.0
        %4675 = vmatprep.subr.mxu0 0.0
        %4676 = vmatpush1.msra.mxu0 0.0
        %4677 = vmatprep.subr.mxu0 0.0
        %4678 = vmatpush1.msra.mxu0 0.0
        %4679 = vmatprep.subr.mxu0 0.0
        %4680 = vmatpush1.msra.mxu0 0.0
        %4681 = vmatprep.subr.mxu0 0.0
        %4682 = vmatpush1.msra.mxu0 0.0
        %4683 = vmatprep.subr.mxu0 0.0
        %4684 = vmatpush1.msra.mxu0 0.0
        %4685 = vmatprep.subr.mxu0 0.0
        %4686 = vmatpush1.msra.mxu0 0.0
        %4687 = vmatprep.subr.mxu0 0.0
        %4688 = vmatpush1.msra.mxu0 0.0
        %4689 = vmatprep.mubr.f32.mxu0 0.0
        %4690 = vmatmul.mubr.f32.gmra.mrb[0].mxu0 %v4614
        %v4691 = vpop.f32.mrb[0].mxu0
        %v4692 = vadd.f32 0.0, %v4691
        %v4693 = vpop.f32.mrb[0].mxu0
        %v4694 = vadd.f32 0.0, %v4693
        %4695 = vmatprep.mubr.f32.mxu0 0.0
        %4696 = vmatmul.mubr.f32.gmra.mrb[0].mxu0 %v4617
        %v4697 = vpop.f32.mrb[0].mxu0
        %v4698 = vadd.f32 0.0, %v4697
        %v4699 = vpop.f32.mrb[0].mxu0
        %v4700 = vadd.f32 0.0, %v4699
        %4701 = vdwg.mxu0
        %s4702 = scalar_lea.vmem %s6, 16
        %v4703 = vld [vmem:[%s4702] sm:$0xff]
        %v4704 = vld [vmem:[%s4702 + $0x8] sm:$0x1f]
        %v4706 = vsel %vm4612, %v4703, 0
        %v4709 = vsel %vm4612, %v4704, 0
        %4711 = vmatprep.subr.mxu0 %v4603
        %4712 = vmatpush1.msra.mxu0 %v4602
        %4713 = vmatprep.subr.mxu0 %v4605
        %4714 = vmatpush1.msra.mxu0 %v4604
        %4715 = vmatprep.subr.mxu0 %v4607
        %4716 = vmatpush1.msra.mxu0 %v4606
        %4717 = vmatprep.subr.mxu0 %v4623
        %4718 = vmatpush1.msra.mxu0 %v4620
        %4719 = vmatprep.subr.mxu0 0.0
        %4720 = vmatpush1.msra.mxu0 0.0
        %4721 = vmatprep.subr.mxu0 0.0
        %4722 = vmatpush1.msra.mxu0 0.0
        %4723 = vmatprep.subr.mxu0 0.0
        %4724 = vmatpush1.msra.mxu0 0.0
        %4725 = vmatprep.subr.mxu0 0.0
        %4726 = vmatpush1.msra.mxu0 0.0
        %4727 = vmatprep.subr.mxu0 0.0
        %4728 = vmatpush1.msra.mxu0 0.0
        %4729 = vmatprep.subr.mxu0 0.0
        %4730 = vmatpush1.msra.mxu0 0.0
        %4731 = vmatprep.subr.mxu0 0.0
        %4732 = vmatpush1.msra.mxu0 0.0
        %4733 = vmatprep.subr.mxu0 0.0
        %4734 = vmatpush1.msra.mxu0 0.0
        %4735 = vmatprep.subr.mxu0 0.0
        %4736 = vmatpush1.msra.mxu0 0.0
        %4737 = vmatprep.subr.mxu0 0.0
        %4738 = vmatpush1.msra.mxu0 0.0
        %4739 = vmatprep.subr.mxu0 0.0
        %4740 = vmatpush1.msra.mxu0 0.0
        %4741 = vmatprep.subr.mxu0 0.0
        %4742 = vmatpush1.msra.mxu0 0.0
        %4743 = vmatprep.subr.mxu0 0.0
        %4744 = vmatpush1.msra.mxu0 0.0
        %4745 = vmatprep.subr.mxu0 0.0
        %4746 = vmatpush1.msra.mxu0 0.0
        %4747 = vmatprep.subr.mxu0 0.0
        %4748 = vmatpush1.msra.mxu0 0.0
        %4749 = vmatprep.subr.mxu0 0.0
        %4750 = vmatpush1.msra.mxu0 0.0
        %4751 = vmatprep.subr.mxu0 0.0
        %4752 = vmatpush1.msra.mxu0 0.0
        %4753 = vmatprep.subr.mxu0 0.0
        %4754 = vmatpush1.msra.mxu0 0.0
        %4755 = vmatprep.subr.mxu0 0.0
        %4756 = vmatpush1.msra.mxu0 0.0
        %4757 = vmatprep.subr.mxu0 0.0
        %4758 = vmatpush1.msra.mxu0 0.0
        %4759 = vmatprep.subr.mxu0 0.0
        %4760 = vmatpush1.msra.mxu0 0.0
        %4761 = vmatprep.subr.mxu0 0.0
        %4762 = vmatpush1.msra.mxu0 0.0
        %4763 = vmatprep.subr.mxu0 0.0
        %4764 = vmatpush1.msra.mxu0 0.0
        %4765 = vmatprep.subr.mxu0 0.0
        %4766 = vmatpush1.msra.mxu0 0.0
        %4767 = vmatprep.subr.mxu0 0.0
        %4768 = vmatpush1.msra.mxu0 0.0
        %4769 = vmatprep.subr.mxu0 0.0
        %4770 = vmatpush1.msra.mxu0 0.0
        %4771 = vmatprep.subr.mxu0 0.0
        %4772 = vmatpush1.msra.mxu0 0.0
        %4773 = vmatprep.subr.mxu0 0.0
        %4774 = vmatpush1.msra.mxu0 0.0
        %4775 = vmatprep.mubr.f32.mxu0 0.0
        %4776 = vmatmul.mubr.f32.gmra.mrb[0].mxu0 %v4706
        %v4777 = vpop.f32.mrb[0].mxu0
        %v4778 = vadd.f32 0.0, %v4777
        %v4779 = vpop.f32.mrb[0].mxu0
        %v4780 = vadd.f32 0.0, %v4779
        %4781 = vmatprep.mubr.f32.mxu0 0.0
        %4782 = vmatmul.mubr.f32.gmra.mrb[0].mxu0 %v4709
        %v4783 = vpop.f32.mrb[0].mxu0
        %v4784 = vadd.f32 0.0, %v4783
        %v4785 = vpop.f32.mrb[0].mxu0
        %v4786 = vadd.f32 0.0, %v4785
        %4787 = vdwg.mxu0
        %v4788 = vmax.f32 %v4692, %v4778
        %v4789 = vmax.f32 %v4694, %v4780
        %v4790 = vmax.f32 %v4698, %v4784
        %v4791 = vmax.f32 %v4700, %v4786
        %v4792 = vpack.c.bf16 %v4790, %v4788
        %v4793 = vpack.c.bf16 %v4791, %v4789
        %v4794 = vld [vmem:[%s7] sm:$0xf]
        %v4795 = vld [vmem:[%s7 + $0x4] sm:$0xf]
        %v4796 = vld [vmem:[%s7 + $0x8] sm:$0xf]
        %v4797 = vld [vmem:[%s7 + $0xc] sm:$0xf]
        %v4798 = vld [vmem:[%s7 + $0x10] sm:$0xf]
        %v4799 = vld [vmem:[%s7 + $0x14] sm:$0xf]
        %v4800 = vld [vmem:[%s7 + $0x18] sm:$0xf]
        %v4801 = vld [vmem:[%s7 + $0x1c] sm:$0xf]
        %v4802 = vld [vmem:[%s7 + $0x20] sm:$0xf]
        %v4803 = vld [vmem:[%s7 + $0x24] sm:$0xf]
        %v4804 = vld [vmem:[%s7 + $0x28] sm:$0xf]
        %v4805 = vld [vmem:[%s7 + $0x2c] sm:$0xf]
        %v4806 = vld [vmem:[%s7 + $0x30] sm:$0xf]
        %v4807 = vld [vmem:[%s7 + $0x34] sm:$0xf]
        %v4808 = vld [vmem:[%s7 + $0x38] sm:$0xf]
        %v4809 = vld [vmem:[%s7 + $0x3c] sm:$0xf]
        %v4810 = vld [vmem:[%s7 + $0x40] sm:$0xf]
        %v4811 = vld [vmem:[%s7 + $0x44] sm:$0xf]
        %v4812 = vld [vmem:[%s7 + $0x48] sm:$0xf]
        %v4813 = vld [vmem:[%s7 + $0x4c] sm:$0xf]
        %v4814 = vld [vmem:[%s7 + $0x50] sm:$0xf]
        %v4815 = vld [vmem:[%s7 + $0x54] sm:$0xf]
        %v4816 = vld [vmem:[%s7 + $0x58] sm:$0xf]
        %v4817 = vld [vmem:[%s7 + $0x5c] sm:$0xf]
        %v4818 = vld [vmem:[%s7 + $0x60] sm:$0xf]
        %v4819 = vld [vmem:[%s7 + $0x64] sm:$0xf]
        %v4846 = vunpack.c.l.b16 %v4794
        %v4847 = vunpack.c.l.b16 %v4795
        %v4848 = vunpack.c.l.b16 %v4796
        %v4849 = vunpack.c.l.b16 %v4797
        %v4850 = vunpack.c.l.b16 %v4798
        %v4851 = vunpack.c.l.b16 %v4799
        %v4852 = vunpack.c.l.b16 %v4800
        %v4853 = vunpack.c.l.b16 %v4801
        %v4854 = vunpack.c.l.b16 %v4802
        %v4855 = vunpack.c.l.b16 %v4803
        %v4856 = vunpack.c.l.b16 %v4804
        %v4857 = vunpack.c.l.b16 %v4805
        %v4858 = vunpack.c.l.b16 %v4806
        %v4859 = vunpack.c.l.b16 %v4807
        %v4860 = vunpack.c.l.b16 %v4808
        %v4861 = vunpack.c.l.b16 %v4809
        %v4862 = vunpack.c.l.b16 %v4810
        %v4863 = vunpack.c.l.b16 %v4811
        %v4864 = vunpack.c.l.b16 %v4812
        %v4865 = vunpack.c.l.b16 %v4813
        %v4866 = vunpack.c.l.b16 %v4814
        %v4867 = vunpack.c.l.b16 %v4815
        %v4868 = vunpack.c.l.b16 %v4816
        %v4869 = vunpack.c.l.b16 %v4817
        %v4870 = vunpack.c.l.b16 %v4818
        %v4871 = vunpack.c.l.b16 %v4819
        %v4872 = vpack.c.b16 %v4847, %v4846
        %v4873 = vpack.c.b16 %v4849, %v4848
        %v4874 = vpack.c.b16 %v4851, %v4850
        %v4875 = vpack.c.b16 %v4853, %v4852
        %v4876 = vpack.c.b16 %v4855, %v4854
        %v4877 = vpack.c.b16 %v4857, %v4856
        %v4878 = vpack.c.b16 %v4859, %v4858
        %v4879 = vpack.c.b16 %v4861, %v4860
        %v4880 = vpack.c.b16 %v4863, %v4862
        %v4881 = vpack.c.b16 %v4865, %v4864
        %v4882 = vpack.c.b16 %v4867, %v4866
        %v4883 = vpack.c.b16 %v4869, %v4868
        %v4884 = vpack.c.b16 %v4871, %v4870
        %vm4898 = vcmask 654336
        %v4900 = vsel %vm4898, %v4793, 0
        %4902 = vmatprep.subr.bf16.mxu0 0
        %4903 = vmatpush1.bf16.msra.mxu0 %v4872
        %4904 = vmatprep.subr.bf16.mxu0 0
        %4905 = vmatpush1.bf16.msra.mxu0 %v4873
        %4906 = vmatprep.subr.bf16.mxu0 0
        %4907 = vmatpush1.bf16.msra.mxu0 %v4874
        %4908 = vmatprep.subr.bf16.mxu0 0
        %4909 = vmatpush1.bf16.msra.mxu0 %v4875
        %4910 = vmatprep.subr.bf16.mxu0 0
        %4911 = vmatpush1.bf16.msra.mxu0 %v4876
        %4912 = vmatprep.subr.bf16.mxu0 0
        %4913 = vmatpush1.bf16.msra.mxu0 %v4877
        %4914 = vmatprep.subr.bf16.mxu0 0
        %4915 = vmatpush1.bf16.msra.mxu0 %v4878
        %4916 = vmatprep.subr.bf16.mxu0 0
        %4917 = vmatpush1.bf16.msra.mxu0 %v4879
        %4918 = vmatprep.subr.bf16.mxu0 0
        %4919 = vmatpush1.bf16.msra.mxu0 %v4880
        %4920 = vmatprep.subr.bf16.mxu0 0
        %4921 = vmatpush1.bf16.msra.mxu0 %v4881
        %4922 = vmatprep.subr.bf16.mxu0 0
        %4923 = vmatpush1.bf16.msra.mxu0 %v4882
        %4924 = vmatprep.subr.bf16.mxu0 0
        %4925 = vmatpush1.bf16.msra.mxu0 %v4883
        %4926 = vmatprep.subr.bf16.mxu0 0
        %4927 = vmatpush1.bf16.msra.mxu0 %v4884
        %4928 = vmatprep.subr.bf16.mxu0 0
        %4929 = vmatpush1.bf16.msra.mxu0 0
        %4930 = vmatprep.subr.bf16.mxu0 0
        %4931 = vmatpush1.bf16.msra.mxu0 0
        %4932 = vmatprep.subr.bf16.mxu0 0
        %4933 = vmatpush1.bf16.msra.mxu0 0
        %4934 = vmatprep.mubr.bf16.mxu0 %v4900
        %4935 = vmatmul.mubr.bf16.gmra.mrb[0].mxu0 %v4792
        %v4936 = vpop.f32.mrb[0].mxu0
        %v4937 = vadd.f32 0.0, %v4936
        %v4938 = vpop.f32.mrb[0].mxu0
        %v4939 = vpop.f32.mrb[0].mxu0
        %v4940 = vadd.f32 0.0, %v4939
        %v4941 = vpop.f32.mrb[0].mxu0
        %4942 = vdwg.mxu0
        %vm4943 = vcmask 850944
        %4944 = vst.msk [vmem:[#allocation4] sm:$0xff] %vm4943, %v4937
        %vm4945 = vcmask 847872
        %4946 = vst.msk [vmem:[#allocation4 + $0x8] sm:$0x1f] %vm4945, %v4940
        %v4947 = vld [vmem:[#allocation4] sm:$0xff]
        %v4948 = vld [vmem:[#allocation4 + $0x8] sm:$0x7]
        %v4949 = vpack.c.bf16 %v4948, %v4947
        %v4950 = vld [vmem:[%s8] sm:$0xf]
        %v4951 = vld [vmem:[%s8 + $0x4] sm:$0xf]
        %v4952 = vld [vmem:[%s8 + $0x8] sm:$0xf]
        %v4953 = vld [vmem:[%s8 + $0xc] sm:$0xf]
        %v4954 = vld [vmem:[%s8 + $0x10] sm:$0xf]
        %v4955 = vld [vmem:[%s8 + $0x14] sm:$0xf]
        %v4956 = vld [vmem:[%s8 + $0x18] sm:$0xf]
        %v4957 = vld [vmem:[%s8 + $0x1c] sm:$0xf]
        %v4958 = vld [vmem:[%s8 + $0x20] sm:$0xf]
        %v4959 = vld [vmem:[%s8 + $0x24] sm:$0xf]
        %v4960 = vld [vmem:[%s8 + $0x28] sm:$0xf]
        %v4961 = vld [vmem:[%s8 + $0x2c] sm:$0xf]
        %v4962 = vld [vmem:[%s8 + $0x30] sm:$0xf]
        %v4963 = vld [vmem:[#allocation4 + $0x1] sm:$0xff]
        %v4964 = vld [vmem:[#allocation4 + $0x9] sm:$0x7]
        %v4965 = vpack.c.bf16 %v4964, %v4963
        %s4966 = scalar_lea.vmem %s8, 52
        %v4967 = vld [vmem:[%s4966] sm:$0xf]
        %v4968 = vld [vmem:[%s4966 + $0x4] sm:$0xf]
        %v4969 = vld [vmem:[%s4966 + $0x8] sm:$0xf]
        %v4970 = vld [vmem:[%s4966 + $0xc] sm:$0xf]
        %v4971 = vld [vmem:[%s4966 + $0x10] sm:$0xf]
        %v4972 = vld [vmem:[%s4966 + $0x14] sm:$0xf]
        %v4973 = vld [vmem:[%s4966 + $0x18] sm:$0xf]
        %v4974 = vld [vmem:[%s4966 + $0x1c] sm:$0xf]
        %v4975 = vld [vmem:[%s4966 + $0x20] sm:$0xf]
        %v4976 = vld [vmem:[%s4966 + $0x24] sm:$0xf]
        %v4977 = vld [vmem:[%s4966 + $0x28] sm:$0xf]
        %v4978 = vld [vmem:[%s4966 + $0x2c] sm:$0xf]
        %v4979 = vld [vmem:[%s4966 + $0x30] sm:$0xf]
        %v4993 = vunpack.c.l.b16 %v4967
        %v4994 = vunpack.c.l.b16 %v4968
        %v4995 = vunpack.c.l.b16 %v4969
        %v4996 = vunpack.c.l.b16 %v4970
        %v4997 = vunpack.c.l.b16 %v4971
        %v4998 = vunpack.c.l.b16 %v4972
        %v4999 = vunpack.c.l.b16 %v4973
        %v5000 = vunpack.c.l.b16 %v4974
        %v5001 = vunpack.c.l.b16 %v4975
        %v5002 = vunpack.c.l.b16 %v4976
        %v5003 = vunpack.c.l.b16 %v4977
        %v5004 = vunpack.c.l.b16 %v4978
        %v5005 = vunpack.c.l.b16 %v4979
        %v5006 = vpack.c.b16 %v4994, %v4993
        %v5007 = vpack.c.b16 %v4996, %v4995
        %v5008 = vpack.c.b16 %v4998, %v4997
        %v5009 = vpack.c.b16 %v5000, %v4999
        %v5010 = vpack.c.b16 %v5002, %v5001
        %v5011 = vpack.c.b16 %v5004, %v5003
        %v5012 = vpack.c.b16 %v5005, %v5005
        %v5020 = vsel %vm4943, %v4965, 0
        %v5023 = vsel %vm1251, %v5012, 0
        %5025 = vmatprep.subr.bf16.mxu0 0
        %5026 = vmatpush1.bf16.msra.mxu0 %v5006
        %5027 = vmatprep.subr.bf16.mxu0 0
        %5028 = vmatpush1.bf16.msra.mxu0 %v5007
        %5029 = vmatprep.subr.bf16.mxu0 0
        %5030 = vmatpush1.bf16.msra.mxu0 %v5008
        %5031 = vmatprep.subr.bf16.mxu0 0
        %5032 = vmatpush1.bf16.msra.mxu0 %v5009
        %5033 = vmatprep.subr.bf16.mxu0 0
        %5034 = vmatpush1.bf16.msra.mxu0 %v5010
        %5035 = vmatprep.subr.bf16.mxu0 0
        %5036 = vmatpush1.bf16.msra.mxu0 %v5011
        %5037 = vmatprep.subr.bf16.mxu0 0
        %5038 = vmatpush1.bf16.msra.mxu0 %v5023
        %5039 = vmatprep.subr.bf16.mxu0 0
        %5040 = vmatpush1.bf16.msra.mxu0 0
        %5041 = vmatprep.subr.bf16.mxu0 0
        %5042 = vmatpush1.bf16.msra.mxu0 0
        %5043 = vmatprep.subr.bf16.mxu0 0
        %5044 = vmatpush1.bf16.msra.mxu0 0
        %5045 = vmatprep.subr.bf16.mxu0 0
        %5046 = vmatpush1.bf16.msra.mxu0 0
        %5047 = vmatprep.subr.bf16.mxu0 0
        %5048 = vmatpush1.bf16.msra.mxu0 0
        %5049 = vmatprep.subr.bf16.mxu0 0
        %5050 = vmatpush1.bf16.msra.mxu0 0
        %5051 = vmatprep.subr.bf16.mxu0 0
        %5052 = vmatpush1.bf16.msra.mxu0 0
        %5053 = vmatprep.subr.bf16.mxu0 0
        %5054 = vmatpush1.bf16.msra.mxu0 0
        %5055 = vmatprep.subr.bf16.mxu0 0
        %5056 = vmatpush1.bf16.msra.mxu0 0
        %5057 = vmatprep.mubr.bf16.mxu0 0
        %5058 = vmatmul.mubr.bf16.gmra.mrb[0].mxu0 %v5020
        %v5059 = vpop.f32.mrb[0].mxu0
        %v5060 = vadd.f32 0.0, %v5059
        %v5061 = vpop.f32.mrb[0].mxu0
        %v5062 = vpop.f32.mrb[0].mxu0
        %v5063 = vadd.f32 0.0, %v5062
        %v5064 = vpop.f32.mrb[0].mxu0
        %5065 = vdwg.mxu0
        %v5079 = vunpack.c.l.b16 %v4950
        %v5080 = vunpack.c.l.b16 %v4951
        %v5081 = vunpack.c.l.b16 %v4952
        %v5082 = vunpack.c.l.b16 %v4953
        %v5083 = vunpack.c.l.b16 %v4954
        %v5084 = vunpack.c.l.b16 %v4955
        %v5085 = vunpack.c.l.b16 %v4956
        %v5086 = vunpack.c.l.b16 %v4957
        %v5087 = vunpack.c.l.b16 %v4958
        %v5088 = vunpack.c.l.b16 %v4959
        %v5089 = vunpack.c.l.b16 %v4960
        %v5090 = vunpack.c.l.b16 %v4961
        %v5091 = vunpack.c.l.b16 %v4962
        %v5092 = vpack.c.b16 %v5080, %v5079
        %v5093 = vpack.c.b16 %v5082, %v5081
        %v5094 = vpack.c.b16 %v5084, %v5083
        %v5095 = vpack.c.b16 %v5086, %v5085
        %v5096 = vpack.c.b16 %v5088, %v5087
        %v5097 = vpack.c.b16 %v5090, %v5089
        %v5098 = vpack.c.b16 %v5091, %v5091
        %v5106 = vsel %vm4943, %v4949, 0
        %v5109 = vsel %vm1251, %v5098, 0
        %5111 = vmatprep.subr.bf16.mxu0 0
        %5112 = vmatpush1.bf16.msra.mxu0 %v5092
        %5113 = vmatprep.subr.bf16.mxu0 0
        %5114 = vmatpush1.bf16.msra.mxu0 %v5093
        %5115 = vmatprep.subr.bf16.mxu0 0
        %5116 = vmatpush1.bf16.msra.mxu0 %v5094
        %5117 = vmatprep.subr.bf16.mxu0 0
        %5118 = vmatpush1.bf16.msra.mxu0 %v5095
        %5119 = vmatprep.subr.bf16.mxu0 0
        %5120 = vmatpush1.bf16.msra.mxu0 %v5096
        %5121 = vmatprep.subr.bf16.mxu0 0
        %5122 = vmatpush1.bf16.msra.mxu0 %v5097
        %5123 = vmatprep.subr.bf16.mxu0 0
        %5124 = vmatpush1.bf16.msra.mxu0 %v5109
        %5125 = vmatprep.subr.bf16.mxu0 0
        %5126 = vmatpush1.bf16.msra.mxu0 0
        %5127 = vmatprep.subr.bf16.mxu0 0
        %5128 = vmatpush1.bf16.msra.mxu0 0
        %5129 = vmatprep.subr.bf16.mxu0 0
        %5130 = vmatpush1.bf16.msra.mxu0 0
        %5131 = vmatprep.subr.bf16.mxu0 0
        %5132 = vmatpush1.bf16.msra.mxu0 0
        %5133 = vmatprep.subr.bf16.mxu0 0
        %5134 = vmatpush1.bf16.msra.mxu0 0
        %5135 = vmatprep.subr.bf16.mxu0 0
        %5136 = vmatpush1.bf16.msra.mxu0 0
        %5137 = vmatprep.subr.bf16.mxu0 0
        %5138 = vmatpush1.bf16.msra.mxu0 0
        %5139 = vmatprep.subr.bf16.mxu0 0
        %5140 = vmatpush1.bf16.msra.mxu0 0
        %5141 = vmatprep.subr.bf16.mxu0 0
        %5142 = vmatpush1.bf16.msra.mxu0 0
        %5143 = vmatprep.mubr.bf16.mxu0 0
        %5144 = vmatmul.mubr.bf16.gmra.mrb[0].mxu0 %v5106
        %v5145 = vpop.f32.mrb[0].mxu0
        %v5146 = vadd.f32 %v5060, %v5145
        %v5147 = vpop.f32.mrb[0].mxu0
        %v5148 = vpop.f32.mrb[0].mxu0
        %v5149 = vadd.f32 %v5063, %v5148
        %v5150 = vpop.f32.mrb[0].mxu0
        %5151 = vdwg.mxu0
        %v5152 = vld [vmem:[#allocation4 + $0x2] sm:$0xff]
        %v5153 = vld [vmem:[#allocation4 + $0xa] sm:$0x7]
        %v5154 = vpack.c.bf16 %v5153, %v5152
        %s5155 = scalar_lea.vmem %s8, 104
        %v5156 = vld [vmem:[%s5155] sm:$0xf]
        %v5157 = vld [vmem:[%s5155 + $0x4] sm:$0xf]
        %v5158 = vld [vmem:[%s5155 + $0x8] sm:$0xf]
        %v5159 = vld [vmem:[%s5155 + $0xc] sm:$0xf]
        %v5160 = vld [vmem:[%s5155 + $0x10] sm:$0xf]
        %v5161 = vld [vmem:[%s5155 + $0x14] sm:$0xf]
        %v5162 = vld [vmem:[%s5155 + $0x18] sm:$0xf]
        %v5163 = vld [vmem:[%s5155 + $0x1c] sm:$0xf]
        %v5164 = vld [vmem:[%s5155 + $0x20] sm:$0xf]
        %v5165 = vld [vmem:[%s5155 + $0x24] sm:$0xf]
        %v5166 = vld [vmem:[%s5155 + $0x28] sm:$0xf]
        %v5167 = vld [vmem:[%s5155 + $0x2c] sm:$0xf]
        %v5168 = vld [vmem:[%s5155 + $0x30] sm:$0xf]
        %v5182 = vunpack.c.l.b16 %v5156
        %v5183 = vunpack.c.l.b16 %v5157
        %v5184 = vunpack.c.l.b16 %v5158
        %v5185 = vunpack.c.l.b16 %v5159
        %v5186 = vunpack.c.l.b16 %v5160
        %v5187 = vunpack.c.l.b16 %v5161
        %v5188 = vunpack.c.l.b16 %v5162
        %v5189 = vunpack.c.l.b16 %v5163
        %v5190 = vunpack.c.l.b16 %v5164
        %v5191 = vunpack.c.l.b16 %v5165
        %v5192 = vunpack.c.l.b16 %v5166
        %v5193 = vunpack.c.l.b16 %v5167
        %v5194 = vunpack.c.l.b16 %v5168
        %v5195 = vpack.c.b16 %v5183, %v5182
        %v5196 = vpack.c.b16 %v5185, %v5184
        %v5197 = vpack.c.b16 %v5187, %v5186
        %v5198 = vpack.c.b16 %v5189, %v5188
        %v5199 = vpack.c.b16 %v5191, %v5190
        %v5200 = vpack.c.b16 %v5193, %v5192
        %v5201 = vpack.c.b16 %v5194, %v5194
        %v5209 = vsel %vm4943, %v5154, 0
        %v5212 = vsel %vm1251, %v5201, 0
        %5214 = vmatprep.subr.bf16.mxu0 0
        %5215 = vmatpush1.bf16.msra.mxu0 %v5195
        %5216 = vmatprep.subr.bf16.mxu0 0
        %5217 = vmatpush1.bf16.msra.mxu0 %v5196
        %5218 = vmatprep.subr.bf16.mxu0 0
        %5219 = vmatpush1.bf16.msra.mxu0 %v5197
        %5220 = vmatprep.subr.bf16.mxu0 0
        %5221 = vmatpush1.bf16.msra.mxu0 %v5198
        %5222 = vmatprep.subr.bf16.mxu0 0
        %5223 = vmatpush1.bf16.msra.mxu0 %v5199
        %5224 = vmatprep.subr.bf16.mxu0 0
        %5225 = vmatpush1.bf16.msra.mxu0 %v5200
        %5226 = vmatprep.subr.bf16.mxu0 0
        %5227 = vmatpush1.bf16.msra.mxu0 %v5212
        %5228 = vmatprep.subr.bf16.mxu0 0
        %5229 = vmatpush1.bf16.msra.mxu0 0
        %5230 = vmatprep.subr.bf16.mxu0 0
        %5231 = vmatpush1.bf16.msra.mxu0 0
        %5232 = vmatprep.subr.bf16.mxu0 0
        %5233 = vmatpush1.bf16.msra.mxu0 0
        %5234 = vmatprep.subr.bf16.mxu0 0
        %5235 = vmatpush1.bf16.msra.mxu0 0
        %5236 = vmatprep.subr.bf16.mxu0 0
        %5237 = vmatpush1.bf16.msra.mxu0 0
        %5238 = vmatprep.subr.bf16.mxu0 0
        %5239 = vmatpush1.bf16.msra.mxu0 0
        %5240 = vmatprep.subr.bf16.mxu0 0
        %5241 = vmatpush1.bf16.msra.mxu0 0
        %5242 = vmatprep.subr.bf16.mxu0 0
        %5243 = vmatpush1.bf16.msra.mxu0 0
        %5244 = vmatprep.subr.bf16.mxu0 0
        %5245 = vmatpush1.bf16.msra.mxu0 0
        %5246 = vmatprep.mubr.bf16.mxu0 0
        %5247 = vmatmul.mubr.bf16.gmra.mrb[0].mxu0 %v5209
        %v5248 = vpop.f32.mrb[0].mxu0
        %v5249 = vadd.f32 0.0, %v5248
        %v5250 = vpop.f32.mrb[0].mxu0
        %v5251 = vpop.f32.mrb[0].mxu0
        %v5252 = vadd.f32 0.0, %v5251
        %v5253 = vpop.f32.mrb[0].mxu0
        %5254 = vdwg.mxu0
        %v5255 = vadd.f32 %v5146, %v5249
        %v5256 = vadd.f32 %v5149, %v5252
        %v5257 = vmax.f32 %v5255, 0.0
        %v5258 = vmax.f32 %v5256, 0.0
        %v5259 = vld [vmem:[%s9] sm:$0x1]
        %v5260 = vld [vmem:[%s9 + $0x1] sm:$0x1]
        %v5261 = vld [vmem:[%s9 + $0x2] sm:$0x1]
        %v5262 = vlaneseq
        %v5263 = vshrl.u32 %v5262, 7
        %v5264 = vsub.s32 0, %v5263
        %v5265 = vrot.slane %v5261, %v5264
        %v5266 = vmul.f32 %v5257, %v5265
        %v5267 = vmul.f32 %v5258, %v5265
        %vm5268 = vcmask 900096
        %v5269 = vsel %vm5268, %v5266, 0.0
        %5270 = vadd.xlane.f32.xlu0 %v5269
        %v5271 = vpop.xlane.xlu0 %5270
        %vm5272 = vcmask 894976
        %v5273 = vsel %vm5272, %v5267, 0.0
        %5274 = vadd.xlane.f32.xlu0 %v5273
        %v5275 = vpop.xlane.xlu0 %5274
        %vm5276 = vcmask 1042432
        %v5277 = vsel %vm5276, %v5275, 0.0
        %v5278 = vadd.f32 %v5271, %v5277
        %v5279 = vrot.slane %v5278, 4
        %v5280 = vadd.f32 %v5278, %v5279
        %v5281 = vrot.slane %v5280, 2
        %v5282 = vadd.f32 %v5280, %v5281
        %v5283 = vrot.slane %v5282, 1
        %v5284 = vadd.f32 %v5282, %v5283
        %v5285 = vmul.f32 %v5266, %v5257
        %v5286 = vmul.f32 %v5267, %v5258
        %v5287 = vsel %vm5268, %v5285, 0.0
        %5288 = vadd.xlane.f32.xlu0 %v5287
        %v5289 = vpop.xlane.xlu0 %5288
        %v5290 = vsel %vm5272, %v5286, 0.0
        %5291 = vadd.xlane.f32.xlu0 %v5290
        %v5292 = vpop.xlane.xlu0 %5291
        %v5293 = vsel %vm5276, %v5292, 0.0
        %v5294 = vadd.f32 %v5289, %v5293
        %v5295 = vrot.slane %v5294, 4
        %v5296 = vadd.f32 %v5294, %v5295
        %v5297 = vrot.slane %v5296, 2
        %v5298 = vadd.f32 %v5296, %v5297
        %v5299 = vrot.slane %v5298, 1
        %v5300 = vadd.f32 %v5298, %v5299
        %v5301 = vmul.f32 %v5284, 0.0016528926
        %v5302 = vmul.f32 %v5300, 0.0016528926
        %v5303 = vmul.f32 %v5301, %v5301
        %v5304 = vsub.f32 %v5302, %v5303
        %v5305 = vmul.f32 %v5261, %v5301
        %v5306 = vadd.f32 %v5305, 0.0
        %v5307 = vmul.f32 %v5261, %v5304
        %v5308 = vadd.f32 %v5307, 0.0
        %v5309 = vld [vmem:[%s9 + $0x3] sm:$0x1]
        %v5310 = vlaneseq
        %v5311 = vshrl.u32 %v5310, 7
        %v5312 = vsub.s32 0, %v5311
        %v5313 = vrot.slane %v5309, %v5312
        %v5314 = vmul.f32 %v5257, %v5313
        %v5315 = vmul.f32 %v5258, %v5313
        %v5316 = vsel %vm5268, %v5314, 0.0
        %5317 = vadd.xlane.f32.xlu0 %v5316
        %v5318 = vpop.xlane.xlu0 %5317
        %v5319 = vsel %vm5272, %v5315, 0.0
        %5320 = vadd.xlane.f32.xlu0 %v5319
        %v5321 = vpop.xlane.xlu0 %5320
        %v5322 = vsel %vm5276, %v5321, 0.0
        %v5323 = vadd.f32 %v5318, %v5322
        %v5324 = vrot.slane %v5323, 4
        %v5325 = vadd.f32 %v5323, %v5324
        %v5326 = vrot.slane %v5325, 2
        %v5327 = vadd.f32 %v5325, %v5326
        %v5328 = vrot.slane %v5327, 1
        %v5329 = vadd.f32 %v5327, %v5328
        %v5330 = vmul.f32 %v5314, %v5257
        %v5331 = vmul.f32 %v5315, %v5258
        %v5332 = vsel %vm5268, %v5330, 0.0
        %5333 = vadd.xlane.f32.xlu0 %v5332
        %v5334 = vpop.xlane.xlu0 %5333
        %v5335 = vsel %vm5272, %v5331, 0.0
        %5336 = vadd.xlane.f32.xlu0 %v5335
        %v5337 = vpop.xlane.xlu0 %5336
        %v5338 = vsel %vm5276, %v5337, 0.0
        %v5339 = vadd.f32 %v5334, %v5338
        %v5340 = vrot.slane %v5339, 4
        %v5341 = vadd.f32 %v5339, %v5340
        %v5342 = vrot.slane %v5341, 2
        %v5343 = vadd.f32 %v5341, %v5342
        %v5344 = vrot.slane %v5343, 1
        %v5345 = vadd.f32 %v5343, %v5344
        %v5346 = vmul.f32 %v5329, 0.0016528926
        %v5347 = vmul.f32 %v5345, 0.0016528926
        %v5348 = vmul.f32 %v5346, %v5346
        %v5349 = vsub.f32 %v5347, %v5348
        %v5350 = vmul.f32 %v5309, %v5346
        %v5351 = vadd.f32 %v5306, %v5350
        %v5352 = vmul.f32 %v5309, %v5349
        %v5353 = vadd.f32 %v5308, %v5352
        %v5354 = vadd.f32 %v5353, 1e-05
        %v5355 = vrsqrt.pop %v5354
        %v5356 = vlaneseq
        %v5357 = vshrl.u32 %v5356, 7
        %v5358 = vsub.s32 0, %v5357
        %v5359 = vrot.slane %v5351, %v5358
        %v5360 = vsub.f32 %v5257, %v5359
        %v5361 = vsub.f32 %v5258, %v5359
        %v5362 = vmul.f32 %v5355, %v5259
        %v5363 = vlaneseq
        %v5364 = vshrl.u32 %v5363, 7
        %v5365 = vsub.s32 0, %v5364
        %v5366 = vrot.slane %v5362, %v5365
        %v5367 = vmul.f32 %v5360, %v5366
        %v5368 = vmul.f32 %v5361, %v5366
        %v5369 = vlaneseq
        %v5370 = vshrl.u32 %v5369, 7
        %v5371 = vsub.s32 0, %v5370
        %v5372 = vrot.slane %v5260, %v5371
        %v5373 = vadd.f32 %v5367, %v5372
        %v5374 = vadd.f32 %v5368, %v5372
        %5375 = vst.msk [vmem:[#allocation5] sm:$0xff] %vm5268, %v5373
        %5376 = vst.msk [vmem:[#allocation5 + $0x8] sm:$0x7] %vm5272, %v5374
        %v5377 = vld [vmem:[#allocation5] sm:$0xff]
        %v5378 = vld [vmem:[#allocation5 + $0x8] sm:$0x1]
        %v5379 = vpack.c.bf16 %v5378, %v5377
        %v5380 = vld [vmem:[%s10] sm:$0xf]
        %v5381 = vld [vmem:[%s10 + $0x4] sm:$0xf]
        %v5382 = vld [vmem:[%s10 + $0x8] sm:$0xf]
        %v5383 = vld [vmem:[%s10 + $0xc] sm:$0xf]
        %v5384 = vld [vmem:[%s10 + $0x10] sm:$0xf]
        %v5385 = vld [vmem:[%s10 + $0x14] sm:$0xf]
        %v5386 = vld [vmem:[%s10 + $0x18] sm:$0xf]
        %v5387 = vld [vmem:[%s10 + $0x1c] sm:$0xf]
        %v5388 = vld [vmem:[%s10 + $0x20] sm:$0xf]
        %v5389 = vld [vmem:[%s10 + $0x24] sm:$0xf]
        %v5390 = vld [vmem:[%s10 + $0x28] sm:$0xf]
        %v5391 = vld [vmem:[%s10 + $0x2c] sm:$0xf]
        %v5392 = vld [vmem:[%s10 + $0x30] sm:$0xf]
        %v5393 = vld [vmem:[%s10 + $0x34] sm:$0x7]
        %v5394 = vld [vmem:[#allocation5 + $0x1] sm:$0xff]
        %v5395 = vld [vmem:[#allocation5 + $0x9] sm:$0x1]
        %v5396 = vpack.c.bf16 %v5395, %v5394
        %s5397 = scalar_lea.vmem %s10, 56
        %v5398 = vld [vmem:[%s5397] sm:$0xf]
        %v5399 = vld [vmem:[%s5397 + $0x4] sm:$0xf]
        %v5400 = vld [vmem:[%s5397 + $0x8] sm:$0xf]
        %v5401 = vld [vmem:[%s5397 + $0xc] sm:$0xf]
        %v5402 = vld [vmem:[%s5397 + $0x10] sm:$0xf]
        %v5403 = vld [vmem:[%s5397 + $0x14] sm:$0xf]
        %v5404 = vld [vmem:[%s5397 + $0x18] sm:$0xf]
        %v5405 = vld [vmem:[%s5397 + $0x1c] sm:$0xf]
        %v5406 = vld [vmem:[%s5397 + $0x20] sm:$0xf]
        %v5407 = vld [vmem:[%s5397 + $0x24] sm:$0xf]
        %v5408 = vld [vmem:[%s5397 + $0x28] sm:$0xf]
        %v5409 = vld [vmem:[%s5397 + $0x2c] sm:$0xf]
        %v5410 = vld [vmem:[%s5397 + $0x30] sm:$0xf]
        %v5411 = vld [vmem:[%s5397 + $0x34] sm:$0x7]
        %v5426 = vunpack.c.l.b16 %v5398
        %v5427 = vunpack.c.l.b16 %v5399
        %v5428 = vunpack.c.l.b16 %v5400
        %v5429 = vunpack.c.l.b16 %v5401
        %v5430 = vunpack.c.l.b16 %v5402
        %v5431 = vunpack.c.l.b16 %v5403
        %v5432 = vunpack.c.l.b16 %v5404
        %v5433 = vunpack.c.l.b16 %v5405
        %v5434 = vunpack.c.l.b16 %v5406
        %v5435 = vunpack.c.l.b16 %v5407
        %v5436 = vunpack.c.l.b16 %v5408
        %v5437 = vunpack.c.l.b16 %v5409
        %v5438 = vunpack.c.l.b16 %v5410
        %v5439 = vunpack.c.l.b16 %v5411
        %v5440 = vpack.c.b16 %v5427, %v5426
        %v5441 = vpack.c.b16 %v5429, %v5428
        %v5442 = vpack.c.b16 %v5431, %v5430
        %v5443 = vpack.c.b16 %v5433, %v5432
        %v5444 = vpack.c.b16 %v5435, %v5434
        %v5445 = vpack.c.b16 %v5437, %v5436
        %v5446 = vpack.c.b16 %v5439, %v5438
        %v5454 = vsel %vm5268, %v5396, 0
        %v5457 = vsel %vm759, %v5446, 0
        %5459 = vmatprep.subr.bf16.mxu0 0
        %5460 = vmatpush1.bf16.msra.mxu0 %v5440
        %5461 = vmatprep.subr.bf16.mxu0 0
        %5462 = vmatpush1.bf16.msra.mxu0 %v5441
        %5463 = vmatprep.subr.bf16.mxu0 0
        %5464 = vmatpush1.bf16.msra.mxu0 %v5442
        %5465 = vmatprep.subr.bf16.mxu0 0
        %5466 = vmatpush1.bf16.msra.mxu0 %v5443
        %5467 = vmatprep.subr.bf16.mxu0 0
        %5468 = vmatpush1.bf16.msra.mxu0 %v5444
        %5469 = vmatprep.subr.bf16.mxu0 0
        %5470 = vmatpush1.bf16.msra.mxu0 %v5445
        %5471 = vmatprep.subr.bf16.mxu0 0
        %5472 = vmatpush1.bf16.msra.mxu0 %v5457
        %5473 = vmatprep.subr.bf16.mxu0 0
        %5474 = vmatpush1.bf16.msra.mxu0 0
        %5475 = vmatprep.subr.bf16.mxu0 0
        %5476 = vmatpush1.bf16.msra.mxu0 0
        %5477 = vmatprep.subr.bf16.mxu0 0
        %5478 = vmatpush1.bf16.msra.mxu0 0
        %5479 = vmatprep.subr.bf16.mxu0 0
        %5480 = vmatpush1.bf16.msra.mxu0 0
        %5481 = vmatprep.subr.bf16.mxu0 0
        %5482 = vmatpush1.bf16.msra.mxu0 0
        %5483 = vmatprep.subr.bf16.mxu0 0
        %5484 = vmatpush1.bf16.msra.mxu0 0
        %5485 = vmatprep.subr.bf16.mxu0 0
        %5486 = vmatpush1.bf16.msra.mxu0 0
        %5487 = vmatprep.subr.bf16.mxu0 0
        %5488 = vmatpush1.bf16.msra.mxu0 0
        %5489 = vmatprep.subr.bf16.mxu0 0
        %5490 = vmatpush1.bf16.msra.mxu0 0
        %5491 = vmatprep.mubr.bf16.mxu0 0
        %5492 = vmatmul.mubr.bf16.gmra.mrb[0].mxu0 %v5454
        %v5493 = vpop.f32.mrb[0].mxu0
        %v5494 = vadd.f32 0.0, %v5493
        %v5495 = vpop.f32.mrb[0].mxu0
        %v5496 = vpop.f32.mrb[0].mxu0
        %v5497 = vadd.f32 0.0, %v5496
        %v5498 = vpop.f32.mrb[0].mxu0
        %5499 = vdwg.mxu0
        %v5514 = vunpack.c.l.b16 %v5380
        %v5515 = vunpack.c.l.b16 %v5381
        %v5516 = vunpack.c.l.b16 %v5382
        %v5517 = vunpack.c.l.b16 %v5383
        %v5518 = vunpack.c.l.b16 %v5384
        %v5519 = vunpack.c.l.b16 %v5385
        %v5520 = vunpack.c.l.b16 %v5386
        %v5521 = vunpack.c.l.b16 %v5387
        %v5522 = vunpack.c.l.b16 %v5388
        %v5523 = vunpack.c.l.b16 %v5389
        %v5524 = vunpack.c.l.b16 %v5390
        %v5525 = vunpack.c.l.b16 %v5391
        %v5526 = vunpack.c.l.b16 %v5392
        %v5527 = vunpack.c.l.b16 %v5393
        %v5528 = vpack.c.b16 %v5515, %v5514
        %v5529 = vpack.c.b16 %v5517, %v5516
        %v5530 = vpack.c.b16 %v5519, %v5518
        %v5531 = vpack.c.b16 %v5521, %v5520
        %v5532 = vpack.c.b16 %v5523, %v5522
        %v5533 = vpack.c.b16 %v5525, %v5524
        %v5534 = vpack.c.b16 %v5527, %v5526
        %v5542 = vsel %vm5268, %v5379, 0
        %v5545 = vsel %vm759, %v5534, 0
        %5547 = vmatprep.subr.bf16.mxu0 0
        %5548 = vmatpush1.bf16.msra.mxu0 %v5528
        %5549 = vmatprep.subr.bf16.mxu0 0
        %5550 = vmatpush1.bf16.msra.mxu0 %v5529
        %5551 = vmatprep.subr.bf16.mxu0 0
        %5552 = vmatpush1.bf16.msra.mxu0 %v5530
        %5553 = vmatprep.subr.bf16.mxu0 0
        %5554 = vmatpush1.bf16.msra.mxu0 %v5531
        %5555 = vmatprep.subr.bf16.mxu0 0
        %5556 = vmatpush1.bf16.msra.mxu0 %v5532
        %5557 = vmatprep.subr.bf16.mxu0 0
        %5558 = vmatpush1.bf16.msra.mxu0 %v5533
        %5559 = vmatprep.subr.bf16.mxu0 0
        %5560 = vmatpush1.bf16.msra.mxu0 %v5545
        %5561 = vmatprep.subr.bf16.mxu0 0
        %5562 = vmatpush1.bf16.msra.mxu0 0
        %5563 = vmatprep.subr.bf16.mxu0 0
        %5564 = vmatpush1.bf16.msra.mxu0 0
        %5565 = vmatprep.subr.bf16.mxu0 0
        %5566 = vmatpush1.bf16.msra.mxu0 0
        %5567 = vmatprep.subr.bf16.mxu0 0
        %5568 = vmatpush1.bf16.msra.mxu0 0
        %5569 = vmatprep.subr.bf16.mxu0 0
        %5570 = vmatpush1.bf16.msra.mxu0 0
        %5571 = vmatprep.subr.bf16.mxu0 0
        %5572 = vmatpush1.bf16.msra.mxu0 0
        %5573 = vmatprep.subr.bf16.mxu0 0
        %5574 = vmatpush1.bf16.msra.mxu0 0
        %5575 = vmatprep.subr.bf16.mxu0 0
        %5576 = vmatpush1.bf16.msra.mxu0 0
        %5577 = vmatprep.subr.bf16.mxu0 0
        %5578 = vmatpush1.bf16.msra.mxu0 0
        %5579 = vmatprep.mubr.bf16.mxu0 0
        %5580 = vmatmul.mubr.bf16.gmra.mrb[0].mxu0 %v5542
        %v5581 = vpop.f32.mrb[0].mxu0
        %v5582 = vadd.f32 %v5494, %v5581
        %v5583 = vpop.f32.mrb[0].mxu0
        %v5584 = vpop.f32.mrb[0].mxu0
        %v5585 = vadd.f32 %v5497, %v5584
        %v5586 = vpop.f32.mrb[0].mxu0
        %5587 = vdwg.mxu0
        %v5588 = vld [vmem:[#allocation5 + $0x2] sm:$0xff]
        %v5589 = vld [vmem:[#allocation5 + $0xa] sm:$0x1]
        %v5590 = vpack.c.bf16 %v5589, %v5588
        %s5591 = scalar_lea.vmem %s10, 112
        %v5592 = vld [vmem:[%s5591] sm:$0xf]
        %v5593 = vld [vmem:[%s5591 + $0x4] sm:$0xf]
        %v5594 = vld [vmem:[%s5591 + $0x8] sm:$0xf]
        %v5595 = vld [vmem:[%s5591 + $0xc] sm:$0xf]
        %v5596 = vld [vmem:[%s5591 + $0x10] sm:$0xf]
        %v5597 = vld [vmem:[%s5591 + $0x14] sm:$0xf]
        %v5598 = vld [vmem:[%s5591 + $0x18] sm:$0xf]
        %v5599 = vld [vmem:[%s5591 + $0x1c] sm:$0xf]
        %v5600 = vld [vmem:[%s5591 + $0x20] sm:$0xf]
        %v5601 = vld [vmem:[%s5591 + $0x24] sm:$0xf]
        %v5602 = vld [vmem:[%s5591 + $0x28] sm:$0xf]
        %v5603 = vld [vmem:[%s5591 + $0x2c] sm:$0xf]
        %v5604 = vld [vmem:[%s5591 + $0x30] sm:$0xf]
        %v5605 = vld [vmem:[%s5591 + $0x34] sm:$0x7]
        %v5620 = vunpack.c.l.b16 %v5592
        %v5621 = vunpack.c.l.b16 %v5593
        %v5622 = vunpack.c.l.b16 %v5594
        %v5623 = vunpack.c.l.b16 %v5595
        %v5624 = vunpack.c.l.b16 %v5596
        %v5625 = vunpack.c.l.b16 %v5597
        %v5626 = vunpack.c.l.b16 %v5598
        %v5627 = vunpack.c.l.b16 %v5599
        %v5628 = vunpack.c.l.b16 %v5600
        %v5629 = vunpack.c.l.b16 %v5601
        %v5630 = vunpack.c.l.b16 %v5602
        %v5631 = vunpack.c.l.b16 %v5603
        %v5632 = vunpack.c.l.b16 %v5604
        %v5633 = vunpack.c.l.b16 %v5605
        %v5634 = vpack.c.b16 %v5621, %v5620
        %v5635 = vpack.c.b16 %v5623, %v5622
        %v5636 = vpack.c.b16 %v5625, %v5624
        %v5637 = vpack.c.b16 %v5627, %v5626
        %v5638 = vpack.c.b16 %v5629, %v5628
        %v5639 = vpack.c.b16 %v5631, %v5630
        %v5640 = vpack.c.b16 %v5633, %v5632
        %v5648 = vsel %vm5268, %v5590, 0
        %v5651 = vsel %vm759, %v5640, 0
        %5653 = vmatprep.subr.bf16.mxu0 0
        %5654 = vmatpush1.bf16.msra.mxu0 %v5634
        %5655 = vmatprep.subr.bf16.mxu0 0
        %5656 = vmatpush1.bf16.msra.mxu0 %v5635
        %5657 = vmatprep.subr.bf16.mxu0 0
        %5658 = vmatpush1.bf16.msra.mxu0 %v5636
        %5659 = vmatprep.subr.bf16.mxu0 0
        %5660 = vmatpush1.bf16.msra.mxu0 %v5637
        %5661 = vmatprep.subr.bf16.mxu0 0
        %5662 = vmatpush1.bf16.msra.mxu0 %v5638
        %5663 = vmatprep.subr.bf16.mxu0 0
        %5664 = vmatpush1.bf16.msra.mxu0 %v5639
        %5665 = vmatprep.subr.bf16.mxu0 0
        %5666 = vmatpush1.bf16.msra.mxu0 %v5651
        %5667 = vmatprep.subr.bf16.mxu0 0
        %5668 = vmatpush1.bf16.msra.mxu0 0
        %5669 = vmatprep.subr.bf16.mxu0 0
        %5670 = vmatpush1.bf16.msra.mxu0 0
        %5671 = vmatprep.subr.bf16.mxu0 0
        %5672 = vmatpush1.bf16.msra.mxu0 0
        %5673 = vmatprep.subr.bf16.mxu0 0
        %5674 = vmatpush1.bf16.msra.mxu0 0
        %5675 = vmatprep.subr.bf16.mxu0 0
        %5676 = vmatpush1.bf16.msra.mxu0 0
        %5677 = vmatprep.subr.bf16.mxu0 0
        %5678 = vmatpush1.bf16.msra.mxu0 0
        %5679 = vmatprep.subr.bf16.mxu0 0
        %5680 = vmatpush1.bf16.msra.mxu0 0
        %5681 = vmatprep.subr.bf16.mxu0 0
        %5682 = vmatpush1.bf16.msra.mxu0 0
        %5683 = vmatprep.subr.bf16.mxu0 0
        %5684 = vmatpush1.bf16.msra.mxu0 0
        %5685 = vmatprep.mubr.bf16.mxu0 0
        %5686 = vmatmul.mubr.bf16.gmra.mrb[0].mxu0 %v5648
        %v5687 = vpop.f32.mrb[0].mxu0
        %v5688 = vadd.f32 0.0, %v5687
        %v5689 = vpop.f32.mrb[0].mxu0
        %v5690 = vpop.f32.mrb[0].mxu0
        %v5691 = vadd.f32 0.0, %v5690
        %v5692 = vpop.f32.mrb[0].mxu0
        %5693 = vdwg.mxu0
        %v5694 = vadd.f32 %v5582, %v5688
        %v5695 = vadd.f32 %v5585, %v5691
        %v5696 = vmax.f32 %v5694, 0.0
        %v5697 = vmax.f32 %v5695, 0.0
        %v5698 = vld [vmem:[%s11] sm:$0x1]
        %v5699 = vld [vmem:[%s11 + $0x1] sm:$0x1]
        %v5700 = vld [vmem:[%s11 + $0x2] sm:$0x1]
        %v5701 = vlaneseq
        %v5702 = vshrl.u32 %v5701, 7
        %v5703 = vsub.s32 0, %v5702
        %v5704 = vrot.slane %v5700, %v5703
        %v5705 = vmul.f32 %v5696, %v5704
        %v5706 = vmul.f32 %v5697, %v5704
        %vm5707 = vcmask 883712
        %v5708 = vsel %vm5707, %v5705, 0.0
        %5709 = vadd.xlane.f32.xlu0 %v5708
        %v5710 = vpop.xlane.xlu0 %5709
        %vm5711 = vcmask 876544
        %v5712 = vsel %vm5711, %v5706, 0.0
        %5713 = vadd.xlane.f32.xlu0 %v5712
        %v5714 = vpop.xlane.xlu0 %5713
        %vm5715 = vcmask 1040384
        %v5716 = vsel %vm5715, %v5714, 0.0
        %v5717 = vadd.f32 %v5710, %v5716
        %v5718 = vrot.slane %v5717, 4
        %v5719 = vadd.f32 %v5717, %v5718
        %v5720 = vrot.slane %v5719, 2
        %v5721 = vadd.f32 %v5719, %v5720
        %v5722 = vrot.slane %v5721, 1
        %v5723 = vadd.f32 %v5721, %v5722
        %v5724 = vmul.f32 %v5705, %v5696
        %v5725 = vmul.f32 %v5706, %v5697
        %v5726 = vsel %vm5707, %v5724, 0.0
        %5727 = vadd.xlane.f32.xlu0 %v5726
        %v5728 = vpop.xlane.xlu0 %5727
        %v5729 = vsel %vm5711, %v5725, 0.0
        %5730 = vadd.xlane.f32.xlu0 %v5729
        %v5731 = vpop.xlane.xlu0 %5730
        %v5732 = vsel %vm5715, %v5731, 0.0
        %v5733 = vadd.f32 %v5728, %v5732
        %v5734 = vrot.slane %v5733, 4
        %v5735 = vadd.f32 %v5733, %v5734
        %v5736 = vrot.slane %v5735, 2
        %v5737 = vadd.f32 %v5735, %v5736
        %v5738 = vrot.slane %v5737, 1
        %v5739 = vadd.f32 %v5737, %v5738
        %v5740 = vmul.f32 %v5723, 0.002057613
        %v5741 = vmul.f32 %v5739, 0.002057613
        %v5742 = vmul.f32 %v5740, %v5740
        %v5743 = vsub.f32 %v5741, %v5742
        %v5744 = vmul.f32 %v5700, %v5740
        %v5745 = vadd.f32 %v5744, 0.0
        %v5746 = vmul.f32 %v5700, %v5743
        %v5747 = vadd.f32 %v5746, 0.0
        %v5748 = vld [vmem:[%s11 + $0x3] sm:$0x1]
        %v5749 = vlaneseq
        %v5750 = vshrl.u32 %v5749, 7
        %v5751 = vsub.s32 0, %v5750
        %v5752 = vrot.slane %v5748, %v5751
        %v5753 = vmul.f32 %v5696, %v5752
        %v5754 = vmul.f32 %v5697, %v5752
        %v5755 = vsel %vm5707, %v5753, 0.0
        %5756 = vadd.xlane.f32.xlu0 %v5755
        %v5757 = vpop.xlane.xlu0 %5756
        %v5758 = vsel %vm5711, %v5754, 0.0
        %5759 = vadd.xlane.f32.xlu0 %v5758
        %v5760 = vpop.xlane.xlu0 %5759
        %v5761 = vsel %vm5715, %v5760, 0.0
        %v5762 = vadd.f32 %v5757, %v5761
        %v5763 = vrot.slane %v5762, 4
        %v5764 = vadd.f32 %v5762, %v5763
        %v5765 = vrot.slane %v5764, 2
        %v5766 = vadd.f32 %v5764, %v5765
        %v5767 = vrot.slane %v5766, 1
        %v5768 = vadd.f32 %v5766, %v5767
        %v5769 = vmul.f32 %v5753, %v5696
        %v5770 = vmul.f32 %v5754, %v5697
        %v5771 = vsel %vm5707, %v5769, 0.0
        %5772 = vadd.xlane.f32.xlu0 %v5771
        %v5773 = vpop.xlane.xlu0 %5772
        %v5774 = vsel %vm5711, %v5770, 0.0
        %5775 = vadd.xlane.f32.xlu0 %v5774
        %v5776 = vpop.xlane.xlu0 %5775
        %v5777 = vsel %vm5715, %v5776, 0.0
        %v5778 = vadd.f32 %v5773, %v5777
        %v5779 = vrot.slane %v5778, 4
        %v5780 = vadd.f32 %v5778, %v5779
        %v5781 = vrot.slane %v5780, 2
        %v5782 = vadd.f32 %v5780, %v5781
        %v5783 = vrot.slane %v5782, 1
        %v5784 = vadd.f32 %v5782, %v5783
        %v5785 = vmul.f32 %v5768, 0.002057613
        %v5786 = vmul.f32 %v5784, 0.002057613
        %v5787 = vmul.f32 %v5785, %v5785
        %v5788 = vsub.f32 %v5786, %v5787
        %v5789 = vmul.f32 %v5748, %v5785
        %v5790 = vadd.f32 %v5745, %v5789
        %v5791 = vmul.f32 %v5748, %v5788
        %v5792 = vadd.f32 %v5747, %v5791
        %v5793 = vadd.f32 %v5792, 1e-05
        %v5794 = vrsqrt.pop %v5793
        %v5795 = vlaneseq
        %v5796 = vshrl.u32 %v5795, 7
        %v5797 = vsub.s32 0, %v5796
        %v5798 = vrot.slane %v5790, %v5797
        %v5799 = vsub.f32 %v5696, %v5798
        %v5800 = vsub.f32 %v5697, %v5798
        %v5801 = vmul.f32 %v5794, %v5698
        %v5802 = vlaneseq
        %v5803 = vshrl.u32 %v5802, 7
        %v5804 = vsub.s32 0, %v5803
        %v5805 = vrot.slane %v5801, %v5804
        %v5806 = vmul.f32 %v5799, %v5805
        %v5807 = vmul.f32 %v5800, %v5805
        %v5808 = vlaneseq
        %v5809 = vshrl.u32 %v5808, 7
        %v5810 = vsub.s32 0, %v5809
        %v5811 = vrot.slane %v5699, %v5810
        %v5812 = vadd.f32 %v5806, %v5811
        %v5813 = vadd.f32 %v5807, %v5811
        %5814 = vst.msk [vmem:[#allocation6] sm:$0xff] %vm5707, %v5812
        %5815 = vst.msk [vmem:[#allocation6 + $0x8] sm:$0x1] %vm5711, %v5813
        %v5816 = vld [vmem:[#allocation6] sm:$0x7f]
        %v5817 = vpack.c.bf16 %v5816, %v5816
        %v5818 = vld [vmem:[%s12] sm:$0xf]
        %v5819 = vld [vmem:[%s12 + $0x4] sm:$0xf]
        %v5820 = vld [vmem:[%s12 + $0x8] sm:$0xf]
        %v5821 = vld [vmem:[%s12 + $0xc] sm:$0xf]
        %v5822 = vld [vmem:[%s12 + $0x10] sm:$0xf]
        %v5823 = vld [vmem:[%s12 + $0x14] sm:$0xf]
        %v5824 = vld [vmem:[%s12 + $0x18] sm:$0xf]
        %v5825 = vld [vmem:[%s12 + $0x1c] sm:$0xf]
        %v5826 = vld [vmem:[%s12 + $0x20] sm:$0xf]
        %v5827 = vld [vmem:[%s12 + $0x24] sm:$0xf]
        %v5828 = vld [vmem:[%s12 + $0x28] sm:$0xf]
        %v5829 = vld [vmem:[%s12 + $0x2c] sm:$0xf]
        %v5830 = vld [vmem:[%s12 + $0x30] sm:$0xf]
        %v5831 = vld [vmem:[%s12 + $0x34] sm:$0x3]
        %v5832 = vld [vmem:[#allocation6 + $0x1] sm:$0x7f]
        %v5833 = vpack.c.bf16 %v5832, %v5832
        %s5834 = scalar_lea.vmem %s12, 56
        %v5835 = vld [vmem:[%s5834] sm:$0xf]
        %v5836 = vld [vmem:[%s5834 + $0x4] sm:$0xf]
        %v5837 = vld [vmem:[%s5834 + $0x8] sm:$0xf]
        %v5838 = vld [vmem:[%s5834 + $0xc] sm:$0xf]
        %v5839 = vld [vmem:[%s5834 + $0x10] sm:$0xf]
        %v5840 = vld [vmem:[%s5834 + $0x14] sm:$0xf]
        %v5841 = vld [vmem:[%s5834 + $0x18] sm:$0xf]
        %v5842 = vld [vmem:[%s5834 + $0x1c] sm:$0xf]
        %v5843 = vld [vmem:[%s5834 + $0x20] sm:$0xf]
        %v5844 = vld [vmem:[%s5834 + $0x24] sm:$0xf]
        %v5845 = vld [vmem:[%s5834 + $0x28] sm:$0xf]
        %v5846 = vld [vmem:[%s5834 + $0x2c] sm:$0xf]
        %v5847 = vld [vmem:[%s5834 + $0x30] sm:$0xf]
        %v5848 = vld [vmem:[%s5834 + $0x34] sm:$0x3]
        %v5863 = vunpack.c.l.b16 %v5835
        %v5864 = vunpack.c.l.b16 %v5836
        %v5865 = vunpack.c.l.b16 %v5837
        %v5866 = vunpack.c.l.b16 %v5838
        %v5867 = vunpack.c.l.b16 %v5839
        %v5868 = vunpack.c.l.b16 %v5840
        %v5869 = vunpack.c.l.b16 %v5841
        %v5870 = vunpack.c.l.b16 %v5842
        %v5871 = vunpack.c.l.b16 %v5843
        %v5872 = vunpack.c.l.b16 %v5844
        %v5873 = vunpack.c.l.b16 %v5845
        %v5874 = vunpack.c.l.b16 %v5846
        %v5875 = vunpack.c.l.b16 %v5847
        %v5876 = vunpack.c.l.b16 %v5848
        %v5877 = vpack.c.b16 %v5864, %v5863
        %v5878 = vpack.c.b16 %v5866, %v5865
        %v5879 = vpack.c.b16 %v5868, %v5867
        %v5880 = vpack.c.b16 %v5870, %v5869
        %v5881 = vpack.c.b16 %v5872, %v5871
        %v5882 = vpack.c.b16 %v5874, %v5873
        %v5883 = vpack.c.b16 %v5876, %v5875
        %v5891 = vsel %vm5707, %v5833, 0
        %vm5893 = vcmask 1045504
        %v5895 = vsel %vm5893, %v5883, 0
        %5897 = vmatprep.subr.bf16.mxu0 0
        %5898 = vmatpush1.bf16.msra.mxu0 %v5877
        %5899 = vmatprep.subr.bf16.mxu0 0
        %5900 = vmatpush1.bf16.msra.mxu0 %v5878
        %5901 = vmatprep.subr.bf16.mxu0 0
        %5902 = vmatpush1.bf16.msra.mxu0 %v5879
        %5903 = vmatprep.subr.bf16.mxu0 0
        %5904 = vmatpush1.bf16.msra.mxu0 %v5880
        %5905 = vmatprep.subr.bf16.mxu0 0
        %5906 = vmatpush1.bf16.msra.mxu0 %v5881
        %5907 = vmatprep.subr.bf16.mxu0 0
        %5908 = vmatpush1.bf16.msra.mxu0 %v5882
        %5909 = vmatprep.subr.bf16.mxu0 0
        %5910 = vmatpush1.bf16.msra.mxu0 %v5895
        %5911 = vmatprep.subr.bf16.mxu0 0
        %5912 = vmatpush1.bf16.msra.mxu0 0
        %5913 = vmatprep.subr.bf16.mxu0 0
        %5914 = vmatpush1.bf16.msra.mxu0 0
        %5915 = vmatprep.subr.bf16.mxu0 0
        %5916 = vmatpush1.bf16.msra.mxu0 0
        %5917 = vmatprep.subr.bf16.mxu0 0
        %5918 = vmatpush1.bf16.msra.mxu0 0
        %5919 = vmatprep.subr.bf16.mxu0 0
        %5920 = vmatpush1.bf16.msra.mxu0 0
        %5921 = vmatprep.subr.bf16.mxu0 0
        %5922 = vmatpush1.bf16.msra.mxu0 0
        %5923 = vmatprep.subr.bf16.mxu0 0
        %5924 = vmatpush1.bf16.msra.mxu0 0
        %5925 = vmatprep.subr.bf16.mxu0 0
        %5926 = vmatpush1.bf16.msra.mxu0 0
        %5927 = vmatprep.subr.bf16.mxu0 0
        %5928 = vmatpush1.bf16.msra.mxu0 0
        %5929 = vmatprep.mubr.bf16.mxu0 0
        %5930 = vmatmul.mubr.bf16.gmra.mrb[0].mxu0 %v5891
        %v5931 = vpop.f32.mrb[0].mxu0
        %v5932 = vadd.f32 0.0, %v5931
        %v5933 = vpop.f32.mrb[0].mxu0
        %v5934 = vpop.f32.mrb[0].mxu0
        %v5935 = vpop.f32.mrb[0].mxu0
        %5936 = vdwg.mxu0
        %v5951 = vunpack.c.l.b16 %v5818
        %v5952 = vunpack.c.l.b16 %v5819
        %v5953 = vunpack.c.l.b16 %v5820
        %v5954 = vunpack.c.l.b16 %v5821
        %v5955 = vunpack.c.l.b16 %v5822
        %v5956 = vunpack.c.l.b16 %v5823
        %v5957 = vunpack.c.l.b16 %v5824
        %v5958 = vunpack.c.l.b16 %v5825
        %v5959 = vunpack.c.l.b16 %v5826
        %v5960 = vunpack.c.l.b16 %v5827
        %v5961 = vunpack.c.l.b16 %v5828
        %v5962 = vunpack.c.l.b16 %v5829
        %v5963 = vunpack.c.l.b16 %v5830
        %v5964 = vunpack.c.l.b16 %v5831
        %v5965 = vpack.c.b16 %v5952, %v5951
        %v5966 = vpack.c.b16 %v5954, %v5953
        %v5967 = vpack.c.b16 %v5956, %v5955
        %v5968 = vpack.c.b16 %v5958, %v5957
        %v5969 = vpack.c.b16 %v5960, %v5959
        %v5970 = vpack.c.b16 %v5962, %v5961
        %v5971 = vpack.c.b16 %v5964, %v5963
        %v5979 = vsel %vm5707, %v5817, 0
        %v5982 = vsel %vm5893, %v5971, 0
        %5984 = vmatprep.subr.bf16.mxu0 0
        %5985 = vmatpush1.bf16.msra.mxu0 %v5965
        %5986 = vmatprep.subr.bf16.mxu0 0
        %5987 = vmatpush1.bf16.msra.mxu0 %v5966
        %5988 = vmatprep.subr.bf16.mxu0 0
        %5989 = vmatpush1.bf16.msra.mxu0 %v5967
        %5990 = vmatprep.subr.bf16.mxu0 0
        %5991 = vmatpush1.bf16.msra.mxu0 %v5968
        %5992 = vmatprep.subr.bf16.mxu0 0
        %5993 = vmatpush1.bf16.msra.mxu0 %v5969
        %5994 = vmatprep.subr.bf16.mxu0 0
        %5995 = vmatpush1.bf16.msra.mxu0 %v5970
        %5996 = vmatprep.subr.bf16.mxu0 0
        %5997 = vmatpush1.bf16.msra.mxu0 %v5982
        %5998 = vmatprep.subr.bf16.mxu0 0
        %5999 = vmatpush1.bf16.msra.mxu0 0
        %6000 = vmatprep.subr.bf16.mxu0 0
        %6001 = vmatpush1.bf16.msra.mxu0 0
        %6002 = vmatprep.subr.bf16.mxu0 0
        %6003 = vmatpush1.bf16.msra.mxu0 0
        %6004 = vmatprep.subr.bf16.mxu0 0
        %6005 = vmatpush1.bf16.msra.mxu0 0
        %6006 = vmatprep.subr.bf16.mxu0 0
        %6007 = vmatpush1.bf16.msra.mxu0 0
        %6008 = vmatprep.subr.bf16.mxu0 0
        %6009 = vmatpush1.bf16.msra.mxu0 0
        %6010 = vmatprep.subr.bf16.mxu0 0
        %6011 = vmatpush1.bf16.msra.mxu0 0
        %6012 = vmatprep.subr.bf16.mxu0 0
        %6013 = vmatpush1.bf16.msra.mxu0 0
        %6014 = vmatprep.subr.bf16.mxu0 0
        %6015 = vmatpush1.bf16.msra.mxu0 0
        %6016 = vmatprep.mubr.bf16.mxu0 0
        %6017 = vmatmul.mubr.bf16.gmra.mrb[0].mxu0 %v5979
        %v6018 = vpop.f32.mrb[0].mxu0
        %v6019 = vadd.f32 %v5932, %v6018
        %v6020 = vpop.f32.mrb[0].mxu0
        %v6021 = vpop.f32.mrb[0].mxu0
        %v6022 = vpop.f32.mrb[0].mxu0
        %6023 = vdwg.mxu0
        %v6024 = vld [vmem:[#allocation6 + $0x2] sm:$0x7f]
        %v6025 = vpack.c.bf16 %v6024, %v6024
        %s6026 = scalar_lea.vmem %s12, 112
        %v6027 = vld [vmem:[%s6026] sm:$0xf]
        %v6028 = vld [vmem:[%s6026 + $0x4] sm:$0xf]
        %v6029 = vld [vmem:[%s6026 + $0x8] sm:$0xf]
        %v6030 = vld [vmem:[%s6026 + $0xc] sm:$0xf]
        %v6031 = vld [vmem:[%s6026 + $0x10] sm:$0xf]
        %v6032 = vld [vmem:[%s6026 + $0x14] sm:$0xf]
        %v6033 = vld [vmem:[%s6026 + $0x18] sm:$0xf]
        %v6034 = vld [vmem:[%s6026 + $0x1c] sm:$0xf]
        %v6035 = vld [vmem:[%s6026 + $0x20] sm:$0xf]
        %v6036 = vld [vmem:[%s6026 + $0x24] sm:$0xf]
        %v6037 = vld [vmem:[%s6026 + $0x28] sm:$0xf]
        %v6038 = vld [vmem:[%s6026 + $0x2c] sm:$0xf]
        %v6039 = vld [vmem:[%s6026 + $0x30] sm:$0xf]
        %v6040 = vld [vmem:[%s6026 + $0x34] sm:$0x3]
        %v6055 = vunpack.c.l.b16 %v6027
        %v6056 = vunpack.c.l.b16 %v6028
        %v6057 = vunpack.c.l.b16 %v6029
        %v6058 = vunpack.c.l.b16 %v6030
        %v6059 = vunpack.c.l.b16 %v6031
        %v6060 = vunpack.c.l.b16 %v6032
        %v6061 = vunpack.c.l.b16 %v6033
        %v6062 = vunpack.c.l.b16 %v6034
        %v6063 = vunpack.c.l.b16 %v6035
        %v6064 = vunpack.c.l.b16 %v6036
        %v6065 = vunpack.c.l.b16 %v6037
        %v6066 = vunpack.c.l.b16 %v6038
        %v6067 = vunpack.c.l.b16 %v6039
        %v6068 = vunpack.c.l.b16 %v6040
        %v6069 = vpack.c.b16 %v6056, %v6055
        %v6070 = vpack.c.b16 %v6058, %v6057
        %v6071 = vpack.c.b16 %v6060, %v6059
        %v6072 = vpack.c.b16 %v6062, %v6061
        %v6073 = vpack.c.b16 %v6064, %v6063
        %v6074 = vpack.c.b16 %v6066, %v6065
        %v6075 = vpack.c.b16 %v6068, %v6067
        %v6083 = vsel %vm5707, %v6025, 0
        %v6086 = vsel %vm5893, %v6075, 0
        %6088 = vmatprep.subr.bf16.mxu0 0
        %6089 = vmatpush1.bf16.msra.mxu0 %v6069
        %6090 = vmatprep.subr.bf16.mxu0 0
        %6091 = vmatpush1.bf16.msra.mxu0 %v6070
        %6092 = vmatprep.subr.bf16.mxu0 0
        %6093 = vmatpush1.bf16.msra.mxu0 %v6071
        %6094 = vmatprep.subr.bf16.mxu0 0
        %6095 = vmatpush1.bf16.msra.mxu0 %v6072
        %6096 = vmatprep.subr.bf16.mxu0 0
        %6097 = vmatpush1.bf16.msra.mxu0 %v6073
        %6098 = vmatprep.subr.bf16.mxu0 0
        %6099 = vmatpush1.bf16.msra.mxu0 %v6074
        %6100 = vmatprep.subr.bf16.mxu0 0
        %6101 = vmatpush1.bf16.msra.mxu0 %v6086
        %6102 = vmatprep.subr.bf16.mxu0 0
        %6103 = vmatpush1.bf16.msra.mxu0 0
        %6104 = vmatprep.subr.bf16.mxu0 0
        %6105 = vmatpush1.bf16.msra.mxu0 0
        %6106 = vmatprep.subr.bf16.mxu0 0
        %6107 = vmatpush1.bf16.msra.mxu0 0
        %6108 = vmatprep.subr.bf16.mxu0 0
        %6109 = vmatpush1.bf16.msra.mxu0 0
        %6110 = vmatprep.subr.bf16.mxu0 0
        %6111 = vmatpush1.bf16.msra.mxu0 0
        %6112 = vmatprep.subr.bf16.mxu0 0
        %6113 = vmatpush1.bf16.msra.mxu0 0
        %6114 = vmatprep.subr.bf16.mxu0 0
        %6115 = vmatpush1.bf16.msra.mxu0 0
        %6116 = vmatprep.subr.bf16.mxu0 0
        %6117 = vmatpush1.bf16.msra.mxu0 0
        %6118 = vmatprep.subr.bf16.mxu0 0
        %6119 = vmatpush1.bf16.msra.mxu0 0
        %6120 = vmatprep.mubr.bf16.mxu0 0
        %6121 = vmatmul.mubr.bf16.gmra.mrb[0].mxu0 %v6083
        %v6122 = vpop.f32.mrb[0].mxu0
        %v6123 = vadd.f32 0.0, %v6122
        %v6124 = vpop.f32.mrb[0].mxu0
        %v6125 = vpop.f32.mrb[0].mxu0
        %v6126 = vpop.f32.mrb[0].mxu0
        %6127 = vdwg.mxu0
        %v6128 = vadd.f32 %v6019, %v6123
        %v6129 = vmax.f32 %v6128, 0.0
        %v6130 = vld [vmem:[%s13] sm:$0x1]
        %v6131 = vld [vmem:[%s13 + $0x1] sm:$0x1]
        %v6132 = vld [vmem:[%s13 + $0x2] sm:$0x1]
        %v6133 = vlaneseq
        %v6134 = vshrl.u32 %v6133, 7
        %v6135 = vsub.s32 0, %v6134
        %v6136 = vrot.slane %v6132, %v6135
        %v6137 = vmul.f32 %v6129, %v6136
        %vm6138 = vcmask 800768
        %v6139 = vsel %vm6138, %v6137, 0.0
        %6140 = vadd.xlane.f32.xlu0 %v6139
        %v6141 = vpop.xlane.xlu0 %6140
        %v6142 = vsel %vm759, %v6141, 0.0
        %v6143 = vrot.slane %v6142, 4
        %v6144 = vadd.f32 %v6142, %v6143
        %v6145 = vrot.slane %v6144, 2
        %v6146 = vadd.f32 %v6144, %v6145
        %v6147 = vrot.slane %v6146, 1
        %v6148 = vadd.f32 %v6146, %v6147
        %v6149 = vmul.f32 %v6137, %v6129
        %v6150 = vsel %vm6138, %v6149, 0.0
        %6151 = vadd.xlane.f32.xlu0 %v6150
        %v6152 = vpop.xlane.xlu0 %6151
        %v6153 = vsel %vm759, %v6152, 0.0
        %v6154 = vrot.slane %v6153, 4
        %v6155 = vadd.f32 %v6153, %v6154
        %v6156 = vrot.slane %v6155, 2
        %v6157 = vadd.f32 %v6155, %v6156
        %v6158 = vrot.slane %v6157, 1
        %v6159 = vadd.f32 %v6157, %v6158
        %v6160 = vmul.f32 %v6148, 0.002915452
        %v6161 = vmul.f32 %v6159, 0.002915452
        %v6162 = vmul.f32 %v6160, %v6160
        %v6163 = vsub.f32 %v6161, %v6162
        %v6164 = vmul.f32 %v6132, %v6160
        %v6165 = vadd.f32 %v6164, 0.0
        %v6166 = vmul.f32 %v6132, %v6163
        %v6167 = vadd.f32 %v6166, 0.0
        %v6168 = vld [vmem:[%s13 + $0x3] sm:$0x1]
        %v6169 = vlaneseq
        %v6170 = vshrl.u32 %v6169, 7
        %v6171 = vsub.s32 0, %v6170
        %v6172 = vrot.slane %v6168, %v6171
        %v6173 = vmul.f32 %v6129, %v6172
        %v6174 = vsel %vm6138, %v6173, 0.0
        %6175 = vadd.xlane.f32.xlu0 %v6174
        %v6176 = vpop.xlane.xlu0 %6175
        %v6177 = vsel %vm759, %v6176, 0.0
        %v6178 = vrot.slane %v6177, 4
        %v6179 = vadd.f32 %v6177, %v6178
        %v6180 = vrot.slane %v6179, 2
        %v6181 = vadd.f32 %v6179, %v6180
        %v6182 = vrot.slane %v6181, 1
        %v6183 = vadd.f32 %v6181, %v6182
        %v6184 = vmul.f32 %v6173, %v6129
        %v6185 = vsel %vm6138, %v6184, 0.0
        %6186 = vadd.xlane.f32.xlu0 %v6185
        %v6187 = vpop.xlane.xlu0 %6186
        %v6188 = vsel %vm759, %v6187, 0.0
        %v6189 = vrot.slane %v6188, 4
        %v6190 = vadd.f32 %v6188, %v6189
        %v6191 = vrot.slane %v6190, 2
        %v6192 = vadd.f32 %v6190, %v6191
        %v6193 = vrot.slane %v6192, 1
        %v6194 = vadd.f32 %v6192, %v6193
        %v6195 = vmul.f32 %v6183, 0.002915452
        %v6196 = vmul.f32 %v6194, 0.002915452
        %v6197 = vmul.f32 %v6195, %v6195
        %v6198 = vsub.f32 %v6196, %v6197
        %v6199 = vmul.f32 %v6168, %v6195
        %v6200 = vadd.f32 %v6165, %v6199
        %v6201 = vmul.f32 %v6168, %v6198
        %v6202 = vadd.f32 %v6167, %v6201
        %v6203 = vadd.f32 %v6202, 1e-05
        %v6204 = vrsqrt.pop %v6203
        %v6205 = vlaneseq
        %v6206 = vshrl.u32 %v6205, 7
        %v6207 = vsub.s32 0, %v6206
        %v6208 = vrot.slane %v6200, %v6207
        %v6209 = vsub.f32 %v6129, %v6208
        %v6210 = vmul.f32 %v6204, %v6130
        %v6211 = vlaneseq
        %v6212 = vshrl.u32 %v6211, 7
        %v6213 = vsub.s32 0, %v6212
        %v6214 = vrot.slane %v6210, %v6213
        %v6215 = vmul.f32 %v6209, %v6214
        %v6216 = vlaneseq
        %v6217 = vshrl.u32 %v6216, 7
        %v6218 = vsub.s32 0, %v6217
        %v6219 = vrot.slane %v6131, %v6218
        %v6220 = vadd.f32 %v6215, %v6219
        %6221 = vst.msk [vmem:[#allocation7] sm:$0x7f] %vm6138, %v6220
        %v6222 = vld [vmem:[#allocation7] sm:$0x1f]
        %v6223 = vpack.c.bf16 %v6222, %v6222
        %v6224 = vld [vmem:[%s14] sm:$0xf]
        %v6225 = vld [vmem:[%s14 + $0x4] sm:$0xf]
        %v6226 = vld [vmem:[%s14 + $0x8] sm:$0xf]
        %v6227 = vld [vmem:[%s14 + $0xc] sm:$0xf]
        %v6228 = vld [vmem:[%s14 + $0x10] sm:$0xf]
        %v6229 = vld [vmem:[%s14 + $0x14] sm:$0xf]
        %v6230 = vld [vmem:[%s14 + $0x18] sm:$0xf]
        %v6231 = vld [vmem:[%s14 + $0x1c] sm:$0xf]
        %v6232 = vld [vmem:[%s14 + $0x20] sm:$0xf]
        %v6233 = vld [vmem:[%s14 + $0x24] sm:$0xf]
        %v6234 = vld [vmem:[%s14 + $0x28] sm:$0xf]
        %v6235 = vld [vmem:[%s14 + $0x2c] sm:$0xf]
        %v6236 = vld [vmem:[%s14 + $0x30] sm:$0x1]
        %v6237 = vld [vmem:[#allocation7 + $0x1] sm:$0x1f]
        %v6238 = vpack.c.bf16 %v6237, %v6237
        %s6239 = scalar_lea.vmem %s14, 52
        %v6240 = vld [vmem:[%s6239] sm:$0xf]
        %v6241 = vld [vmem:[%s6239 + $0x4] sm:$0xf]
        %v6242 = vld [vmem:[%s6239 + $0x8] sm:$0xf]
        %v6243 = vld [vmem:[%s6239 + $0xc] sm:$0xf]
        %v6244 = vld [vmem:[%s6239 + $0x10] sm:$0xf]
        %v6245 = vld [vmem:[%s6239 + $0x14] sm:$0xf]
        %v6246 = vld [vmem:[%s6239 + $0x18] sm:$0xf]
        %v6247 = vld [vmem:[%s6239 + $0x1c] sm:$0xf]
        %v6248 = vld [vmem:[%s6239 + $0x20] sm:$0xf]
        %v6249 = vld [vmem:[%s6239 + $0x24] sm:$0xf]
        %v6250 = vld [vmem:[%s6239 + $0x28] sm:$0xf]
        %v6251 = vld [vmem:[%s6239 + $0x2c] sm:$0xf]
        %v6252 = vld [vmem:[%s6239 + $0x30] sm:$0x1]
        %v6266 = vunpack.c.l.b16 %v6240
        %v6267 = vunpack.c.l.b16 %v6241
        %v6268 = vunpack.c.l.b16 %v6242
        %v6269 = vunpack.c.l.b16 %v6243
        %v6270 = vunpack.c.l.b16 %v6244
        %v6271 = vunpack.c.l.b16 %v6245
        %v6272 = vunpack.c.l.b16 %v6246
        %v6273 = vunpack.c.l.b16 %v6247
        %v6274 = vunpack.c.l.b16 %v6248
        %v6275 = vunpack.c.l.b16 %v6249
        %v6276 = vunpack.c.l.b16 %v6250
        %v6277 = vunpack.c.l.b16 %v6251
        %v6278 = vunpack.c.l.b16 %v6252
        %v6279 = vpack.c.b16 %v6267, %v6266
        %v6280 = vpack.c.b16 %v6269, %v6268
        %v6281 = vpack.c.b16 %v6271, %v6270
        %v6282 = vpack.c.b16 %v6273, %v6272
        %v6283 = vpack.c.b16 %v6275, %v6274
        %v6284 = vpack.c.b16 %v6277, %v6276
        %v6285 = vpack.c.b16 %v6278, %v6278
        %vm6292 = vcmask 801792
        %v6294 = vsel %vm6292, %v6238, 0
        %v6297 = vsel %vm5715, %v6285, 0
        %6299 = vmatprep.subr.bf16.mxu0 0
        %6300 = vmatpush1.bf16.msra.mxu0 %v6279
        %6301 = vmatprep.subr.bf16.mxu0 0
        %6302 = vmatpush1.bf16.msra.mxu0 %v6280
        %6303 = vmatprep.subr.bf16.mxu0 0
        %6304 = vmatpush1.bf16.msra.mxu0 %v6281
        %6305 = vmatprep.subr.bf16.mxu0 0
        %6306 = vmatpush1.bf16.msra.mxu0 %v6282
        %6307 = vmatprep.subr.bf16.mxu0 0
        %6308 = vmatpush1.bf16.msra.mxu0 %v6283
        %6309 = vmatprep.subr.bf16.mxu0 0
        %6310 = vmatpush1.bf16.msra.mxu0 %v6284
        %6311 = vmatprep.subr.bf16.mxu0 0
        %6312 = vmatpush1.bf16.msra.mxu0 %v6297
        %6313 = vmatprep.subr.bf16.mxu0 0
        %6314 = vmatpush1.bf16.msra.mxu0 0
        %6315 = vmatprep.subr.bf16.mxu0 0
        %6316 = vmatpush1.bf16.msra.mxu0 0
        %6317 = vmatprep.subr.bf16.mxu0 0
        %6318 = vmatpush1.bf16.msra.mxu0 0
        %6319 = vmatprep.subr.bf16.mxu0 0
        %6320 = vmatpush1.bf16.msra.mxu0 0
        %6321 = vmatprep.subr.bf16.mxu0 0
        %6322 = vmatpush1.bf16.msra.mxu0 0
        %6323 = vmatprep.subr.bf16.mxu0 0
        %6324 = vmatpush1.bf16.msra.mxu0 0
        %6325 = vmatprep.subr.bf16.mxu0 0
        %6326 = vmatpush1.bf16.msra.mxu0 0
        %6327 = vmatprep.subr.bf16.mxu0 0
        %6328 = vmatpush1.bf16.msra.mxu0 0
        %6329 = vmatprep.subr.bf16.mxu0 0
        %6330 = vmatpush1.bf16.msra.mxu0 0
        %6331 = vmatprep.mubr.bf16.mxu0 0
        %6332 = vmatmul.mubr.bf16.gmra.mrb[0].mxu0 %v6294
        %v6333 = vpop.f32.mrb[0].mxu0
        %v6334 = vadd.f32 0.0, %v6333
        %v6335 = vpop.f32.mrb[0].mxu0
        %v6336 = vpop.f32.mrb[0].mxu0
        %v6337 = vpop.f32.mrb[0].mxu0
        %6338 = vdwg.mxu0
        %v6352 = vunpack.c.l.b16 %v6224
        %v6353 = vunpack.c.l.b16 %v6225
        %v6354 = vunpack.c.l.b16 %v6226
        %v6355 = vunpack.c.l.b16 %v6227
        %v6356 = vunpack.c.l.b16 %v6228
        %v6357 = vunpack.c.l.b16 %v6229
        %v6358 = vunpack.c.l.b16 %v6230
        %v6359 = vunpack.c.l.b16 %v6231
        %v6360 = vunpack.c.l.b16 %v6232
        %v6361 = vunpack.c.l.b16 %v6233
        %v6362 = vunpack.c.l.b16 %v6234
        %v6363 = vunpack.c.l.b16 %v6235
        %v6364 = vunpack.c.l.b16 %v6236
        %v6365 = vpack.c.b16 %v6353, %v6352
        %v6366 = vpack.c.b16 %v6355, %v6354
        %v6367 = vpack.c.b16 %v6357, %v6356
        %v6368 = vpack.c.b16 %v6359, %v6358
        %v6369 = vpack.c.b16 %v6361, %v6360
        %v6370 = vpack.c.b16 %v6363, %v6362
        %v6371 = vpack.c.b16 %v6364, %v6364
        %v6379 = vsel %vm6292, %v6223, 0
        %v6382 = vsel %vm5715, %v6371, 0
        %6384 = vmatprep.subr.bf16.mxu0 0
        %6385 = vmatpush1.bf16.msra.mxu0 %v6365
        %6386 = vmatprep.subr.bf16.mxu0 0
        %6387 = vmatpush1.bf16.msra.mxu0 %v6366
        %6388 = vmatprep.subr.bf16.mxu0 0
        %6389 = vmatpush1.bf16.msra.mxu0 %v6367
        %6390 = vmatprep.subr.bf16.mxu0 0
        %6391 = vmatpush1.bf16.msra.mxu0 %v6368
        %6392 = vmatprep.subr.bf16.mxu0 0
        %6393 = vmatpush1.bf16.msra.mxu0 %v6369
        %6394 = vmatprep.subr.bf16.mxu0 0
        %6395 = vmatpush1.bf16.msra.mxu0 %v6370
        %6396 = vmatprep.subr.bf16.mxu0 0
        %6397 = vmatpush1.bf16.msra.mxu0 %v6382
        %6398 = vmatprep.subr.bf16.mxu0 0
        %6399 = vmatpush1.bf16.msra.mxu0 0
        %6400 = vmatprep.subr.bf16.mxu0 0
        %6401 = vmatpush1.bf16.msra.mxu0 0
        %6402 = vmatprep.subr.bf16.mxu0 0
        %6403 = vmatpush1.bf16.msra.mxu0 0
        %6404 = vmatprep.subr.bf16.mxu0 0
        %6405 = vmatpush1.bf16.msra.mxu0 0
        %6406 = vmatprep.subr.bf16.mxu0 0
        %6407 = vmatpush1.bf16.msra.mxu0 0
        %6408 = vmatprep.subr.bf16.mxu0 0
        %6409 = vmatpush1.bf16.msra.mxu0 0
        %6410 = vmatprep.subr.bf16.mxu0 0
        %6411 = vmatpush1.bf16.msra.mxu0 0
        %6412 = vmatprep.subr.bf16.mxu0 0
        %6413 = vmatpush1.bf16.msra.mxu0 0
        %6414 = vmatprep.subr.bf16.mxu0 0
        %6415 = vmatpush1.bf16.msra.mxu0 0
        %6416 = vmatprep.mubr.bf16.mxu0 0
        %6417 = vmatmul.mubr.bf16.gmra.mrb[0].mxu0 %v6379
        %v6418 = vpop.f32.mrb[0].mxu0
        %v6419 = vadd.f32 %v6334, %v6418
        %v6420 = vpop.f32.mrb[0].mxu0
        %v6421 = vpop.f32.mrb[0].mxu0
        %v6422 = vpop.f32.mrb[0].mxu0
        %6423 = vdwg.mxu0
        %v6424 = vld [vmem:[#allocation7 + $0x2] sm:$0x1f]
        %v6425 = vpack.c.bf16 %v6424, %v6424
        %s6426 = scalar_lea.vmem %s14, 104
        %v6427 = vld [vmem:[%s6426] sm:$0xf]
        %v6428 = vld [vmem:[%s6426 + $0x4] sm:$0xf]
        %v6429 = vld [vmem:[%s6426 + $0x8] sm:$0xf]
        %v6430 = vld [vmem:[%s6426 + $0xc] sm:$0xf]
        %v6431 = vld [vmem:[%s6426 + $0x10] sm:$0xf]
        %v6432 = vld [vmem:[%s6426 + $0x14] sm:$0xf]
        %v6433 = vld [vmem:[%s6426 + $0x18] sm:$0xf]
        %v6434 = vld [vmem:[%s6426 + $0x1c] sm:$0xf]
        %v6435 = vld [vmem:[%s6426 + $0x20] sm:$0xf]
        %v6436 = vld [vmem:[%s6426 + $0x24] sm:$0xf]
        %v6437 = vld [vmem:[%s6426 + $0x28] sm:$0xf]
        %v6438 = vld [vmem:[%s6426 + $0x2c] sm:$0xf]
        %v6439 = vld [vmem:[%s6426 + $0x30] sm:$0x1]
        %v6453 = vunpack.c.l.b16 %v6427
        %v6454 = vunpack.c.l.b16 %v6428
        %v6455 = vunpack.c.l.b16 %v6429
        %v6456 = vunpack.c.l.b16 %v6430
        %v6457 = vunpack.c.l.b16 %v6431
        %v6458 = vunpack.c.l.b16 %v6432
        %v6459 = vunpack.c.l.b16 %v6433
        %v6460 = vunpack.c.l.b16 %v6434
        %v6461 = vunpack.c.l.b16 %v6435
        %v6462 = vunpack.c.l.b16 %v6436
        %v6463 = vunpack.c.l.b16 %v6437
        %v6464 = vunpack.c.l.b16 %v6438
        %v6465 = vunpack.c.l.b16 %v6439
        %v6466 = vpack.c.b16 %v6454, %v6453
        %v6467 = vpack.c.b16 %v6456, %v6455
        %v6468 = vpack.c.b16 %v6458, %v6457
        %v6469 = vpack.c.b16 %v6460, %v6459
        %v6470 = vpack.c.b16 %v6462, %v6461
        %v6471 = vpack.c.b16 %v6464, %v6463
        %v6472 = vpack.c.b16 %v6465, %v6465
        %v6480 = vsel %vm6292, %v6425, 0
        %v6483 = vsel %vm5715, %v6472, 0
        %6485 = vmatprep.subr.bf16.mxu0 0
        %6486 = vmatpush1.bf16.msra.mxu0 %v6466
        %6487 = vmatprep.subr.bf16.mxu0 0
        %6488 = vmatpush1.bf16.msra.mxu0 %v6467
        %6489 = vmatprep.subr.bf16.mxu0 0
        %6490 = vmatpush1.bf16.msra.mxu0 %v6468
        %6491 = vmatprep.subr.bf16.mxu0 0
        %6492 = vmatpush1.bf16.msra.mxu0 %v6469
        %6493 = vmatprep.subr.bf16.mxu0 0
        %6494 = vmatpush1.bf16.msra.mxu0 %v6470
        %6495 = vmatprep.subr.bf16.mxu0 0
        %6496 = vmatpush1.bf16.msra.mxu0 %v6471
        %6497 = vmatprep.subr.bf16.mxu0 0
        %6498 = vmatpush1.bf16.msra.mxu0 %v6483
        %6499 = vmatprep.subr.bf16.mxu0 0
        %6500 = vmatpush1.bf16.msra.mxu0 0
        %6501 = vmatprep.subr.bf16.mxu0 0
        %6502 = vmatpush1.bf16.msra.mxu0 0
        %6503 = vmatprep.subr.bf16.mxu0 0
        %6504 = vmatpush1.bf16.msra.mxu0 0
        %6505 = vmatprep.subr.bf16.mxu0 0
        %6506 = vmatpush1.bf16.msra.mxu0 0
        %6507 = vmatprep.subr.bf16.mxu0 0
        %6508 = vmatpush1.bf16.msra.mxu0 0
        %6509 = vmatprep.subr.bf16.mxu0 0
        %6510 = vmatpush1.bf16.msra.mxu0 0
        %6511 = vmatprep.subr.bf16.mxu0 0
        %6512 = vmatpush1.bf16.msra.mxu0 0
        %6513 = vmatprep.subr.bf16.mxu0 0
        %6514 = vmatpush1.bf16.msra.mxu0 0
        %6515 = vmatprep.subr.bf16.mxu0 0
        %6516 = vmatpush1.bf16.msra.mxu0 0
        %6517 = vmatprep.mubr.bf16.mxu0 0
        %6518 = vmatmul.mubr.bf16.gmra.mrb[0].mxu0 %v6480
        %v6519 = vpop.f32.mrb[0].mxu0
        %v6520 = vadd.f32 0.0, %v6519
        %v6521 = vpop.f32.mrb[0].mxu0
        %v6522 = vpop.f32.mrb[0].mxu0
        %v6523 = vpop.f32.mrb[0].mxu0
        %6524 = vdwg.mxu0
        %v6525 = vadd.f32 %v6419, %v6520
        %v6526 = vmax.f32 %v6525, 0.0
        %v6527 = vld [vmem:[%s15] sm:$0x1]
        %v6528 = vld [vmem:[%s15 + $0x1] sm:$0x1]
        %v6529 = vld [vmem:[%s15 + $0x2] sm:$0x1]
        %v6530 = vlaneseq
        %v6531 = vshrl.u32 %v6530, 7
        %v6532 = vsub.s32 0, %v6531
        %v6533 = vrot.slane %v6529, %v6532
        %v6534 = vmul.f32 %v6526, %v6533
        %vm6535 = vcmask 651264
        %v6536 = vsel %vm6535, %v6534, 0.0
        %6537 = vadd.xlane.f32.xlu0 %v6536
        %v6538 = vpop.xlane.xlu0 %6537
        %vm6539 = vcmask 1044480
        %v6540 = vsel %vm6539, %v6538, 0.0
        %v6541 = vrot.slane %v6540, 4
        %v6542 = vadd.f32 %v6540, %v6541
        %v6543 = vrot.slane %v6542, 2
        %v6544 = vadd.f32 %v6542, %v6543
        %v6545 = vrot.slane %v6544, 1
        %v6546 = vadd.f32 %v6544, %v6545
        %v6547 = vmul.f32 %v6534, %v6526
        %v6548 = vsel %vm6535, %v6547, 0.0
        %6549 = vadd.xlane.f32.xlu0 %v6548
        %v6550 = vpop.xlane.xlu0 %6549
        %v6551 = vsel %vm6539, %v6550, 0.0
        %v6552 = vrot.slane %v6551, 4
        %v6553 = vadd.f32 %v6551, %v6552
        %v6554 = vrot.slane %v6553, 2
        %v6555 = vadd.f32 %v6553, %v6554
        %v6556 = vrot.slane %v6555, 1
        %v6557 = vadd.f32 %v6555, %v6556
        %v6558 = vmul.f32 %v6546, 0.005
        %v6559 = vmul.f32 %v6557, 0.005
        %v6560 = vmul.f32 %v6558, %v6558
        %v6561 = vsub.f32 %v6559, %v6560
        %v6562 = vmul.f32 %v6529, %v6558
        %v6563 = vadd.f32 %v6562, 0.0
        %v6564 = vmul.f32 %v6529, %v6561
        %v6565 = vadd.f32 %v6564, 0.0
        %v6566 = vld [vmem:[%s15 + $0x3] sm:$0x1]
        %v6567 = vlaneseq
        %v6568 = vshrl.u32 %v6567, 7
        %v6569 = vsub.s32 0, %v6568
        %v6570 = vrot.slane %v6566, %v6569
        %v6571 = vmul.f32 %v6526, %v6570
        %v6572 = vsel %vm6535, %v6571, 0.0
        %6573 = vadd.xlane.f32.xlu0 %v6572
        %v6574 = vpop.xlane.xlu0 %6573
        %v6575 = vsel %vm6539, %v6574, 0.0
        %v6576 = vrot.slane %v6575, 4
        %v6577 = vadd.f32 %v6575, %v6576
        %v6578 = vrot.slane %v6577, 2
        %v6579 = vadd.f32 %v6577, %v6578
        %v6580 = vrot.slane %v6579, 1
        %v6581 = vadd.f32 %v6579, %v6580
        %v6582 = vmul.f32 %v6571, %v6526
        %v6583 = vsel %vm6535, %v6582, 0.0
        %6584 = vadd.xlane.f32.xlu0 %v6583
        %v6585 = vpop.xlane.xlu0 %6584
        %v6586 = vsel %vm6539, %v6585, 0.0
        %v6587 = vrot.slane %v6586, 4
        %v6588 = vadd.f32 %v6586, %v6587
        %v6589 = vrot.slane %v6588, 2
        %v6590 = vadd.f32 %v6588, %v6589
        %v6591 = vrot.slane %v6590, 1
        %v6592 = vadd.f32 %v6590, %v6591
        %v6593 = vmul.f32 %v6581, 0.005
        %v6594 = vmul.f32 %v6592, 0.005
        %v6595 = vmul.f32 %v6593, %v6593
        %v6596 = vsub.f32 %v6594, %v6595
        %v6597 = vmul.f32 %v6566, %v6593
        %v6598 = vadd.f32 %v6563, %v6597
        %v6599 = vmul.f32 %v6566, %v6596
        %v6600 = vadd.f32 %v6565, %v6599
        %v6601 = vadd.f32 %v6600, 1e-05
        %v6602 = vrsqrt.pop %v6601
        %v6603 = vlaneseq
        %v6604 = vshrl.u32 %v6603, 7
        %v6605 = vsub.s32 0, %v6604
        %v6606 = vrot.slane %v6598, %v6605
        %v6607 = vsub.f32 %v6526, %v6606
        %v6608 = vmul.f32 %v6602, %v6527
        %v6609 = vlaneseq
        %v6610 = vshrl.u32 %v6609, 7
        %v6611 = vsub.s32 0, %v6610
        %v6612 = vrot.slane %v6608, %v6611
        %v6613 = vmul.f32 %v6607, %v6612
        %v6614 = vlaneseq
        %v6615 = vshrl.u32 %v6614, 7
        %v6616 = vsub.s32 0, %v6615
        %v6617 = vrot.slane %v6528, %v6616
        %v6618 = vadd.f32 %v6613, %v6617
        %v6619 = vpack.c.bf16 %v6618, %v6618
        %v6620 = vld [vmem:[%s16] sm:$0xf]
        %v6621 = vld [vmem:[%s16 + $0x4] sm:$0xf]
        %v6622 = vld [vmem:[%s16 + $0x8] sm:$0xf]
        %v6623 = vld [vmem:[%s16 + $0xc] sm:$0xf]
        %v6624 = vld [vmem:[%s16 + $0x10] sm:$0xf]
        %v6625 = vld [vmem:[%s16 + $0x14] sm:$0xf]
        %v6626 = vld [vmem:[%s16 + $0x18] sm:$0xf]
        %v6627 = vld [vmem:[%s16 + $0x1c] sm:$0xf]
        %v6628 = vld [vmem:[%s16 + $0x20] sm:$0xf]
        %v6629 = vld [vmem:[%s16 + $0x24] sm:$0xf]
        %v6630 = vld [vmem:[%s17] sm:$0x1]
        %v6632 = vlaneseq
        %v6633 = vshrl.u32 %v6632, 7
        %v6634 = vsub.s32 0, %v6633
        %v6635 = vrot.slane %v6630, %v6634
        %v6647 = vunpack.c.l.b16 %v6620
        %v6648 = vunpack.c.l.b16 %v6621
        %v6649 = vunpack.c.l.b16 %v6622
        %v6650 = vunpack.c.l.b16 %v6623
        %v6651 = vunpack.c.l.b16 %v6624
        %v6652 = vunpack.c.l.b16 %v6625
        %v6653 = vunpack.c.l.b16 %v6626
        %v6654 = vunpack.c.l.b16 %v6627
        %v6655 = vunpack.c.l.b16 %v6628
        %v6656 = vunpack.c.l.b16 %v6629
        %v6657 = vpack.c.b16 %v6648, %v6647
        %v6658 = vpack.c.b16 %v6650, %v6649
        %v6659 = vpack.c.b16 %v6652, %v6651
        %v6660 = vpack.c.b16 %v6654, %v6653
        %v6661 = vpack.c.b16 %v6656, %v6655
        %v6668 = vsel %vm4898, %v6619, 0
        %6670 = vmatprep.subr.bf16.mxu0 0
        %6671 = vmatpush1.bf16.msra.mxu0 %v6657
        %6672 = vmatprep.subr.bf16.mxu0 0
        %6673 = vmatpush1.bf16.msra.mxu0 %v6658
        %6674 = vmatprep.subr.bf16.mxu0 0
        %6675 = vmatpush1.bf16.msra.mxu0 %v6659
        %6676 = vmatprep.subr.bf16.mxu0 0
        %6677 = vmatpush1.bf16.msra.mxu0 %v6660
        %6678 = vmatprep.subr.bf16.mxu0 0
        %6679 = vmatpush1.bf16.msra.mxu0 %v6661
        %6680 = vmatprep.subr.bf16.mxu0 0
        %6681 = vmatpush1.bf16.msra.mxu0 0
        %6682 = vmatprep.subr.bf16.mxu0 0
        %6683 = vmatpush1.bf16.msra.mxu0 0
        %6684 = vmatprep.subr.bf16.mxu0 0
        %6685 = vmatpush1.bf16.msra.mxu0 0
        %6686 = vmatprep.subr.bf16.mxu0 0
        %6687 = vmatpush1.bf16.msra.mxu0 0
        %6688 = vmatprep.subr.bf16.mxu0 0
        %6689 = vmatpush1.bf16.msra.mxu0 0
        %6690 = vmatprep.subr.bf16.mxu0 0
        %6691 = vmatpush1.bf16.msra.mxu0 0
        %6692 = vmatprep.subr.bf16.mxu0 0
        %6693 = vmatpush1.bf16.msra.mxu0 0
        %6694 = vmatprep.subr.bf16.mxu0 0
        %6695 = vmatpush1.bf16.msra.mxu0 0
        %6696 = vmatprep.subr.bf16.mxu0 0
        %6697 = vmatpush1.bf16.msra.mxu0 0
        %6698 = vmatprep.subr.bf16.mxu0 0
        %6699 = vmatpush1.bf16.msra.mxu0 0
        %6700 = vmatprep.subr.bf16.mxu0 0
        %6701 = vmatpush1.bf16.msra.mxu0 0
        %6702 = vmatprep.mubr.bf16.mxu0 0
        %6703 = vmatmul.mubr.bf16.gmra.mrb[0].mxu0 %v6668
        %v6704 = vpop.f32.mrb[0].mxu0
        %v6705 = vadd.f32 %v6635, %v6704
        %v6706 = vpop.f32.mrb[0].mxu0
        %v6707 = vpop.f32.mrb[0].mxu0
        %v6708 = vpop.f32.mrb[0].mxu0
        %6709 = vdwg.mxu0
        %vm6710 = vcmask 978944
        %v6711 = vsel %vm6710, %v6705, 0.0
        %v6712 = vrot.slane %v6711, 4
        %v6713 = vadd.f32 %v6711, %v6712
        %v6714 = vrot.slane %v6713, 2
        %v6715 = vadd.f32 %v6713, %v6714
        %v6716 = vrot.slane %v6715, 1
        %v6717 = vadd.f32 %v6715, %v6716
        %v6718 = vld [vmem:[%s18] sm:$0xff]
        %v6719 = vld [vmem:[%s18 + $0x8] sm:$0xff]
        %v6720 = vld [vmem:[%s18 + $0x10] sm:$0xff]
        %v6721 = vld [vmem:[%s18 + $0x18] sm:$0xff]
        %v6722 = vld [vmem:[%s18 + $0x20] sm:$0xff]
        %v6723 = vld [vmem:[%s18 + $0x28] sm:$0xff]
        %v6724 = vld [vmem:[%s18 + $0x30] sm:$0xff]
        %v6725 = vld [vmem:[%s18 + $0x38] sm:$0xff]
        %v6726 = vld [vmem:[%s18 + $0x40] sm:$0xff]
        %v6727 = vld [vmem:[%s18 + $0x48] sm:$0xff]
        %v6728 = vld [vmem:[%s18 + $0x50] sm:$0xff]
        %v6729 = vld [vmem:[%s18 + $0x58] sm:$0xff]
        %v6730 = vld [vmem:[%s18 + $0x60] sm:$0xff]
        %v6731 = vld [vmem:[%s18 + $0x68] sm:$0xff]
        %v6732 = vld [vmem:[%s18 + $0x70] sm:$0xff]
        %vm6733 = vcmask 982016
        %v6735 = vsel %vm6733, %v6717, 0
        %6737 = vmatprep.subr.mxu0 0.0
        %6738 = vmatpush1.msra.mxu0 %v6718
        %6739 = vmatprep.subr.mxu0 0.0
        %6740 = vmatpush1.msra.mxu0 %v6719
        %6741 = vmatprep.subr.mxu0 0.0
        %6742 = vmatpush1.msra.mxu0 %v6720
        %6743 = vmatprep.subr.mxu0 0.0
        %6744 = vmatpush1.msra.mxu0 %v6721
        %6745 = vmatprep.subr.mxu0 0.0
        %6746 = vmatpush1.msra.mxu0 %v6722
        %6747 = vmatprep.subr.mxu0 0.0
        %6748 = vmatpush1.msra.mxu0 %v6723
        %6749 = vmatprep.subr.mxu0 0.0
        %6750 = vmatpush1.msra.mxu0 %v6724
        %6751 = vmatprep.subr.mxu0 0.0
        %6752 = vmatpush1.msra.mxu0 %v6725
        %6753 = vmatprep.subr.mxu0 0.0
        %6754 = vmatpush1.msra.mxu0 %v6726
        %6755 = vmatprep.subr.mxu0 0.0
        %6756 = vmatpush1.msra.mxu0 %v6727
        %6757 = vmatprep.subr.mxu0 0.0
        %6758 = vmatpush1.msra.mxu0 %v6728
        %6759 = vmatprep.subr.mxu0 0.0
        %6760 = vmatpush1.msra.mxu0 %v6729
        %6761 = vmatprep.subr.mxu0 0.0
        %6762 = vmatpush1.msra.mxu0 %v6730
        %6763 = vmatprep.subr.mxu0 0.0
        %6764 = vmatpush1.msra.mxu0 %v6731
        %6765 = vmatprep.subr.mxu0 0.0
        %6766 = vmatpush1.msra.mxu0 %v6732
        %6767 = vmatprep.subr.mxu0 0.0
        %6768 = vmatpush1.msra.mxu0 0.0
        %6769 = vmatprep.subr.mxu0 0.0
        %6770 = vmatpush1.msra.mxu0 0.0
        %6771 = vmatprep.subr.mxu0 0.0
        %6772 = vmatpush1.msra.mxu0 0.0
        %6773 = vmatprep.subr.mxu0 0.0
        %6774 = vmatpush1.msra.mxu0 0.0
        %6775 = vmatprep.subr.mxu0 0.0
        %6776 = vmatpush1.msra.mxu0 0.0
        %6777 = vmatprep.subr.mxu0 0.0
        %6778 = vmatpush1.msra.mxu0 0.0
        %6779 = vmatprep.subr.mxu0 0.0
        %6780 = vmatpush1.msra.mxu0 0.0
        %6781 = vmatprep.subr.mxu0 0.0
        %6782 = vmatpush1.msra.mxu0 0.0
        %6783 = vmatprep.subr.mxu0 0.0
        %6784 = vmatpush1.msra.mxu0 0.0
        %6785 = vmatprep.subr.mxu0 0.0
        %6786 = vmatpush1.msra.mxu0 0.0
        %6787 = vmatprep.subr.mxu0 0.0
        %6788 = vmatpush1.msra.mxu0 0.0
        %6789 = vmatprep.subr.mxu0 0.0
        %6790 = vmatpush1.msra.mxu0 0.0
        %6791 = vmatprep.subr.mxu0 0.0
        %6792 = vmatpush1.msra.mxu0 0.0
        %6793 = vmatprep.subr.mxu0 0.0
        %6794 = vmatpush1.msra.mxu0 0.0
        %6795 = vmatprep.subr.mxu0 0.0
        %6796 = vmatpush1.msra.mxu0 0.0
        %6797 = vmatprep.subr.mxu0 0.0
        %6798 = vmatpush1.msra.mxu0 0.0
        %6799 = vmatprep.subr.mxu0 0.0
        %6800 = vmatpush1.msra.mxu0 0.0
        %6801 = vmatprep.mubr.f32.mxu0 0.0
        %6802 = vmatmul.mubr.f32.gmra.mrb[0].mxu0 %v6735
        %v6803 = vpop.f32.mrb[0].mxu0
        %v6804 = vadd.f32 0.0, %v6803
        %v6805 = vpop.f32.mrb[0].mxu0
        %6806 = vdwg.mxu0
        %v6807 = vld [vmem:[%s19] sm:$0xff]
        %v6808 = vld [vmem:[%s19 + $0x8] sm:$0xff]
        %v6809 = vld [vmem:[%s19 + $0x10] sm:$0xff]
        %v6810 = vld [vmem:[%s20] sm:$0x1]
        %v6812 = vsel %vm1236, %v6804, 0
        %6814 = vmatprep.subr.mxu0 0.0
        %6815 = vmatpush1.msra.mxu0 %v6807
        %6816 = vmatprep.subr.mxu0 0.0
        %6817 = vmatpush1.msra.mxu0 %v6808
        %6818 = vmatprep.subr.mxu0 0.0
        %6819 = vmatpush1.msra.mxu0 %v6809
        %6820 = vmatprep.subr.mxu0 0.0
        %6821 = vmatpush1.msra.mxu0 0.0
        %6822 = vmatprep.subr.mxu0 0.0
        %6823 = vmatpush1.msra.mxu0 0.0
        %6824 = vmatprep.subr.mxu0 0.0
        %6825 = vmatpush1.msra.mxu0 0.0
        %6826 = vmatprep.subr.mxu0 0.0
        %6827 = vmatpush1.msra.mxu0 0.0
        %6828 = vmatprep.subr.mxu0 0.0
        %6829 = vmatpush1.msra.mxu0 0.0
        %6830 = vmatprep.subr.mxu0 0.0
        %6831 = vmatpush1.msra.mxu0 0.0
        %6832 = vmatprep.subr.mxu0 0.0
        %6833 = vmatpush1.msra.mxu0 0.0
        %6834 = vmatprep.subr.mxu0 0.0
        %6835 = vmatpush1.msra.mxu0 0.0
        %6836 = vmatprep.subr.mxu0 0.0
        %6837 = vmatpush1.msra.mxu0 0.0
        %6838 = vmatprep.subr.mxu0 0.0
        %6839 = vmatpush1.msra.mxu0 0.0
        %6840 = vmatprep.subr.mxu0 0.0
        %6841 = vmatpush1.msra.mxu0 0.0
        %6842 = vmatprep.subr.mxu0 0.0
        %6843 = vmatpush1.msra.mxu0 0.0
        %6844 = vmatprep.subr.mxu0 0.0
        %6845 = vmatpush1.msra.mxu0 0.0
        %6846 = vmatprep.subr.mxu0 0.0
        %6847 = vmatpush1.msra.mxu0 0.0
        %6848 = vmatprep.subr.mxu0 0.0
        %6849 = vmatpush1.msra.mxu0 0.0
        %6850 = vmatprep.subr.mxu0 0.0
        %6851 = vmatpush1.msra.mxu0 0.0
        %6852 = vmatprep.subr.mxu0 0.0
        %6853 = vmatpush1.msra.mxu0 0.0
        %6854 = vmatprep.subr.mxu0 0.0
        %6855 = vmatpush1.msra.mxu0 0.0
        %6856 = vmatprep.subr.mxu0 0.0
        %6857 = vmatpush1.msra.mxu0 0.0
        %6858 = vmatprep.subr.mxu0 0.0
        %6859 = vmatpush1.msra.mxu0 0.0
        %6860 = vmatprep.subr.mxu0 0.0
        %6861 = vmatpush1.msra.mxu0 0.0
        %6862 = vmatprep.subr.mxu0 0.0
        %6863 = vmatpush1.msra.mxu0 0.0
        %6864 = vmatprep.subr.mxu0 0.0
        %6865 = vmatpush1.msra.mxu0 0.0
        %6866 = vmatprep.subr.mxu0 0.0
        %6867 = vmatpush1.msra.mxu0 0.0
        %6868 = vmatprep.subr.mxu0 0.0
        %6869 = vmatpush1.msra.mxu0 0.0
        %6870 = vmatprep.subr.mxu0 0.0
        %6871 = vmatpush1.msra.mxu0 0.0
        %6872 = vmatprep.subr.mxu0 0.0
        %6873 = vmatpush1.msra.mxu0 0.0
        %6874 = vmatprep.subr.mxu0 0.0
        %6875 = vmatpush1.msra.mxu0 0.0
        %6876 = vmatprep.subr.mxu0 0.0
        %6877 = vmatpush1.msra.mxu0 0.0
        %6878 = vmatprep.mubr.f32.mxu0 0.0
        %6879 = vmatmul.mubr.f32.gmra.mrb[0].mxu0 %v6812
        %v6880 = vpop.f32.mrb[0].mxu0
        %v6881 = vadd.f32 %v6810, %v6880
        %v6882 = vpop.f32.mrb[0].mxu0
        %6883 = vdwg.mxu0
        %vm6884 = vcmask 73728
        %6885 = vst.msk [vmem:[%s678] sm:$0x1] %vm6884, %v6881
        %s6886 = sand.u32 %s491, 1
        %s6887 = scalar_lea.sflag [#allocation10], %s6886
        %s6888 = sand.u32 %s491, 1
        %s6889 = scalar_lea.vmem [#allocation13], %s6888
        // Predicated region
        $region113: #{_build_forward.1} parent=103 // pred_check
          %p6890 = pneg %p501
        $region114: #{_build_forward.1} parent=103 // pred_check_branch
          %6892 = sbr.rel (%p6890) target = $region116
        $region115: #{_build_forward.1} parent=103 // pred_region
          %s6894 = ssub.s32 16, 16
          %6895 = vsyncadd %s6887, %s6894
          %s6896 = smul.addr %s37, 16
          %s6897 = scalar_lea.hbm %s21, %s6896
          %s6899 = sshll.u32 %s6889, 4
          %s6900 = int_to_ptr.vmem [resolvable:$true] %s6899
          %6902 = dma.vmem_to_hbm [thread:$0]  %s6900, 16, %s6897, %s6887
        $region116: #{_build_forward.1} parent=103 // pred_fallthru
          _
      $region104: #{_build_forward.1} parent=5 // pred_fallthru
        _
      %p6903 = scmp.le.s32.totalorder 2, %s32
      // Predicated region
      $region117: #{_build_forward.1} parent=5 // pred_check
        %p6904 = pneg %p6903
      $region118: #{_build_forward.1} parent=5 // pred_check_branch
        %6906 = sbr.rel (%p6904) target = $region120
      $region119: #{_build_forward.1} parent=5 // pred_region
        %s6907 = ssub.s32 %s32, 2
        // Predicated region
        $region121: #{_build_forward.1} parent=119 // pred_check
          %p6908 = pneg %p507
        $region122: #{_build_forward.1} parent=119 // pred_check_branch
          %6910 = sbr.rel (%p6908) target = $region124
        $region123: #{_build_forward.1} parent=119 // pred_region
          %s6911 = sand.u32 %s492, 1
          %s6912 = scalar_lea.sflag [#allocation10], %s6911
          %s6913 = sand.u32 %s492, 1
          %s6914 = scalar_lea.vmem [#allocation13], %s6913
          %6915 = dma.done %s6912, 16
        $region124: #{_build_forward.1} parent=119 // pred_fallthru
          _
      $region120: #{_build_forward.1} parent=5 // pred_fallthru
        _
    $region6: #{_build_forward.1} parent=1 // loop_footer
      %s36 = sadd.s32 1, %s32
    $region7: #{_build_forward.1} parent=1 // loop_footer_branch
      %31 = sbr.rel target = $region3
    $region8: #{_build_forward.1} parent=1 // loop_exit
      _
    %6916 = vsyncpa [#allocation9], 1
    %s6917 = scalar_lea.sflag [#allocation9], 1
    %6918 = vsyncpa %s6917, 1
    %6919 = vsyncpa [#allocation12], 1
    %6920 = vsyncpa [#allocation10], 1
    %s6921 = scalar_lea.sflag [#allocation10], 1
    %6922 = vsyncpa %s6921, 1

</llo_original>
